<compile_context>
chip_gen: v7x
topology: tpu7x:2x2x1
jax: 0.10.0
libtpu: 0.0.40
codegen_flags: <defaults>
</compile_context>

<pallas_src>
import jax
import jax.numpy as jnp
from jax.experimental import pallas as pl
from jax.experimental.pallas import tpu as pltpu


NCLS_PAD = 128  # lane-dense padded class dimension (classifier output columns)


def _round_up(a, b):
    return (a + b - 1) // b * b


def _fused_kernel(x_ref, wc_ref, bc_ref, w1_ref, b1_ref, w2_ref, b2_ref, o_ref):
    """TILE_N samples per grid step:
         feat = relu(x @ Wc_big + bc)     # conv3x3(+bias,+ReLU) as one dense matmul, NCHW order
         h    = relu(feat @ w1 + b1)      # base-tail Linear, then F.relu(base(x))
         out  = h @ w2_pad + b2_pad       # classifier Linear (lane-dense, 128 padded classes)
    """
    x = x_ref[...].astype(jnp.bfloat16)                                   # (TN, Cin*P), one cast
    feat = jnp.dot(x, wc_ref[...], preferred_element_type=jnp.float32)    # (TN, Cout*P)
    feat = jnp.maximum(feat + bc_ref[...], 0.0)                           # conv bias + ReLU
    h = jnp.dot(feat.astype(jnp.bfloat16), w1_ref[...],
                preferred_element_type=jnp.float32)                       # (TN, hidden)
    h = jnp.maximum(h + b1_ref[...], 0.0)                                 # F.relu(base(x))
    o = jnp.dot(h.astype(jnp.bfloat16), w2_ref[...],
                preferred_element_type=jnp.float32)                       # (TN, 128)
    o_ref[...] = o + b2_ref[...]                                          # lane-dense store


def _conv_as_dense_matrix(w_conv, cin, cout, H, W):
    """Embed the 3x3 / stride-1 / pad-1 conv (incl. zero-padding boundary masks) into one
    (Cin*H*W, Cout*H*W) matrix.  Column order is (cout-major, position-minor) == the NCHW
    flatten that Linear1's weight rows expect, so conv -> flatten -> Linear needs no in-kernel
    transpose/relayout.  w_conv rows are im2col layout: row = ci*9 + (kh*3+kw)."""
    P = H * W
    p = jnp.arange(P)
    hh, ww = p // W, p % W
    q = jnp.arange(P)
    taps = []
    for dh in (-1, 0, 1):
        for dw in (-1, 0, 1):
            off = dh * W + dw
            valid = (hh + dh >= 0) & (hh + dh < H) & (ww + dw >= 0) & (ww + dw < W)
            taps.append((q[:, None] == (p + off)[None, :]) & valid[None, :])
    S = jnp.stack(taps).astype(jnp.float32)                    # (9, P, P) shift+mask selectors
    A = w_conv.reshape(cin, 9, cout).transpose(1, 0, 2)        # (9, Cin, Cout)
    big = jnp.einsum('tco,tqp->cqop', A, S)                    # (Cin, P, Cout, P)
    return big.reshape(cin * P, cout * P).astype(jnp.bfloat16)


def init_params(key, cin=4, cconv=8, h=16, w=16, hidden=32, num_classes=10):
    k = jax.random.split(key, 6)
    return {
        # conv weight stored in im2col layout: rows = ci*9 + (kh*3+kw), cols = cout
        "w_conv": jax.random.normal(k[0], (cin * 9, cconv), jnp.float32) * 0.05,
        "b_conv": jax.random.normal(k[1], (1, cconv), jnp.float32) * 0.05,
        "w1": jax.random.normal(k[2], (cconv * h * w, hidden), jnp.float32) * 0.02,
        "b1": jax.random.normal(k[3], (1, hidden), jnp.float32) * 0.02,
        "w2": jax.random.normal(k[4], (hidden, num_classes), jnp.float32) * 0.05,
        "b2": jax.random.normal(k[5], (1, num_classes), jnp.float32) * 0.05,
    }


def decoupled_model_forward(x_nchw, params, *, tile_n=256):
    N, Cin, H, W = x_nchw.shape
    P = H * W
    Cout = params["b_conv"].shape[-1]
    hidden = params["w1"].shape[1]
    num_classes = params["w2"].shape[1]
    assert num_classes <= NCLS_PAD

    # ---- trace-time weight prep (pure function of the weights; hoist/cache per weight update
    #      in production — here it is recomputed per jitted call, a few MB of XLA work). ----
    wc_big = _conv_as_dense_matrix(params["w_conv"], Cin, Cout, H, W)      # (Cin*P, Cout*P) bf16
    bc_big = jnp.repeat(params["b_conv"].reshape(Cout, 1), P, axis=1
                        ).reshape(1, Cout * P).astype(jnp.float32)         # (1, Cout*P)
    w1_b = params["w1"].astype(jnp.bfloat16)                               # (Cout*P, hidden)
    b1_f = params["b1"].astype(jnp.float32)                                # (1, hidden)
    w2_p = jnp.pad(params["w2"], ((0, 0), (0, NCLS_PAD - num_classes))).astype(jnp.bfloat16)
    b2_p = jnp.pad(params["b2"], ((0, 0), (0, NCLS_PAD - num_classes))).astype(jnp.float32)

    # ---- batch tiling: batch on the matmul M axis; 8-multiple sublane tile; pad N ----
    tile = min(tile_n, _round_up(max(N, 1), 8))
    Np = _round_up(N, tile)
    # TODO(synk): on v5e, accept bf16 x from the producer to halve the dominant HBM stream.
    x_flat = x_nchw.reshape(N, Cin * P).astype(jnp.float32)    # free NCHW flatten, lane-dense
    if Np != N:
        x_flat = jnp.pad(x_flat, ((0, Np - N), (0, 0)))

    out = pl.pallas_call(
        _fused_kernel,
        out_shape=jax.ShapeDtypeStruct((Np, NCLS_PAD), jnp.float32),
        grid=(Np // tile,),
        in_specs=[
            pl.BlockSpec((tile, Cin * P), lambda i: (i, 0)),        # per-tile activations
            pl.BlockSpec((Cin * P, Cout * P), lambda i: (0, 0)),    # resident dense-conv matrix
            pl.BlockSpec((1, Cout * P), lambda i: (0, 0)),
            pl.BlockSpec((Cout * P, hidden), lambda i: (0, 0)),
            pl.BlockSpec((1, hidden), lambda i: (0, 0)),
            pl.BlockSpec((hidden, NCLS_PAD), lambda i: (0, 0)),
            pl.BlockSpec((1, NCLS_PAD), lambda i: (0, 0)),
        ],
        out_specs=pl.BlockSpec((tile, NCLS_PAD), lambda i: (i, 0)),
        compiler_params=pltpu.CompilerParams(
            dimension_semantics=("parallel",),       # shard batch tiles across TCs (v7x)
            vmem_limit_bytes=48 * 1024 * 1024,       # safe for v7x's 64 MiB VMEM
        ),
    )(x_flat, wc_big, bc_big, w1_b, b1_f, w2_p, b2_p)

    return out[:N, :num_classes]


def _reference_forward(x_nchw, params):
    """Pure-JAX (f32) reference matching the torch semantics."""
    N, Cin, H, W = x_nchw.shape
    Cout = params["w_conv"].shape[1]
    xp = jnp.pad(x_nchw, ((0, 0), (0, 0), (1, 1), (1, 1)))
    cols = [xp[:, :, kh:kh + H, kw:kw + W] for kh in range(3) for kw in range(3)]
    patches = (jnp.stack(cols, axis=2)               # (N, Cin, 9, H, W)
               .transpose(0, 3, 4, 1, 2)
               .reshape(N * H * W, Cin * 9))
    conv = jnp.maximum(patches @ params["w_conv"] + params["b_conv"], 0.0)
    feats = (conv.reshape(N, H, W, Cout).transpose(0, 3, 1, 2).reshape(N, Cout * H * W))
    h = jnp.maximum(feats @ params["w1"] + params["b1"], 0.0)
    return h @ params["w2"] + params["b2"]


if __name__ == "__main__":
    key = jax.random.PRNGKey(0)
    k_x, k_p = jax.random.split(key)

    N, Cin, H, W = 2, 4, 16, 16
    x = jax.random.normal(k_x, (N, Cin, H, W), jnp.float32)
    params = init_params(k_p, cin=Cin, h=H, w=W)

    fwd = jax.jit(decoupled_model_forward)
    y = fwd(x, params)
    jax.block_until_ready(y)

    assert y.shape == (N, 10), y.shape
    assert bool(jnp.all(jnp.isfinite(y))), "non-finite output"

    y_ref = _reference_forward(x, params)
    assert bool(jnp.allclose(y, y_ref, rtol=5e-2, atol=5e-2)), (
        "mismatch vs reference, max abs err = %f" % float(jnp.max(jnp.abs(y - y_ref))))

    # TODO(synk): forward-hook feature capture (need_all_features / get_all_features) and
    # dropout train/eval toggling are host-side module plumbing, not forward compute.
    print("KERNEL_OK")
</pallas_src>

<mosaic_0001>
module attributes {stable_mosaic.version = 11 : i64} {
  func.func @_fused_kernel(%arg0: i32, %arg1: memref<8x1024xf32, #tpu.memory_space<vmem>>, %arg2: memref<1024x2048xbf16, #tpu.memory_space<vmem>>, %arg3: memref<1x2048xf32, #tpu.memory_space<vmem>>, %arg4: memref<2048x32xbf16, #tpu.memory_space<vmem>>, %arg5: memref<1x32xf32, #tpu.memory_space<vmem>>, %arg6: memref<32x128xbf16, #tpu.memory_space<vmem>>, %arg7: memref<1x128xf32, #tpu.memory_space<vmem>>, %arg8: memref<8x128xf32, #tpu.memory_space<vmem>>) attributes {dimension_semantics = [#tpu.dimension_semantics<parallel>], iteration_bounds = array<i64: 1>, scalar_prefetch = 0 : i64, scratch_operands = 0 : i64, tpu.core_type = #tpu.core_type<tc>, window_params = [{transform_indices = @transform_0, window_bounds = array<i64: 8, 1024>}, {pipeline_mode = #tpu.pipeline_mode<synchronous>, transform_indices = @transform_1, window_bounds = array<i64: 1024, 2048>}, {pipeline_mode = #tpu.pipeline_mode<synchronous>, transform_indices = @transform_2, window_bounds = array<i64: 1, 2048>}, {pipeline_mode = #tpu.pipeline_mode<synchronous>, transform_indices = @transform_3, window_bounds = array<i64: 2048, 32>}, {pipeline_mode = #tpu.pipeline_mode<synchronous>, transform_indices = @transform_4, window_bounds = array<i64: 1, 32>}, {pipeline_mode = #tpu.pipeline_mode<synchronous>, transform_indices = @transform_5, window_bounds = array<i64: 32, 128>}, {pipeline_mode = #tpu.pipeline_mode<synchronous>, transform_indices = @transform_6, window_bounds = array<i64: 1, 128>}, {transform_indices = @transform_7, window_bounds = array<i64: 8, 128>}]} {
    %c0 = arith.constant 0 : index
    %c0_0 = arith.constant 0 : index
    %0 = vector.load %arg1[%c0, %c0_0] : memref<8x1024xf32, #tpu.memory_space<vmem>>, vector<8x1024xf32>
    %1 = arith.truncf %0 : vector<8x1024xf32> to vector<8x1024xbf16>
    %c0_1 = arith.constant 0 : index
    %c0_2 = arith.constant 0 : index
    %2 = vector.load %arg2[%c0_1, %c0_2] : memref<1024x2048xbf16, #tpu.memory_space<vmem>>, vector<1024x2048xbf16>
    %cst = arith.constant dense<0.000000e+00> : vector<8x2048xf32>
    %3 = tpu.matmul %1, %2, %cst {dimension_numbers = #tpu.dot_dimension_numbers<[1], [0], [0], [1], [0, 0, 1, 1], [], []>} : vector<8x1024xbf16>, vector<1024x2048xbf16>, vector<8x2048xf32> -> vector<8x2048xf32>
    %c0_3 = arith.constant 0 : index
    %c0_4 = arith.constant 0 : index
    %4 = vector.load %arg3[%c0_3, %c0_4] : memref<1x2048xf32, #tpu.memory_space<vmem>>, vector<1x2048xf32>
    %5 = vector.broadcast %4 : vector<1x2048xf32> to vector<8x2048xf32>
    %6 = arith.addf %3, %5 : vector<8x2048xf32>
    %cst_5 = arith.constant 0.000000e+00 : f32
    %7 = vector.broadcast %cst_5 : f32 to vector<8x2048xf32>
    %8 = arith.maximumf %6, %7 : vector<8x2048xf32>
    %9 = arith.truncf %8 : vector<8x2048xf32> to vector<8x2048xbf16>
    %c0_6 = arith.constant 0 : index
    %c0_7 = arith.constant 0 : index
    %10 = vector.load %arg4[%c0_6, %c0_7] : memref<2048x32xbf16, #tpu.memory_space<vmem>>, vector<2048x32xbf16>
    %cst_8 = arith.constant dense<0.000000e+00> : vector<8x32xf32>
    %11 = tpu.matmul %9, %10, %cst_8 {dimension_numbers = #tpu.dot_dimension_numbers<[1], [0], [0], [1], [0, 0, 1, 1], [], []>} : vector<8x2048xbf16>, vector<2048x32xbf16>, vector<8x32xf32> -> vector<8x32xf32>
    %c0_9 = arith.constant 0 : index
    %c0_10 = arith.constant 0 : index
    %12 = vector.load %arg5[%c0_9, %c0_10] : memref<1x32xf32, #tpu.memory_space<vmem>>, vector<1x32xf32>
    %13 = vector.broadcast %12 : vector<1x32xf32> to vector<8x32xf32>
    %14 = arith.addf %11, %13 : vector<8x32xf32>
    %cst_11 = arith.constant 0.000000e+00 : f32
    %15 = vector.broadcast %cst_11 : f32 to vector<8x32xf32>
    %16 = arith.maximumf %14, %15 : vector<8x32xf32>
    %17 = arith.truncf %16 : vector<8x32xf32> to vector<8x32xbf16>
    %c0_12 = arith.constant 0 : index
    %c0_13 = arith.constant 0 : index
    %18 = vector.load %arg6[%c0_12, %c0_13] : memref<32x128xbf16, #tpu.memory_space<vmem>>, vector<32x128xbf16>
    %cst_14 = arith.constant dense<0.000000e+00> : vector<8x128xf32>
    %19 = tpu.matmul %17, %18, %cst_14 {dimension_numbers = #tpu.dot_dimension_numbers<[1], [0], [0], [1], [0, 0, 1, 1], [], []>} : vector<8x32xbf16>, vector<32x128xbf16>, vector<8x128xf32> -> vector<8x128xf32>
    %c0_15 = arith.constant 0 : index
    %c0_16 = arith.constant 0 : index
    %20 = vector.load %arg7[%c0_15, %c0_16] : memref<1x128xf32, #tpu.memory_space<vmem>>, vector<1x128xf32>
    %21 = vector.broadcast %20 : vector<1x128xf32> to vector<8x128xf32>
    %22 = arith.addf %19, %21 : vector<8x128xf32>
    %c0_17 = arith.constant 0 : index
    %c0_18 = arith.constant 0 : index
    %23 = vector.load %arg8[%c0_17, %c0_18] : memref<8x128xf32, #tpu.memory_space<vmem>>, vector<8x128xf32>
    tpu.vector_store %arg8[%c0_17, %c0_18], %22 {strides = array<i32>} : memref<8x128xf32, #tpu.memory_space<vmem>>, vector<8x128xf32>,
    return
  }
  func.func @transform_0(%arg0: i32) -> (i32, i32) {
    %c0_i32 = arith.constant 0 : i32
    %c0_i32_0 = arith.constant 0 : i32
    return %arg0, %c0_i32 : i32, i32
  }
  func.func @transform_1(%arg0: i32) -> (i32, i32) {
    %c0_i32 = arith.constant 0 : i32
    %c0_i32_0 = arith.constant 0 : i32
    %c0_i32_1 = arith.constant 0 : i32
    return %c0_i32, %c0_i32_0 : i32, i32
  }
  func.func @transform_2(%arg0: i32) -> (i32, i32) {
    %c0_i32 = arith.constant 0 : i32
    %c0_i32_0 = arith.constant 0 : i32
    %c0_i32_1 = arith.constant 0 : i32
    return %c0_i32, %c0_i32_0 : i32, i32
  }
  func.func @transform_3(%arg0: i32) -> (i32, i32) {
    %c0_i32 = arith.constant 0 : i32
    %c0_i32_0 = arith.constant 0 : i32
    %c0_i32_1 = arith.constant 0 : i32
    return %c0_i32, %c0_i32_0 : i32, i32
  }
  func.func @transform_4(%arg0: i32) -> (i32, i32) {
    %c0_i32 = arith.constant 0 : i32
    %c0_i32_0 = arith.constant 0 : i32
    %c0_i32_1 = arith.constant 0 : i32
    return %c0_i32, %c0_i32_0 : i32, i32
  }
  func.func @transform_5(%arg0: i32) -> (i32, i32) {
    %c0_i32 = arith.constant 0 : i32
    %c0_i32_0 = arith.constant 0 : i32
    %c0_i32_1 = arith.constant 0 : i32
    return %c0_i32, %c0_i32_0 : i32, i32
  }
  func.func @transform_6(%arg0: i32) -> (i32, i32) {
    %c0_i32 = arith.constant 0 : i32
    %c0_i32_0 = arith.constant 0 : i32
    %c0_i32_1 = arith.constant 0 : i32
    return %c0_i32, %c0_i32_0 : i32, i32
  }
  func.func @transform_7(%arg0: i32) -> (i32, i32) {
    %c0_i32 = arith.constant 0 : i32
    %c0_i32_0 = arith.constant 0 : i32
    return %arg0, %c0_i32 : i32, i32
  }
}

</mosaic_0001>

<llo_original>
// kernel: decoupled_model_forward.1
$region0: #{decoupled_model_forward.1}
  #allocation0 [shape = 'u32[]', space=smem, size = 0x4, offset = 0x4, fixed_abs, tag = 'smem constant byte address 0x4 - core index']
  #allocation1 [shape = 'u32[144,128]{1,0:T(1,128)}', space=vmem, size = 0x12000, scoped, tag = 'internal scratch']
  %s0 = inlined_call_operand.vmem [shape: f32[8,1024], index: 0, kind: input, shape index: {}]
  %s1 = inlined_call_operand.vmem [shape: bf16[1024,2048], index: 1, kind: input, shape index: {}]
  %s2 = inlined_call_operand.vmem [shape: f32[1,2048], index: 2, kind: input, shape index: {}]
  %s3 = inlined_call_operand.vmem [shape: bf16[2048,32], index: 3, kind: input, shape index: {}]
  %s4 = inlined_call_operand.vmem [shape: f32[1,32], index: 4, kind: input, shape index: {}]
  %s5 = inlined_call_operand.vmem [shape: bf16[32,128], index: 5, kind: input, shape index: {}]
  %s6 = inlined_call_operand.vmem [shape: f32[1,128], index: 6, kind: input, shape index: {}]
  %s7 = inlined_call_operand.vmem [shape: f32[8,128], index: 7, kind: output, shape index: {}]
  %s8 = sld [smem:[#allocation0]]
  $region38: #{decoupled_model_forward.1} parent=0
    _
  %s10 = ssub.s32 1, %s8
  %s11 = scalar_select 0, %s10, %s8
  // Predicated region
  $region2: #{decoupled_model_forward.1} parent=0 // pred_check
    _
  $region3: #{decoupled_model_forward.1} parent=0 // pred_check_branch
    %13 = sbr.rel (0) target = $region5
  $region4: #{decoupled_model_forward.1} parent=0 // pred_region
    _
  $region5: #{decoupled_model_forward.1} parent=0 // pred_fallthru
    _
  // Predicated region
  $region6: #{decoupled_model_forward.1} parent=0 // pred_check
    _
  $region7: #{decoupled_model_forward.1} parent=0 // pred_check_branch
    %15 = sbr.rel (0) target = $region9
  $region8: #{decoupled_model_forward.1} parent=0 // pred_region
    _
  $region9: #{decoupled_model_forward.1} parent=0 // pred_fallthru
    _
  // Predicated region
  $region10: #{decoupled_model_forward.1} parent=0 // pred_check
    _
  $region11: #{decoupled_model_forward.1} parent=0 // pred_check_branch
    %17 = sbr.rel (0) target = $region13
  $region12: #{decoupled_model_forward.1} parent=0 // pred_region
    _
  $region13: #{decoupled_model_forward.1} parent=0 // pred_fallthru
    _
  // Predicated region
  $region14: #{decoupled_model_forward.1} parent=0 // pred_check
    _
  $region15: #{decoupled_model_forward.1} parent=0 // pred_check_branch
    %19 = sbr.rel (0) target = $region17
  $region16: #{decoupled_model_forward.1} parent=0 // pred_region
    _
  $region17: #{decoupled_model_forward.1} parent=0 // pred_fallthru
    _
  // Predicated region
  $region18: #{decoupled_model_forward.1} parent=0 // pred_check
    _
  $region19: #{decoupled_model_forward.1} parent=0 // pred_check_branch
    %21 = sbr.rel (0) target = $region21
  $region20: #{decoupled_model_forward.1} parent=0 // pred_region
    _
  $region21: #{decoupled_model_forward.1} parent=0 // pred_fallthru
    _
  // Predicated region
  $region22: #{decoupled_model_forward.1} parent=0 // pred_check
    _
  $region23: #{decoupled_model_forward.1} parent=0 // pred_check_branch
    %23 = sbr.rel (0) target = $region25
  $region24: #{decoupled_model_forward.1} parent=0 // pred_region
    _
  $region25: #{decoupled_model_forward.1} parent=0 // pred_fallthru
    _
  // Predicated region
  $region26: #{decoupled_model_forward.1} parent=0 // pred_check
    _
  $region27: #{decoupled_model_forward.1} parent=0 // pred_check_branch
    %25 = sbr.rel (0) target = $region29
  $region28: #{decoupled_model_forward.1} parent=0 // pred_region
    _
  $region29: #{decoupled_model_forward.1} parent=0 // pred_fallthru
    _
  %v27 = vld [vmem:[%s0] sm:$0xff]
  %v28 = vld [vmem:[%s0 + $0x8] sm:$0xff]
  %v29 = vld [vmem:[%s0 + $0x10] sm:$0xff]
  %v30 = vld [vmem:[%s0 + $0x18] sm:$0xff]
  %v31 = vld [vmem:[%s0 + $0x20] sm:$0xff]
  %v32 = vld [vmem:[%s0 + $0x28] sm:$0xff]
  %v33 = vld [vmem:[%s0 + $0x30] sm:$0xff]
  %v34 = vld [vmem:[%s0 + $0x38] sm:$0xff]
  %v35 = vpack.c.bf16 %v27, %v27
  %v36 = vpack.c.bf16 %v28, %v28
  %v37 = vpack.c.bf16 %v29, %v29
  %v38 = vpack.c.bf16 %v30, %v30
  %v39 = vpack.c.bf16 %v31, %v31
  %v40 = vpack.c.bf16 %v32, %v32
  %v41 = vpack.c.bf16 %v33, %v33
  %v42 = vpack.c.bf16 %v34, %v34
  %v43 = vld [vmem:[%s1] sm:$0xff]
  %v44 = vld [vmem:[%s1 + $0x8] sm:$0xff]
  %v45 = vld [vmem:[%s1 + $0x10] sm:$0xff]
  %v46 = vld [vmem:[%s1 + $0x18] sm:$0xff]
  %v47 = vld [vmem:[%s1 + $0x20] sm:$0xff]
  %v48 = vld [vmem:[%s1 + $0x28] sm:$0xff]
  %v49 = vld [vmem:[%s1 + $0x30] sm:$0xff]
  %v50 = vld [vmem:[%s1 + $0x38] sm:$0xff]
  %v51 = vld [vmem:[%s1 + $0x40] sm:$0xff]
  %v52 = vld [vmem:[%s1 + $0x48] sm:$0xff]
  %v53 = vld [vmem:[%s1 + $0x50] sm:$0xff]
  %v54 = vld [vmem:[%s1 + $0x58] sm:$0xff]
  %v55 = vld [vmem:[%s1 + $0x60] sm:$0xff]
  %v56 = vld [vmem:[%s1 + $0x68] sm:$0xff]
  %v57 = vld [vmem:[%s1 + $0x70] sm:$0xff]
  %v58 = vld [vmem:[%s1 + $0x78] sm:$0xff]
  %v59 = vld [vmem:[%s1 + $0x80] sm:$0xff]
  %v60 = vld [vmem:[%s1 + $0x88] sm:$0xff]
  %v61 = vld [vmem:[%s1 + $0x90] sm:$0xff]
  %v62 = vld [vmem:[%s1 + $0x98] sm:$0xff]
  %v63 = vld [vmem:[%s1 + $0xa0] sm:$0xff]
  %v64 = vld [vmem:[%s1 + $0xa8] sm:$0xff]
  %v65 = vld [vmem:[%s1 + $0xb0] sm:$0xff]
  %v66 = vld [vmem:[%s1 + $0xb8] sm:$0xff]
  %v67 = vld [vmem:[%s1 + $0xc0] sm:$0xff]
  %v68 = vld [vmem:[%s1 + $0xc8] sm:$0xff]
  %v69 = vld [vmem:[%s1 + $0xd0] sm:$0xff]
  %v70 = vld [vmem:[%s1 + $0xd8] sm:$0xff]
  %v71 = vld [vmem:[%s1 + $0xe0] sm:$0xff]
  %v72 = vld [vmem:[%s1 + $0xe8] sm:$0xff]
  %v73 = vld [vmem:[%s1 + $0xf0] sm:$0xff]
  %v74 = vld [vmem:[%s1 + $0xf8] sm:$0xff]
  %v75 = vld [vmem:[%s1 + $0x100] sm:$0xff]
  %v76 = vld [vmem:[%s1 + $0x108] sm:$0xff]
  %v77 = vld [vmem:[%s1 + $0x110] sm:$0xff]
  %v78 = vld [vmem:[%s1 + $0x118] sm:$0xff]
  %v79 = vld [vmem:[%s1 + $0x120] sm:$0xff]
  %v80 = vld [vmem:[%s1 + $0x128] sm:$0xff]
  %v81 = vld [vmem:[%s1 + $0x130] sm:$0xff]
  %v82 = vld [vmem:[%s1 + $0x138] sm:$0xff]
  %v83 = vld [vmem:[%s1 + $0x140] sm:$0xff]
  %v84 = vld [vmem:[%s1 + $0x148] sm:$0xff]
  %v85 = vld [vmem:[%s1 + $0x150] sm:$0xff]
  %v86 = vld [vmem:[%s1 + $0x158] sm:$0xff]
  %v87 = vld [vmem:[%s1 + $0x160] sm:$0xff]
  %v88 = vld [vmem:[%s1 + $0x168] sm:$0xff]
  %v89 = vld [vmem:[%s1 + $0x170] sm:$0xff]
  %v90 = vld [vmem:[%s1 + $0x178] sm:$0xff]
  %v91 = vld [vmem:[%s1 + $0x180] sm:$0xff]
  %v92 = vld [vmem:[%s1 + $0x188] sm:$0xff]
  %v93 = vld [vmem:[%s1 + $0x190] sm:$0xff]
  %v94 = vld [vmem:[%s1 + $0x198] sm:$0xff]
  %v95 = vld [vmem:[%s1 + $0x1a0] sm:$0xff]
  %v96 = vld [vmem:[%s1 + $0x1a8] sm:$0xff]
  %v97 = vld [vmem:[%s1 + $0x1b0] sm:$0xff]
  %v98 = vld [vmem:[%s1 + $0x1b8] sm:$0xff]
  %v99 = vld [vmem:[%s1 + $0x1c0] sm:$0xff]
  %v100 = vld [vmem:[%s1 + $0x1c8] sm:$0xff]
  %v101 = vld [vmem:[%s1 + $0x1d0] sm:$0xff]
  %v102 = vld [vmem:[%s1 + $0x1d8] sm:$0xff]
  %v103 = vld [vmem:[%s1 + $0x1e0] sm:$0xff]
  %v104 = vld [vmem:[%s1 + $0x1e8] sm:$0xff]
  %v105 = vld [vmem:[%s1 + $0x1f0] sm:$0xff]
  %v106 = vld [vmem:[%s1 + $0x1f8] sm:$0xff]
  %v107 = vld [vmem:[%s1 + $0x200] sm:$0xff]
  %v108 = vld [vmem:[%s1 + $0x208] sm:$0xff]
  %v109 = vld [vmem:[%s1 + $0x210] sm:$0xff]
  %v110 = vld [vmem:[%s1 + $0x218] sm:$0xff]
  %v111 = vld [vmem:[%s1 + $0x220] sm:$0xff]
  %v112 = vld [vmem:[%s1 + $0x228] sm:$0xff]
  %v113 = vld [vmem:[%s1 + $0x230] sm:$0xff]
  %v114 = vld [vmem:[%s1 + $0x238] sm:$0xff]
  %v115 = vld [vmem:[%s1 + $0x240] sm:$0xff]
  %v116 = vld [vmem:[%s1 + $0x248] sm:$0xff]
  %v117 = vld [vmem:[%s1 + $0x250] sm:$0xff]
  %v118 = vld [vmem:[%s1 + $0x258] sm:$0xff]
  %v119 = vld [vmem:[%s1 + $0x260] sm:$0xff]
  %v120 = vld [vmem:[%s1 + $0x268] sm:$0xff]
  %v121 = vld [vmem:[%s1 + $0x270] sm:$0xff]
  %v122 = vld [vmem:[%s1 + $0x278] sm:$0xff]
  %v123 = vld [vmem:[%s1 + $0x280] sm:$0xff]
  %v124 = vld [vmem:[%s1 + $0x288] sm:$0xff]
  %v125 = vld [vmem:[%s1 + $0x290] sm:$0xff]
  %v126 = vld [vmem:[%s1 + $0x298] sm:$0xff]
  %v127 = vld [vmem:[%s1 + $0x2a0] sm:$0xff]
  %v128 = vld [vmem:[%s1 + $0x2a8] sm:$0xff]
  %v129 = vld [vmem:[%s1 + $0x2b0] sm:$0xff]
  %v130 = vld [vmem:[%s1 + $0x2b8] sm:$0xff]
  %v131 = vld [vmem:[%s1 + $0x2c0] sm:$0xff]
  %v132 = vld [vmem:[%s1 + $0x2c8] sm:$0xff]
  %v133 = vld [vmem:[%s1 + $0x2d0] sm:$0xff]
  %v134 = vld [vmem:[%s1 + $0x2d8] sm:$0xff]
  %v135 = vld [vmem:[%s1 + $0x2e0] sm:$0xff]
  %v136 = vld [vmem:[%s1 + $0x2e8] sm:$0xff]
  %v137 = vld [vmem:[%s1 + $0x2f0] sm:$0xff]
  %v138 = vld [vmem:[%s1 + $0x2f8] sm:$0xff]
  %v139 = vld [vmem:[%s1 + $0x300] sm:$0xff]
  %v140 = vld [vmem:[%s1 + $0x308] sm:$0xff]
  %v141 = vld [vmem:[%s1 + $0x310] sm:$0xff]
  %v142 = vld [vmem:[%s1 + $0x318] sm:$0xff]
  %v143 = vld [vmem:[%s1 + $0x320] sm:$0xff]
  %v144 = vld [vmem:[%s1 + $0x328] sm:$0xff]
  %v145 = vld [vmem:[%s1 + $0x330] sm:$0xff]
  %v146 = vld [vmem:[%s1 + $0x338] sm:$0xff]
  %v147 = vld [vmem:[%s1 + $0x340] sm:$0xff]
  %v148 = vld [vmem:[%s1 + $0x348] sm:$0xff]
  %v149 = vld [vmem:[%s1 + $0x350] sm:$0xff]
  %v150 = vld [vmem:[%s1 + $0x358] sm:$0xff]
  %v151 = vld [vmem:[%s1 + $0x360] sm:$0xff]
  %v152 = vld [vmem:[%s1 + $0x368] sm:$0xff]
  %v153 = vld [vmem:[%s1 + $0x370] sm:$0xff]
  %v154 = vld [vmem:[%s1 + $0x378] sm:$0xff]
  %v155 = vld [vmem:[%s1 + $0x380] sm:$0xff]
  %v156 = vld [vmem:[%s1 + $0x388] sm:$0xff]
  %v157 = vld [vmem:[%s1 + $0x390] sm:$0xff]
  %v158 = vld [vmem:[%s1 + $0x398] sm:$0xff]
  %v159 = vld [vmem:[%s1 + $0x3a0] sm:$0xff]
  %v160 = vld [vmem:[%s1 + $0x3a8] sm:$0xff]
  %v161 = vld [vmem:[%s1 + $0x3b0] sm:$0xff]
  %v162 = vld [vmem:[%s1 + $0x3b8] sm:$0xff]
  %v163 = vld [vmem:[%s1 + $0x3c0] sm:$0xff]
  %v164 = vld [vmem:[%s1 + $0x3c8] sm:$0xff]
  %v165 = vld [vmem:[%s1 + $0x3d0] sm:$0xff]
  %v166 = vld [vmem:[%s1 + $0x3d8] sm:$0xff]
  %v167 = vld [vmem:[%s1 + $0x3e0] sm:$0xff]
  %v168 = vld [vmem:[%s1 + $0x3e8] sm:$0xff]
  %v169 = vld [vmem:[%s1 + $0x3f0] sm:$0xff]
  %v170 = vld [vmem:[%s1 + $0x3f8] sm:$0xff]
  %v171 = vld [vmem:[%s1 + $0x400] sm:$0xff]
  %v172 = vld [vmem:[%s1 + $0x408] sm:$0xff]
  %v173 = vld [vmem:[%s1 + $0x410] sm:$0xff]
  %v174 = vld [vmem:[%s1 + $0x418] sm:$0xff]
  %v175 = vld [vmem:[%s1 + $0x420] sm:$0xff]
  %v176 = vld [vmem:[%s1 + $0x428] sm:$0xff]
  %v177 = vld [vmem:[%s1 + $0x430] sm:$0xff]
  %v178 = vld [vmem:[%s1 + $0x438] sm:$0xff]
  %v179 = vld [vmem:[%s1 + $0x440] sm:$0xff]
  %v180 = vld [vmem:[%s1 + $0x448] sm:$0xff]
  %v181 = vld [vmem:[%s1 + $0x450] sm:$0xff]
  %v182 = vld [vmem:[%s1 + $0x458] sm:$0xff]
  %v183 = vld [vmem:[%s1 + $0x460] sm:$0xff]
  %v184 = vld [vmem:[%s1 + $0x468] sm:$0xff]
  %v185 = vld [vmem:[%s1 + $0x470] sm:$0xff]
  %v186 = vld [vmem:[%s1 + $0x478] sm:$0xff]
  %v187 = vld [vmem:[%s1 + $0x480] sm:$0xff]
  %v188 = vld [vmem:[%s1 + $0x488] sm:$0xff]
  %v189 = vld [vmem:[%s1 + $0x490] sm:$0xff]
  %v190 = vld [vmem:[%s1 + $0x498] sm:$0xff]
  %v191 = vld [vmem:[%s1 + $0x4a0] sm:$0xff]
  %v192 = vld [vmem:[%s1 + $0x4a8] sm:$0xff]
  %v193 = vld [vmem:[%s1 + $0x4b0] sm:$0xff]
  %v194 = vld [vmem:[%s1 + $0x4b8] sm:$0xff]
  %v195 = vld [vmem:[%s1 + $0x4c0] sm:$0xff]
  %v196 = vld [vmem:[%s1 + $0x4c8] sm:$0xff]
  %v197 = vld [vmem:[%s1 + $0x4d0] sm:$0xff]
  %v198 = vld [vmem:[%s1 + $0x4d8] sm:$0xff]
  %v199 = vld [vmem:[%s1 + $0x4e0] sm:$0xff]
  %v200 = vld [vmem:[%s1 + $0x4e8] sm:$0xff]
  %v201 = vld [vmem:[%s1 + $0x4f0] sm:$0xff]
  %v202 = vld [vmem:[%s1 + $0x4f8] sm:$0xff]
  %v203 = vld [vmem:[%s1 + $0x500] sm:$0xff]
  %v204 = vld [vmem:[%s1 + $0x508] sm:$0xff]
  %v205 = vld [vmem:[%s1 + $0x510] sm:$0xff]
  %v206 = vld [vmem:[%s1 + $0x518] sm:$0xff]
  %v207 = vld [vmem:[%s1 + $0x520] sm:$0xff]
  %v208 = vld [vmem:[%s1 + $0x528] sm:$0xff]
  %v209 = vld [vmem:[%s1 + $0x530] sm:$0xff]
  %v210 = vld [vmem:[%s1 + $0x538] sm:$0xff]
  %v211 = vld [vmem:[%s1 + $0x540] sm:$0xff]
  %v212 = vld [vmem:[%s1 + $0x548] sm:$0xff]
  %v213 = vld [vmem:[%s1 + $0x550] sm:$0xff]
  %v214 = vld [vmem:[%s1 + $0x558] sm:$0xff]
  %v215 = vld [vmem:[%s1 + $0x560] sm:$0xff]
  %v216 = vld [vmem:[%s1 + $0x568] sm:$0xff]
  %v217 = vld [vmem:[%s1 + $0x570] sm:$0xff]
  %v218 = vld [vmem:[%s1 + $0x578] sm:$0xff]
  %v219 = vld [vmem:[%s1 + $0x580] sm:$0xff]
  %v220 = vld [vmem:[%s1 + $0x588] sm:$0xff]
  %v221 = vld [vmem:[%s1 + $0x590] sm:$0xff]
  %v222 = vld [vmem:[%s1 + $0x598] sm:$0xff]
  %v223 = vld [vmem:[%s1 + $0x5a0] sm:$0xff]
  %v224 = vld [vmem:[%s1 + $0x5a8] sm:$0xff]
  %v225 = vld [vmem:[%s1 + $0x5b0] sm:$0xff]
  %v226 = vld [vmem:[%s1 + $0x5b8] sm:$0xff]
  %v227 = vld [vmem:[%s1 + $0x5c0] sm:$0xff]
  %v228 = vld [vmem:[%s1 + $0x5c8] sm:$0xff]
  %v229 = vld [vmem:[%s1 + $0x5d0] sm:$0xff]
  %v230 = vld [vmem:[%s1 + $0x5d8] sm:$0xff]
  %v231 = vld [vmem:[%s1 + $0x5e0] sm:$0xff]
  %v232 = vld [vmem:[%s1 + $0x5e8] sm:$0xff]
  %v233 = vld [vmem:[%s1 + $0x5f0] sm:$0xff]
  %v234 = vld [vmem:[%s1 + $0x5f8] sm:$0xff]
  %v235 = vld [vmem:[%s1 + $0x600] sm:$0xff]
  %v236 = vld [vmem:[%s1 + $0x608] sm:$0xff]
  %v237 = vld [vmem:[%s1 + $0x610] sm:$0xff]
  %v238 = vld [vmem:[%s1 + $0x618] sm:$0xff]
  %v239 = vld [vmem:[%s1 + $0x620] sm:$0xff]
  %v240 = vld [vmem:[%s1 + $0x628] sm:$0xff]
  %v241 = vld [vmem:[%s1 + $0x630] sm:$0xff]
  %v242 = vld [vmem:[%s1 + $0x638] sm:$0xff]
  %v243 = vld [vmem:[%s1 + $0x640] sm:$0xff]
  %v244 = vld [vmem:[%s1 + $0x648] sm:$0xff]
  %v245 = vld [vmem:[%s1 + $0x650] sm:$0xff]
  %v246 = vld [vmem:[%s1 + $0x658] sm:$0xff]
  %v247 = vld [vmem:[%s1 + $0x660] sm:$0xff]
  %v248 = vld [vmem:[%s1 + $0x668] sm:$0xff]
  %v249 = vld [vmem:[%s1 + $0x670] sm:$0xff]
  %v250 = vld [vmem:[%s1 + $0x678] sm:$0xff]
  %v251 = vld [vmem:[%s1 + $0x680] sm:$0xff]
  %v252 = vld [vmem:[%s1 + $0x688] sm:$0xff]
  %v253 = vld [vmem:[%s1 + $0x690] sm:$0xff]
  %v254 = vld [vmem:[%s1 + $0x698] sm:$0xff]
  %v255 = vld [vmem:[%s1 + $0x6a0] sm:$0xff]
  %v256 = vld [vmem:[%s1 + $0x6a8] sm:$0xff]
  %v257 = vld [vmem:[%s1 + $0x6b0] sm:$0xff]
  %v258 = vld [vmem:[%s1 + $0x6b8] sm:$0xff]
  %v259 = vld [vmem:[%s1 + $0x6c0] sm:$0xff]
  %v260 = vld [vmem:[%s1 + $0x6c8] sm:$0xff]
  %v261 = vld [vmem:[%s1 + $0x6d0] sm:$0xff]
  %v262 = vld [vmem:[%s1 + $0x6d8] sm:$0xff]
  %v263 = vld [vmem:[%s1 + $0x6e0] sm:$0xff]
  %v264 = vld [vmem:[%s1 + $0x6e8] sm:$0xff]
  %v265 = vld [vmem:[%s1 + $0x6f0] sm:$0xff]
  %v266 = vld [vmem:[%s1 + $0x6f8] sm:$0xff]
  %v267 = vld [vmem:[%s1 + $0x700] sm:$0xff]
  %v268 = vld [vmem:[%s1 + $0x708] sm:$0xff]
  %v269 = vld [vmem:[%s1 + $0x710] sm:$0xff]
  %v270 = vld [vmem:[%s1 + $0x718] sm:$0xff]
  %v271 = vld [vmem:[%s1 + $0x720] sm:$0xff]
  %v272 = vld [vmem:[%s1 + $0x728] sm:$0xff]
  %v273 = vld [vmem:[%s1 + $0x730] sm:$0xff]
  %v274 = vld [vmem:[%s1 + $0x738] sm:$0xff]
  %v275 = vld [vmem:[%s1 + $0x740] sm:$0xff]
  %v276 = vld [vmem:[%s1 + $0x748] sm:$0xff]
  %v277 = vld [vmem:[%s1 + $0x750] sm:$0xff]
  %v278 = vld [vmem:[%s1 + $0x758] sm:$0xff]
  %v279 = vld [vmem:[%s1 + $0x760] sm:$0xff]
  %v280 = vld [vmem:[%s1 + $0x768] sm:$0xff]
  %v281 = vld [vmem:[%s1 + $0x770] sm:$0xff]
  %v282 = vld [vmem:[%s1 + $0x778] sm:$0xff]
  %v283 = vld [vmem:[%s1 + $0x780] sm:$0xff]
  %v284 = vld [vmem:[%s1 + $0x788] sm:$0xff]
  %v285 = vld [vmem:[%s1 + $0x790] sm:$0xff]
  %v286 = vld [vmem:[%s1 + $0x798] sm:$0xff]
  %v287 = vld [vmem:[%s1 + $0x7a0] sm:$0xff]
  %v288 = vld [vmem:[%s1 + $0x7a8] sm:$0xff]
  %v289 = vld [vmem:[%s1 + $0x7b0] sm:$0xff]
  %v290 = vld [vmem:[%s1 + $0x7b8] sm:$0xff]
  %v291 = vld [vmem:[%s1 + $0x7c0] sm:$0xff]
  %v292 = vld [vmem:[%s1 + $0x7c8] sm:$0xff]
  %v293 = vld [vmem:[%s1 + $0x7d0] sm:$0xff]
  %v294 = vld [vmem:[%s1 + $0x7d8] sm:$0xff]
  %v295 = vld [vmem:[%s1 + $0x7e0] sm:$0xff]
  %v296 = vld [vmem:[%s1 + $0x7e8] sm:$0xff]
  %v297 = vld [vmem:[%s1 + $0x7f0] sm:$0xff]
  %v298 = vld [vmem:[%s1 + $0x7f8] sm:$0xff]
  %v299 = vld [vmem:[%s1 + $0x800] sm:$0xff]
  %v300 = vld [vmem:[%s1 + $0x808] sm:$0xff]
  %v301 = vld [vmem:[%s1 + $0x810] sm:$0xff]
  %v302 = vld [vmem:[%s1 + $0x818] sm:$0xff]
  %v303 = vld [vmem:[%s1 + $0x820] sm:$0xff]
  %v304 = vld [vmem:[%s1 + $0x828] sm:$0xff]
  %v305 = vld [vmem:[%s1 + $0x830] sm:$0xff]
  %v306 = vld [vmem:[%s1 + $0x838] sm:$0xff]
  %v307 = vld [vmem:[%s1 + $0x840] sm:$0xff]
  %v308 = vld [vmem:[%s1 + $0x848] sm:$0xff]
  %v309 = vld [vmem:[%s1 + $0x850] sm:$0xff]
  %v310 = vld [vmem:[%s1 + $0x858] sm:$0xff]
  %v311 = vld [vmem:[%s1 + $0x860] sm:$0xff]
  %v312 = vld [vmem:[%s1 + $0x868] sm:$0xff]
  %v313 = vld [vmem:[%s1 + $0x870] sm:$0xff]
  %v314 = vld [vmem:[%s1 + $0x878] sm:$0xff]
  %v315 = vld [vmem:[%s1 + $0x880] sm:$0xff]
  %v316 = vld [vmem:[%s1 + $0x888] sm:$0xff]
  %v317 = vld [vmem:[%s1 + $0x890] sm:$0xff]
  %v318 = vld [vmem:[%s1 + $0x898] sm:$0xff]
  %v319 = vld [vmem:[%s1 + $0x8a0] sm:$0xff]
  %v320 = vld [vmem:[%s1 + $0x8a8] sm:$0xff]
  %v321 = vld [vmem:[%s1 + $0x8b0] sm:$0xff]
  %v322 = vld [vmem:[%s1 + $0x8b8] sm:$0xff]
  %v323 = vld [vmem:[%s1 + $0x8c0] sm:$0xff]
  %v324 = vld [vmem:[%s1 + $0x8c8] sm:$0xff]
  %v325 = vld [vmem:[%s1 + $0x8d0] sm:$0xff]
  %v326 = vld [vmem:[%s1 + $0x8d8] sm:$0xff]
  %v327 = vld [vmem:[%s1 + $0x8e0] sm:$0xff]
  %v328 = vld [vmem:[%s1 + $0x8e8] sm:$0xff]
  %v329 = vld [vmem:[%s1 + $0x8f0] sm:$0xff]
  %v330 = vld [vmem:[%s1 + $0x8f8] sm:$0xff]
  %v331 = vld [vmem:[%s1 + $0x900] sm:$0xff]
  %v332 = vld [vmem:[%s1 + $0x908] sm:$0xff]
  %v333 = vld [vmem:[%s1 + $0x910] sm:$0xff]
  %v334 = vld [vmem:[%s1 + $0x918] sm:$0xff]
  %v335 = vld [vmem:[%s1 + $0x920] sm:$0xff]
  %v336 = vld [vmem:[%s1 + $0x928] sm:$0xff]
  %v337 = vld [vmem:[%s1 + $0x930] sm:$0xff]
  %v338 = vld [vmem:[%s1 + $0x938] sm:$0xff]
  %v339 = vld [vmem:[%s1 + $0x940] sm:$0xff]
  %v340 = vld [vmem:[%s1 + $0x948] sm:$0xff]
  %v341 = vld [vmem:[%s1 + $0x950] sm:$0xff]
  %v342 = vld [vmem:[%s1 + $0x958] sm:$0xff]
  %v343 = vld [vmem:[%s1 + $0x960] sm:$0xff]
  %v344 = vld [vmem:[%s1 + $0x968] sm:$0xff]
  %v345 = vld [vmem:[%s1 + $0x970] sm:$0xff]
  %v346 = vld [vmem:[%s1 + $0x978] sm:$0xff]
  %v347 = vld [vmem:[%s1 + $0x980] sm:$0xff]
  %v348 = vld [vmem:[%s1 + $0x988] sm:$0xff]
  %v349 = vld [vmem:[%s1 + $0x990] sm:$0xff]
  %v350 = vld [vmem:[%s1 + $0x998] sm:$0xff]
  %v351 = vld [vmem:[%s1 + $0x9a0] sm:$0xff]
  %v352 = vld [vmem:[%s1 + $0x9a8] sm:$0xff]
  %v353 = vld [vmem:[%s1 + $0x9b0] sm:$0xff]
  %v354 = vld [vmem:[%s1 + $0x9b8] sm:$0xff]
  %v355 = vld [vmem:[%s1 + $0x9c0] sm:$0xff]
  %v356 = vld [vmem:[%s1 + $0x9c8] sm:$0xff]
  %v357 = vld [vmem:[%s1 + $0x9d0] sm:$0xff]
  %v358 = vld [vmem:[%s1 + $0x9d8] sm:$0xff]
  %v359 = vld [vmem:[%s1 + $0x9e0] sm:$0xff]
  %v360 = vld [vmem:[%s1 + $0x9e8] sm:$0xff]
  %v361 = vld [vmem:[%s1 + $0x9f0] sm:$0xff]
  %v362 = vld [vmem:[%s1 + $0x9f8] sm:$0xff]
  %v363 = vld [vmem:[%s1 + $0xa00] sm:$0xff]
  %v364 = vld [vmem:[%s1 + $0xa08] sm:$0xff]
  %v365 = vld [vmem:[%s1 + $0xa10] sm:$0xff]
  %v366 = vld [vmem:[%s1 + $0xa18] sm:$0xff]
  %v367 = vld [vmem:[%s1 + $0xa20] sm:$0xff]
  %v368 = vld [vmem:[%s1 + $0xa28] sm:$0xff]
  %v369 = vld [vmem:[%s1 + $0xa30] sm:$0xff]
  %v370 = vld [vmem:[%s1 + $0xa38] sm:$0xff]
  %v371 = vld [vmem:[%s1 + $0xa40] sm:$0xff]
  %v372 = vld [vmem:[%s1 + $0xa48] sm:$0xff]
  %v373 = vld [vmem:[%s1 + $0xa50] sm:$0xff]
  %v374 = vld [vmem:[%s1 + $0xa58] sm:$0xff]
  %v375 = vld [vmem:[%s1 + $0xa60] sm:$0xff]
  %v376 = vld [vmem:[%s1 + $0xa68] sm:$0xff]
  %v377 = vld [vmem:[%s1 + $0xa70] sm:$0xff]
  %v378 = vld [vmem:[%s1 + $0xa78] sm:$0xff]
  %v379 = vld [vmem:[%s1 + $0xa80] sm:$0xff]
  %v380 = vld [vmem:[%s1 + $0xa88] sm:$0xff]
  %v381 = vld [vmem:[%s1 + $0xa90] sm:$0xff]
  %v382 = vld [vmem:[%s1 + $0xa98] sm:$0xff]
  %v383 = vld [vmem:[%s1 + $0xaa0] sm:$0xff]
  %v384 = vld [vmem:[%s1 + $0xaa8] sm:$0xff]
  %v385 = vld [vmem:[%s1 + $0xab0] sm:$0xff]
  %v386 = vld [vmem:[%s1 + $0xab8] sm:$0xff]
  %v387 = vld [vmem:[%s1 + $0xac0] sm:$0xff]
  %v388 = vld [vmem:[%s1 + $0xac8] sm:$0xff]
  %v389 = vld [vmem:[%s1 + $0xad0] sm:$0xff]
  %v390 = vld [vmem:[%s1 + $0xad8] sm:$0xff]
  %v391 = vld [vmem:[%s1 + $0xae0] sm:$0xff]
  %v392 = vld [vmem:[%s1 + $0xae8] sm:$0xff]
  %v393 = vld [vmem:[%s1 + $0xaf0] sm:$0xff]
  %v394 = vld [vmem:[%s1 + $0xaf8] sm:$0xff]
  %v395 = vld [vmem:[%s1 + $0xb00] sm:$0xff]
  %v396 = vld [vmem:[%s1 + $0xb08] sm:$0xff]
  %v397 = vld [vmem:[%s1 + $0xb10] sm:$0xff]
  %v398 = vld [vmem:[%s1 + $0xb18] sm:$0xff]
  %v399 = vld [vmem:[%s1 + $0xb20] sm:$0xff]
  %v400 = vld [vmem:[%s1 + $0xb28] sm:$0xff]
  %v401 = vld [vmem:[%s1 + $0xb30] sm:$0xff]
  %v402 = vld [vmem:[%s1 + $0xb38] sm:$0xff]
  %v403 = vld [vmem:[%s1 + $0xb40] sm:$0xff]
  %v404 = vld [vmem:[%s1 + $0xb48] sm:$0xff]
  %v405 = vld [vmem:[%s1 + $0xb50] sm:$0xff]
  %v406 = vld [vmem:[%s1 + $0xb58] sm:$0xff]
  %v407 = vld [vmem:[%s1 + $0xb60] sm:$0xff]
  %v408 = vld [vmem:[%s1 + $0xb68] sm:$0xff]
  %v409 = vld [vmem:[%s1 + $0xb70] sm:$0xff]
  %v410 = vld [vmem:[%s1 + $0xb78] sm:$0xff]
  %v411 = vld [vmem:[%s1 + $0xb80] sm:$0xff]
  %v412 = vld [vmem:[%s1 + $0xb88] sm:$0xff]
  %v413 = vld [vmem:[%s1 + $0xb90] sm:$0xff]
  %v414 = vld [vmem:[%s1 + $0xb98] sm:$0xff]
  %v415 = vld [vmem:[%s1 + $0xba0] sm:$0xff]
  %v416 = vld [vmem:[%s1 + $0xba8] sm:$0xff]
  %v417 = vld [vmem:[%s1 + $0xbb0] sm:$0xff]
  %v418 = vld [vmem:[%s1 + $0xbb8] sm:$0xff]
  %v419 = vld [vmem:[%s1 + $0xbc0] sm:$0xff]
  %v420 = vld [vmem:[%s1 + $0xbc8] sm:$0xff]
  %v421 = vld [vmem:[%s1 + $0xbd0] sm:$0xff]
  %v422 = vld [vmem:[%s1 + $0xbd8] sm:$0xff]
  %v423 = vld [vmem:[%s1 + $0xbe0] sm:$0xff]
  %v424 = vld [vmem:[%s1 + $0xbe8] sm:$0xff]
  %v425 = vld [vmem:[%s1 + $0xbf0] sm:$0xff]
  %v426 = vld [vmem:[%s1 + $0xbf8] sm:$0xff]
  %v427 = vld [vmem:[%s1 + $0xc00] sm:$0xff]
  %v428 = vld [vmem:[%s1 + $0xc08] sm:$0xff]
  %v429 = vld [vmem:[%s1 + $0xc10] sm:$0xff]
  %v430 = vld [vmem:[%s1 + $0xc18] sm:$0xff]
  %v431 = vld [vmem:[%s1 + $0xc20] sm:$0xff]
  %v432 = vld [vmem:[%s1 + $0xc28] sm:$0xff]
  %v433 = vld [vmem:[%s1 + $0xc30] sm:$0xff]
  %v434 = vld [vmem:[%s1 + $0xc38] sm:$0xff]
  %v435 = vld [vmem:[%s1 + $0xc40] sm:$0xff]
  %v436 = vld [vmem:[%s1 + $0xc48] sm:$0xff]
  %v437 = vld [vmem:[%s1 + $0xc50] sm:$0xff]
  %v438 = vld [vmem:[%s1 + $0xc58] sm:$0xff]
  %v439 = vld [vmem:[%s1 + $0xc60] sm:$0xff]
  %v440 = vld [vmem:[%s1 + $0xc68] sm:$0xff]
  %v441 = vld [vmem:[%s1 + $0xc70] sm:$0xff]
  %v442 = vld [vmem:[%s1 + $0xc78] sm:$0xff]
  %v443 = vld [vmem:[%s1 + $0xc80] sm:$0xff]
  %v444 = vld [vmem:[%s1 + $0xc88] sm:$0xff]
  %v445 = vld [vmem:[%s1 + $0xc90] sm:$0xff]
  %v446 = vld [vmem:[%s1 + $0xc98] sm:$0xff]
  %v447 = vld [vmem:[%s1 + $0xca0] sm:$0xff]
  %v448 = vld [vmem:[%s1 + $0xca8] sm:$0xff]
  %v449 = vld [vmem:[%s1 + $0xcb0] sm:$0xff]
  %v450 = vld [vmem:[%s1 + $0xcb8] sm:$0xff]
  %v451 = vld [vmem:[%s1 + $0xcc0] sm:$0xff]
  %v452 = vld [vmem:[%s1 + $0xcc8] sm:$0xff]
  %v453 = vld [vmem:[%s1 + $0xcd0] sm:$0xff]
  %v454 = vld [vmem:[%s1 + $0xcd8] sm:$0xff]
  %v455 = vld [vmem:[%s1 + $0xce0] sm:$0xff]
  %v456 = vld [vmem:[%s1 + $0xce8] sm:$0xff]
  %v457 = vld [vmem:[%s1 + $0xcf0] sm:$0xff]
  %v458 = vld [vmem:[%s1 + $0xcf8] sm:$0xff]
  %v459 = vld [vmem:[%s1 + $0xd00] sm:$0xff]
  %v460 = vld [vmem:[%s1 + $0xd08] sm:$0xff]
  %v461 = vld [vmem:[%s1 + $0xd10] sm:$0xff]
  %v462 = vld [vmem:[%s1 + $0xd18] sm:$0xff]
  %v463 = vld [vmem:[%s1 + $0xd20] sm:$0xff]
  %v464 = vld [vmem:[%s1 + $0xd28] sm:$0xff]
  %v465 = vld [vmem:[%s1 + $0xd30] sm:$0xff]
  %v466 = vld [vmem:[%s1 + $0xd38] sm:$0xff]
  %v467 = vld [vmem:[%s1 + $0xd40] sm:$0xff]
  %v468 = vld [vmem:[%s1 + $0xd48] sm:$0xff]
  %v469 = vld [vmem:[%s1 + $0xd50] sm:$0xff]
  %v470 = vld [vmem:[%s1 + $0xd58] sm:$0xff]
  %v471 = vld [vmem:[%s1 + $0xd60] sm:$0xff]
  %v472 = vld [vmem:[%s1 + $0xd68] sm:$0xff]
  %v473 = vld [vmem:[%s1 + $0xd70] sm:$0xff]
  %v474 = vld [vmem:[%s1 + $0xd78] sm:$0xff]
  %v475 = vld [vmem:[%s1 + $0xd80] sm:$0xff]
  %v476 = vld [vmem:[%s1 + $0xd88] sm:$0xff]
  %v477 = vld [vmem:[%s1 + $0xd90] sm:$0xff]
  %v478 = vld [vmem:[%s1 + $0xd98] sm:$0xff]
  %v479 = vld [vmem:[%s1 + $0xda0] sm:$0xff]
  %v480 = vld [vmem:[%s1 + $0xda8] sm:$0xff]
  %v481 = vld [vmem:[%s1 + $0xdb0] sm:$0xff]
  %v482 = vld [vmem:[%s1 + $0xdb8] sm:$0xff]
  %v483 = vld [vmem:[%s1 + $0xdc0] sm:$0xff]
  %v484 = vld [vmem:[%s1 + $0xdc8] sm:$0xff]
  %v485 = vld [vmem:[%s1 + $0xdd0] sm:$0xff]
  %v486 = vld [vmem:[%s1 + $0xdd8] sm:$0xff]
  %v487 = vld [vmem:[%s1 + $0xde0] sm:$0xff]
  %v488 = vld [vmem:[%s1 + $0xde8] sm:$0xff]
  %v489 = vld [vmem:[%s1 + $0xdf0] sm:$0xff]
  %v490 = vld [vmem:[%s1 + $0xdf8] sm:$0xff]
  %v491 = vld [vmem:[%s1 + $0xe00] sm:$0xff]
  %v492 = vld [vmem:[%s1 + $0xe08] sm:$0xff]
  %v493 = vld [vmem:[%s1 + $0xe10] sm:$0xff]
  %v494 = vld [vmem:[%s1 + $0xe18] sm:$0xff]
  %v495 = vld [vmem:[%s1 + $0xe20] sm:$0xff]
  %v496 = vld [vmem:[%s1 + $0xe28] sm:$0xff]
  %v497 = vld [vmem:[%s1 + $0xe30] sm:$0xff]
  %v498 = vld [vmem:[%s1 + $0xe38] sm:$0xff]
  %v499 = vld [vmem:[%s1 + $0xe40] sm:$0xff]
  %v500 = vld [vmem:[%s1 + $0xe48] sm:$0xff]
  %v501 = vld [vmem:[%s1 + $0xe50] sm:$0xff]
  %v502 = vld [vmem:[%s1 + $0xe58] sm:$0xff]
  %v503 = vld [vmem:[%s1 + $0xe60] sm:$0xff]
  %v504 = vld [vmem:[%s1 + $0xe68] sm:$0xff]
  %v505 = vld [vmem:[%s1 + $0xe70] sm:$0xff]
  %v506 = vld [vmem:[%s1 + $0xe78] sm:$0xff]
  %v507 = vld [vmem:[%s1 + $0xe80] sm:$0xff]
  %v508 = vld [vmem:[%s1 + $0xe88] sm:$0xff]
  %v509 = vld [vmem:[%s1 + $0xe90] sm:$0xff]
  %v510 = vld [vmem:[%s1 + $0xe98] sm:$0xff]
  %v511 = vld [vmem:[%s1 + $0xea0] sm:$0xff]
  %v512 = vld [vmem:[%s1 + $0xea8] sm:$0xff]
  %v513 = vld [vmem:[%s1 + $0xeb0] sm:$0xff]
  %v514 = vld [vmem:[%s1 + $0xeb8] sm:$0xff]
  %v515 = vld [vmem:[%s1 + $0xec0] sm:$0xff]
  %v516 = vld [vmem:[%s1 + $0xec8] sm:$0xff]
  %v517 = vld [vmem:[%s1 + $0xed0] sm:$0xff]
  %v518 = vld [vmem:[%s1 + $0xed8] sm:$0xff]
  %v519 = vld [vmem:[%s1 + $0xee0] sm:$0xff]
  %v520 = vld [vmem:[%s1 + $0xee8] sm:$0xff]
  %v521 = vld [vmem:[%s1 + $0xef0] sm:$0xff]
  %v522 = vld [vmem:[%s1 + $0xef8] sm:$0xff]
  %v523 = vld [vmem:[%s1 + $0xf00] sm:$0xff]
  %v524 = vld [vmem:[%s1 + $0xf08] sm:$0xff]
  %v525 = vld [vmem:[%s1 + $0xf10] sm:$0xff]
  %v526 = vld [vmem:[%s1 + $0xf18] sm:$0xff]
  %v527 = vld [vmem:[%s1 + $0xf20] sm:$0xff]
  %v528 = vld [vmem:[%s1 + $0xf28] sm:$0xff]
  %v529 = vld [vmem:[%s1 + $0xf30] sm:$0xff]
  %v530 = vld [vmem:[%s1 + $0xf38] sm:$0xff]
  %v531 = vld [vmem:[%s1 + $0xf40] sm:$0xff]
  %v532 = vld [vmem:[%s1 + $0xf48] sm:$0xff]
  %v533 = vld [vmem:[%s1 + $0xf50] sm:$0xff]
  %v534 = vld [vmem:[%s1 + $0xf58] sm:$0xff]
  %v535 = vld [vmem:[%s1 + $0xf60] sm:$0xff]
  %v536 = vld [vmem:[%s1 + $0xf68] sm:$0xff]
  %v537 = vld [vmem:[%s1 + $0xf70] sm:$0xff]
  %v538 = vld [vmem:[%s1 + $0xf78] sm:$0xff]
  %v539 = vld [vmem:[%s1 + $0xf80] sm:$0xff]
  %v540 = vld [vmem:[%s1 + $0xf88] sm:$0xff]
  %v541 = vld [vmem:[%s1 + $0xf90] sm:$0xff]
  %v542 = vld [vmem:[%s1 + $0xf98] sm:$0xff]
  %v543 = vld [vmem:[%s1 + $0xfa0] sm:$0xff]
  %v544 = vld [vmem:[%s1 + $0xfa8] sm:$0xff]
  %v545 = vld [vmem:[%s1 + $0xfb0] sm:$0xff]
  %v546 = vld [vmem:[%s1 + $0xfb8] sm:$0xff]
  %v547 = vld [vmem:[%s1 + $0xfc0] sm:$0xff]
  %v548 = vld [vmem:[%s1 + $0xfc8] sm:$0xff]
  %v549 = vld [vmem:[%s1 + $0xfd0] sm:$0xff]
  %v550 = vld [vmem:[%s1 + $0xfd8] sm:$0xff]
  %v551 = vld [vmem:[%s1 + $0xfe0] sm:$0xff]
  %v552 = vld [vmem:[%s1 + $0xfe8] sm:$0xff]
  %v553 = vld [vmem:[%s1 + $0xff0] sm:$0xff]
  %v554 = vld [vmem:[%s1 + $0xff8] sm:$0xff]
  %v555 = vld [vmem:[%s1 + $0x1000] sm:$0xff]
  %v556 = vld [vmem:[%s1 + $0x1008] sm:$0xff]
  %v557 = vld [vmem:[%s1 + $0x1010] sm:$0xff]
  %v558 = vld [vmem:[%s1 + $0x1018] sm:$0xff]
  %v559 = vld [vmem:[%s1 + $0x1020] sm:$0xff]
  %v560 = vld [vmem:[%s1 + $0x1028] sm:$0xff]
  %v561 = vld [vmem:[%s1 + $0x1030] sm:$0xff]
  %v562 = vld [vmem:[%s1 + $0x1038] sm:$0xff]
  %v563 = vld [vmem:[%s1 + $0x1040] sm:$0xff]
  %v564 = vld [vmem:[%s1 + $0x1048] sm:$0xff]
  %v565 = vld [vmem:[%s1 + $0x1050] sm:$0xff]
  %v566 = vld [vmem:[%s1 + $0x1058] sm:$0xff]
  %v567 = vld [vmem:[%s1 + $0x1060] sm:$0xff]
  %v568 = vld [vmem:[%s1 + $0x1068] sm:$0xff]
  %v569 = vld [vmem:[%s1 + $0x1070] sm:$0xff]
  %v570 = vld [vmem:[%s1 + $0x1078] sm:$0xff]
  %v571 = vld [vmem:[%s1 + $0x1080] sm:$0xff]
  %v572 = vld [vmem:[%s1 + $0x1088] sm:$0xff]
  %v573 = vld [vmem:[%s1 + $0x1090] sm:$0xff]
  %v574 = vld [vmem:[%s1 + $0x1098] sm:$0xff]
  %v575 = vld [vmem:[%s1 + $0x10a0] sm:$0xff]
  %v576 = vld [vmem:[%s1 + $0x10a8] sm:$0xff]
  %v577 = vld [vmem:[%s1 + $0x10b0] sm:$0xff]
  %v578 = vld [vmem:[%s1 + $0x10b8] sm:$0xff]
  %v579 = vld [vmem:[%s1 + $0x10c0] sm:$0xff]
  %v580 = vld [vmem:[%s1 + $0x10c8] sm:$0xff]
  %v581 = vld [vmem:[%s1 + $0x10d0] sm:$0xff]
  %v582 = vld [vmem:[%s1 + $0x10d8] sm:$0xff]
  %v583 = vld [vmem:[%s1 + $0x10e0] sm:$0xff]
  %v584 = vld [vmem:[%s1 + $0x10e8] sm:$0xff]
  %v585 = vld [vmem:[%s1 + $0x10f0] sm:$0xff]
  %v586 = vld [vmem:[%s1 + $0x10f8] sm:$0xff]
  %v587 = vld [vmem:[%s1 + $0x1100] sm:$0xff]
  %v588 = vld [vmem:[%s1 + $0x1108] sm:$0xff]
  %v589 = vld [vmem:[%s1 + $0x1110] sm:$0xff]
  %v590 = vld [vmem:[%s1 + $0x1118] sm:$0xff]
  %v591 = vld [vmem:[%s1 + $0x1120] sm:$0xff]
  %v592 = vld [vmem:[%s1 + $0x1128] sm:$0xff]
  %v593 = vld [vmem:[%s1 + $0x1130] sm:$0xff]
  %v594 = vld [vmem:[%s1 + $0x1138] sm:$0xff]
  %v595 = vld [vmem:[%s1 + $0x1140] sm:$0xff]
  %v596 = vld [vmem:[%s1 + $0x1148] sm:$0xff]
  %v597 = vld [vmem:[%s1 + $0x1150] sm:$0xff]
  %v598 = vld [vmem:[%s1 + $0x1158] sm:$0xff]
  %v599 = vld [vmem:[%s1 + $0x1160] sm:$0xff]
  %v600 = vld [vmem:[%s1 + $0x1168] sm:$0xff]
  %v601 = vld [vmem:[%s1 + $0x1170] sm:$0xff]
  %v602 = vld [vmem:[%s1 + $0x1178] sm:$0xff]
  %v603 = vld [vmem:[%s1 + $0x1180] sm:$0xff]
  %v604 = vld [vmem:[%s1 + $0x1188] sm:$0xff]
  %v605 = vld [vmem:[%s1 + $0x1190] sm:$0xff]
  %v606 = vld [vmem:[%s1 + $0x1198] sm:$0xff]
  %v607 = vld [vmem:[%s1 + $0x11a0] sm:$0xff]
  %v608 = vld [vmem:[%s1 + $0x11a8] sm:$0xff]
  %v609 = vld [vmem:[%s1 + $0x11b0] sm:$0xff]
  %v610 = vld [vmem:[%s1 + $0x11b8] sm:$0xff]
  %v611 = vld [vmem:[%s1 + $0x11c0] sm:$0xff]
  %v612 = vld [vmem:[%s1 + $0x11c8] sm:$0xff]
  %v613 = vld [vmem:[%s1 + $0x11d0] sm:$0xff]
  %v614 = vld [vmem:[%s1 + $0x11d8] sm:$0xff]
  %v615 = vld [vmem:[%s1 + $0x11e0] sm:$0xff]
  %v616 = vld [vmem:[%s1 + $0x11e8] sm:$0xff]
  %v617 = vld [vmem:[%s1 + $0x11f0] sm:$0xff]
  %v618 = vld [vmem:[%s1 + $0x11f8] sm:$0xff]
  %v619 = vld [vmem:[%s1 + $0x1200] sm:$0xff]
  %v620 = vld [vmem:[%s1 + $0x1208] sm:$0xff]
  %v621 = vld [vmem:[%s1 + $0x1210] sm:$0xff]
  %v622 = vld [vmem:[%s1 + $0x1218] sm:$0xff]
  %v623 = vld [vmem:[%s1 + $0x1220] sm:$0xff]
  %v624 = vld [vmem:[%s1 + $0x1228] sm:$0xff]
  %v625 = vld [vmem:[%s1 + $0x1230] sm:$0xff]
  %v626 = vld [vmem:[%s1 + $0x1238] sm:$0xff]
  %v627 = vld [vmem:[%s1 + $0x1240] sm:$0xff]
  %v628 = vld [vmem:[%s1 + $0x1248] sm:$0xff]
  %v629 = vld [vmem:[%s1 + $0x1250] sm:$0xff]
  %v630 = vld [vmem:[%s1 + $0x1258] sm:$0xff]
  %v631 = vld [vmem:[%s1 + $0x1260] sm:$0xff]
  %v632 = vld [vmem:[%s1 + $0x1268] sm:$0xff]
  %v633 = vld [vmem:[%s1 + $0x1270] sm:$0xff]
  %v634 = vld [vmem:[%s1 + $0x1278] sm:$0xff]
  %v635 = vld [vmem:[%s1 + $0x1280] sm:$0xff]
  %v636 = vld [vmem:[%s1 + $0x1288] sm:$0xff]
  %v637 = vld [vmem:[%s1 + $0x1290] sm:$0xff]
  %v638 = vld [vmem:[%s1 + $0x1298] sm:$0xff]
  %v639 = vld [vmem:[%s1 + $0x12a0] sm:$0xff]
  %v640 = vld [vmem:[%s1 + $0x12a8] sm:$0xff]
  %v641 = vld [vmem:[%s1 + $0x12b0] sm:$0xff]
  %v642 = vld [vmem:[%s1 + $0x12b8] sm:$0xff]
  %v643 = vld [vmem:[%s1 + $0x12c0] sm:$0xff]
  %v644 = vld [vmem:[%s1 + $0x12c8] sm:$0xff]
  %v645 = vld [vmem:[%s1 + $0x12d0] sm:$0xff]
  %v646 = vld [vmem:[%s1 + $0x12d8] sm:$0xff]
  %v647 = vld [vmem:[%s1 + $0x12e0] sm:$0xff]
  %v648 = vld [vmem:[%s1 + $0x12e8] sm:$0xff]
  %v649 = vld [vmem:[%s1 + $0x12f0] sm:$0xff]
  %v650 = vld [vmem:[%s1 + $0x12f8] sm:$0xff]
  %v651 = vld [vmem:[%s1 + $0x1300] sm:$0xff]
  %v652 = vld [vmem:[%s1 + $0x1308] sm:$0xff]
  %v653 = vld [vmem:[%s1 + $0x1310] sm:$0xff]
  %v654 = vld [vmem:[%s1 + $0x1318] sm:$0xff]
  %v655 = vld [vmem:[%s1 + $0x1320] sm:$0xff]
  %v656 = vld [vmem:[%s1 + $0x1328] sm:$0xff]
  %v657 = vld [vmem:[%s1 + $0x1330] sm:$0xff]
  %v658 = vld [vmem:[%s1 + $0x1338] sm:$0xff]
  %v659 = vld [vmem:[%s1 + $0x1340] sm:$0xff]
  %v660 = vld [vmem:[%s1 + $0x1348] sm:$0xff]
  %v661 = vld [vmem:[%s1 + $0x1350] sm:$0xff]
  %v662 = vld [vmem:[%s1 + $0x1358] sm:$0xff]
  %v663 = vld [vmem:[%s1 + $0x1360] sm:$0xff]
  %v664 = vld [vmem:[%s1 + $0x1368] sm:$0xff]
  %v665 = vld [vmem:[%s1 + $0x1370] sm:$0xff]
  %v666 = vld [vmem:[%s1 + $0x1378] sm:$0xff]
  %v667 = vld [vmem:[%s1 + $0x1380] sm:$0xff]
  %v668 = vld [vmem:[%s1 + $0x1388] sm:$0xff]
  %v669 = vld [vmem:[%s1 + $0x1390] sm:$0xff]
  %v670 = vld [vmem:[%s1 + $0x1398] sm:$0xff]
  %v671 = vld [vmem:[%s1 + $0x13a0] sm:$0xff]
  %v672 = vld [vmem:[%s1 + $0x13a8] sm:$0xff]
  %v673 = vld [vmem:[%s1 + $0x13b0] sm:$0xff]
  %v674 = vld [vmem:[%s1 + $0x13b8] sm:$0xff]
  %v675 = vld [vmem:[%s1 + $0x13c0] sm:$0xff]
  %v676 = vld [vmem:[%s1 + $0x13c8] sm:$0xff]
  %v677 = vld [vmem:[%s1 + $0x13d0] sm:$0xff]
  %v678 = vld [vmem:[%s1 + $0x13d8] sm:$0xff]
  %v679 = vld [vmem:[%s1 + $0x13e0] sm:$0xff]
  %v680 = vld [vmem:[%s1 + $0x13e8] sm:$0xff]
  %v681 = vld [vmem:[%s1 + $0x13f0] sm:$0xff]
  %v682 = vld [vmem:[%s1 + $0x13f8] sm:$0xff]
  %v683 = vld [vmem:[%s1 + $0x1400] sm:$0xff]
  %v684 = vld [vmem:[%s1 + $0x1408] sm:$0xff]
  %v685 = vld [vmem:[%s1 + $0x1410] sm:$0xff]
  %v686 = vld [vmem:[%s1 + $0x1418] sm:$0xff]
  %v687 = vld [vmem:[%s1 + $0x1420] sm:$0xff]
  %v688 = vld [vmem:[%s1 + $0x1428] sm:$0xff]
  %v689 = vld [vmem:[%s1 + $0x1430] sm:$0xff]
  %v690 = vld [vmem:[%s1 + $0x1438] sm:$0xff]
  %v691 = vld [vmem:[%s1 + $0x1440] sm:$0xff]
  %v692 = vld [vmem:[%s1 + $0x1448] sm:$0xff]
  %v693 = vld [vmem:[%s1 + $0x1450] sm:$0xff]
  %v694 = vld [vmem:[%s1 + $0x1458] sm:$0xff]
  %v695 = vld [vmem:[%s1 + $0x1460] sm:$0xff]
  %v696 = vld [vmem:[%s1 + $0x1468] sm:$0xff]
  %v697 = vld [vmem:[%s1 + $0x1470] sm:$0xff]
  %v698 = vld [vmem:[%s1 + $0x1478] sm:$0xff]
  %v699 = vld [vmem:[%s1 + $0x1480] sm:$0xff]
  %v700 = vld [vmem:[%s1 + $0x1488] sm:$0xff]
  %v701 = vld [vmem:[%s1 + $0x1490] sm:$0xff]
  %v702 = vld [vmem:[%s1 + $0x1498] sm:$0xff]
  %v703 = vld [vmem:[%s1 + $0x14a0] sm:$0xff]
  %v704 = vld [vmem:[%s1 + $0x14a8] sm:$0xff]
  %v705 = vld [vmem:[%s1 + $0x14b0] sm:$0xff]
  %v706 = vld [vmem:[%s1 + $0x14b8] sm:$0xff]
  %v707 = vld [vmem:[%s1 + $0x14c0] sm:$0xff]
  %v708 = vld [vmem:[%s1 + $0x14c8] sm:$0xff]
  %v709 = vld [vmem:[%s1 + $0x14d0] sm:$0xff]
  %v710 = vld [vmem:[%s1 + $0x14d8] sm:$0xff]
  %v711 = vld [vmem:[%s1 + $0x14e0] sm:$0xff]
  %v712 = vld [vmem:[%s1 + $0x14e8] sm:$0xff]
  %v713 = vld [vmem:[%s1 + $0x14f0] sm:$0xff]
  %v714 = vld [vmem:[%s1 + $0x14f8] sm:$0xff]
  %v715 = vld [vmem:[%s1 + $0x1500] sm:$0xff]
  %v716 = vld [vmem:[%s1 + $0x1508] sm:$0xff]
  %v717 = vld [vmem:[%s1 + $0x1510] sm:$0xff]
  %v718 = vld [vmem:[%s1 + $0x1518] sm:$0xff]
  %v719 = vld [vmem:[%s1 + $0x1520] sm:$0xff]
  %v720 = vld [vmem:[%s1 + $0x1528] sm:$0xff]
  %v721 = vld [vmem:[%s1 + $0x1530] sm:$0xff]
  %v722 = vld [vmem:[%s1 + $0x1538] sm:$0xff]
  %v723 = vld [vmem:[%s1 + $0x1540] sm:$0xff]
  %v724 = vld [vmem:[%s1 + $0x1548] sm:$0xff]
  %v725 = vld [vmem:[%s1 + $0x1550] sm:$0xff]
  %v726 = vld [vmem:[%s1 + $0x1558] sm:$0xff]
  %v727 = vld [vmem:[%s1 + $0x1560] sm:$0xff]
  %v728 = vld [vmem:[%s1 + $0x1568] sm:$0xff]
  %v729 = vld [vmem:[%s1 + $0x1570] sm:$0xff]
  %v730 = vld [vmem:[%s1 + $0x1578] sm:$0xff]
  %v731 = vld [vmem:[%s1 + $0x1580] sm:$0xff]
  %v732 = vld [vmem:[%s1 + $0x1588] sm:$0xff]
  %v733 = vld [vmem:[%s1 + $0x1590] sm:$0xff]
  %v734 = vld [vmem:[%s1 + $0x1598] sm:$0xff]
  %v735 = vld [vmem:[%s1 + $0x15a0] sm:$0xff]
  %v736 = vld [vmem:[%s1 + $0x15a8] sm:$0xff]
  %v737 = vld [vmem:[%s1 + $0x15b0] sm:$0xff]
  %v738 = vld [vmem:[%s1 + $0x15b8] sm:$0xff]
  %v739 = vld [vmem:[%s1 + $0x15c0] sm:$0xff]
  %v740 = vld [vmem:[%s1 + $0x15c8] sm:$0xff]
  %v741 = vld [vmem:[%s1 + $0x15d0] sm:$0xff]
  %v742 = vld [vmem:[%s1 + $0x15d8] sm:$0xff]
  %v743 = vld [vmem:[%s1 + $0x15e0] sm:$0xff]
  %v744 = vld [vmem:[%s1 + $0x15e8] sm:$0xff]
  %v745 = vld [vmem:[%s1 + $0x15f0] sm:$0xff]
  %v746 = vld [vmem:[%s1 + $0x15f8] sm:$0xff]
  %v747 = vld [vmem:[%s1 + $0x1600] sm:$0xff]
  %v748 = vld [vmem:[%s1 + $0x1608] sm:$0xff]
  %v749 = vld [vmem:[%s1 + $0x1610] sm:$0xff]
  %v750 = vld [vmem:[%s1 + $0x1618] sm:$0xff]
  %v751 = vld [vmem:[%s1 + $0x1620] sm:$0xff]
  %v752 = vld [vmem:[%s1 + $0x1628] sm:$0xff]
  %v753 = vld [vmem:[%s1 + $0x1630] sm:$0xff]
  %v754 = vld [vmem:[%s1 + $0x1638] sm:$0xff]
  %v755 = vld [vmem:[%s1 + $0x1640] sm:$0xff]
  %v756 = vld [vmem:[%s1 + $0x1648] sm:$0xff]
  %v757 = vld [vmem:[%s1 + $0x1650] sm:$0xff]
  %v758 = vld [vmem:[%s1 + $0x1658] sm:$0xff]
  %v759 = vld [vmem:[%s1 + $0x1660] sm:$0xff]
  %v760 = vld [vmem:[%s1 + $0x1668] sm:$0xff]
  %v761 = vld [vmem:[%s1 + $0x1670] sm:$0xff]
  %v762 = vld [vmem:[%s1 + $0x1678] sm:$0xff]
  %v763 = vld [vmem:[%s1 + $0x1680] sm:$0xff]
  %v764 = vld [vmem:[%s1 + $0x1688] sm:$0xff]
  %v765 = vld [vmem:[%s1 + $0x1690] sm:$0xff]
  %v766 = vld [vmem:[%s1 + $0x1698] sm:$0xff]
  %v767 = vld [vmem:[%s1 + $0x16a0] sm:$0xff]
  %v768 = vld [vmem:[%s1 + $0x16a8] sm:$0xff]
  %v769 = vld [vmem:[%s1 + $0x16b0] sm:$0xff]
  %v770 = vld [vmem:[%s1 + $0x16b8] sm:$0xff]
  %v771 = vld [vmem:[%s1 + $0x16c0] sm:$0xff]
  %v772 = vld [vmem:[%s1 + $0x16c8] sm:$0xff]
  %v773 = vld [vmem:[%s1 + $0x16d0] sm:$0xff]
  %v774 = vld [vmem:[%s1 + $0x16d8] sm:$0xff]
  %v775 = vld [vmem:[%s1 + $0x16e0] sm:$0xff]
  %v776 = vld [vmem:[%s1 + $0x16e8] sm:$0xff]
  %v777 = vld [vmem:[%s1 + $0x16f0] sm:$0xff]
  %v778 = vld [vmem:[%s1 + $0x16f8] sm:$0xff]
  %v779 = vld [vmem:[%s1 + $0x1700] sm:$0xff]
  %v780 = vld [vmem:[%s1 + $0x1708] sm:$0xff]
  %v781 = vld [vmem:[%s1 + $0x1710] sm:$0xff]
  %v782 = vld [vmem:[%s1 + $0x1718] sm:$0xff]
  %v783 = vld [vmem:[%s1 + $0x1720] sm:$0xff]
  %v784 = vld [vmem:[%s1 + $0x1728] sm:$0xff]
  %v785 = vld [vmem:[%s1 + $0x1730] sm:$0xff]
  %v786 = vld [vmem:[%s1 + $0x1738] sm:$0xff]
  %v787 = vld [vmem:[%s1 + $0x1740] sm:$0xff]
  %v788 = vld [vmem:[%s1 + $0x1748] sm:$0xff]
  %v789 = vld [vmem:[%s1 + $0x1750] sm:$0xff]
  %v790 = vld [vmem:[%s1 + $0x1758] sm:$0xff]
  %v791 = vld [vmem:[%s1 + $0x1760] sm:$0xff]
  %v792 = vld [vmem:[%s1 + $0x1768] sm:$0xff]
  %v793 = vld [vmem:[%s1 + $0x1770] sm:$0xff]
  %v794 = vld [vmem:[%s1 + $0x1778] sm:$0xff]
  %v795 = vld [vmem:[%s1 + $0x1780] sm:$0xff]
  %v796 = vld [vmem:[%s1 + $0x1788] sm:$0xff]
  %v797 = vld [vmem:[%s1 + $0x1790] sm:$0xff]
  %v798 = vld [vmem:[%s1 + $0x1798] sm:$0xff]
  %v799 = vld [vmem:[%s1 + $0x17a0] sm:$0xff]
  %v800 = vld [vmem:[%s1 + $0x17a8] sm:$0xff]
  %v801 = vld [vmem:[%s1 + $0x17b0] sm:$0xff]
  %v802 = vld [vmem:[%s1 + $0x17b8] sm:$0xff]
  %v803 = vld [vmem:[%s1 + $0x17c0] sm:$0xff]
  %v804 = vld [vmem:[%s1 + $0x17c8] sm:$0xff]
  %v805 = vld [vmem:[%s1 + $0x17d0] sm:$0xff]
  %v806 = vld [vmem:[%s1 + $0x17d8] sm:$0xff]
  %v807 = vld [vmem:[%s1 + $0x17e0] sm:$0xff]
  %v808 = vld [vmem:[%s1 + $0x17e8] sm:$0xff]
  %v809 = vld [vmem:[%s1 + $0x17f0] sm:$0xff]
  %v810 = vld [vmem:[%s1 + $0x17f8] sm:$0xff]
  %v811 = vld [vmem:[%s1 + $0x1800] sm:$0xff]
  %v812 = vld [vmem:[%s1 + $0x1808] sm:$0xff]
  %v813 = vld [vmem:[%s1 + $0x1810] sm:$0xff]
  %v814 = vld [vmem:[%s1 + $0x1818] sm:$0xff]
  %v815 = vld [vmem:[%s1 + $0x1820] sm:$0xff]
  %v816 = vld [vmem:[%s1 + $0x1828] sm:$0xff]
  %v817 = vld [vmem:[%s1 + $0x1830] sm:$0xff]
  %v818 = vld [vmem:[%s1 + $0x1838] sm:$0xff]
  %v819 = vld [vmem:[%s1 + $0x1840] sm:$0xff]
  %v820 = vld [vmem:[%s1 + $0x1848] sm:$0xff]
  %v821 = vld [vmem:[%s1 + $0x1850] sm:$0xff]
  %v822 = vld [vmem:[%s1 + $0x1858] sm:$0xff]
  %v823 = vld [vmem:[%s1 + $0x1860] sm:$0xff]
  %v824 = vld [vmem:[%s1 + $0x1868] sm:$0xff]
  %v825 = vld [vmem:[%s1 + $0x1870] sm:$0xff]
  %v826 = vld [vmem:[%s1 + $0x1878] sm:$0xff]
  %v827 = vld [vmem:[%s1 + $0x1880] sm:$0xff]
  %v828 = vld [vmem:[%s1 + $0x1888] sm:$0xff]
  %v829 = vld [vmem:[%s1 + $0x1890] sm:$0xff]
  %v830 = vld [vmem:[%s1 + $0x1898] sm:$0xff]
  %v831 = vld [vmem:[%s1 + $0x18a0] sm:$0xff]
  %v832 = vld [vmem:[%s1 + $0x18a8] sm:$0xff]
  %v833 = vld [vmem:[%s1 + $0x18b0] sm:$0xff]
  %v834 = vld [vmem:[%s1 + $0x18b8] sm:$0xff]
  %v835 = vld [vmem:[%s1 + $0x18c0] sm:$0xff]
  %v836 = vld [vmem:[%s1 + $0x18c8] sm:$0xff]
  %v837 = vld [vmem:[%s1 + $0x18d0] sm:$0xff]
  %v838 = vld [vmem:[%s1 + $0x18d8] sm:$0xff]
  %v839 = vld [vmem:[%s1 + $0x18e0] sm:$0xff]
  %v840 = vld [vmem:[%s1 + $0x18e8] sm:$0xff]
  %v841 = vld [vmem:[%s1 + $0x18f0] sm:$0xff]
  %v842 = vld [vmem:[%s1 + $0x18f8] sm:$0xff]
  %v843 = vld [vmem:[%s1 + $0x1900] sm:$0xff]
  %v844 = vld [vmem:[%s1 + $0x1908] sm:$0xff]
  %v845 = vld [vmem:[%s1 + $0x1910] sm:$0xff]
  %v846 = vld [vmem:[%s1 + $0x1918] sm:$0xff]
  %v847 = vld [vmem:[%s1 + $0x1920] sm:$0xff]
  %v848 = vld [vmem:[%s1 + $0x1928] sm:$0xff]
  %v849 = vld [vmem:[%s1 + $0x1930] sm:$0xff]
  %v850 = vld [vmem:[%s1 + $0x1938] sm:$0xff]
  %v851 = vld [vmem:[%s1 + $0x1940] sm:$0xff]
  %v852 = vld [vmem:[%s1 + $0x1948] sm:$0xff]
  %v853 = vld [vmem:[%s1 + $0x1950] sm:$0xff]
  %v854 = vld [vmem:[%s1 + $0x1958] sm:$0xff]
  %v855 = vld [vmem:[%s1 + $0x1960] sm:$0xff]
  %v856 = vld [vmem:[%s1 + $0x1968] sm:$0xff]
  %v857 = vld [vmem:[%s1 + $0x1970] sm:$0xff]
  %v858 = vld [vmem:[%s1 + $0x1978] sm:$0xff]
  %v859 = vld [vmem:[%s1 + $0x1980] sm:$0xff]
  %v860 = vld [vmem:[%s1 + $0x1988] sm:$0xff]
  %v861 = vld [vmem:[%s1 + $0x1990] sm:$0xff]
  %v862 = vld [vmem:[%s1 + $0x1998] sm:$0xff]
  %v863 = vld [vmem:[%s1 + $0x19a0] sm:$0xff]
  %v864 = vld [vmem:[%s1 + $0x19a8] sm:$0xff]
  %v865 = vld [vmem:[%s1 + $0x19b0] sm:$0xff]
  %v866 = vld [vmem:[%s1 + $0x19b8] sm:$0xff]
  %v867 = vld [vmem:[%s1 + $0x19c0] sm:$0xff]
  %v868 = vld [vmem:[%s1 + $0x19c8] sm:$0xff]
  %v869 = vld [vmem:[%s1 + $0x19d0] sm:$0xff]
  %v870 = vld [vmem:[%s1 + $0x19d8] sm:$0xff]
  %v871 = vld [vmem:[%s1 + $0x19e0] sm:$0xff]
  %v872 = vld [vmem:[%s1 + $0x19e8] sm:$0xff]
  %v873 = vld [vmem:[%s1 + $0x19f0] sm:$0xff]
  %v874 = vld [vmem:[%s1 + $0x19f8] sm:$0xff]
  %v875 = vld [vmem:[%s1 + $0x1a00] sm:$0xff]
  %v876 = vld [vmem:[%s1 + $0x1a08] sm:$0xff]
  %v877 = vld [vmem:[%s1 + $0x1a10] sm:$0xff]
  %v878 = vld [vmem:[%s1 + $0x1a18] sm:$0xff]
  %v879 = vld [vmem:[%s1 + $0x1a20] sm:$0xff]
  %v880 = vld [vmem:[%s1 + $0x1a28] sm:$0xff]
  %v881 = vld [vmem:[%s1 + $0x1a30] sm:$0xff]
  %v882 = vld [vmem:[%s1 + $0x1a38] sm:$0xff]
  %v883 = vld [vmem:[%s1 + $0x1a40] sm:$0xff]
  %v884 = vld [vmem:[%s1 + $0x1a48] sm:$0xff]
  %v885 = vld [vmem:[%s1 + $0x1a50] sm:$0xff]
  %v886 = vld [vmem:[%s1 + $0x1a58] sm:$0xff]
  %v887 = vld [vmem:[%s1 + $0x1a60] sm:$0xff]
  %v888 = vld [vmem:[%s1 + $0x1a68] sm:$0xff]
  %v889 = vld [vmem:[%s1 + $0x1a70] sm:$0xff]
  %v890 = vld [vmem:[%s1 + $0x1a78] sm:$0xff]
  %v891 = vld [vmem:[%s1 + $0x1a80] sm:$0xff]
  %v892 = vld [vmem:[%s1 + $0x1a88] sm:$0xff]
  %v893 = vld [vmem:[%s1 + $0x1a90] sm:$0xff]
  %v894 = vld [vmem:[%s1 + $0x1a98] sm:$0xff]
  %v895 = vld [vmem:[%s1 + $0x1aa0] sm:$0xff]
  %v896 = vld [vmem:[%s1 + $0x1aa8] sm:$0xff]
  %v897 = vld [vmem:[%s1 + $0x1ab0] sm:$0xff]
  %v898 = vld [vmem:[%s1 + $0x1ab8] sm:$0xff]
  %v899 = vld [vmem:[%s1 + $0x1ac0] sm:$0xff]
  %v900 = vld [vmem:[%s1 + $0x1ac8] sm:$0xff]
  %v901 = vld [vmem:[%s1 + $0x1ad0] sm:$0xff]
  %v902 = vld [vmem:[%s1 + $0x1ad8] sm:$0xff]
  %v903 = vld [vmem:[%s1 + $0x1ae0] sm:$0xff]
  %v904 = vld [vmem:[%s1 + $0x1ae8] sm:$0xff]
  %v905 = vld [vmem:[%s1 + $0x1af0] sm:$0xff]
  %v906 = vld [vmem:[%s1 + $0x1af8] sm:$0xff]
  %v907 = vld [vmem:[%s1 + $0x1b00] sm:$0xff]
  %v908 = vld [vmem:[%s1 + $0x1b08] sm:$0xff]
  %v909 = vld [vmem:[%s1 + $0x1b10] sm:$0xff]
  %v910 = vld [vmem:[%s1 + $0x1b18] sm:$0xff]
  %v911 = vld [vmem:[%s1 + $0x1b20] sm:$0xff]
  %v912 = vld [vmem:[%s1 + $0x1b28] sm:$0xff]
  %v913 = vld [vmem:[%s1 + $0x1b30] sm:$0xff]
  %v914 = vld [vmem:[%s1 + $0x1b38] sm:$0xff]
  %v915 = vld [vmem:[%s1 + $0x1b40] sm:$0xff]
  %v916 = vld [vmem:[%s1 + $0x1b48] sm:$0xff]
  %v917 = vld [vmem:[%s1 + $0x1b50] sm:$0xff]
  %v918 = vld [vmem:[%s1 + $0x1b58] sm:$0xff]
  %v919 = vld [vmem:[%s1 + $0x1b60] sm:$0xff]
  %v920 = vld [vmem:[%s1 + $0x1b68] sm:$0xff]
  %v921 = vld [vmem:[%s1 + $0x1b70] sm:$0xff]
  %v922 = vld [vmem:[%s1 + $0x1b78] sm:$0xff]
  %v923 = vld [vmem:[%s1 + $0x1b80] sm:$0xff]
  %v924 = vld [vmem:[%s1 + $0x1b88] sm:$0xff]
  %v925 = vld [vmem:[%s1 + $0x1b90] sm:$0xff]
  %v926 = vld [vmem:[%s1 + $0x1b98] sm:$0xff]
  %v927 = vld [vmem:[%s1 + $0x1ba0] sm:$0xff]
  %v928 = vld [vmem:[%s1 + $0x1ba8] sm:$0xff]
  %v929 = vld [vmem:[%s1 + $0x1bb0] sm:$0xff]
  %v930 = vld [vmem:[%s1 + $0x1bb8] sm:$0xff]
  %v931 = vld [vmem:[%s1 + $0x1bc0] sm:$0xff]
  %v932 = vld [vmem:[%s1 + $0x1bc8] sm:$0xff]
  %v933 = vld [vmem:[%s1 + $0x1bd0] sm:$0xff]
  %v934 = vld [vmem:[%s1 + $0x1bd8] sm:$0xff]
  %v935 = vld [vmem:[%s1 + $0x1be0] sm:$0xff]
  %v936 = vld [vmem:[%s1 + $0x1be8] sm:$0xff]
  %v937 = vld [vmem:[%s1 + $0x1bf0] sm:$0xff]
  %v938 = vld [vmem:[%s1 + $0x1bf8] sm:$0xff]
  %v939 = vld [vmem:[%s1 + $0x1c00] sm:$0xff]
  %v940 = vld [vmem:[%s1 + $0x1c08] sm:$0xff]
  %v941 = vld [vmem:[%s1 + $0x1c10] sm:$0xff]
  %v942 = vld [vmem:[%s1 + $0x1c18] sm:$0xff]
  %v943 = vld [vmem:[%s1 + $0x1c20] sm:$0xff]
  %v944 = vld [vmem:[%s1 + $0x1c28] sm:$0xff]
  %v945 = vld [vmem:[%s1 + $0x1c30] sm:$0xff]
  %v946 = vld [vmem:[%s1 + $0x1c38] sm:$0xff]
  %v947 = vld [vmem:[%s1 + $0x1c40] sm:$0xff]
  %v948 = vld [vmem:[%s1 + $0x1c48] sm:$0xff]
  %v949 = vld [vmem:[%s1 + $0x1c50] sm:$0xff]
  %v950 = vld [vmem:[%s1 + $0x1c58] sm:$0xff]
  %v951 = vld [vmem:[%s1 + $0x1c60] sm:$0xff]
  %v952 = vld [vmem:[%s1 + $0x1c68] sm:$0xff]
  %v953 = vld [vmem:[%s1 + $0x1c70] sm:$0xff]
  %v954 = vld [vmem:[%s1 + $0x1c78] sm:$0xff]
  %v955 = vld [vmem:[%s1 + $0x1c80] sm:$0xff]
  %v956 = vld [vmem:[%s1 + $0x1c88] sm:$0xff]
  %v957 = vld [vmem:[%s1 + $0x1c90] sm:$0xff]
  %v958 = vld [vmem:[%s1 + $0x1c98] sm:$0xff]
  %v959 = vld [vmem:[%s1 + $0x1ca0] sm:$0xff]
  %v960 = vld [vmem:[%s1 + $0x1ca8] sm:$0xff]
  %v961 = vld [vmem:[%s1 + $0x1cb0] sm:$0xff]
  %v962 = vld [vmem:[%s1 + $0x1cb8] sm:$0xff]
  %v963 = vld [vmem:[%s1 + $0x1cc0] sm:$0xff]
  %v964 = vld [vmem:[%s1 + $0x1cc8] sm:$0xff]
  %v965 = vld [vmem:[%s1 + $0x1cd0] sm:$0xff]
  %v966 = vld [vmem:[%s1 + $0x1cd8] sm:$0xff]
  %v967 = vld [vmem:[%s1 + $0x1ce0] sm:$0xff]
  %v968 = vld [vmem:[%s1 + $0x1ce8] sm:$0xff]
  %v969 = vld [vmem:[%s1 + $0x1cf0] sm:$0xff]
  %v970 = vld [vmem:[%s1 + $0x1cf8] sm:$0xff]
  %v971 = vld [vmem:[%s1 + $0x1d00] sm:$0xff]
  %v972 = vld [vmem:[%s1 + $0x1d08] sm:$0xff]
  %v973 = vld [vmem:[%s1 + $0x1d10] sm:$0xff]
  %v974 = vld [vmem:[%s1 + $0x1d18] sm:$0xff]
  %v975 = vld [vmem:[%s1 + $0x1d20] sm:$0xff]
  %v976 = vld [vmem:[%s1 + $0x1d28] sm:$0xff]
  %v977 = vld [vmem:[%s1 + $0x1d30] sm:$0xff]
  %v978 = vld [vmem:[%s1 + $0x1d38] sm:$0xff]
  %v979 = vld [vmem:[%s1 + $0x1d40] sm:$0xff]
  %v980 = vld [vmem:[%s1 + $0x1d48] sm:$0xff]
  %v981 = vld [vmem:[%s1 + $0x1d50] sm:$0xff]
  %v982 = vld [vmem:[%s1 + $0x1d58] sm:$0xff]
  %v983 = vld [vmem:[%s1 + $0x1d60] sm:$0xff]
  %v984 = vld [vmem:[%s1 + $0x1d68] sm:$0xff]
  %v985 = vld [vmem:[%s1 + $0x1d70] sm:$0xff]
  %v986 = vld [vmem:[%s1 + $0x1d78] sm:$0xff]
  %v987 = vld [vmem:[%s1 + $0x1d80] sm:$0xff]
  %v988 = vld [vmem:[%s1 + $0x1d88] sm:$0xff]
  %v989 = vld [vmem:[%s1 + $0x1d90] sm:$0xff]
  %v990 = vld [vmem:[%s1 + $0x1d98] sm:$0xff]
  %v991 = vld [vmem:[%s1 + $0x1da0] sm:$0xff]
  %v992 = vld [vmem:[%s1 + $0x1da8] sm:$0xff]
  %v993 = vld [vmem:[%s1 + $0x1db0] sm:$0xff]
  %v994 = vld [vmem:[%s1 + $0x1db8] sm:$0xff]
  %v995 = vld [vmem:[%s1 + $0x1dc0] sm:$0xff]
  %v996 = vld [vmem:[%s1 + $0x1dc8] sm:$0xff]
  %v997 = vld [vmem:[%s1 + $0x1dd0] sm:$0xff]
  %v998 = vld [vmem:[%s1 + $0x1dd8] sm:$0xff]
  %v999 = vld [vmem:[%s1 + $0x1de0] sm:$0xff]
  %v1000 = vld [vmem:[%s1 + $0x1de8] sm:$0xff]
  %v1001 = vld [vmem:[%s1 + $0x1df0] sm:$0xff]
  %v1002 = vld [vmem:[%s1 + $0x1df8] sm:$0xff]
  %v1003 = vld [vmem:[%s1 + $0x1e00] sm:$0xff]
  %v1004 = vld [vmem:[%s1 + $0x1e08] sm:$0xff]
  %v1005 = vld [vmem:[%s1 + $0x1e10] sm:$0xff]
  %v1006 = vld [vmem:[%s1 + $0x1e18] sm:$0xff]
  %v1007 = vld [vmem:[%s1 + $0x1e20] sm:$0xff]
  %v1008 = vld [vmem:[%s1 + $0x1e28] sm:$0xff]
  %v1009 = vld [vmem:[%s1 + $0x1e30] sm:$0xff]
  %v1010 = vld [vmem:[%s1 + $0x1e38] sm:$0xff]
  %v1011 = vld [vmem:[%s1 + $0x1e40] sm:$0xff]
  %v1012 = vld [vmem:[%s1 + $0x1e48] sm:$0xff]
  %v1013 = vld [vmem:[%s1 + $0x1e50] sm:$0xff]
  %v1014 = vld [vmem:[%s1 + $0x1e58] sm:$0xff]
  %v1015 = vld [vmem:[%s1 + $0x1e60] sm:$0xff]
  %v1016 = vld [vmem:[%s1 + $0x1e68] sm:$0xff]
  %v1017 = vld [vmem:[%s1 + $0x1e70] sm:$0xff]
  %v1018 = vld [vmem:[%s1 + $0x1e78] sm:$0xff]
  %v1019 = vld [vmem:[%s1 + $0x1e80] sm:$0xff]
  %v1020 = vld [vmem:[%s1 + $0x1e88] sm:$0xff]
  %v1021 = vld [vmem:[%s1 + $0x1e90] sm:$0xff]
  %v1022 = vld [vmem:[%s1 + $0x1e98] sm:$0xff]
  %v1023 = vld [vmem:[%s1 + $0x1ea0] sm:$0xff]
  %v1024 = vld [vmem:[%s1 + $0x1ea8] sm:$0xff]
  %v1025 = vld [vmem:[%s1 + $0x1eb0] sm:$0xff]
  %v1026 = vld [vmem:[%s1 + $0x1eb8] sm:$0xff]
  %v1027 = vld [vmem:[%s1 + $0x1ec0] sm:$0xff]
  %v1028 = vld [vmem:[%s1 + $0x1ec8] sm:$0xff]
  %v1029 = vld [vmem:[%s1 + $0x1ed0] sm:$0xff]
  %v1030 = vld [vmem:[%s1 + $0x1ed8] sm:$0xff]
  %v1031 = vld [vmem:[%s1 + $0x1ee0] sm:$0xff]
  %v1032 = vld [vmem:[%s1 + $0x1ee8] sm:$0xff]
  %v1033 = vld [vmem:[%s1 + $0x1ef0] sm:$0xff]
  %v1034 = vld [vmem:[%s1 + $0x1ef8] sm:$0xff]
  %v1035 = vld [vmem:[%s1 + $0x1f00] sm:$0xff]
  %v1036 = vld [vmem:[%s1 + $0x1f08] sm:$0xff]
  %v1037 = vld [vmem:[%s1 + $0x1f10] sm:$0xff]
  %v1038 = vld [vmem:[%s1 + $0x1f18] sm:$0xff]
  %v1039 = vld [vmem:[%s1 + $0x1f20] sm:$0xff]
  %v1040 = vld [vmem:[%s1 + $0x1f28] sm:$0xff]
  %v1041 = vld [vmem:[%s1 + $0x1f30] sm:$0xff]
  %v1042 = vld [vmem:[%s1 + $0x1f38] sm:$0xff]
  %v1043 = vld [vmem:[%s1 + $0x1f40] sm:$0xff]
  %v1044 = vld [vmem:[%s1 + $0x1f48] sm:$0xff]
  %v1045 = vld [vmem:[%s1 + $0x1f50] sm:$0xff]
  %v1046 = vld [vmem:[%s1 + $0x1f58] sm:$0xff]
  %v1047 = vld [vmem:[%s1 + $0x1f60] sm:$0xff]
  %v1048 = vld [vmem:[%s1 + $0x1f68] sm:$0xff]
  %v1049 = vld [vmem:[%s1 + $0x1f70] sm:$0xff]
  %v1050 = vld [vmem:[%s1 + $0x1f78] sm:$0xff]
  %v1051 = vld [vmem:[%s1 + $0x1f80] sm:$0xff]
  %v1052 = vld [vmem:[%s1 + $0x1f88] sm:$0xff]
  %v1053 = vld [vmem:[%s1 + $0x1f90] sm:$0xff]
  %v1054 = vld [vmem:[%s1 + $0x1f98] sm:$0xff]
  %v1055 = vld [vmem:[%s1 + $0x1fa0] sm:$0xff]
  %v1056 = vld [vmem:[%s1 + $0x1fa8] sm:$0xff]
  %v1057 = vld [vmem:[%s1 + $0x1fb0] sm:$0xff]
  %v1058 = vld [vmem:[%s1 + $0x1fb8] sm:$0xff]
  %v1059 = vld [vmem:[%s1 + $0x1fc0] sm:$0xff]
  %v1060 = vld [vmem:[%s1 + $0x1fc8] sm:$0xff]
  %v1061 = vld [vmem:[%s1 + $0x1fd0] sm:$0xff]
  %v1062 = vld [vmem:[%s1 + $0x1fd8] sm:$0xff]
  %v1063 = vld [vmem:[%s1 + $0x1fe0] sm:$0xff]
  %v1064 = vld [vmem:[%s1 + $0x1fe8] sm:$0xff]
  %v1065 = vld [vmem:[%s1 + $0x1ff0] sm:$0xff]
  %v1066 = vld [vmem:[%s1 + $0x1ff8] sm:$0xff]
  %v1067 = vld [vmem:[%s2] sm:$0xff]
  %v1068 = vld [vmem:[%s2 + $0x8] sm:$0xff]
  %v1071 = vlaneseq
  %v1072 = vshrl.u32 %v1071, 7
  %v1073 = vsub.s32 0, %v1072
  %v1074 = vrot.slane %v1067, %v1073
  %v1075 = vlaneseq
  %v1076 = vshrl.u32 %v1075, 7
  %v1077 = vsub.s32 1, %v1076
  %v1078 = vrot.slane %v1067, %v1077
  %v1079 = vlaneseq
  %v1080 = vshrl.u32 %v1079, 7
  %v1081 = vsub.s32 2, %v1080
  %v1082 = vrot.slane %v1067, %v1081
  %v1083 = vlaneseq
  %v1084 = vshrl.u32 %v1083, 7
  %v1085 = vsub.s32 3, %v1084
  %v1086 = vrot.slane %v1067, %v1085
  %v1087 = vlaneseq
  %v1088 = vshrl.u32 %v1087, 7
  %v1089 = vsub.s32 4, %v1088
  %v1090 = vrot.slane %v1067, %v1089
  %v1091 = vlaneseq
  %v1092 = vshrl.u32 %v1091, 7
  %v1093 = vsub.s32 5, %v1092
  %v1094 = vrot.slane %v1067, %v1093
  %v1095 = vlaneseq
  %v1096 = vshrl.u32 %v1095, 7
  %v1097 = vsub.s32 6, %v1096
  %v1098 = vrot.slane %v1067, %v1097
  %v1099 = vlaneseq
  %v1100 = vshrl.u32 %v1099, 7
  %v1101 = vsub.s32 7, %v1100
  %v1102 = vrot.slane %v1067, %v1101
  %v1103 = vlaneseq
  %v1104 = vshrl.u32 %v1103, 7
  %v1105 = vsub.s32 0, %v1104
  %v1106 = vrot.slane %v1068, %v1105
  %v1107 = vlaneseq
  %v1108 = vshrl.u32 %v1107, 7
  %v1109 = vsub.s32 1, %v1108
  %v1110 = vrot.slane %v1068, %v1109
  %v1111 = vlaneseq
  %v1112 = vshrl.u32 %v1111, 7
  %v1113 = vsub.s32 2, %v1112
  %v1114 = vrot.slane %v1068, %v1113
  %v1115 = vlaneseq
  %v1116 = vshrl.u32 %v1115, 7
  %v1117 = vsub.s32 3, %v1116
  %v1118 = vrot.slane %v1068, %v1117
  %v1119 = vlaneseq
  %v1120 = vshrl.u32 %v1119, 7
  %v1121 = vsub.s32 4, %v1120
  %v1122 = vrot.slane %v1068, %v1121
  %v1123 = vlaneseq
  %v1124 = vshrl.u32 %v1123, 7
  %v1125 = vsub.s32 5, %v1124
  %v1126 = vrot.slane %v1068, %v1125
  %v1127 = vlaneseq
  %v1128 = vshrl.u32 %v1127, 7
  %v1129 = vsub.s32 6, %v1128
  %v1130 = vrot.slane %v1068, %v1129
  %v1131 = vlaneseq
  %v1132 = vshrl.u32 %v1131, 7
  %v1133 = vsub.s32 7, %v1132
  %v1134 = vrot.slane %v1068, %v1133
  %v2175 = vunpack.c.l.b16 %v43
  %v2176 = vunpack.c.h.b16 %v43
  %v2177 = vunpack.c.l.b16 %v44
  %v2178 = vunpack.c.h.b16 %v44
  %v2179 = vunpack.c.l.b16 %v45
  %v2180 = vunpack.c.h.b16 %v45
  %v2181 = vunpack.c.l.b16 %v46
  %v2182 = vunpack.c.h.b16 %v46
  %v2183 = vunpack.c.l.b16 %v47
  %v2184 = vunpack.c.h.b16 %v47
  %v2185 = vunpack.c.l.b16 %v48
  %v2186 = vunpack.c.h.b16 %v48
  %v2187 = vunpack.c.l.b16 %v49
  %v2188 = vunpack.c.h.b16 %v49
  %v2189 = vunpack.c.l.b16 %v50
  %v2190 = vunpack.c.h.b16 %v50
  %v2191 = vunpack.c.l.b16 %v51
  %v2192 = vunpack.c.h.b16 %v51
  %v2193 = vunpack.c.l.b16 %v52
  %v2194 = vunpack.c.h.b16 %v52
  %v2195 = vunpack.c.l.b16 %v53
  %v2196 = vunpack.c.h.b16 %v53
  %v2197 = vunpack.c.l.b16 %v54
  %v2198 = vunpack.c.h.b16 %v54
  %v2199 = vunpack.c.l.b16 %v55
  %v2200 = vunpack.c.h.b16 %v55
  %v2201 = vunpack.c.l.b16 %v56
  %v2202 = vunpack.c.h.b16 %v56
  %v2203 = vunpack.c.l.b16 %v57
  %v2204 = vunpack.c.h.b16 %v57
  %v2205 = vunpack.c.l.b16 %v58
  %v2206 = vunpack.c.h.b16 %v58
  %v2207 = vunpack.c.l.b16 %v59
  %v2208 = vunpack.c.h.b16 %v59
  %v2209 = vunpack.c.l.b16 %v60
  %v2210 = vunpack.c.h.b16 %v60
  %v2211 = vunpack.c.l.b16 %v61
  %v2212 = vunpack.c.h.b16 %v61
  %v2213 = vunpack.c.l.b16 %v62
  %v2214 = vunpack.c.h.b16 %v62
  %v2215 = vunpack.c.l.b16 %v63
  %v2216 = vunpack.c.h.b16 %v63
  %v2217 = vunpack.c.l.b16 %v64
  %v2218 = vunpack.c.h.b16 %v64
  %v2219 = vunpack.c.l.b16 %v65
  %v2220 = vunpack.c.h.b16 %v65
  %v2221 = vunpack.c.l.b16 %v66
  %v2222 = vunpack.c.h.b16 %v66
  %v2223 = vunpack.c.l.b16 %v67
  %v2224 = vunpack.c.h.b16 %v67
  %v2225 = vunpack.c.l.b16 %v68
  %v2226 = vunpack.c.h.b16 %v68
  %v2227 = vunpack.c.l.b16 %v69
  %v2228 = vunpack.c.h.b16 %v69
  %v2229 = vunpack.c.l.b16 %v70
  %v2230 = vunpack.c.h.b16 %v70
  %v2231 = vunpack.c.l.b16 %v71
  %v2232 = vunpack.c.h.b16 %v71
  %v2233 = vunpack.c.l.b16 %v72
  %v2234 = vunpack.c.h.b16 %v72
  %v2235 = vunpack.c.l.b16 %v73
  %v2236 = vunpack.c.h.b16 %v73
  %v2237 = vunpack.c.l.b16 %v74
  %v2238 = vunpack.c.h.b16 %v74
  %v2239 = vunpack.c.l.b16 %v75
  %v2240 = vunpack.c.h.b16 %v75
  %v2241 = vunpack.c.l.b16 %v76
  %v2242 = vunpack.c.h.b16 %v76
  %v2243 = vunpack.c.l.b16 %v77
  %v2244 = vunpack.c.h.b16 %v77
  %v2245 = vunpack.c.l.b16 %v78
  %v2246 = vunpack.c.h.b16 %v78
  %v2247 = vunpack.c.l.b16 %v79
  %v2248 = vunpack.c.h.b16 %v79
  %v2249 = vunpack.c.l.b16 %v80
  %v2250 = vunpack.c.h.b16 %v80
  %v2251 = vunpack.c.l.b16 %v81
  %v2252 = vunpack.c.h.b16 %v81
  %v2253 = vunpack.c.l.b16 %v82
  %v2254 = vunpack.c.h.b16 %v82
  %v2255 = vunpack.c.l.b16 %v83
  %v2256 = vunpack.c.h.b16 %v83
  %v2257 = vunpack.c.l.b16 %v84
  %v2258 = vunpack.c.h.b16 %v84
  %v2259 = vunpack.c.l.b16 %v85
  %v2260 = vunpack.c.h.b16 %v85
  %v2261 = vunpack.c.l.b16 %v86
  %v2262 = vunpack.c.h.b16 %v86
  %v2263 = vunpack.c.l.b16 %v87
  %v2264 = vunpack.c.h.b16 %v87
  %v2265 = vunpack.c.l.b16 %v88
  %v2266 = vunpack.c.h.b16 %v88
  %v2267 = vunpack.c.l.b16 %v89
  %v2268 = vunpack.c.h.b16 %v89
  %v2269 = vunpack.c.l.b16 %v90
  %v2270 = vunpack.c.h.b16 %v90
  %v2271 = vunpack.c.l.b16 %v91
  %v2272 = vunpack.c.h.b16 %v91
  %v2273 = vunpack.c.l.b16 %v92
  %v2274 = vunpack.c.h.b16 %v92
  %v2275 = vunpack.c.l.b16 %v93
  %v2276 = vunpack.c.h.b16 %v93
  %v2277 = vunpack.c.l.b16 %v94
  %v2278 = vunpack.c.h.b16 %v94
  %v2279 = vunpack.c.l.b16 %v95
  %v2280 = vunpack.c.h.b16 %v95
  %v2281 = vunpack.c.l.b16 %v96
  %v2282 = vunpack.c.h.b16 %v96
  %v2283 = vunpack.c.l.b16 %v97
  %v2284 = vunpack.c.h.b16 %v97
  %v2285 = vunpack.c.l.b16 %v98
  %v2286 = vunpack.c.h.b16 %v98
  %v2287 = vunpack.c.l.b16 %v99
  %v2288 = vunpack.c.h.b16 %v99
  %v2289 = vunpack.c.l.b16 %v100
  %v2290 = vunpack.c.h.b16 %v100
  %v2291 = vunpack.c.l.b16 %v101
  %v2292 = vunpack.c.h.b16 %v101
  %v2293 = vunpack.c.l.b16 %v102
  %v2294 = vunpack.c.h.b16 %v102
  %v2295 = vunpack.c.l.b16 %v103
  %v2296 = vunpack.c.h.b16 %v103
  %v2297 = vunpack.c.l.b16 %v104
  %v2298 = vunpack.c.h.b16 %v104
  %v2299 = vunpack.c.l.b16 %v105
  %v2300 = vunpack.c.h.b16 %v105
  %v2301 = vunpack.c.l.b16 %v106
  %v2302 = vunpack.c.h.b16 %v106
  %v2303 = vunpack.c.l.b16 %v107
  %v2304 = vunpack.c.h.b16 %v107
  %v2305 = vunpack.c.l.b16 %v108
  %v2306 = vunpack.c.h.b16 %v108
  %v2307 = vunpack.c.l.b16 %v109
  %v2308 = vunpack.c.h.b16 %v109
  %v2309 = vunpack.c.l.b16 %v110
  %v2310 = vunpack.c.h.b16 %v110
  %v2311 = vunpack.c.l.b16 %v111
  %v2312 = vunpack.c.h.b16 %v111
  %v2313 = vunpack.c.l.b16 %v112
  %v2314 = vunpack.c.h.b16 %v112
  %v2315 = vunpack.c.l.b16 %v113
  %v2316 = vunpack.c.h.b16 %v113
  %v2317 = vunpack.c.l.b16 %v114
  %v2318 = vunpack.c.h.b16 %v114
  %v2319 = vunpack.c.l.b16 %v115
  %v2320 = vunpack.c.h.b16 %v115
  %v2321 = vunpack.c.l.b16 %v116
  %v2322 = vunpack.c.h.b16 %v116
  %v2323 = vunpack.c.l.b16 %v117
  %v2324 = vunpack.c.h.b16 %v117
  %v2325 = vunpack.c.l.b16 %v118
  %v2326 = vunpack.c.h.b16 %v118
  %v2327 = vunpack.c.l.b16 %v119
  %v2328 = vunpack.c.h.b16 %v119
  %v2329 = vunpack.c.l.b16 %v120
  %v2330 = vunpack.c.h.b16 %v120
  %v2331 = vunpack.c.l.b16 %v121
  %v2332 = vunpack.c.h.b16 %v121
  %v2333 = vunpack.c.l.b16 %v122
  %v2334 = vunpack.c.h.b16 %v122
  %v2335 = vunpack.c.l.b16 %v123
  %v2336 = vunpack.c.h.b16 %v123
  %v2337 = vunpack.c.l.b16 %v124
  %v2338 = vunpack.c.h.b16 %v124
  %v2339 = vunpack.c.l.b16 %v125
  %v2340 = vunpack.c.h.b16 %v125
  %v2341 = vunpack.c.l.b16 %v126
  %v2342 = vunpack.c.h.b16 %v126
  %v2343 = vunpack.c.l.b16 %v127
  %v2344 = vunpack.c.h.b16 %v127
  %v2345 = vunpack.c.l.b16 %v128
  %v2346 = vunpack.c.h.b16 %v128
  %v2347 = vunpack.c.l.b16 %v129
  %v2348 = vunpack.c.h.b16 %v129
  %v2349 = vunpack.c.l.b16 %v130
  %v2350 = vunpack.c.h.b16 %v130
  %v2351 = vunpack.c.l.b16 %v131
  %v2352 = vunpack.c.h.b16 %v131
  %v2353 = vunpack.c.l.b16 %v132
  %v2354 = vunpack.c.h.b16 %v132
  %v2355 = vunpack.c.l.b16 %v133
  %v2356 = vunpack.c.h.b16 %v133
  %v2357 = vunpack.c.l.b16 %v134
  %v2358 = vunpack.c.h.b16 %v134
  %v2359 = vunpack.c.l.b16 %v135
  %v2360 = vunpack.c.h.b16 %v135
  %v2361 = vunpack.c.l.b16 %v136
  %v2362 = vunpack.c.h.b16 %v136
  %v2363 = vunpack.c.l.b16 %v137
  %v2364 = vunpack.c.h.b16 %v137
  %v2365 = vunpack.c.l.b16 %v138
  %v2366 = vunpack.c.h.b16 %v138
  %v2367 = vunpack.c.l.b16 %v139
  %v2368 = vunpack.c.h.b16 %v139
  %v2369 = vunpack.c.l.b16 %v140
  %v2370 = vunpack.c.h.b16 %v140
  %v2371 = vunpack.c.l.b16 %v141
  %v2372 = vunpack.c.h.b16 %v141
  %v2373 = vunpack.c.l.b16 %v142
  %v2374 = vunpack.c.h.b16 %v142
  %v2375 = vunpack.c.l.b16 %v143
  %v2376 = vunpack.c.h.b16 %v143
  %v2377 = vunpack.c.l.b16 %v144
  %v2378 = vunpack.c.h.b16 %v144
  %v2379 = vunpack.c.l.b16 %v145
  %v2380 = vunpack.c.h.b16 %v145
  %v2381 = vunpack.c.l.b16 %v146
  %v2382 = vunpack.c.h.b16 %v146
  %v2383 = vunpack.c.l.b16 %v147
  %v2384 = vunpack.c.h.b16 %v147
  %v2385 = vunpack.c.l.b16 %v148
  %v2386 = vunpack.c.h.b16 %v148
  %v2387 = vunpack.c.l.b16 %v149
  %v2388 = vunpack.c.h.b16 %v149
  %v2389 = vunpack.c.l.b16 %v150
  %v2390 = vunpack.c.h.b16 %v150
  %v2391 = vunpack.c.l.b16 %v151
  %v2392 = vunpack.c.h.b16 %v151
  %v2393 = vunpack.c.l.b16 %v152
  %v2394 = vunpack.c.h.b16 %v152
  %v2395 = vunpack.c.l.b16 %v153
  %v2396 = vunpack.c.h.b16 %v153
  %v2397 = vunpack.c.l.b16 %v154
  %v2398 = vunpack.c.h.b16 %v154
  %v2399 = vunpack.c.l.b16 %v155
  %v2400 = vunpack.c.h.b16 %v155
  %v2401 = vunpack.c.l.b16 %v156
  %v2402 = vunpack.c.h.b16 %v156
  %v2403 = vunpack.c.l.b16 %v157
  %v2404 = vunpack.c.h.b16 %v157
  %v2405 = vunpack.c.l.b16 %v158
  %v2406 = vunpack.c.h.b16 %v158
  %v2407 = vunpack.c.l.b16 %v159
  %v2408 = vunpack.c.h.b16 %v159
  %v2409 = vunpack.c.l.b16 %v160
  %v2410 = vunpack.c.h.b16 %v160
  %v2411 = vunpack.c.l.b16 %v161
  %v2412 = vunpack.c.h.b16 %v161
  %v2413 = vunpack.c.l.b16 %v162
  %v2414 = vunpack.c.h.b16 %v162
  %v2415 = vunpack.c.l.b16 %v163
  %v2416 = vunpack.c.h.b16 %v163
  %v2417 = vunpack.c.l.b16 %v164
  %v2418 = vunpack.c.h.b16 %v164
  %v2419 = vunpack.c.l.b16 %v165
  %v2420 = vunpack.c.h.b16 %v165
  %v2421 = vunpack.c.l.b16 %v166
  %v2422 = vunpack.c.h.b16 %v166
  %v2423 = vunpack.c.l.b16 %v167
  %v2424 = vunpack.c.h.b16 %v167
  %v2425 = vunpack.c.l.b16 %v168
  %v2426 = vunpack.c.h.b16 %v168
  %v2427 = vunpack.c.l.b16 %v169
  %v2428 = vunpack.c.h.b16 %v169
  %v2429 = vunpack.c.l.b16 %v170
  %v2430 = vunpack.c.h.b16 %v170
  %v2431 = vunpack.c.l.b16 %v171
  %v2432 = vunpack.c.h.b16 %v171
  %v2433 = vunpack.c.l.b16 %v172
  %v2434 = vunpack.c.h.b16 %v172
  %v2435 = vunpack.c.l.b16 %v173
  %v2436 = vunpack.c.h.b16 %v173
  %v2437 = vunpack.c.l.b16 %v174
  %v2438 = vunpack.c.h.b16 %v174
  %v2439 = vunpack.c.l.b16 %v175
  %v2440 = vunpack.c.h.b16 %v175
  %v2441 = vunpack.c.l.b16 %v176
  %v2442 = vunpack.c.h.b16 %v176
  %v2443 = vunpack.c.l.b16 %v177
  %v2444 = vunpack.c.h.b16 %v177
  %v2445 = vunpack.c.l.b16 %v178
  %v2446 = vunpack.c.h.b16 %v178
  %v2447 = vunpack.c.l.b16 %v179
  %v2448 = vunpack.c.h.b16 %v179
  %v2449 = vunpack.c.l.b16 %v180
  %v2450 = vunpack.c.h.b16 %v180
  %v2451 = vunpack.c.l.b16 %v181
  %v2452 = vunpack.c.h.b16 %v181
  %v2453 = vunpack.c.l.b16 %v182
  %v2454 = vunpack.c.h.b16 %v182
  %v2455 = vunpack.c.l.b16 %v183
  %v2456 = vunpack.c.h.b16 %v183
  %v2457 = vunpack.c.l.b16 %v184
  %v2458 = vunpack.c.h.b16 %v184
  %v2459 = vunpack.c.l.b16 %v185
  %v2460 = vunpack.c.h.b16 %v185
  %v2461 = vunpack.c.l.b16 %v186
  %v2462 = vunpack.c.h.b16 %v186
  %v2463 = vunpack.c.l.b16 %v187
  %v2464 = vunpack.c.h.b16 %v187
  %v2465 = vunpack.c.l.b16 %v188
  %v2466 = vunpack.c.h.b16 %v188
  %v2467 = vunpack.c.l.b16 %v189
  %v2468 = vunpack.c.h.b16 %v189
  %v2469 = vunpack.c.l.b16 %v190
  %v2470 = vunpack.c.h.b16 %v190
  %v2471 = vunpack.c.l.b16 %v191
  %v2472 = vunpack.c.h.b16 %v191
  %v2473 = vunpack.c.l.b16 %v192
  %v2474 = vunpack.c.h.b16 %v192
  %v2475 = vunpack.c.l.b16 %v193
  %v2476 = vunpack.c.h.b16 %v193
  %v2477 = vunpack.c.l.b16 %v194
  %v2478 = vunpack.c.h.b16 %v194
  %v2479 = vunpack.c.l.b16 %v195
  %v2480 = vunpack.c.h.b16 %v195
  %v2481 = vunpack.c.l.b16 %v196
  %v2482 = vunpack.c.h.b16 %v196
  %v2483 = vunpack.c.l.b16 %v197
  %v2484 = vunpack.c.h.b16 %v197
  %v2485 = vunpack.c.l.b16 %v198
  %v2486 = vunpack.c.h.b16 %v198
  %v2487 = vunpack.c.l.b16 %v199
  %v2488 = vunpack.c.h.b16 %v199
  %v2489 = vunpack.c.l.b16 %v200
  %v2490 = vunpack.c.h.b16 %v200
  %v2491 = vunpack.c.l.b16 %v201
  %v2492 = vunpack.c.h.b16 %v201
  %v2493 = vunpack.c.l.b16 %v202
  %v2494 = vunpack.c.h.b16 %v202
  %v2495 = vunpack.c.l.b16 %v203
  %v2496 = vunpack.c.h.b16 %v203
  %v2497 = vunpack.c.l.b16 %v204
  %v2498 = vunpack.c.h.b16 %v204
  %v2499 = vunpack.c.l.b16 %v205
  %v2500 = vunpack.c.h.b16 %v205
  %v2501 = vunpack.c.l.b16 %v206
  %v2502 = vunpack.c.h.b16 %v206
  %v2503 = vunpack.c.l.b16 %v207
  %v2504 = vunpack.c.h.b16 %v207
  %v2505 = vunpack.c.l.b16 %v208
  %v2506 = vunpack.c.h.b16 %v208
  %v2507 = vunpack.c.l.b16 %v209
  %v2508 = vunpack.c.h.b16 %v209
  %v2509 = vunpack.c.l.b16 %v210
  %v2510 = vunpack.c.h.b16 %v210
  %v2511 = vunpack.c.l.b16 %v211
  %v2512 = vunpack.c.h.b16 %v211
  %v2513 = vunpack.c.l.b16 %v212
  %v2514 = vunpack.c.h.b16 %v212
  %v2515 = vunpack.c.l.b16 %v213
  %v2516 = vunpack.c.h.b16 %v213
  %v2517 = vunpack.c.l.b16 %v214
  %v2518 = vunpack.c.h.b16 %v214
  %v2519 = vunpack.c.l.b16 %v215
  %v2520 = vunpack.c.h.b16 %v215
  %v2521 = vunpack.c.l.b16 %v216
  %v2522 = vunpack.c.h.b16 %v216
  %v2523 = vunpack.c.l.b16 %v217
  %v2524 = vunpack.c.h.b16 %v217
  %v2525 = vunpack.c.l.b16 %v218
  %v2526 = vunpack.c.h.b16 %v218
  %v2527 = vunpack.c.l.b16 %v219
  %v2528 = vunpack.c.h.b16 %v219
  %v2529 = vunpack.c.l.b16 %v220
  %v2530 = vunpack.c.h.b16 %v220
  %v2531 = vunpack.c.l.b16 %v221
  %v2532 = vunpack.c.h.b16 %v221
  %v2533 = vunpack.c.l.b16 %v222
  %v2534 = vunpack.c.h.b16 %v222
  %v2535 = vunpack.c.l.b16 %v223
  %v2536 = vunpack.c.h.b16 %v223
  %v2537 = vunpack.c.l.b16 %v224
  %v2538 = vunpack.c.h.b16 %v224
  %v2539 = vunpack.c.l.b16 %v225
  %v2540 = vunpack.c.h.b16 %v225
  %v2541 = vunpack.c.l.b16 %v226
  %v2542 = vunpack.c.h.b16 %v226
  %v2543 = vunpack.c.l.b16 %v227
  %v2544 = vunpack.c.h.b16 %v227
  %v2545 = vunpack.c.l.b16 %v228
  %v2546 = vunpack.c.h.b16 %v228
  %v2547 = vunpack.c.l.b16 %v229
  %v2548 = vunpack.c.h.b16 %v229
  %v2549 = vunpack.c.l.b16 %v230
  %v2550 = vunpack.c.h.b16 %v230
  %v2551 = vunpack.c.l.b16 %v231
  %v2552 = vunpack.c.h.b16 %v231
  %v2553 = vunpack.c.l.b16 %v232
  %v2554 = vunpack.c.h.b16 %v232
  %v2555 = vunpack.c.l.b16 %v233
  %v2556 = vunpack.c.h.b16 %v233
  %v2557 = vunpack.c.l.b16 %v234
  %v2558 = vunpack.c.h.b16 %v234
  %v2559 = vunpack.c.l.b16 %v235
  %v2560 = vunpack.c.h.b16 %v235
  %v2561 = vunpack.c.l.b16 %v236
  %v2562 = vunpack.c.h.b16 %v236
  %v2563 = vunpack.c.l.b16 %v237
  %v2564 = vunpack.c.h.b16 %v237
  %v2565 = vunpack.c.l.b16 %v238
  %v2566 = vunpack.c.h.b16 %v238
  %v2567 = vunpack.c.l.b16 %v239
  %v2568 = vunpack.c.h.b16 %v239
  %v2569 = vunpack.c.l.b16 %v240
  %v2570 = vunpack.c.h.b16 %v240
  %v2571 = vunpack.c.l.b16 %v241
  %v2572 = vunpack.c.h.b16 %v241
  %v2573 = vunpack.c.l.b16 %v242
  %v2574 = vunpack.c.h.b16 %v242
  %v2575 = vunpack.c.l.b16 %v243
  %v2576 = vunpack.c.h.b16 %v243
  %v2577 = vunpack.c.l.b16 %v244
  %v2578 = vunpack.c.h.b16 %v244
  %v2579 = vunpack.c.l.b16 %v245
  %v2580 = vunpack.c.h.b16 %v245
  %v2581 = vunpack.c.l.b16 %v246
  %v2582 = vunpack.c.h.b16 %v246
  %v2583 = vunpack.c.l.b16 %v247
  %v2584 = vunpack.c.h.b16 %v247
  %v2585 = vunpack.c.l.b16 %v248
  %v2586 = vunpack.c.h.b16 %v248
  %v2587 = vunpack.c.l.b16 %v249
  %v2588 = vunpack.c.h.b16 %v249
  %v2589 = vunpack.c.l.b16 %v250
  %v2590 = vunpack.c.h.b16 %v250
  %v2591 = vunpack.c.l.b16 %v251
  %v2592 = vunpack.c.h.b16 %v251
  %v2593 = vunpack.c.l.b16 %v252
  %v2594 = vunpack.c.h.b16 %v252
  %v2595 = vunpack.c.l.b16 %v253
  %v2596 = vunpack.c.h.b16 %v253
  %v2597 = vunpack.c.l.b16 %v254
  %v2598 = vunpack.c.h.b16 %v254
  %v2599 = vunpack.c.l.b16 %v255
  %v2600 = vunpack.c.h.b16 %v255
  %v2601 = vunpack.c.l.b16 %v256
  %v2602 = vunpack.c.h.b16 %v256
  %v2603 = vunpack.c.l.b16 %v257
  %v2604 = vunpack.c.h.b16 %v257
  %v2605 = vunpack.c.l.b16 %v258
  %v2606 = vunpack.c.h.b16 %v258
  %v2607 = vunpack.c.l.b16 %v259
  %v2608 = vunpack.c.h.b16 %v259
  %v2609 = vunpack.c.l.b16 %v260
  %v2610 = vunpack.c.h.b16 %v260
  %v2611 = vunpack.c.l.b16 %v261
  %v2612 = vunpack.c.h.b16 %v261
  %v2613 = vunpack.c.l.b16 %v262
  %v2614 = vunpack.c.h.b16 %v262
  %v2615 = vunpack.c.l.b16 %v263
  %v2616 = vunpack.c.h.b16 %v263
  %v2617 = vunpack.c.l.b16 %v264
  %v2618 = vunpack.c.h.b16 %v264
  %v2619 = vunpack.c.l.b16 %v265
  %v2620 = vunpack.c.h.b16 %v265
  %v2621 = vunpack.c.l.b16 %v266
  %v2622 = vunpack.c.h.b16 %v266
  %v2623 = vunpack.c.l.b16 %v267
  %v2624 = vunpack.c.h.b16 %v267
  %v2625 = vunpack.c.l.b16 %v268
  %v2626 = vunpack.c.h.b16 %v268
  %v2627 = vunpack.c.l.b16 %v269
  %v2628 = vunpack.c.h.b16 %v269
  %v2629 = vunpack.c.l.b16 %v270
  %v2630 = vunpack.c.h.b16 %v270
  %v2631 = vunpack.c.l.b16 %v271
  %v2632 = vunpack.c.h.b16 %v271
  %v2633 = vunpack.c.l.b16 %v272
  %v2634 = vunpack.c.h.b16 %v272
  %v2635 = vunpack.c.l.b16 %v273
  %v2636 = vunpack.c.h.b16 %v273
  %v2637 = vunpack.c.l.b16 %v274
  %v2638 = vunpack.c.h.b16 %v274
  %v2639 = vunpack.c.l.b16 %v275
  %v2640 = vunpack.c.h.b16 %v275
  %v2641 = vunpack.c.l.b16 %v276
  %v2642 = vunpack.c.h.b16 %v276
  %v2643 = vunpack.c.l.b16 %v277
  %v2644 = vunpack.c.h.b16 %v277
  %v2645 = vunpack.c.l.b16 %v278
  %v2646 = vunpack.c.h.b16 %v278
  %v2647 = vunpack.c.l.b16 %v279
  %v2648 = vunpack.c.h.b16 %v279
  %v2649 = vunpack.c.l.b16 %v280
  %v2650 = vunpack.c.h.b16 %v280
  %v2651 = vunpack.c.l.b16 %v281
  %v2652 = vunpack.c.h.b16 %v281
  %v2653 = vunpack.c.l.b16 %v282
  %v2654 = vunpack.c.h.b16 %v282
  %v2655 = vunpack.c.l.b16 %v283
  %v2656 = vunpack.c.h.b16 %v283
  %v2657 = vunpack.c.l.b16 %v284
  %v2658 = vunpack.c.h.b16 %v284
  %v2659 = vunpack.c.l.b16 %v285
  %v2660 = vunpack.c.h.b16 %v285
  %v2661 = vunpack.c.l.b16 %v286
  %v2662 = vunpack.c.h.b16 %v286
  %v2663 = vunpack.c.l.b16 %v287
  %v2664 = vunpack.c.h.b16 %v287
  %v2665 = vunpack.c.l.b16 %v288
  %v2666 = vunpack.c.h.b16 %v288
  %v2667 = vunpack.c.l.b16 %v289
  %v2668 = vunpack.c.h.b16 %v289
  %v2669 = vunpack.c.l.b16 %v290
  %v2670 = vunpack.c.h.b16 %v290
  %v2671 = vunpack.c.l.b16 %v291
  %v2672 = vunpack.c.h.b16 %v291
  %v2673 = vunpack.c.l.b16 %v292
  %v2674 = vunpack.c.h.b16 %v292
  %v2675 = vunpack.c.l.b16 %v293
  %v2676 = vunpack.c.h.b16 %v293
  %v2677 = vunpack.c.l.b16 %v294
  %v2678 = vunpack.c.h.b16 %v294
  %v2679 = vunpack.c.l.b16 %v295
  %v2680 = vunpack.c.h.b16 %v295
  %v2681 = vunpack.c.l.b16 %v296
  %v2682 = vunpack.c.h.b16 %v296
  %v2683 = vunpack.c.l.b16 %v297
  %v2684 = vunpack.c.h.b16 %v297
  %v2685 = vunpack.c.l.b16 %v298
  %v2686 = vunpack.c.h.b16 %v298
  %v2687 = vunpack.c.l.b16 %v299
  %v2688 = vunpack.c.h.b16 %v299
  %v2689 = vunpack.c.l.b16 %v300
  %v2690 = vunpack.c.h.b16 %v300
  %v2691 = vunpack.c.l.b16 %v301
  %v2692 = vunpack.c.h.b16 %v301
  %v2693 = vunpack.c.l.b16 %v302
  %v2694 = vunpack.c.h.b16 %v302
  %v2695 = vunpack.c.l.b16 %v303
  %v2696 = vunpack.c.h.b16 %v303
  %v2697 = vunpack.c.l.b16 %v304
  %v2698 = vunpack.c.h.b16 %v304
  %v2699 = vunpack.c.l.b16 %v305
  %v2700 = vunpack.c.h.b16 %v305
  %v2701 = vunpack.c.l.b16 %v306
  %v2702 = vunpack.c.h.b16 %v306
  %v2703 = vunpack.c.l.b16 %v307
  %v2704 = vunpack.c.h.b16 %v307
  %v2705 = vunpack.c.l.b16 %v308
  %v2706 = vunpack.c.h.b16 %v308
  %v2707 = vunpack.c.l.b16 %v309
  %v2708 = vunpack.c.h.b16 %v309
  %v2709 = vunpack.c.l.b16 %v310
  %v2710 = vunpack.c.h.b16 %v310
  %v2711 = vunpack.c.l.b16 %v311
  %v2712 = vunpack.c.h.b16 %v311
  %v2713 = vunpack.c.l.b16 %v312
  %v2714 = vunpack.c.h.b16 %v312
  %v2715 = vunpack.c.l.b16 %v313
  %v2716 = vunpack.c.h.b16 %v313
  %v2717 = vunpack.c.l.b16 %v314
  %v2718 = vunpack.c.h.b16 %v314
  %v2719 = vunpack.c.l.b16 %v315
  %v2720 = vunpack.c.h.b16 %v315
  %v2721 = vunpack.c.l.b16 %v316
  %v2722 = vunpack.c.h.b16 %v316
  %v2723 = vunpack.c.l.b16 %v317
  %v2724 = vunpack.c.h.b16 %v317
  %v2725 = vunpack.c.l.b16 %v318
  %v2726 = vunpack.c.h.b16 %v318
  %v2727 = vunpack.c.l.b16 %v319
  %v2728 = vunpack.c.h.b16 %v319
  %v2729 = vunpack.c.l.b16 %v320
  %v2730 = vunpack.c.h.b16 %v320
  %v2731 = vunpack.c.l.b16 %v321
  %v2732 = vunpack.c.h.b16 %v321
  %v2733 = vunpack.c.l.b16 %v322
  %v2734 = vunpack.c.h.b16 %v322
  %v2735 = vunpack.c.l.b16 %v323
  %v2736 = vunpack.c.h.b16 %v323
  %v2737 = vunpack.c.l.b16 %v324
  %v2738 = vunpack.c.h.b16 %v324
  %v2739 = vunpack.c.l.b16 %v325
  %v2740 = vunpack.c.h.b16 %v325
  %v2741 = vunpack.c.l.b16 %v326
  %v2742 = vunpack.c.h.b16 %v326
  %v2743 = vunpack.c.l.b16 %v327
  %v2744 = vunpack.c.h.b16 %v327
  %v2745 = vunpack.c.l.b16 %v328
  %v2746 = vunpack.c.h.b16 %v328
  %v2747 = vunpack.c.l.b16 %v329
  %v2748 = vunpack.c.h.b16 %v329
  %v2749 = vunpack.c.l.b16 %v330
  %v2750 = vunpack.c.h.b16 %v330
  %v2751 = vunpack.c.l.b16 %v331
  %v2752 = vunpack.c.h.b16 %v331
  %v2753 = vunpack.c.l.b16 %v332
  %v2754 = vunpack.c.h.b16 %v332
  %v2755 = vunpack.c.l.b16 %v333
  %v2756 = vunpack.c.h.b16 %v333
  %v2757 = vunpack.c.l.b16 %v334
  %v2758 = vunpack.c.h.b16 %v334
  %v2759 = vunpack.c.l.b16 %v335
  %v2760 = vunpack.c.h.b16 %v335
  %v2761 = vunpack.c.l.b16 %v336
  %v2762 = vunpack.c.h.b16 %v336
  %v2763 = vunpack.c.l.b16 %v337
  %v2764 = vunpack.c.h.b16 %v337
  %v2765 = vunpack.c.l.b16 %v338
  %v2766 = vunpack.c.h.b16 %v338
  %v2767 = vunpack.c.l.b16 %v339
  %v2768 = vunpack.c.h.b16 %v339
  %v2769 = vunpack.c.l.b16 %v340
  %v2770 = vunpack.c.h.b16 %v340
  %v2771 = vunpack.c.l.b16 %v341
  %v2772 = vunpack.c.h.b16 %v341
  %v2773 = vunpack.c.l.b16 %v342
  %v2774 = vunpack.c.h.b16 %v342
  %v2775 = vunpack.c.l.b16 %v343
  %v2776 = vunpack.c.h.b16 %v343
  %v2777 = vunpack.c.l.b16 %v344
  %v2778 = vunpack.c.h.b16 %v344
  %v2779 = vunpack.c.l.b16 %v345
  %v2780 = vunpack.c.h.b16 %v345
  %v2781 = vunpack.c.l.b16 %v346
  %v2782 = vunpack.c.h.b16 %v346
  %v2783 = vunpack.c.l.b16 %v347
  %v2784 = vunpack.c.h.b16 %v347
  %v2785 = vunpack.c.l.b16 %v348
  %v2786 = vunpack.c.h.b16 %v348
  %v2787 = vunpack.c.l.b16 %v349
  %v2788 = vunpack.c.h.b16 %v349
  %v2789 = vunpack.c.l.b16 %v350
  %v2790 = vunpack.c.h.b16 %v350
  %v2791 = vunpack.c.l.b16 %v351
  %v2792 = vunpack.c.h.b16 %v351
  %v2793 = vunpack.c.l.b16 %v352
  %v2794 = vunpack.c.h.b16 %v352
  %v2795 = vunpack.c.l.b16 %v353
  %v2796 = vunpack.c.h.b16 %v353
  %v2797 = vunpack.c.l.b16 %v354
  %v2798 = vunpack.c.h.b16 %v354
  %v2799 = vunpack.c.l.b16 %v355
  %v2800 = vunpack.c.h.b16 %v355
  %v2801 = vunpack.c.l.b16 %v356
  %v2802 = vunpack.c.h.b16 %v356
  %v2803 = vunpack.c.l.b16 %v357
  %v2804 = vunpack.c.h.b16 %v357
  %v2805 = vunpack.c.l.b16 %v358
  %v2806 = vunpack.c.h.b16 %v358
  %v2807 = vunpack.c.l.b16 %v359
  %v2808 = vunpack.c.h.b16 %v359
  %v2809 = vunpack.c.l.b16 %v360
  %v2810 = vunpack.c.h.b16 %v360
  %v2811 = vunpack.c.l.b16 %v361
  %v2812 = vunpack.c.h.b16 %v361
  %v2813 = vunpack.c.l.b16 %v362
  %v2814 = vunpack.c.h.b16 %v362
  %v2815 = vunpack.c.l.b16 %v363
  %v2816 = vunpack.c.h.b16 %v363
  %v2817 = vunpack.c.l.b16 %v364
  %v2818 = vunpack.c.h.b16 %v364
  %v2819 = vunpack.c.l.b16 %v365
  %v2820 = vunpack.c.h.b16 %v365
  %v2821 = vunpack.c.l.b16 %v366
  %v2822 = vunpack.c.h.b16 %v366
  %v2823 = vunpack.c.l.b16 %v367
  %v2824 = vunpack.c.h.b16 %v367
  %v2825 = vunpack.c.l.b16 %v368
  %v2826 = vunpack.c.h.b16 %v368
  %v2827 = vunpack.c.l.b16 %v369
  %v2828 = vunpack.c.h.b16 %v369
  %v2829 = vunpack.c.l.b16 %v370
  %v2830 = vunpack.c.h.b16 %v370
  %v2831 = vunpack.c.l.b16 %v371
  %v2832 = vunpack.c.h.b16 %v371
  %v2833 = vunpack.c.l.b16 %v372
  %v2834 = vunpack.c.h.b16 %v372
  %v2835 = vunpack.c.l.b16 %v373
  %v2836 = vunpack.c.h.b16 %v373
  %v2837 = vunpack.c.l.b16 %v374
  %v2838 = vunpack.c.h.b16 %v374
  %v2839 = vunpack.c.l.b16 %v375
  %v2840 = vunpack.c.h.b16 %v375
  %v2841 = vunpack.c.l.b16 %v376
  %v2842 = vunpack.c.h.b16 %v376
  %v2843 = vunpack.c.l.b16 %v377
  %v2844 = vunpack.c.h.b16 %v377
  %v2845 = vunpack.c.l.b16 %v378
  %v2846 = vunpack.c.h.b16 %v378
  %v2847 = vunpack.c.l.b16 %v379
  %v2848 = vunpack.c.h.b16 %v379
  %v2849 = vunpack.c.l.b16 %v380
  %v2850 = vunpack.c.h.b16 %v380
  %v2851 = vunpack.c.l.b16 %v381
  %v2852 = vunpack.c.h.b16 %v381
  %v2853 = vunpack.c.l.b16 %v382
  %v2854 = vunpack.c.h.b16 %v382
  %v2855 = vunpack.c.l.b16 %v383
  %v2856 = vunpack.c.h.b16 %v383
  %v2857 = vunpack.c.l.b16 %v384
  %v2858 = vunpack.c.h.b16 %v384
  %v2859 = vunpack.c.l.b16 %v385
  %v2860 = vunpack.c.h.b16 %v385
  %v2861 = vunpack.c.l.b16 %v386
  %v2862 = vunpack.c.h.b16 %v386
  %v2863 = vunpack.c.l.b16 %v387
  %v2864 = vunpack.c.h.b16 %v387
  %v2865 = vunpack.c.l.b16 %v388
  %v2866 = vunpack.c.h.b16 %v388
  %v2867 = vunpack.c.l.b16 %v389
  %v2868 = vunpack.c.h.b16 %v389
  %v2869 = vunpack.c.l.b16 %v390
  %v2870 = vunpack.c.h.b16 %v390
  %v2871 = vunpack.c.l.b16 %v391
  %v2872 = vunpack.c.h.b16 %v391
  %v2873 = vunpack.c.l.b16 %v392
  %v2874 = vunpack.c.h.b16 %v392
  %v2875 = vunpack.c.l.b16 %v393
  %v2876 = vunpack.c.h.b16 %v393
  %v2877 = vunpack.c.l.b16 %v394
  %v2878 = vunpack.c.h.b16 %v394
  %v2879 = vunpack.c.l.b16 %v395
  %v2880 = vunpack.c.h.b16 %v395
  %v2881 = vunpack.c.l.b16 %v396
  %v2882 = vunpack.c.h.b16 %v396
  %v2883 = vunpack.c.l.b16 %v397
  %v2884 = vunpack.c.h.b16 %v397
  %v2885 = vunpack.c.l.b16 %v398
  %v2886 = vunpack.c.h.b16 %v398
  %v2887 = vunpack.c.l.b16 %v399
  %v2888 = vunpack.c.h.b16 %v399
  %v2889 = vunpack.c.l.b16 %v400
  %v2890 = vunpack.c.h.b16 %v400
  %v2891 = vunpack.c.l.b16 %v401
  %v2892 = vunpack.c.h.b16 %v401
  %v2893 = vunpack.c.l.b16 %v402
  %v2894 = vunpack.c.h.b16 %v402
  %v2895 = vunpack.c.l.b16 %v403
  %v2896 = vunpack.c.h.b16 %v403
  %v2897 = vunpack.c.l.b16 %v404
  %v2898 = vunpack.c.h.b16 %v404
  %v2899 = vunpack.c.l.b16 %v405
  %v2900 = vunpack.c.h.b16 %v405
  %v2901 = vunpack.c.l.b16 %v406
  %v2902 = vunpack.c.h.b16 %v406
  %v2903 = vunpack.c.l.b16 %v407
  %v2904 = vunpack.c.h.b16 %v407
  %v2905 = vunpack.c.l.b16 %v408
  %v2906 = vunpack.c.h.b16 %v408
  %v2907 = vunpack.c.l.b16 %v409
  %v2908 = vunpack.c.h.b16 %v409
  %v2909 = vunpack.c.l.b16 %v410
  %v2910 = vunpack.c.h.b16 %v410
  %v2911 = vunpack.c.l.b16 %v411
  %v2912 = vunpack.c.h.b16 %v411
  %v2913 = vunpack.c.l.b16 %v412
  %v2914 = vunpack.c.h.b16 %v412
  %v2915 = vunpack.c.l.b16 %v413
  %v2916 = vunpack.c.h.b16 %v413
  %v2917 = vunpack.c.l.b16 %v414
  %v2918 = vunpack.c.h.b16 %v414
  %v2919 = vunpack.c.l.b16 %v415
  %v2920 = vunpack.c.h.b16 %v415
  %v2921 = vunpack.c.l.b16 %v416
  %v2922 = vunpack.c.h.b16 %v416
  %v2923 = vunpack.c.l.b16 %v417
  %v2924 = vunpack.c.h.b16 %v417
  %v2925 = vunpack.c.l.b16 %v418
  %v2926 = vunpack.c.h.b16 %v418
  %v2927 = vunpack.c.l.b16 %v419
  %v2928 = vunpack.c.h.b16 %v419
  %v2929 = vunpack.c.l.b16 %v420
  %v2930 = vunpack.c.h.b16 %v420
  %v2931 = vunpack.c.l.b16 %v421
  %v2932 = vunpack.c.h.b16 %v421
  %v2933 = vunpack.c.l.b16 %v422
  %v2934 = vunpack.c.h.b16 %v422
  %v2935 = vunpack.c.l.b16 %v423
  %v2936 = vunpack.c.h.b16 %v423
  %v2937 = vunpack.c.l.b16 %v424
  %v2938 = vunpack.c.h.b16 %v424
  %v2939 = vunpack.c.l.b16 %v425
  %v2940 = vunpack.c.h.b16 %v425
  %v2941 = vunpack.c.l.b16 %v426
  %v2942 = vunpack.c.h.b16 %v426
  %v2943 = vunpack.c.l.b16 %v427
  %v2944 = vunpack.c.h.b16 %v427
  %v2945 = vunpack.c.l.b16 %v428
  %v2946 = vunpack.c.h.b16 %v428
  %v2947 = vunpack.c.l.b16 %v429
  %v2948 = vunpack.c.h.b16 %v429
  %v2949 = vunpack.c.l.b16 %v430
  %v2950 = vunpack.c.h.b16 %v430
  %v2951 = vunpack.c.l.b16 %v431
  %v2952 = vunpack.c.h.b16 %v431
  %v2953 = vunpack.c.l.b16 %v432
  %v2954 = vunpack.c.h.b16 %v432
  %v2955 = vunpack.c.l.b16 %v433
  %v2956 = vunpack.c.h.b16 %v433
  %v2957 = vunpack.c.l.b16 %v434
  %v2958 = vunpack.c.h.b16 %v434
  %v2959 = vunpack.c.l.b16 %v435
  %v2960 = vunpack.c.h.b16 %v435
  %v2961 = vunpack.c.l.b16 %v436
  %v2962 = vunpack.c.h.b16 %v436
  %v2963 = vunpack.c.l.b16 %v437
  %v2964 = vunpack.c.h.b16 %v437
  %v2965 = vunpack.c.l.b16 %v438
  %v2966 = vunpack.c.h.b16 %v438
  %v2967 = vunpack.c.l.b16 %v439
  %v2968 = vunpack.c.h.b16 %v439
  %v2969 = vunpack.c.l.b16 %v440
  %v2970 = vunpack.c.h.b16 %v440
  %v2971 = vunpack.c.l.b16 %v441
  %v2972 = vunpack.c.h.b16 %v441
  %v2973 = vunpack.c.l.b16 %v442
  %v2974 = vunpack.c.h.b16 %v442
  %v2975 = vunpack.c.l.b16 %v443
  %v2976 = vunpack.c.h.b16 %v443
  %v2977 = vunpack.c.l.b16 %v444
  %v2978 = vunpack.c.h.b16 %v444
  %v2979 = vunpack.c.l.b16 %v445
  %v2980 = vunpack.c.h.b16 %v445
  %v2981 = vunpack.c.l.b16 %v446
  %v2982 = vunpack.c.h.b16 %v446
  %v2983 = vunpack.c.l.b16 %v447
  %v2984 = vunpack.c.h.b16 %v447
  %v2985 = vunpack.c.l.b16 %v448
  %v2986 = vunpack.c.h.b16 %v448
  %v2987 = vunpack.c.l.b16 %v449
  %v2988 = vunpack.c.h.b16 %v449
  %v2989 = vunpack.c.l.b16 %v450
  %v2990 = vunpack.c.h.b16 %v450
  %v2991 = vunpack.c.l.b16 %v451
  %v2992 = vunpack.c.h.b16 %v451
  %v2993 = vunpack.c.l.b16 %v452
  %v2994 = vunpack.c.h.b16 %v452
  %v2995 = vunpack.c.l.b16 %v453
  %v2996 = vunpack.c.h.b16 %v453
  %v2997 = vunpack.c.l.b16 %v454
  %v2998 = vunpack.c.h.b16 %v454
  %v2999 = vunpack.c.l.b16 %v455
  %v3000 = vunpack.c.h.b16 %v455
  %v3001 = vunpack.c.l.b16 %v456
  %v3002 = vunpack.c.h.b16 %v456
  %v3003 = vunpack.c.l.b16 %v457
  %v3004 = vunpack.c.h.b16 %v457
  %v3005 = vunpack.c.l.b16 %v458
  %v3006 = vunpack.c.h.b16 %v458
  %v3007 = vunpack.c.l.b16 %v459
  %v3008 = vunpack.c.h.b16 %v459
  %v3009 = vunpack.c.l.b16 %v460
  %v3010 = vunpack.c.h.b16 %v460
  %v3011 = vunpack.c.l.b16 %v461
  %v3012 = vunpack.c.h.b16 %v461
  %v3013 = vunpack.c.l.b16 %v462
  %v3014 = vunpack.c.h.b16 %v462
  %v3015 = vunpack.c.l.b16 %v463
  %v3016 = vunpack.c.h.b16 %v463
  %v3017 = vunpack.c.l.b16 %v464
  %v3018 = vunpack.c.h.b16 %v464
  %v3019 = vunpack.c.l.b16 %v465
  %v3020 = vunpack.c.h.b16 %v465
  %v3021 = vunpack.c.l.b16 %v466
  %v3022 = vunpack.c.h.b16 %v466
  %v3023 = vunpack.c.l.b16 %v467
  %v3024 = vunpack.c.h.b16 %v467
  %v3025 = vunpack.c.l.b16 %v468
  %v3026 = vunpack.c.h.b16 %v468
  %v3027 = vunpack.c.l.b16 %v469
  %v3028 = vunpack.c.h.b16 %v469
  %v3029 = vunpack.c.l.b16 %v470
  %v3030 = vunpack.c.h.b16 %v470
  %v3031 = vunpack.c.l.b16 %v471
  %v3032 = vunpack.c.h.b16 %v471
  %v3033 = vunpack.c.l.b16 %v472
  %v3034 = vunpack.c.h.b16 %v472
  %v3035 = vunpack.c.l.b16 %v473
  %v3036 = vunpack.c.h.b16 %v473
  %v3037 = vunpack.c.l.b16 %v474
  %v3038 = vunpack.c.h.b16 %v474
  %v3039 = vunpack.c.l.b16 %v475
  %v3040 = vunpack.c.h.b16 %v475
  %v3041 = vunpack.c.l.b16 %v476
  %v3042 = vunpack.c.h.b16 %v476
  %v3043 = vunpack.c.l.b16 %v477
  %v3044 = vunpack.c.h.b16 %v477
  %v3045 = vunpack.c.l.b16 %v478
  %v3046 = vunpack.c.h.b16 %v478
  %v3047 = vunpack.c.l.b16 %v479
  %v3048 = vunpack.c.h.b16 %v479
  %v3049 = vunpack.c.l.b16 %v480
  %v3050 = vunpack.c.h.b16 %v480
  %v3051 = vunpack.c.l.b16 %v481
  %v3052 = vunpack.c.h.b16 %v481
  %v3053 = vunpack.c.l.b16 %v482
  %v3054 = vunpack.c.h.b16 %v482
  %v3055 = vunpack.c.l.b16 %v483
  %v3056 = vunpack.c.h.b16 %v483
  %v3057 = vunpack.c.l.b16 %v484
  %v3058 = vunpack.c.h.b16 %v484
  %v3059 = vunpack.c.l.b16 %v485
  %v3060 = vunpack.c.h.b16 %v485
  %v3061 = vunpack.c.l.b16 %v486
  %v3062 = vunpack.c.h.b16 %v486
  %v3063 = vunpack.c.l.b16 %v487
  %v3064 = vunpack.c.h.b16 %v487
  %v3065 = vunpack.c.l.b16 %v488
  %v3066 = vunpack.c.h.b16 %v488
  %v3067 = vunpack.c.l.b16 %v489
  %v3068 = vunpack.c.h.b16 %v489
  %v3069 = vunpack.c.l.b16 %v490
  %v3070 = vunpack.c.h.b16 %v490
  %v3071 = vunpack.c.l.b16 %v491
  %v3072 = vunpack.c.h.b16 %v491
  %v3073 = vunpack.c.l.b16 %v492
  %v3074 = vunpack.c.h.b16 %v492
  %v3075 = vunpack.c.l.b16 %v493
  %v3076 = vunpack.c.h.b16 %v493
  %v3077 = vunpack.c.l.b16 %v494
  %v3078 = vunpack.c.h.b16 %v494
  %v3079 = vunpack.c.l.b16 %v495
  %v3080 = vunpack.c.h.b16 %v495
  %v3081 = vunpack.c.l.b16 %v496
  %v3082 = vunpack.c.h.b16 %v496
  %v3083 = vunpack.c.l.b16 %v497
  %v3084 = vunpack.c.h.b16 %v497
  %v3085 = vunpack.c.l.b16 %v498
  %v3086 = vunpack.c.h.b16 %v498
  %v3087 = vunpack.c.l.b16 %v499
  %v3088 = vunpack.c.h.b16 %v499
  %v3089 = vunpack.c.l.b16 %v500
  %v3090 = vunpack.c.h.b16 %v500
  %v3091 = vunpack.c.l.b16 %v501
  %v3092 = vunpack.c.h.b16 %v501
  %v3093 = vunpack.c.l.b16 %v502
  %v3094 = vunpack.c.h.b16 %v502
  %v3095 = vunpack.c.l.b16 %v503
  %v3096 = vunpack.c.h.b16 %v503
  %v3097 = vunpack.c.l.b16 %v504
  %v3098 = vunpack.c.h.b16 %v504
  %v3099 = vunpack.c.l.b16 %v505
  %v3100 = vunpack.c.h.b16 %v505
  %v3101 = vunpack.c.l.b16 %v506
  %v3102 = vunpack.c.h.b16 %v506
  %v3103 = vunpack.c.l.b16 %v507
  %v3104 = vunpack.c.h.b16 %v507
  %v3105 = vunpack.c.l.b16 %v508
  %v3106 = vunpack.c.h.b16 %v508
  %v3107 = vunpack.c.l.b16 %v509
  %v3108 = vunpack.c.h.b16 %v509
  %v3109 = vunpack.c.l.b16 %v510
  %v3110 = vunpack.c.h.b16 %v510
  %v3111 = vunpack.c.l.b16 %v511
  %v3112 = vunpack.c.h.b16 %v511
  %v3113 = vunpack.c.l.b16 %v512
  %v3114 = vunpack.c.h.b16 %v512
  %v3115 = vunpack.c.l.b16 %v513
  %v3116 = vunpack.c.h.b16 %v513
  %v3117 = vunpack.c.l.b16 %v514
  %v3118 = vunpack.c.h.b16 %v514
  %v3119 = vunpack.c.l.b16 %v515
  %v3120 = vunpack.c.h.b16 %v515
  %v3121 = vunpack.c.l.b16 %v516
  %v3122 = vunpack.c.h.b16 %v516
  %v3123 = vunpack.c.l.b16 %v517
  %v3124 = vunpack.c.h.b16 %v517
  %v3125 = vunpack.c.l.b16 %v518
  %v3126 = vunpack.c.h.b16 %v518
  %v3127 = vunpack.c.l.b16 %v519
  %v3128 = vunpack.c.h.b16 %v519
  %v3129 = vunpack.c.l.b16 %v520
  %v3130 = vunpack.c.h.b16 %v520
  %v3131 = vunpack.c.l.b16 %v521
  %v3132 = vunpack.c.h.b16 %v521
  %v3133 = vunpack.c.l.b16 %v522
  %v3134 = vunpack.c.h.b16 %v522
  %v3135 = vunpack.c.l.b16 %v523
  %v3136 = vunpack.c.h.b16 %v523
  %v3137 = vunpack.c.l.b16 %v524
  %v3138 = vunpack.c.h.b16 %v524
  %v3139 = vunpack.c.l.b16 %v525
  %v3140 = vunpack.c.h.b16 %v525
  %v3141 = vunpack.c.l.b16 %v526
  %v3142 = vunpack.c.h.b16 %v526
  %v3143 = vunpack.c.l.b16 %v527
  %v3144 = vunpack.c.h.b16 %v527
  %v3145 = vunpack.c.l.b16 %v528
  %v3146 = vunpack.c.h.b16 %v528
  %v3147 = vunpack.c.l.b16 %v529
  %v3148 = vunpack.c.h.b16 %v529
  %v3149 = vunpack.c.l.b16 %v530
  %v3150 = vunpack.c.h.b16 %v530
  %v3151 = vunpack.c.l.b16 %v531
  %v3152 = vunpack.c.h.b16 %v531
  %v3153 = vunpack.c.l.b16 %v532
  %v3154 = vunpack.c.h.b16 %v532
  %v3155 = vunpack.c.l.b16 %v533
  %v3156 = vunpack.c.h.b16 %v533
  %v3157 = vunpack.c.l.b16 %v534
  %v3158 = vunpack.c.h.b16 %v534
  %v3159 = vunpack.c.l.b16 %v535
  %v3160 = vunpack.c.h.b16 %v535
  %v3161 = vunpack.c.l.b16 %v536
  %v3162 = vunpack.c.h.b16 %v536
  %v3163 = vunpack.c.l.b16 %v537
  %v3164 = vunpack.c.h.b16 %v537
  %v3165 = vunpack.c.l.b16 %v538
  %v3166 = vunpack.c.h.b16 %v538
  %v3167 = vunpack.c.l.b16 %v539
  %v3168 = vunpack.c.h.b16 %v539
  %v3169 = vunpack.c.l.b16 %v540
  %v3170 = vunpack.c.h.b16 %v540
  %v3171 = vunpack.c.l.b16 %v541
  %v3172 = vunpack.c.h.b16 %v541
  %v3173 = vunpack.c.l.b16 %v542
  %v3174 = vunpack.c.h.b16 %v542
  %v3175 = vunpack.c.l.b16 %v543
  %v3176 = vunpack.c.h.b16 %v543
  %v3177 = vunpack.c.l.b16 %v544
  %v3178 = vunpack.c.h.b16 %v544
  %v3179 = vunpack.c.l.b16 %v545
  %v3180 = vunpack.c.h.b16 %v545
  %v3181 = vunpack.c.l.b16 %v546
  %v3182 = vunpack.c.h.b16 %v546
  %v3183 = vunpack.c.l.b16 %v547
  %v3184 = vunpack.c.h.b16 %v547
  %v3185 = vunpack.c.l.b16 %v548
  %v3186 = vunpack.c.h.b16 %v548
  %v3187 = vunpack.c.l.b16 %v549
  %v3188 = vunpack.c.h.b16 %v549
  %v3189 = vunpack.c.l.b16 %v550
  %v3190 = vunpack.c.h.b16 %v550
  %v3191 = vunpack.c.l.b16 %v551
  %v3192 = vunpack.c.h.b16 %v551
  %v3193 = vunpack.c.l.b16 %v552
  %v3194 = vunpack.c.h.b16 %v552
  %v3195 = vunpack.c.l.b16 %v553
  %v3196 = vunpack.c.h.b16 %v553
  %v3197 = vunpack.c.l.b16 %v554
  %v3198 = vunpack.c.h.b16 %v554
  %v3199 = vunpack.c.l.b16 %v555
  %v3200 = vunpack.c.h.b16 %v555
  %v3201 = vunpack.c.l.b16 %v556
  %v3202 = vunpack.c.h.b16 %v556
  %v3203 = vunpack.c.l.b16 %v557
  %v3204 = vunpack.c.h.b16 %v557
  %v3205 = vunpack.c.l.b16 %v558
  %v3206 = vunpack.c.h.b16 %v558
  %v3207 = vunpack.c.l.b16 %v559
  %v3208 = vunpack.c.h.b16 %v559
  %v3209 = vunpack.c.l.b16 %v560
  %v3210 = vunpack.c.h.b16 %v560
  %v3211 = vunpack.c.l.b16 %v561
  %v3212 = vunpack.c.h.b16 %v561
  %v3213 = vunpack.c.l.b16 %v562
  %v3214 = vunpack.c.h.b16 %v562
  %v3215 = vunpack.c.l.b16 %v563
  %v3216 = vunpack.c.h.b16 %v563
  %v3217 = vunpack.c.l.b16 %v564
  %v3218 = vunpack.c.h.b16 %v564
  %v3219 = vunpack.c.l.b16 %v565
  %v3220 = vunpack.c.h.b16 %v565
  %v3221 = vunpack.c.l.b16 %v566
  %v3222 = vunpack.c.h.b16 %v566
  %v3223 = vunpack.c.l.b16 %v567
  %v3224 = vunpack.c.h.b16 %v567
  %v3225 = vunpack.c.l.b16 %v568
  %v3226 = vunpack.c.h.b16 %v568
  %v3227 = vunpack.c.l.b16 %v569
  %v3228 = vunpack.c.h.b16 %v569
  %v3229 = vunpack.c.l.b16 %v570
  %v3230 = vunpack.c.h.b16 %v570
  %v3231 = vunpack.c.l.b16 %v571
  %v3232 = vunpack.c.h.b16 %v571
  %v3233 = vunpack.c.l.b16 %v572
  %v3234 = vunpack.c.h.b16 %v572
  %v3235 = vunpack.c.l.b16 %v573
  %v3236 = vunpack.c.h.b16 %v573
  %v3237 = vunpack.c.l.b16 %v574
  %v3238 = vunpack.c.h.b16 %v574
  %v3239 = vunpack.c.l.b16 %v575
  %v3240 = vunpack.c.h.b16 %v575
  %v3241 = vunpack.c.l.b16 %v576
  %v3242 = vunpack.c.h.b16 %v576
  %v3243 = vunpack.c.l.b16 %v577
  %v3244 = vunpack.c.h.b16 %v577
  %v3245 = vunpack.c.l.b16 %v578
  %v3246 = vunpack.c.h.b16 %v578
  %v3247 = vunpack.c.l.b16 %v579
  %v3248 = vunpack.c.h.b16 %v579
  %v3249 = vunpack.c.l.b16 %v580
  %v3250 = vunpack.c.h.b16 %v580
  %v3251 = vunpack.c.l.b16 %v581
  %v3252 = vunpack.c.h.b16 %v581
  %v3253 = vunpack.c.l.b16 %v582
  %v3254 = vunpack.c.h.b16 %v582
  %v3255 = vunpack.c.l.b16 %v583
  %v3256 = vunpack.c.h.b16 %v583
  %v3257 = vunpack.c.l.b16 %v584
  %v3258 = vunpack.c.h.b16 %v584
  %v3259 = vunpack.c.l.b16 %v585
  %v3260 = vunpack.c.h.b16 %v585
  %v3261 = vunpack.c.l.b16 %v586
  %v3262 = vunpack.c.h.b16 %v586
  %v3263 = vunpack.c.l.b16 %v587
  %v3264 = vunpack.c.h.b16 %v587
  %v3265 = vunpack.c.l.b16 %v588
  %v3266 = vunpack.c.h.b16 %v588
  %v3267 = vunpack.c.l.b16 %v589
  %v3268 = vunpack.c.h.b16 %v589
  %v3269 = vunpack.c.l.b16 %v590
  %v3270 = vunpack.c.h.b16 %v590
  %v3271 = vunpack.c.l.b16 %v591
  %v3272 = vunpack.c.h.b16 %v591
  %v3273 = vunpack.c.l.b16 %v592
  %v3274 = vunpack.c.h.b16 %v592
  %v3275 = vunpack.c.l.b16 %v593
  %v3276 = vunpack.c.h.b16 %v593
  %v3277 = vunpack.c.l.b16 %v594
  %v3278 = vunpack.c.h.b16 %v594
  %v3279 = vunpack.c.l.b16 %v595
  %v3280 = vunpack.c.h.b16 %v595
  %v3281 = vunpack.c.l.b16 %v596
  %v3282 = vunpack.c.h.b16 %v596
  %v3283 = vunpack.c.l.b16 %v597
  %v3284 = vunpack.c.h.b16 %v597
  %v3285 = vunpack.c.l.b16 %v598
  %v3286 = vunpack.c.h.b16 %v598
  %v3287 = vunpack.c.l.b16 %v599
  %v3288 = vunpack.c.h.b16 %v599
  %v3289 = vunpack.c.l.b16 %v600
  %v3290 = vunpack.c.h.b16 %v600
  %v3291 = vunpack.c.l.b16 %v601
  %v3292 = vunpack.c.h.b16 %v601
  %v3293 = vunpack.c.l.b16 %v602
  %v3294 = vunpack.c.h.b16 %v602
  %v3295 = vunpack.c.l.b16 %v603
  %v3296 = vunpack.c.h.b16 %v603
  %v3297 = vunpack.c.l.b16 %v604
  %v3298 = vunpack.c.h.b16 %v604
  %v3299 = vunpack.c.l.b16 %v605
  %v3300 = vunpack.c.h.b16 %v605
  %v3301 = vunpack.c.l.b16 %v606
  %v3302 = vunpack.c.h.b16 %v606
  %v3303 = vunpack.c.l.b16 %v607
  %v3304 = vunpack.c.h.b16 %v607
  %v3305 = vunpack.c.l.b16 %v608
  %v3306 = vunpack.c.h.b16 %v608
  %v3307 = vunpack.c.l.b16 %v609
  %v3308 = vunpack.c.h.b16 %v609
  %v3309 = vunpack.c.l.b16 %v610
  %v3310 = vunpack.c.h.b16 %v610
  %v3311 = vunpack.c.l.b16 %v611
  %v3312 = vunpack.c.h.b16 %v611
  %v3313 = vunpack.c.l.b16 %v612
  %v3314 = vunpack.c.h.b16 %v612
  %v3315 = vunpack.c.l.b16 %v613
  %v3316 = vunpack.c.h.b16 %v613
  %v3317 = vunpack.c.l.b16 %v614
  %v3318 = vunpack.c.h.b16 %v614
  %v3319 = vunpack.c.l.b16 %v615
  %v3320 = vunpack.c.h.b16 %v615
  %v3321 = vunpack.c.l.b16 %v616
  %v3322 = vunpack.c.h.b16 %v616
  %v3323 = vunpack.c.l.b16 %v617
  %v3324 = vunpack.c.h.b16 %v617
  %v3325 = vunpack.c.l.b16 %v618
  %v3326 = vunpack.c.h.b16 %v618
  %v3327 = vunpack.c.l.b16 %v619
  %v3328 = vunpack.c.h.b16 %v619
  %v3329 = vunpack.c.l.b16 %v620
  %v3330 = vunpack.c.h.b16 %v620
  %v3331 = vunpack.c.l.b16 %v621
  %v3332 = vunpack.c.h.b16 %v621
  %v3333 = vunpack.c.l.b16 %v622
  %v3334 = vunpack.c.h.b16 %v622
  %v3335 = vunpack.c.l.b16 %v623
  %v3336 = vunpack.c.h.b16 %v623
  %v3337 = vunpack.c.l.b16 %v624
  %v3338 = vunpack.c.h.b16 %v624
  %v3339 = vunpack.c.l.b16 %v625
  %v3340 = vunpack.c.h.b16 %v625
  %v3341 = vunpack.c.l.b16 %v626
  %v3342 = vunpack.c.h.b16 %v626
  %v3343 = vunpack.c.l.b16 %v627
  %v3344 = vunpack.c.h.b16 %v627
  %v3345 = vunpack.c.l.b16 %v628
  %v3346 = vunpack.c.h.b16 %v628
  %v3347 = vunpack.c.l.b16 %v629
  %v3348 = vunpack.c.h.b16 %v629
  %v3349 = vunpack.c.l.b16 %v630
  %v3350 = vunpack.c.h.b16 %v630
  %v3351 = vunpack.c.l.b16 %v631
  %v3352 = vunpack.c.h.b16 %v631
  %v3353 = vunpack.c.l.b16 %v632
  %v3354 = vunpack.c.h.b16 %v632
  %v3355 = vunpack.c.l.b16 %v633
  %v3356 = vunpack.c.h.b16 %v633
  %v3357 = vunpack.c.l.b16 %v634
  %v3358 = vunpack.c.h.b16 %v634
  %v3359 = vunpack.c.l.b16 %v635
  %v3360 = vunpack.c.h.b16 %v635
  %v3361 = vunpack.c.l.b16 %v636
  %v3362 = vunpack.c.h.b16 %v636
  %v3363 = vunpack.c.l.b16 %v637
  %v3364 = vunpack.c.h.b16 %v637
  %v3365 = vunpack.c.l.b16 %v638
  %v3366 = vunpack.c.h.b16 %v638
  %v3367 = vunpack.c.l.b16 %v639
  %v3368 = vunpack.c.h.b16 %v639
  %v3369 = vunpack.c.l.b16 %v640
  %v3370 = vunpack.c.h.b16 %v640
  %v3371 = vunpack.c.l.b16 %v641
  %v3372 = vunpack.c.h.b16 %v641
  %v3373 = vunpack.c.l.b16 %v642
  %v3374 = vunpack.c.h.b16 %v642
  %v3375 = vunpack.c.l.b16 %v643
  %v3376 = vunpack.c.h.b16 %v643
  %v3377 = vunpack.c.l.b16 %v644
  %v3378 = vunpack.c.h.b16 %v644
  %v3379 = vunpack.c.l.b16 %v645
  %v3380 = vunpack.c.h.b16 %v645
  %v3381 = vunpack.c.l.b16 %v646
  %v3382 = vunpack.c.h.b16 %v646
  %v3383 = vunpack.c.l.b16 %v647
  %v3384 = vunpack.c.h.b16 %v647
  %v3385 = vunpack.c.l.b16 %v648
  %v3386 = vunpack.c.h.b16 %v648
  %v3387 = vunpack.c.l.b16 %v649
  %v3388 = vunpack.c.h.b16 %v649
  %v3389 = vunpack.c.l.b16 %v650
  %v3390 = vunpack.c.h.b16 %v650
  %v3391 = vunpack.c.l.b16 %v651
  %v3392 = vunpack.c.h.b16 %v651
  %v3393 = vunpack.c.l.b16 %v652
  %v3394 = vunpack.c.h.b16 %v652
  %v3395 = vunpack.c.l.b16 %v653
  %v3396 = vunpack.c.h.b16 %v653
  %v3397 = vunpack.c.l.b16 %v654
  %v3398 = vunpack.c.h.b16 %v654
  %v3399 = vunpack.c.l.b16 %v655
  %v3400 = vunpack.c.h.b16 %v655
  %v3401 = vunpack.c.l.b16 %v656
  %v3402 = vunpack.c.h.b16 %v656
  %v3403 = vunpack.c.l.b16 %v657
  %v3404 = vunpack.c.h.b16 %v657
  %v3405 = vunpack.c.l.b16 %v658
  %v3406 = vunpack.c.h.b16 %v658
  %v3407 = vunpack.c.l.b16 %v659
  %v3408 = vunpack.c.h.b16 %v659
  %v3409 = vunpack.c.l.b16 %v660
  %v3410 = vunpack.c.h.b16 %v660
  %v3411 = vunpack.c.l.b16 %v661
  %v3412 = vunpack.c.h.b16 %v661
  %v3413 = vunpack.c.l.b16 %v662
  %v3414 = vunpack.c.h.b16 %v662
  %v3415 = vunpack.c.l.b16 %v663
  %v3416 = vunpack.c.h.b16 %v663
  %v3417 = vunpack.c.l.b16 %v664
  %v3418 = vunpack.c.h.b16 %v664
  %v3419 = vunpack.c.l.b16 %v665
  %v3420 = vunpack.c.h.b16 %v665
  %v3421 = vunpack.c.l.b16 %v666
  %v3422 = vunpack.c.h.b16 %v666
  %v3423 = vunpack.c.l.b16 %v667
  %v3424 = vunpack.c.h.b16 %v667
  %v3425 = vunpack.c.l.b16 %v668
  %v3426 = vunpack.c.h.b16 %v668
  %v3427 = vunpack.c.l.b16 %v669
  %v3428 = vunpack.c.h.b16 %v669
  %v3429 = vunpack.c.l.b16 %v670
  %v3430 = vunpack.c.h.b16 %v670
  %v3431 = vunpack.c.l.b16 %v671
  %v3432 = vunpack.c.h.b16 %v671
  %v3433 = vunpack.c.l.b16 %v672
  %v3434 = vunpack.c.h.b16 %v672
  %v3435 = vunpack.c.l.b16 %v673
  %v3436 = vunpack.c.h.b16 %v673
  %v3437 = vunpack.c.l.b16 %v674
  %v3438 = vunpack.c.h.b16 %v674
  %v3439 = vunpack.c.l.b16 %v675
  %v3440 = vunpack.c.h.b16 %v675
  %v3441 = vunpack.c.l.b16 %v676
  %v3442 = vunpack.c.h.b16 %v676
  %v3443 = vunpack.c.l.b16 %v677
  %v3444 = vunpack.c.h.b16 %v677
  %v3445 = vunpack.c.l.b16 %v678
  %v3446 = vunpack.c.h.b16 %v678
  %v3447 = vunpack.c.l.b16 %v679
  %v3448 = vunpack.c.h.b16 %v679
  %v3449 = vunpack.c.l.b16 %v680
  %v3450 = vunpack.c.h.b16 %v680
  %v3451 = vunpack.c.l.b16 %v681
  %v3452 = vunpack.c.h.b16 %v681
  %v3453 = vunpack.c.l.b16 %v682
  %v3454 = vunpack.c.h.b16 %v682
  %v3455 = vunpack.c.l.b16 %v683
  %v3456 = vunpack.c.h.b16 %v683
  %v3457 = vunpack.c.l.b16 %v684
  %v3458 = vunpack.c.h.b16 %v684
  %v3459 = vunpack.c.l.b16 %v685
  %v3460 = vunpack.c.h.b16 %v685
  %v3461 = vunpack.c.l.b16 %v686
  %v3462 = vunpack.c.h.b16 %v686
  %v3463 = vunpack.c.l.b16 %v687
  %v3464 = vunpack.c.h.b16 %v687
  %v3465 = vunpack.c.l.b16 %v688
  %v3466 = vunpack.c.h.b16 %v688
  %v3467 = vunpack.c.l.b16 %v689
  %v3468 = vunpack.c.h.b16 %v689
  %v3469 = vunpack.c.l.b16 %v690
  %v3470 = vunpack.c.h.b16 %v690
  %v3471 = vunpack.c.l.b16 %v691
  %v3472 = vunpack.c.h.b16 %v691
  %v3473 = vunpack.c.l.b16 %v692
  %v3474 = vunpack.c.h.b16 %v692
  %v3475 = vunpack.c.l.b16 %v693
  %v3476 = vunpack.c.h.b16 %v693
  %v3477 = vunpack.c.l.b16 %v694
  %v3478 = vunpack.c.h.b16 %v694
  %v3479 = vunpack.c.l.b16 %v695
  %v3480 = vunpack.c.h.b16 %v695
  %v3481 = vunpack.c.l.b16 %v696
  %v3482 = vunpack.c.h.b16 %v696
  %v3483 = vunpack.c.l.b16 %v697
  %v3484 = vunpack.c.h.b16 %v697
  %v3485 = vunpack.c.l.b16 %v698
  %v3486 = vunpack.c.h.b16 %v698
  %v3487 = vunpack.c.l.b16 %v699
  %v3488 = vunpack.c.h.b16 %v699
  %v3489 = vunpack.c.l.b16 %v700
  %v3490 = vunpack.c.h.b16 %v700
  %v3491 = vunpack.c.l.b16 %v701
  %v3492 = vunpack.c.h.b16 %v701
  %v3493 = vunpack.c.l.b16 %v702
  %v3494 = vunpack.c.h.b16 %v702
  %v3495 = vunpack.c.l.b16 %v703
  %v3496 = vunpack.c.h.b16 %v703
  %v3497 = vunpack.c.l.b16 %v704
  %v3498 = vunpack.c.h.b16 %v704
  %v3499 = vunpack.c.l.b16 %v705
  %v3500 = vunpack.c.h.b16 %v705
  %v3501 = vunpack.c.l.b16 %v706
  %v3502 = vunpack.c.h.b16 %v706
  %v3503 = vunpack.c.l.b16 %v707
  %v3504 = vunpack.c.h.b16 %v707
  %v3505 = vunpack.c.l.b16 %v708
  %v3506 = vunpack.c.h.b16 %v708
  %v3507 = vunpack.c.l.b16 %v709
  %v3508 = vunpack.c.h.b16 %v709
  %v3509 = vunpack.c.l.b16 %v710
  %v3510 = vunpack.c.h.b16 %v710
  %v3511 = vunpack.c.l.b16 %v711
  %v3512 = vunpack.c.h.b16 %v711
  %v3513 = vunpack.c.l.b16 %v712
  %v3514 = vunpack.c.h.b16 %v712
  %v3515 = vunpack.c.l.b16 %v713
  %v3516 = vunpack.c.h.b16 %v713
  %v3517 = vunpack.c.l.b16 %v714
  %v3518 = vunpack.c.h.b16 %v714
  %v3519 = vunpack.c.l.b16 %v715
  %v3520 = vunpack.c.h.b16 %v715
  %v3521 = vunpack.c.l.b16 %v716
  %v3522 = vunpack.c.h.b16 %v716
  %v3523 = vunpack.c.l.b16 %v717
  %v3524 = vunpack.c.h.b16 %v717
  %v3525 = vunpack.c.l.b16 %v718
  %v3526 = vunpack.c.h.b16 %v718
  %v3527 = vunpack.c.l.b16 %v719
  %v3528 = vunpack.c.h.b16 %v719
  %v3529 = vunpack.c.l.b16 %v720
  %v3530 = vunpack.c.h.b16 %v720
  %v3531 = vunpack.c.l.b16 %v721
  %v3532 = vunpack.c.h.b16 %v721
  %v3533 = vunpack.c.l.b16 %v722
  %v3534 = vunpack.c.h.b16 %v722
  %v3535 = vunpack.c.l.b16 %v723
  %v3536 = vunpack.c.h.b16 %v723
  %v3537 = vunpack.c.l.b16 %v724
  %v3538 = vunpack.c.h.b16 %v724
  %v3539 = vunpack.c.l.b16 %v725
  %v3540 = vunpack.c.h.b16 %v725
  %v3541 = vunpack.c.l.b16 %v726
  %v3542 = vunpack.c.h.b16 %v726
  %v3543 = vunpack.c.l.b16 %v727
  %v3544 = vunpack.c.h.b16 %v727
  %v3545 = vunpack.c.l.b16 %v728
  %v3546 = vunpack.c.h.b16 %v728
  %v3547 = vunpack.c.l.b16 %v729
  %v3548 = vunpack.c.h.b16 %v729
  %v3549 = vunpack.c.l.b16 %v730
  %v3550 = vunpack.c.h.b16 %v730
  %v3551 = vunpack.c.l.b16 %v731
  %v3552 = vunpack.c.h.b16 %v731
  %v3553 = vunpack.c.l.b16 %v732
  %v3554 = vunpack.c.h.b16 %v732
  %v3555 = vunpack.c.l.b16 %v733
  %v3556 = vunpack.c.h.b16 %v733
  %v3557 = vunpack.c.l.b16 %v734
  %v3558 = vunpack.c.h.b16 %v734
  %v3559 = vunpack.c.l.b16 %v735
  %v3560 = vunpack.c.h.b16 %v735
  %v3561 = vunpack.c.l.b16 %v736
  %v3562 = vunpack.c.h.b16 %v736
  %v3563 = vunpack.c.l.b16 %v737
  %v3564 = vunpack.c.h.b16 %v737
  %v3565 = vunpack.c.l.b16 %v738
  %v3566 = vunpack.c.h.b16 %v738
  %v3567 = vunpack.c.l.b16 %v739
  %v3568 = vunpack.c.h.b16 %v739
  %v3569 = vunpack.c.l.b16 %v740
  %v3570 = vunpack.c.h.b16 %v740
  %v3571 = vunpack.c.l.b16 %v741
  %v3572 = vunpack.c.h.b16 %v741
  %v3573 = vunpack.c.l.b16 %v742
  %v3574 = vunpack.c.h.b16 %v742
  %v3575 = vunpack.c.l.b16 %v743
  %v3576 = vunpack.c.h.b16 %v743
  %v3577 = vunpack.c.l.b16 %v744
  %v3578 = vunpack.c.h.b16 %v744
  %v3579 = vunpack.c.l.b16 %v745
  %v3580 = vunpack.c.h.b16 %v745
  %v3581 = vunpack.c.l.b16 %v746
  %v3582 = vunpack.c.h.b16 %v746
  %v3583 = vunpack.c.l.b16 %v747
  %v3584 = vunpack.c.h.b16 %v747
  %v3585 = vunpack.c.l.b16 %v748
  %v3586 = vunpack.c.h.b16 %v748
  %v3587 = vunpack.c.l.b16 %v749
  %v3588 = vunpack.c.h.b16 %v749
  %v3589 = vunpack.c.l.b16 %v750
  %v3590 = vunpack.c.h.b16 %v750
  %v3591 = vunpack.c.l.b16 %v751
  %v3592 = vunpack.c.h.b16 %v751
  %v3593 = vunpack.c.l.b16 %v752
  %v3594 = vunpack.c.h.b16 %v752
  %v3595 = vunpack.c.l.b16 %v753
  %v3596 = vunpack.c.h.b16 %v753
  %v3597 = vunpack.c.l.b16 %v754
  %v3598 = vunpack.c.h.b16 %v754
  %v3599 = vunpack.c.l.b16 %v755
  %v3600 = vunpack.c.h.b16 %v755
  %v3601 = vunpack.c.l.b16 %v756
  %v3602 = vunpack.c.h.b16 %v756
  %v3603 = vunpack.c.l.b16 %v757
  %v3604 = vunpack.c.h.b16 %v757
  %v3605 = vunpack.c.l.b16 %v758
  %v3606 = vunpack.c.h.b16 %v758
  %v3607 = vunpack.c.l.b16 %v759
  %v3608 = vunpack.c.h.b16 %v759
  %v3609 = vunpack.c.l.b16 %v760
  %v3610 = vunpack.c.h.b16 %v760
  %v3611 = vunpack.c.l.b16 %v761
  %v3612 = vunpack.c.h.b16 %v761
  %v3613 = vunpack.c.l.b16 %v762
  %v3614 = vunpack.c.h.b16 %v762
  %v3615 = vunpack.c.l.b16 %v763
  %v3616 = vunpack.c.h.b16 %v763
  %v3617 = vunpack.c.l.b16 %v764
  %v3618 = vunpack.c.h.b16 %v764
  %v3619 = vunpack.c.l.b16 %v765
  %v3620 = vunpack.c.h.b16 %v765
  %v3621 = vunpack.c.l.b16 %v766
  %v3622 = vunpack.c.h.b16 %v766
  %v3623 = vunpack.c.l.b16 %v767
  %v3624 = vunpack.c.h.b16 %v767
  %v3625 = vunpack.c.l.b16 %v768
  %v3626 = vunpack.c.h.b16 %v768
  %v3627 = vunpack.c.l.b16 %v769
  %v3628 = vunpack.c.h.b16 %v769
  %v3629 = vunpack.c.l.b16 %v770
  %v3630 = vunpack.c.h.b16 %v770
  %v3631 = vunpack.c.l.b16 %v771
  %v3632 = vunpack.c.h.b16 %v771
  %v3633 = vunpack.c.l.b16 %v772
  %v3634 = vunpack.c.h.b16 %v772
  %v3635 = vunpack.c.l.b16 %v773
  %v3636 = vunpack.c.h.b16 %v773
  %v3637 = vunpack.c.l.b16 %v774
  %v3638 = vunpack.c.h.b16 %v774
  %v3639 = vunpack.c.l.b16 %v775
  %v3640 = vunpack.c.h.b16 %v775
  %v3641 = vunpack.c.l.b16 %v776
  %v3642 = vunpack.c.h.b16 %v776
  %v3643 = vunpack.c.l.b16 %v777
  %v3644 = vunpack.c.h.b16 %v777
  %v3645 = vunpack.c.l.b16 %v778
  %v3646 = vunpack.c.h.b16 %v778
  %v3647 = vunpack.c.l.b16 %v779
  %v3648 = vunpack.c.h.b16 %v779
  %v3649 = vunpack.c.l.b16 %v780
  %v3650 = vunpack.c.h.b16 %v780
  %v3651 = vunpack.c.l.b16 %v781
  %v3652 = vunpack.c.h.b16 %v781
  %v3653 = vunpack.c.l.b16 %v782
  %v3654 = vunpack.c.h.b16 %v782
  %v3655 = vunpack.c.l.b16 %v783
  %v3656 = vunpack.c.h.b16 %v783
  %v3657 = vunpack.c.l.b16 %v784
  %v3658 = vunpack.c.h.b16 %v784
  %v3659 = vunpack.c.l.b16 %v785
  %v3660 = vunpack.c.h.b16 %v785
  %v3661 = vunpack.c.l.b16 %v786
  %v3662 = vunpack.c.h.b16 %v786
  %v3663 = vunpack.c.l.b16 %v787
  %v3664 = vunpack.c.h.b16 %v787
  %v3665 = vunpack.c.l.b16 %v788
  %v3666 = vunpack.c.h.b16 %v788
  %v3667 = vunpack.c.l.b16 %v789
  %v3668 = vunpack.c.h.b16 %v789
  %v3669 = vunpack.c.l.b16 %v790
  %v3670 = vunpack.c.h.b16 %v790
  %v3671 = vunpack.c.l.b16 %v791
  %v3672 = vunpack.c.h.b16 %v791
  %v3673 = vunpack.c.l.b16 %v792
  %v3674 = vunpack.c.h.b16 %v792
  %v3675 = vunpack.c.l.b16 %v793
  %v3676 = vunpack.c.h.b16 %v793
  %v3677 = vunpack.c.l.b16 %v794
  %v3678 = vunpack.c.h.b16 %v794
  %v3679 = vunpack.c.l.b16 %v795
  %v3680 = vunpack.c.h.b16 %v795
  %v3681 = vunpack.c.l.b16 %v796
  %v3682 = vunpack.c.h.b16 %v796
  %v3683 = vunpack.c.l.b16 %v797
  %v3684 = vunpack.c.h.b16 %v797
  %v3685 = vunpack.c.l.b16 %v798
  %v3686 = vunpack.c.h.b16 %v798
  %v3687 = vunpack.c.l.b16 %v799
  %v3688 = vunpack.c.h.b16 %v799
  %v3689 = vunpack.c.l.b16 %v800
  %v3690 = vunpack.c.h.b16 %v800
  %v3691 = vunpack.c.l.b16 %v801
  %v3692 = vunpack.c.h.b16 %v801
  %v3693 = vunpack.c.l.b16 %v802
  %v3694 = vunpack.c.h.b16 %v802
  %v3695 = vunpack.c.l.b16 %v803
  %v3696 = vunpack.c.h.b16 %v803
  %v3697 = vunpack.c.l.b16 %v804
  %v3698 = vunpack.c.h.b16 %v804
  %v3699 = vunpack.c.l.b16 %v805
  %v3700 = vunpack.c.h.b16 %v805
  %v3701 = vunpack.c.l.b16 %v806
  %v3702 = vunpack.c.h.b16 %v806
  %v3703 = vunpack.c.l.b16 %v807
  %v3704 = vunpack.c.h.b16 %v807
  %v3705 = vunpack.c.l.b16 %v808
  %v3706 = vunpack.c.h.b16 %v808
  %v3707 = vunpack.c.l.b16 %v809
  %v3708 = vunpack.c.h.b16 %v809
  %v3709 = vunpack.c.l.b16 %v810
  %v3710 = vunpack.c.h.b16 %v810
  %v3711 = vunpack.c.l.b16 %v811
  %v3712 = vunpack.c.h.b16 %v811
  %v3713 = vunpack.c.l.b16 %v812
  %v3714 = vunpack.c.h.b16 %v812
  %v3715 = vunpack.c.l.b16 %v813
  %v3716 = vunpack.c.h.b16 %v813
  %v3717 = vunpack.c.l.b16 %v814
  %v3718 = vunpack.c.h.b16 %v814
  %v3719 = vunpack.c.l.b16 %v815
  %v3720 = vunpack.c.h.b16 %v815
  %v3721 = vunpack.c.l.b16 %v816
  %v3722 = vunpack.c.h.b16 %v816
  %v3723 = vunpack.c.l.b16 %v817
  %v3724 = vunpack.c.h.b16 %v817
  %v3725 = vunpack.c.l.b16 %v818
  %v3726 = vunpack.c.h.b16 %v818
  %v3727 = vunpack.c.l.b16 %v819
  %v3728 = vunpack.c.h.b16 %v819
  %v3729 = vunpack.c.l.b16 %v820
  %v3730 = vunpack.c.h.b16 %v820
  %v3731 = vunpack.c.l.b16 %v821
  %v3732 = vunpack.c.h.b16 %v821
  %v3733 = vunpack.c.l.b16 %v822
  %v3734 = vunpack.c.h.b16 %v822
  %v3735 = vunpack.c.l.b16 %v823
  %v3736 = vunpack.c.h.b16 %v823
  %v3737 = vunpack.c.l.b16 %v824
  %v3738 = vunpack.c.h.b16 %v824
  %v3739 = vunpack.c.l.b16 %v825
  %v3740 = vunpack.c.h.b16 %v825
  %v3741 = vunpack.c.l.b16 %v826
  %v3742 = vunpack.c.h.b16 %v826
  %v3743 = vunpack.c.l.b16 %v827
  %v3744 = vunpack.c.h.b16 %v827
  %v3745 = vunpack.c.l.b16 %v828
  %v3746 = vunpack.c.h.b16 %v828
  %v3747 = vunpack.c.l.b16 %v829
  %v3748 = vunpack.c.h.b16 %v829
  %v3749 = vunpack.c.l.b16 %v830
  %v3750 = vunpack.c.h.b16 %v830
  %v3751 = vunpack.c.l.b16 %v831
  %v3752 = vunpack.c.h.b16 %v831
  %v3753 = vunpack.c.l.b16 %v832
  %v3754 = vunpack.c.h.b16 %v832
  %v3755 = vunpack.c.l.b16 %v833
  %v3756 = vunpack.c.h.b16 %v833
  %v3757 = vunpack.c.l.b16 %v834
  %v3758 = vunpack.c.h.b16 %v834
  %v3759 = vunpack.c.l.b16 %v835
  %v3760 = vunpack.c.h.b16 %v835
  %v3761 = vunpack.c.l.b16 %v836
  %v3762 = vunpack.c.h.b16 %v836
  %v3763 = vunpack.c.l.b16 %v837
  %v3764 = vunpack.c.h.b16 %v837
  %v3765 = vunpack.c.l.b16 %v838
  %v3766 = vunpack.c.h.b16 %v838
  %v3767 = vunpack.c.l.b16 %v839
  %v3768 = vunpack.c.h.b16 %v839
  %v3769 = vunpack.c.l.b16 %v840
  %v3770 = vunpack.c.h.b16 %v840
  %v3771 = vunpack.c.l.b16 %v841
  %v3772 = vunpack.c.h.b16 %v841
  %v3773 = vunpack.c.l.b16 %v842
  %v3774 = vunpack.c.h.b16 %v842
  %v3775 = vunpack.c.l.b16 %v843
  %v3776 = vunpack.c.h.b16 %v843
  %v3777 = vunpack.c.l.b16 %v844
  %v3778 = vunpack.c.h.b16 %v844
  %v3779 = vunpack.c.l.b16 %v845
  %v3780 = vunpack.c.h.b16 %v845
  %v3781 = vunpack.c.l.b16 %v846
  %v3782 = vunpack.c.h.b16 %v846
  %v3783 = vunpack.c.l.b16 %v847
  %v3784 = vunpack.c.h.b16 %v847
  %v3785 = vunpack.c.l.b16 %v848
  %v3786 = vunpack.c.h.b16 %v848
  %v3787 = vunpack.c.l.b16 %v849
  %v3788 = vunpack.c.h.b16 %v849
  %v3789 = vunpack.c.l.b16 %v850
  %v3790 = vunpack.c.h.b16 %v850
  %v3791 = vunpack.c.l.b16 %v851
  %v3792 = vunpack.c.h.b16 %v851
  %v3793 = vunpack.c.l.b16 %v852
  %v3794 = vunpack.c.h.b16 %v852
  %v3795 = vunpack.c.l.b16 %v853
  %v3796 = vunpack.c.h.b16 %v853
  %v3797 = vunpack.c.l.b16 %v854
  %v3798 = vunpack.c.h.b16 %v854
  %v3799 = vunpack.c.l.b16 %v855
  %v3800 = vunpack.c.h.b16 %v855
  %v3801 = vunpack.c.l.b16 %v856
  %v3802 = vunpack.c.h.b16 %v856
  %v3803 = vunpack.c.l.b16 %v857
  %v3804 = vunpack.c.h.b16 %v857
  %v3805 = vunpack.c.l.b16 %v858
  %v3806 = vunpack.c.h.b16 %v858
  %v3807 = vunpack.c.l.b16 %v859
  %v3808 = vunpack.c.h.b16 %v859
  %v3809 = vunpack.c.l.b16 %v860
  %v3810 = vunpack.c.h.b16 %v860
  %v3811 = vunpack.c.l.b16 %v861
  %v3812 = vunpack.c.h.b16 %v861
  %v3813 = vunpack.c.l.b16 %v862
  %v3814 = vunpack.c.h.b16 %v862
  %v3815 = vunpack.c.l.b16 %v863
  %v3816 = vunpack.c.h.b16 %v863
  %v3817 = vunpack.c.l.b16 %v864
  %v3818 = vunpack.c.h.b16 %v864
  %v3819 = vunpack.c.l.b16 %v865
  %v3820 = vunpack.c.h.b16 %v865
  %v3821 = vunpack.c.l.b16 %v866
  %v3822 = vunpack.c.h.b16 %v866
  %v3823 = vunpack.c.l.b16 %v867
  %v3824 = vunpack.c.h.b16 %v867
  %v3825 = vunpack.c.l.b16 %v868
  %v3826 = vunpack.c.h.b16 %v868
  %v3827 = vunpack.c.l.b16 %v869
  %v3828 = vunpack.c.h.b16 %v869
  %v3829 = vunpack.c.l.b16 %v870
  %v3830 = vunpack.c.h.b16 %v870
  %v3831 = vunpack.c.l.b16 %v871
  %v3832 = vunpack.c.h.b16 %v871
  %v3833 = vunpack.c.l.b16 %v872
  %v3834 = vunpack.c.h.b16 %v872
  %v3835 = vunpack.c.l.b16 %v873
  %v3836 = vunpack.c.h.b16 %v873
  %v3837 = vunpack.c.l.b16 %v874
  %v3838 = vunpack.c.h.b16 %v874
  %v3839 = vunpack.c.l.b16 %v875
  %v3840 = vunpack.c.h.b16 %v875
  %v3841 = vunpack.c.l.b16 %v876
  %v3842 = vunpack.c.h.b16 %v876
  %v3843 = vunpack.c.l.b16 %v877
  %v3844 = vunpack.c.h.b16 %v877
  %v3845 = vunpack.c.l.b16 %v878
  %v3846 = vunpack.c.h.b16 %v878
  %v3847 = vunpack.c.l.b16 %v879
  %v3848 = vunpack.c.h.b16 %v879
  %v3849 = vunpack.c.l.b16 %v880
  %v3850 = vunpack.c.h.b16 %v880
  %v3851 = vunpack.c.l.b16 %v881
  %v3852 = vunpack.c.h.b16 %v881
  %v3853 = vunpack.c.l.b16 %v882
  %v3854 = vunpack.c.h.b16 %v882
  %v3855 = vunpack.c.l.b16 %v883
  %v3856 = vunpack.c.h.b16 %v883
  %v3857 = vunpack.c.l.b16 %v884
  %v3858 = vunpack.c.h.b16 %v884
  %v3859 = vunpack.c.l.b16 %v885
  %v3860 = vunpack.c.h.b16 %v885
  %v3861 = vunpack.c.l.b16 %v886
  %v3862 = vunpack.c.h.b16 %v886
  %v3863 = vunpack.c.l.b16 %v887
  %v3864 = vunpack.c.h.b16 %v887
  %v3865 = vunpack.c.l.b16 %v888
  %v3866 = vunpack.c.h.b16 %v888
  %v3867 = vunpack.c.l.b16 %v889
  %v3868 = vunpack.c.h.b16 %v889
  %v3869 = vunpack.c.l.b16 %v890
  %v3870 = vunpack.c.h.b16 %v890
  %v3871 = vunpack.c.l.b16 %v891
  %v3872 = vunpack.c.h.b16 %v891
  %v3873 = vunpack.c.l.b16 %v892
  %v3874 = vunpack.c.h.b16 %v892
  %v3875 = vunpack.c.l.b16 %v893
  %v3876 = vunpack.c.h.b16 %v893
  %v3877 = vunpack.c.l.b16 %v894
  %v3878 = vunpack.c.h.b16 %v894
  %v3879 = vunpack.c.l.b16 %v895
  %v3880 = vunpack.c.h.b16 %v895
  %v3881 = vunpack.c.l.b16 %v896
  %v3882 = vunpack.c.h.b16 %v896
  %v3883 = vunpack.c.l.b16 %v897
  %v3884 = vunpack.c.h.b16 %v897
  %v3885 = vunpack.c.l.b16 %v898
  %v3886 = vunpack.c.h.b16 %v898
  %v3887 = vunpack.c.l.b16 %v899
  %v3888 = vunpack.c.h.b16 %v899
  %v3889 = vunpack.c.l.b16 %v900
  %v3890 = vunpack.c.h.b16 %v900
  %v3891 = vunpack.c.l.b16 %v901
  %v3892 = vunpack.c.h.b16 %v901
  %v3893 = vunpack.c.l.b16 %v902
  %v3894 = vunpack.c.h.b16 %v902
  %v3895 = vunpack.c.l.b16 %v903
  %v3896 = vunpack.c.h.b16 %v903
  %v3897 = vunpack.c.l.b16 %v904
  %v3898 = vunpack.c.h.b16 %v904
  %v3899 = vunpack.c.l.b16 %v905
  %v3900 = vunpack.c.h.b16 %v905
  %v3901 = vunpack.c.l.b16 %v906
  %v3902 = vunpack.c.h.b16 %v906
  %v3903 = vunpack.c.l.b16 %v907
  %v3904 = vunpack.c.h.b16 %v907
  %v3905 = vunpack.c.l.b16 %v908
  %v3906 = vunpack.c.h.b16 %v908
  %v3907 = vunpack.c.l.b16 %v909
  %v3908 = vunpack.c.h.b16 %v909
  %v3909 = vunpack.c.l.b16 %v910
  %v3910 = vunpack.c.h.b16 %v910
  %v3911 = vunpack.c.l.b16 %v911
  %v3912 = vunpack.c.h.b16 %v911
  %v3913 = vunpack.c.l.b16 %v912
  %v3914 = vunpack.c.h.b16 %v912
  %v3915 = vunpack.c.l.b16 %v913
  %v3916 = vunpack.c.h.b16 %v913
  %v3917 = vunpack.c.l.b16 %v914
  %v3918 = vunpack.c.h.b16 %v914
  %v3919 = vunpack.c.l.b16 %v915
  %v3920 = vunpack.c.h.b16 %v915
  %v3921 = vunpack.c.l.b16 %v916
  %v3922 = vunpack.c.h.b16 %v916
  %v3923 = vunpack.c.l.b16 %v917
  %v3924 = vunpack.c.h.b16 %v917
  %v3925 = vunpack.c.l.b16 %v918
  %v3926 = vunpack.c.h.b16 %v918
  %v3927 = vunpack.c.l.b16 %v919
  %v3928 = vunpack.c.h.b16 %v919
  %v3929 = vunpack.c.l.b16 %v920
  %v3930 = vunpack.c.h.b16 %v920
  %v3931 = vunpack.c.l.b16 %v921
  %v3932 = vunpack.c.h.b16 %v921
  %v3933 = vunpack.c.l.b16 %v922
  %v3934 = vunpack.c.h.b16 %v922
  %v3935 = vunpack.c.l.b16 %v923
  %v3936 = vunpack.c.h.b16 %v923
  %v3937 = vunpack.c.l.b16 %v924
  %v3938 = vunpack.c.h.b16 %v924
  %v3939 = vunpack.c.l.b16 %v925
  %v3940 = vunpack.c.h.b16 %v925
  %v3941 = vunpack.c.l.b16 %v926
  %v3942 = vunpack.c.h.b16 %v926
  %v3943 = vunpack.c.l.b16 %v927
  %v3944 = vunpack.c.h.b16 %v927
  %v3945 = vunpack.c.l.b16 %v928
  %v3946 = vunpack.c.h.b16 %v928
  %v3947 = vunpack.c.l.b16 %v929
  %v3948 = vunpack.c.h.b16 %v929
  %v3949 = vunpack.c.l.b16 %v930
  %v3950 = vunpack.c.h.b16 %v930
  %v3951 = vunpack.c.l.b16 %v931
  %v3952 = vunpack.c.h.b16 %v931
  %v3953 = vunpack.c.l.b16 %v932
  %v3954 = vunpack.c.h.b16 %v932
  %v3955 = vunpack.c.l.b16 %v933
  %v3956 = vunpack.c.h.b16 %v933
  %v3957 = vunpack.c.l.b16 %v934
  %v3958 = vunpack.c.h.b16 %v934
  %v3959 = vunpack.c.l.b16 %v935
  %v3960 = vunpack.c.h.b16 %v935
  %v3961 = vunpack.c.l.b16 %v936
  %v3962 = vunpack.c.h.b16 %v936
  %v3963 = vunpack.c.l.b16 %v937
  %v3964 = vunpack.c.h.b16 %v937
  %v3965 = vunpack.c.l.b16 %v938
  %v3966 = vunpack.c.h.b16 %v938
  %v3967 = vunpack.c.l.b16 %v939
  %v3968 = vunpack.c.h.b16 %v939
  %v3969 = vunpack.c.l.b16 %v940
  %v3970 = vunpack.c.h.b16 %v940
  %v3971 = vunpack.c.l.b16 %v941
  %v3972 = vunpack.c.h.b16 %v941
  %v3973 = vunpack.c.l.b16 %v942
  %v3974 = vunpack.c.h.b16 %v942
  %v3975 = vunpack.c.l.b16 %v943
  %v3976 = vunpack.c.h.b16 %v943
  %v3977 = vunpack.c.l.b16 %v944
  %v3978 = vunpack.c.h.b16 %v944
  %v3979 = vunpack.c.l.b16 %v945
  %v3980 = vunpack.c.h.b16 %v945
  %v3981 = vunpack.c.l.b16 %v946
  %v3982 = vunpack.c.h.b16 %v946
  %v3983 = vunpack.c.l.b16 %v947
  %v3984 = vunpack.c.h.b16 %v947
  %v3985 = vunpack.c.l.b16 %v948
  %v3986 = vunpack.c.h.b16 %v948
  %v3987 = vunpack.c.l.b16 %v949
  %v3988 = vunpack.c.h.b16 %v949
  %v3989 = vunpack.c.l.b16 %v950
  %v3990 = vunpack.c.h.b16 %v950
  %v3991 = vunpack.c.l.b16 %v951
  %v3992 = vunpack.c.h.b16 %v951
  %v3993 = vunpack.c.l.b16 %v952
  %v3994 = vunpack.c.h.b16 %v952
  %v3995 = vunpack.c.l.b16 %v953
  %v3996 = vunpack.c.h.b16 %v953
  %v3997 = vunpack.c.l.b16 %v954
  %v3998 = vunpack.c.h.b16 %v954
  %v3999 = vunpack.c.l.b16 %v955
  %v4000 = vunpack.c.h.b16 %v955
  %v4001 = vunpack.c.l.b16 %v956
  %v4002 = vunpack.c.h.b16 %v956
  %v4003 = vunpack.c.l.b16 %v957
  %v4004 = vunpack.c.h.b16 %v957
  %v4005 = vunpack.c.l.b16 %v958
  %v4006 = vunpack.c.h.b16 %v958
  %v4007 = vunpack.c.l.b16 %v959
  %v4008 = vunpack.c.h.b16 %v959
  %v4009 = vunpack.c.l.b16 %v960
  %v4010 = vunpack.c.h.b16 %v960
  %v4011 = vunpack.c.l.b16 %v961
  %v4012 = vunpack.c.h.b16 %v961
  %v4013 = vunpack.c.l.b16 %v962
  %v4014 = vunpack.c.h.b16 %v962
  %v4015 = vunpack.c.l.b16 %v963
  %v4016 = vunpack.c.h.b16 %v963
  %v4017 = vunpack.c.l.b16 %v964
  %v4018 = vunpack.c.h.b16 %v964
  %v4019 = vunpack.c.l.b16 %v965
  %v4020 = vunpack.c.h.b16 %v965
  %v4021 = vunpack.c.l.b16 %v966
  %v4022 = vunpack.c.h.b16 %v966
  %v4023 = vunpack.c.l.b16 %v967
  %v4024 = vunpack.c.h.b16 %v967
  %v4025 = vunpack.c.l.b16 %v968
  %v4026 = vunpack.c.h.b16 %v968
  %v4027 = vunpack.c.l.b16 %v969
  %v4028 = vunpack.c.h.b16 %v969
  %v4029 = vunpack.c.l.b16 %v970
  %v4030 = vunpack.c.h.b16 %v970
  %v4031 = vunpack.c.l.b16 %v971
  %v4032 = vunpack.c.h.b16 %v971
  %v4033 = vunpack.c.l.b16 %v972
  %v4034 = vunpack.c.h.b16 %v972
  %v4035 = vunpack.c.l.b16 %v973
  %v4036 = vunpack.c.h.b16 %v973
  %v4037 = vunpack.c.l.b16 %v974
  %v4038 = vunpack.c.h.b16 %v974
  %v4039 = vunpack.c.l.b16 %v975
  %v4040 = vunpack.c.h.b16 %v975
  %v4041 = vunpack.c.l.b16 %v976
  %v4042 = vunpack.c.h.b16 %v976
  %v4043 = vunpack.c.l.b16 %v977
  %v4044 = vunpack.c.h.b16 %v977
  %v4045 = vunpack.c.l.b16 %v978
  %v4046 = vunpack.c.h.b16 %v978
  %v4047 = vunpack.c.l.b16 %v979
  %v4048 = vunpack.c.h.b16 %v979
  %v4049 = vunpack.c.l.b16 %v980
  %v4050 = vunpack.c.h.b16 %v980
  %v4051 = vunpack.c.l.b16 %v981
  %v4052 = vunpack.c.h.b16 %v981
  %v4053 = vunpack.c.l.b16 %v982
  %v4054 = vunpack.c.h.b16 %v982
  %v4055 = vunpack.c.l.b16 %v983
  %v4056 = vunpack.c.h.b16 %v983
  %v4057 = vunpack.c.l.b16 %v984
  %v4058 = vunpack.c.h.b16 %v984
  %v4059 = vunpack.c.l.b16 %v985
  %v4060 = vunpack.c.h.b16 %v985
  %v4061 = vunpack.c.l.b16 %v986
  %v4062 = vunpack.c.h.b16 %v986
  %v4063 = vunpack.c.l.b16 %v987
  %v4064 = vunpack.c.h.b16 %v987
  %v4065 = vunpack.c.l.b16 %v988
  %v4066 = vunpack.c.h.b16 %v988
  %v4067 = vunpack.c.l.b16 %v989
  %v4068 = vunpack.c.h.b16 %v989
  %v4069 = vunpack.c.l.b16 %v990
  %v4070 = vunpack.c.h.b16 %v990
  %v4071 = vunpack.c.l.b16 %v991
  %v4072 = vunpack.c.h.b16 %v991
  %v4073 = vunpack.c.l.b16 %v992
  %v4074 = vunpack.c.h.b16 %v992
  %v4075 = vunpack.c.l.b16 %v993
  %v4076 = vunpack.c.h.b16 %v993
  %v4077 = vunpack.c.l.b16 %v994
  %v4078 = vunpack.c.h.b16 %v994
  %v4079 = vunpack.c.l.b16 %v995
  %v4080 = vunpack.c.h.b16 %v995
  %v4081 = vunpack.c.l.b16 %v996
  %v4082 = vunpack.c.h.b16 %v996
  %v4083 = vunpack.c.l.b16 %v997
  %v4084 = vunpack.c.h.b16 %v997
  %v4085 = vunpack.c.l.b16 %v998
  %v4086 = vunpack.c.h.b16 %v998
  %v4087 = vunpack.c.l.b16 %v999
  %v4088 = vunpack.c.h.b16 %v999
  %v4089 = vunpack.c.l.b16 %v1000
  %v4090 = vunpack.c.h.b16 %v1000
  %v4091 = vunpack.c.l.b16 %v1001
  %v4092 = vunpack.c.h.b16 %v1001
  %v4093 = vunpack.c.l.b16 %v1002
  %v4094 = vunpack.c.h.b16 %v1002
  %v4095 = vunpack.c.l.b16 %v1003
  %v4096 = vunpack.c.h.b16 %v1003
  %v4097 = vunpack.c.l.b16 %v1004
  %v4098 = vunpack.c.h.b16 %v1004
  %v4099 = vunpack.c.l.b16 %v1005
  %v4100 = vunpack.c.h.b16 %v1005
  %v4101 = vunpack.c.l.b16 %v1006
  %v4102 = vunpack.c.h.b16 %v1006
  %v4103 = vunpack.c.l.b16 %v1007
  %v4104 = vunpack.c.h.b16 %v1007
  %v4105 = vunpack.c.l.b16 %v1008
  %v4106 = vunpack.c.h.b16 %v1008
  %v4107 = vunpack.c.l.b16 %v1009
  %v4108 = vunpack.c.h.b16 %v1009
  %v4109 = vunpack.c.l.b16 %v1010
  %v4110 = vunpack.c.h.b16 %v1010
  %v4111 = vunpack.c.l.b16 %v1011
  %v4112 = vunpack.c.h.b16 %v1011
  %v4113 = vunpack.c.l.b16 %v1012
  %v4114 = vunpack.c.h.b16 %v1012
  %v4115 = vunpack.c.l.b16 %v1013
  %v4116 = vunpack.c.h.b16 %v1013
  %v4117 = vunpack.c.l.b16 %v1014
  %v4118 = vunpack.c.h.b16 %v1014
  %v4119 = vunpack.c.l.b16 %v1015
  %v4120 = vunpack.c.h.b16 %v1015
  %v4121 = vunpack.c.l.b16 %v1016
  %v4122 = vunpack.c.h.b16 %v1016
  %v4123 = vunpack.c.l.b16 %v1017
  %v4124 = vunpack.c.h.b16 %v1017
  %v4125 = vunpack.c.l.b16 %v1018
  %v4126 = vunpack.c.h.b16 %v1018
  %v4127 = vunpack.c.l.b16 %v1019
  %v4128 = vunpack.c.h.b16 %v1019
  %v4129 = vunpack.c.l.b16 %v1020
  %v4130 = vunpack.c.h.b16 %v1020
  %v4131 = vunpack.c.l.b16 %v1021
  %v4132 = vunpack.c.h.b16 %v1021
  %v4133 = vunpack.c.l.b16 %v1022
  %v4134 = vunpack.c.h.b16 %v1022
  %v4135 = vunpack.c.l.b16 %v1023
  %v4136 = vunpack.c.h.b16 %v1023
  %v4137 = vunpack.c.l.b16 %v1024
  %v4138 = vunpack.c.h.b16 %v1024
  %v4139 = vunpack.c.l.b16 %v1025
  %v4140 = vunpack.c.h.b16 %v1025
  %v4141 = vunpack.c.l.b16 %v1026
  %v4142 = vunpack.c.h.b16 %v1026
  %v4143 = vunpack.c.l.b16 %v1027
  %v4144 = vunpack.c.h.b16 %v1027
  %v4145 = vunpack.c.l.b16 %v1028
  %v4146 = vunpack.c.h.b16 %v1028
  %v4147 = vunpack.c.l.b16 %v1029
  %v4148 = vunpack.c.h.b16 %v1029
  %v4149 = vunpack.c.l.b16 %v1030
  %v4150 = vunpack.c.h.b16 %v1030
  %v4151 = vunpack.c.l.b16 %v1031
  %v4152 = vunpack.c.h.b16 %v1031
  %v4153 = vunpack.c.l.b16 %v1032
  %v4154 = vunpack.c.h.b16 %v1032
  %v4155 = vunpack.c.l.b16 %v1033
  %v4156 = vunpack.c.h.b16 %v1033
  %v4157 = vunpack.c.l.b16 %v1034
  %v4158 = vunpack.c.h.b16 %v1034
  %v4159 = vunpack.c.l.b16 %v1035
  %v4160 = vunpack.c.h.b16 %v1035
  %v4161 = vunpack.c.l.b16 %v1036
  %v4162 = vunpack.c.h.b16 %v1036
  %v4163 = vunpack.c.l.b16 %v1037
  %v4164 = vunpack.c.h.b16 %v1037
  %v4165 = vunpack.c.l.b16 %v1038
  %v4166 = vunpack.c.h.b16 %v1038
  %v4167 = vunpack.c.l.b16 %v1039
  %v4168 = vunpack.c.h.b16 %v1039
  %v4169 = vunpack.c.l.b16 %v1040
  %v4170 = vunpack.c.h.b16 %v1040
  %v4171 = vunpack.c.l.b16 %v1041
  %v4172 = vunpack.c.h.b16 %v1041
  %v4173 = vunpack.c.l.b16 %v1042
  %v4174 = vunpack.c.h.b16 %v1042
  %v4175 = vunpack.c.l.b16 %v1043
  %v4176 = vunpack.c.h.b16 %v1043
  %v4177 = vunpack.c.l.b16 %v1044
  %v4178 = vunpack.c.h.b16 %v1044
  %v4179 = vunpack.c.l.b16 %v1045
  %v4180 = vunpack.c.h.b16 %v1045
  %v4181 = vunpack.c.l.b16 %v1046
  %v4182 = vunpack.c.h.b16 %v1046
  %v4183 = vunpack.c.l.b16 %v1047
  %v4184 = vunpack.c.h.b16 %v1047
  %v4185 = vunpack.c.l.b16 %v1048
  %v4186 = vunpack.c.h.b16 %v1048
  %v4187 = vunpack.c.l.b16 %v1049
  %v4188 = vunpack.c.h.b16 %v1049
  %v4189 = vunpack.c.l.b16 %v1050
  %v4190 = vunpack.c.h.b16 %v1050
  %v4191 = vunpack.c.l.b16 %v1051
  %v4192 = vunpack.c.h.b16 %v1051
  %v4193 = vunpack.c.l.b16 %v1052
  %v4194 = vunpack.c.h.b16 %v1052
  %v4195 = vunpack.c.l.b16 %v1053
  %v4196 = vunpack.c.h.b16 %v1053
  %v4197 = vunpack.c.l.b16 %v1054
  %v4198 = vunpack.c.h.b16 %v1054
  %v4199 = vunpack.c.l.b16 %v1055
  %v4200 = vunpack.c.h.b16 %v1055
  %v4201 = vunpack.c.l.b16 %v1056
  %v4202 = vunpack.c.h.b16 %v1056
  %v4203 = vunpack.c.l.b16 %v1057
  %v4204 = vunpack.c.h.b16 %v1057
  %v4205 = vunpack.c.l.b16 %v1058
  %v4206 = vunpack.c.h.b16 %v1058
  %v4207 = vunpack.c.l.b16 %v1059
  %v4208 = vunpack.c.h.b16 %v1059
  %v4209 = vunpack.c.l.b16 %v1060
  %v4210 = vunpack.c.h.b16 %v1060
  %v4211 = vunpack.c.l.b16 %v1061
  %v4212 = vunpack.c.h.b16 %v1061
  %v4213 = vunpack.c.l.b16 %v1062
  %v4214 = vunpack.c.h.b16 %v1062
  %v4215 = vunpack.c.l.b16 %v1063
  %v4216 = vunpack.c.h.b16 %v1063
  %v4217 = vunpack.c.l.b16 %v1064
  %v4218 = vunpack.c.h.b16 %v1064
  %v4219 = vunpack.c.l.b16 %v1065
  %v4220 = vunpack.c.h.b16 %v1065
  %v4221 = vunpack.c.l.b16 %v1066
  %v4222 = vunpack.c.h.b16 %v1066
  %v4223 = vpack.c.b16 %v2191, %v2175
  %v4224 = vpack.c.b16 %v2192, %v2176
  %v4225 = vpack.c.b16 %v2193, %v2177
  %v4226 = vpack.c.b16 %v2194, %v2178
  %v4227 = vpack.c.b16 %v2195, %v2179
  %v4228 = vpack.c.b16 %v2196, %v2180
  %v4229 = vpack.c.b16 %v2197, %v2181
  %v4230 = vpack.c.b16 %v2198, %v2182
  %v4231 = vpack.c.b16 %v2199, %v2183
  %v4232 = vpack.c.b16 %v2200, %v2184
  %v4233 = vpack.c.b16 %v2201, %v2185
  %v4234 = vpack.c.b16 %v2202, %v2186
  %v4235 = vpack.c.b16 %v2203, %v2187
  %v4236 = vpack.c.b16 %v2204, %v2188
  %v4237 = vpack.c.b16 %v2205, %v2189
  %v4238 = vpack.c.b16 %v2206, %v2190
  %v4239 = vpack.c.b16 %v2223, %v2207
  %v4240 = vpack.c.b16 %v2224, %v2208
  %v4241 = vpack.c.b16 %v2225, %v2209
  %v4242 = vpack.c.b16 %v2226, %v2210
  %v4243 = vpack.c.b16 %v2227, %v2211
  %v4244 = vpack.c.b16 %v2228, %v2212
  %v4245 = vpack.c.b16 %v2229, %v2213
  %v4246 = vpack.c.b16 %v2230, %v2214
  %v4247 = vpack.c.b16 %v2231, %v2215
  %v4248 = vpack.c.b16 %v2232, %v2216
  %v4249 = vpack.c.b16 %v2233, %v2217
  %v4250 = vpack.c.b16 %v2234, %v2218
  %v4251 = vpack.c.b16 %v2235, %v2219
  %v4252 = vpack.c.b16 %v2236, %v2220
  %v4253 = vpack.c.b16 %v2237, %v2221
  %v4254 = vpack.c.b16 %v2238, %v2222
  %v4255 = vpack.c.b16 %v2255, %v2239
  %v4256 = vpack.c.b16 %v2256, %v2240
  %v4257 = vpack.c.b16 %v2257, %v2241
  %v4258 = vpack.c.b16 %v2258, %v2242
  %v4259 = vpack.c.b16 %v2259, %v2243
  %v4260 = vpack.c.b16 %v2260, %v2244
  %v4261 = vpack.c.b16 %v2261, %v2245
  %v4262 = vpack.c.b16 %v2262, %v2246
  %v4263 = vpack.c.b16 %v2263, %v2247
  %v4264 = vpack.c.b16 %v2264, %v2248
  %v4265 = vpack.c.b16 %v2265, %v2249
  %v4266 = vpack.c.b16 %v2266, %v2250
  %v4267 = vpack.c.b16 %v2267, %v2251
  %v4268 = vpack.c.b16 %v2268, %v2252
  %v4269 = vpack.c.b16 %v2269, %v2253
  %v4270 = vpack.c.b16 %v2270, %v2254
  %v4271 = vpack.c.b16 %v2287, %v2271
  %v4272 = vpack.c.b16 %v2288, %v2272
  %v4273 = vpack.c.b16 %v2289, %v2273
  %v4274 = vpack.c.b16 %v2290, %v2274
  %v4275 = vpack.c.b16 %v2291, %v2275
  %v4276 = vpack.c.b16 %v2292, %v2276
  %v4277 = vpack.c.b16 %v2293, %v2277
  %v4278 = vpack.c.b16 %v2294, %v2278
  %v4279 = vpack.c.b16 %v2295, %v2279
  %v4280 = vpack.c.b16 %v2296, %v2280
  %v4281 = vpack.c.b16 %v2297, %v2281
  %v4282 = vpack.c.b16 %v2298, %v2282
  %v4283 = vpack.c.b16 %v2299, %v2283
  %v4284 = vpack.c.b16 %v2300, %v2284
  %v4285 = vpack.c.b16 %v2301, %v2285
  %v4286 = vpack.c.b16 %v2302, %v2286
  %v4287 = vpack.c.b16 %v2319, %v2303
  %v4288 = vpack.c.b16 %v2320, %v2304
  %v4289 = vpack.c.b16 %v2321, %v2305
  %v4290 = vpack.c.b16 %v2322, %v2306
  %v4291 = vpack.c.b16 %v2323, %v2307
  %v4292 = vpack.c.b16 %v2324, %v2308
  %v4293 = vpack.c.b16 %v2325, %v2309
  %v4294 = vpack.c.b16 %v2326, %v2310
  %v4295 = vpack.c.b16 %v2327, %v2311
  %v4296 = vpack.c.b16 %v2328, %v2312
  %v4297 = vpack.c.b16 %v2329, %v2313
  %v4298 = vpack.c.b16 %v2330, %v2314
  %v4299 = vpack.c.b16 %v2331, %v2315
  %v4300 = vpack.c.b16 %v2332, %v2316
  %v4301 = vpack.c.b16 %v2333, %v2317
  %v4302 = vpack.c.b16 %v2334, %v2318
  %v4303 = vpack.c.b16 %v2351, %v2335
  %v4304 = vpack.c.b16 %v2352, %v2336
  %v4305 = vpack.c.b16 %v2353, %v2337
  %v4306 = vpack.c.b16 %v2354, %v2338
  %v4307 = vpack.c.b16 %v2355, %v2339
  %v4308 = vpack.c.b16 %v2356, %v2340
  %v4309 = vpack.c.b16 %v2357, %v2341
  %v4310 = vpack.c.b16 %v2358, %v2342
  %v4311 = vpack.c.b16 %v2359, %v2343
  %v4312 = vpack.c.b16 %v2360, %v2344
  %v4313 = vpack.c.b16 %v2361, %v2345
  %v4314 = vpack.c.b16 %v2362, %v2346
  %v4315 = vpack.c.b16 %v2363, %v2347
  %v4316 = vpack.c.b16 %v2364, %v2348
  %v4317 = vpack.c.b16 %v2365, %v2349
  %v4318 = vpack.c.b16 %v2366, %v2350
  %v4319 = vpack.c.b16 %v2383, %v2367
  %v4320 = vpack.c.b16 %v2384, %v2368
  %v4321 = vpack.c.b16 %v2385, %v2369
  %v4322 = vpack.c.b16 %v2386, %v2370
  %v4323 = vpack.c.b16 %v2387, %v2371
  %v4324 = vpack.c.b16 %v2388, %v2372
  %v4325 = vpack.c.b16 %v2389, %v2373
  %v4326 = vpack.c.b16 %v2390, %v2374
  %v4327 = vpack.c.b16 %v2391, %v2375
  %v4328 = vpack.c.b16 %v2392, %v2376
  %v4329 = vpack.c.b16 %v2393, %v2377
  %v4330 = vpack.c.b16 %v2394, %v2378
  %v4331 = vpack.c.b16 %v2395, %v2379
  %v4332 = vpack.c.b16 %v2396, %v2380
  %v4333 = vpack.c.b16 %v2397, %v2381
  %v4334 = vpack.c.b16 %v2398, %v2382
  %v4335 = vpack.c.b16 %v2415, %v2399
  %v4336 = vpack.c.b16 %v2416, %v2400
  %v4337 = vpack.c.b16 %v2417, %v2401
  %v4338 = vpack.c.b16 %v2418, %v2402
  %v4339 = vpack.c.b16 %v2419, %v2403
  %v4340 = vpack.c.b16 %v2420, %v2404
  %v4341 = vpack.c.b16 %v2421, %v2405
  %v4342 = vpack.c.b16 %v2422, %v2406
  %v4343 = vpack.c.b16 %v2423, %v2407
  %v4344 = vpack.c.b16 %v2424, %v2408
  %v4345 = vpack.c.b16 %v2425, %v2409
  %v4346 = vpack.c.b16 %v2426, %v2410
  %v4347 = vpack.c.b16 %v2427, %v2411
  %v4348 = vpack.c.b16 %v2428, %v2412
  %v4349 = vpack.c.b16 %v2429, %v2413
  %v4350 = vpack.c.b16 %v2430, %v2414
  %v4351 = vpack.c.b16 %v2447, %v2431
  %v4352 = vpack.c.b16 %v2448, %v2432
  %v4353 = vpack.c.b16 %v2449, %v2433
  %v4354 = vpack.c.b16 %v2450, %v2434
  %v4355 = vpack.c.b16 %v2451, %v2435
  %v4356 = vpack.c.b16 %v2452, %v2436
  %v4357 = vpack.c.b16 %v2453, %v2437
  %v4358 = vpack.c.b16 %v2454, %v2438
  %v4359 = vpack.c.b16 %v2455, %v2439
  %v4360 = vpack.c.b16 %v2456, %v2440
  %v4361 = vpack.c.b16 %v2457, %v2441
  %v4362 = vpack.c.b16 %v2458, %v2442
  %v4363 = vpack.c.b16 %v2459, %v2443
  %v4364 = vpack.c.b16 %v2460, %v2444
  %v4365 = vpack.c.b16 %v2461, %v2445
  %v4366 = vpack.c.b16 %v2462, %v2446
  %v4367 = vpack.c.b16 %v2479, %v2463
  %v4368 = vpack.c.b16 %v2480, %v2464
  %v4369 = vpack.c.b16 %v2481, %v2465
  %v4370 = vpack.c.b16 %v2482, %v2466
  %v4371 = vpack.c.b16 %v2483, %v2467
  %v4372 = vpack.c.b16 %v2484, %v2468
  %v4373 = vpack.c.b16 %v2485, %v2469
  %v4374 = vpack.c.b16 %v2486, %v2470
  %v4375 = vpack.c.b16 %v2487, %v2471
  %v4376 = vpack.c.b16 %v2488, %v2472
  %v4377 = vpack.c.b16 %v2489, %v2473
  %v4378 = vpack.c.b16 %v2490, %v2474
  %v4379 = vpack.c.b16 %v2491, %v2475
  %v4380 = vpack.c.b16 %v2492, %v2476
  %v4381 = vpack.c.b16 %v2493, %v2477
  %v4382 = vpack.c.b16 %v2494, %v2478
  %v4383 = vpack.c.b16 %v2511, %v2495
  %v4384 = vpack.c.b16 %v2512, %v2496
  %v4385 = vpack.c.b16 %v2513, %v2497
  %v4386 = vpack.c.b16 %v2514, %v2498
  %v4387 = vpack.c.b16 %v2515, %v2499
  %v4388 = vpack.c.b16 %v2516, %v2500
  %v4389 = vpack.c.b16 %v2517, %v2501
  %v4390 = vpack.c.b16 %v2518, %v2502
  %v4391 = vpack.c.b16 %v2519, %v2503
  %v4392 = vpack.c.b16 %v2520, %v2504
  %v4393 = vpack.c.b16 %v2521, %v2505
  %v4394 = vpack.c.b16 %v2522, %v2506
  %v4395 = vpack.c.b16 %v2523, %v2507
  %v4396 = vpack.c.b16 %v2524, %v2508
  %v4397 = vpack.c.b16 %v2525, %v2509
  %v4398 = vpack.c.b16 %v2526, %v2510
  %v4399 = vpack.c.b16 %v2543, %v2527
  %v4400 = vpack.c.b16 %v2544, %v2528
  %v4401 = vpack.c.b16 %v2545, %v2529
  %v4402 = vpack.c.b16 %v2546, %v2530
  %v4403 = vpack.c.b16 %v2547, %v2531
  %v4404 = vpack.c.b16 %v2548, %v2532
  %v4405 = vpack.c.b16 %v2549, %v2533
  %v4406 = vpack.c.b16 %v2550, %v2534
  %v4407 = vpack.c.b16 %v2551, %v2535
  %v4408 = vpack.c.b16 %v2552, %v2536
  %v4409 = vpack.c.b16 %v2553, %v2537
  %v4410 = vpack.c.b16 %v2554, %v2538
  %v4411 = vpack.c.b16 %v2555, %v2539
  %v4412 = vpack.c.b16 %v2556, %v2540
  %v4413 = vpack.c.b16 %v2557, %v2541
  %v4414 = vpack.c.b16 %v2558, %v2542
  %v4415 = vpack.c.b16 %v2575, %v2559
  %v4416 = vpack.c.b16 %v2576, %v2560
  %v4417 = vpack.c.b16 %v2577, %v2561
  %v4418 = vpack.c.b16 %v2578, %v2562
  %v4419 = vpack.c.b16 %v2579, %v2563
  %v4420 = vpack.c.b16 %v2580, %v2564
  %v4421 = vpack.c.b16 %v2581, %v2565
  %v4422 = vpack.c.b16 %v2582, %v2566
  %v4423 = vpack.c.b16 %v2583, %v2567
  %v4424 = vpack.c.b16 %v2584, %v2568
  %v4425 = vpack.c.b16 %v2585, %v2569
  %v4426 = vpack.c.b16 %v2586, %v2570
  %v4427 = vpack.c.b16 %v2587, %v2571
  %v4428 = vpack.c.b16 %v2588, %v2572
  %v4429 = vpack.c.b16 %v2589, %v2573
  %v4430 = vpack.c.b16 %v2590, %v2574
  %v4431 = vpack.c.b16 %v2607, %v2591
  %v4432 = vpack.c.b16 %v2608, %v2592
  %v4433 = vpack.c.b16 %v2609, %v2593
  %v4434 = vpack.c.b16 %v2610, %v2594
  %v4435 = vpack.c.b16 %v2611, %v2595
  %v4436 = vpack.c.b16 %v2612, %v2596
  %v4437 = vpack.c.b16 %v2613, %v2597
  %v4438 = vpack.c.b16 %v2614, %v2598
  %v4439 = vpack.c.b16 %v2615, %v2599
  %v4440 = vpack.c.b16 %v2616, %v2600
  %v4441 = vpack.c.b16 %v2617, %v2601
  %v4442 = vpack.c.b16 %v2618, %v2602
  %v4443 = vpack.c.b16 %v2619, %v2603
  %v4444 = vpack.c.b16 %v2620, %v2604
  %v4445 = vpack.c.b16 %v2621, %v2605
  %v4446 = vpack.c.b16 %v2622, %v2606
  %v4447 = vpack.c.b16 %v2639, %v2623
  %v4448 = vpack.c.b16 %v2640, %v2624
  %v4449 = vpack.c.b16 %v2641, %v2625
  %v4450 = vpack.c.b16 %v2642, %v2626
  %v4451 = vpack.c.b16 %v2643, %v2627
  %v4452 = vpack.c.b16 %v2644, %v2628
  %v4453 = vpack.c.b16 %v2645, %v2629
  %v4454 = vpack.c.b16 %v2646, %v2630
  %v4455 = vpack.c.b16 %v2647, %v2631
  %v4456 = vpack.c.b16 %v2648, %v2632
  %v4457 = vpack.c.b16 %v2649, %v2633
  %v4458 = vpack.c.b16 %v2650, %v2634
  %v4459 = vpack.c.b16 %v2651, %v2635
  %v4460 = vpack.c.b16 %v2652, %v2636
  %v4461 = vpack.c.b16 %v2653, %v2637
  %v4462 = vpack.c.b16 %v2654, %v2638
  %v4463 = vpack.c.b16 %v2671, %v2655
  %v4464 = vpack.c.b16 %v2672, %v2656
  %v4465 = vpack.c.b16 %v2673, %v2657
  %v4466 = vpack.c.b16 %v2674, %v2658
  %v4467 = vpack.c.b16 %v2675, %v2659
  %v4468 = vpack.c.b16 %v2676, %v2660
  %v4469 = vpack.c.b16 %v2677, %v2661
  %v4470 = vpack.c.b16 %v2678, %v2662
  %v4471 = vpack.c.b16 %v2679, %v2663
  %v4472 = vpack.c.b16 %v2680, %v2664
  %v4473 = vpack.c.b16 %v2681, %v2665
  %v4474 = vpack.c.b16 %v2682, %v2666
  %v4475 = vpack.c.b16 %v2683, %v2667
  %v4476 = vpack.c.b16 %v2684, %v2668
  %v4477 = vpack.c.b16 %v2685, %v2669
  %v4478 = vpack.c.b16 %v2686, %v2670
  %v4479 = vpack.c.b16 %v2703, %v2687
  %v4480 = vpack.c.b16 %v2704, %v2688
  %v4481 = vpack.c.b16 %v2705, %v2689
  %v4482 = vpack.c.b16 %v2706, %v2690
  %v4483 = vpack.c.b16 %v2707, %v2691
  %v4484 = vpack.c.b16 %v2708, %v2692
  %v4485 = vpack.c.b16 %v2709, %v2693
  %v4486 = vpack.c.b16 %v2710, %v2694
  %v4487 = vpack.c.b16 %v2711, %v2695
  %v4488 = vpack.c.b16 %v2712, %v2696
  %v4489 = vpack.c.b16 %v2713, %v2697
  %v4490 = vpack.c.b16 %v2714, %v2698
  %v4491 = vpack.c.b16 %v2715, %v2699
  %v4492 = vpack.c.b16 %v2716, %v2700
  %v4493 = vpack.c.b16 %v2717, %v2701
  %v4494 = vpack.c.b16 %v2718, %v2702
  %v4495 = vpack.c.b16 %v2735, %v2719
  %v4496 = vpack.c.b16 %v2736, %v2720
  %v4497 = vpack.c.b16 %v2737, %v2721
  %v4498 = vpack.c.b16 %v2738, %v2722
  %v4499 = vpack.c.b16 %v2739, %v2723
  %v4500 = vpack.c.b16 %v2740, %v2724
  %v4501 = vpack.c.b16 %v2741, %v2725
  %v4502 = vpack.c.b16 %v2742, %v2726
  %v4503 = vpack.c.b16 %v2743, %v2727
  %v4504 = vpack.c.b16 %v2744, %v2728
  %v4505 = vpack.c.b16 %v2745, %v2729
  %v4506 = vpack.c.b16 %v2746, %v2730
  %v4507 = vpack.c.b16 %v2747, %v2731
  %v4508 = vpack.c.b16 %v2748, %v2732
  %v4509 = vpack.c.b16 %v2749, %v2733
  %v4510 = vpack.c.b16 %v2750, %v2734
  %v4511 = vpack.c.b16 %v2767, %v2751
  %v4512 = vpack.c.b16 %v2768, %v2752
  %v4513 = vpack.c.b16 %v2769, %v2753
  %v4514 = vpack.c.b16 %v2770, %v2754
  %v4515 = vpack.c.b16 %v2771, %v2755
  %v4516 = vpack.c.b16 %v2772, %v2756
  %v4517 = vpack.c.b16 %v2773, %v2757
  %v4518 = vpack.c.b16 %v2774, %v2758
  %v4519 = vpack.c.b16 %v2775, %v2759
  %v4520 = vpack.c.b16 %v2776, %v2760
  %v4521 = vpack.c.b16 %v2777, %v2761
  %v4522 = vpack.c.b16 %v2778, %v2762
  %v4523 = vpack.c.b16 %v2779, %v2763
  %v4524 = vpack.c.b16 %v2780, %v2764
  %v4525 = vpack.c.b16 %v2781, %v2765
  %v4526 = vpack.c.b16 %v2782, %v2766
  %v4527 = vpack.c.b16 %v2799, %v2783
  %v4528 = vpack.c.b16 %v2800, %v2784
  %v4529 = vpack.c.b16 %v2801, %v2785
  %v4530 = vpack.c.b16 %v2802, %v2786
  %v4531 = vpack.c.b16 %v2803, %v2787
  %v4532 = vpack.c.b16 %v2804, %v2788
  %v4533 = vpack.c.b16 %v2805, %v2789
  %v4534 = vpack.c.b16 %v2806, %v2790
  %v4535 = vpack.c.b16 %v2807, %v2791
  %v4536 = vpack.c.b16 %v2808, %v2792
  %v4537 = vpack.c.b16 %v2809, %v2793
  %v4538 = vpack.c.b16 %v2810, %v2794
  %v4539 = vpack.c.b16 %v2811, %v2795
  %v4540 = vpack.c.b16 %v2812, %v2796
  %v4541 = vpack.c.b16 %v2813, %v2797
  %v4542 = vpack.c.b16 %v2814, %v2798
  %v4543 = vpack.c.b16 %v2831, %v2815
  %v4544 = vpack.c.b16 %v2832, %v2816
  %v4545 = vpack.c.b16 %v2833, %v2817
  %v4546 = vpack.c.b16 %v2834, %v2818
  %v4547 = vpack.c.b16 %v2835, %v2819
  %v4548 = vpack.c.b16 %v2836, %v2820
  %v4549 = vpack.c.b16 %v2837, %v2821
  %v4550 = vpack.c.b16 %v2838, %v2822
  %v4551 = vpack.c.b16 %v2839, %v2823
  %v4552 = vpack.c.b16 %v2840, %v2824
  %v4553 = vpack.c.b16 %v2841, %v2825
  %v4554 = vpack.c.b16 %v2842, %v2826
  %v4555 = vpack.c.b16 %v2843, %v2827
  %v4556 = vpack.c.b16 %v2844, %v2828
  %v4557 = vpack.c.b16 %v2845, %v2829
  %v4558 = vpack.c.b16 %v2846, %v2830
  %v4559 = vpack.c.b16 %v2863, %v2847
  %v4560 = vpack.c.b16 %v2864, %v2848
  %v4561 = vpack.c.b16 %v2865, %v2849
  %v4562 = vpack.c.b16 %v2866, %v2850
  %v4563 = vpack.c.b16 %v2867, %v2851
  %v4564 = vpack.c.b16 %v2868, %v2852
  %v4565 = vpack.c.b16 %v2869, %v2853
  %v4566 = vpack.c.b16 %v2870, %v2854
  %v4567 = vpack.c.b16 %v2871, %v2855
  %v4568 = vpack.c.b16 %v2872, %v2856
  %v4569 = vpack.c.b16 %v2873, %v2857
  %v4570 = vpack.c.b16 %v2874, %v2858
  %v4571 = vpack.c.b16 %v2875, %v2859
  %v4572 = vpack.c.b16 %v2876, %v2860
  %v4573 = vpack.c.b16 %v2877, %v2861
  %v4574 = vpack.c.b16 %v2878, %v2862
  %v4575 = vpack.c.b16 %v2895, %v2879
  %v4576 = vpack.c.b16 %v2896, %v2880
  %v4577 = vpack.c.b16 %v2897, %v2881
  %v4578 = vpack.c.b16 %v2898, %v2882
  %v4579 = vpack.c.b16 %v2899, %v2883
  %v4580 = vpack.c.b16 %v2900, %v2884
  %v4581 = vpack.c.b16 %v2901, %v2885
  %v4582 = vpack.c.b16 %v2902, %v2886
  %v4583 = vpack.c.b16 %v2903, %v2887
  %v4584 = vpack.c.b16 %v2904, %v2888
  %v4585 = vpack.c.b16 %v2905, %v2889
  %v4586 = vpack.c.b16 %v2906, %v2890
  %v4587 = vpack.c.b16 %v2907, %v2891
  %v4588 = vpack.c.b16 %v2908, %v2892
  %v4589 = vpack.c.b16 %v2909, %v2893
  %v4590 = vpack.c.b16 %v2910, %v2894
  %v4591 = vpack.c.b16 %v2927, %v2911
  %v4592 = vpack.c.b16 %v2928, %v2912
  %v4593 = vpack.c.b16 %v2929, %v2913
  %v4594 = vpack.c.b16 %v2930, %v2914
  %v4595 = vpack.c.b16 %v2931, %v2915
  %v4596 = vpack.c.b16 %v2932, %v2916
  %v4597 = vpack.c.b16 %v2933, %v2917
  %v4598 = vpack.c.b16 %v2934, %v2918
  %v4599 = vpack.c.b16 %v2935, %v2919
  %v4600 = vpack.c.b16 %v2936, %v2920
  %v4601 = vpack.c.b16 %v2937, %v2921
  %v4602 = vpack.c.b16 %v2938, %v2922
  %v4603 = vpack.c.b16 %v2939, %v2923
  %v4604 = vpack.c.b16 %v2940, %v2924
  %v4605 = vpack.c.b16 %v2941, %v2925
  %v4606 = vpack.c.b16 %v2942, %v2926
  %v4607 = vpack.c.b16 %v2959, %v2943
  %v4608 = vpack.c.b16 %v2960, %v2944
  %v4609 = vpack.c.b16 %v2961, %v2945
  %v4610 = vpack.c.b16 %v2962, %v2946
  %v4611 = vpack.c.b16 %v2963, %v2947
  %v4612 = vpack.c.b16 %v2964, %v2948
  %v4613 = vpack.c.b16 %v2965, %v2949
  %v4614 = vpack.c.b16 %v2966, %v2950
  %v4615 = vpack.c.b16 %v2967, %v2951
  %v4616 = vpack.c.b16 %v2968, %v2952
  %v4617 = vpack.c.b16 %v2969, %v2953
  %v4618 = vpack.c.b16 %v2970, %v2954
  %v4619 = vpack.c.b16 %v2971, %v2955
  %v4620 = vpack.c.b16 %v2972, %v2956
  %v4621 = vpack.c.b16 %v2973, %v2957
  %v4622 = vpack.c.b16 %v2974, %v2958
  %v4623 = vpack.c.b16 %v2991, %v2975
  %v4624 = vpack.c.b16 %v2992, %v2976
  %v4625 = vpack.c.b16 %v2993, %v2977
  %v4626 = vpack.c.b16 %v2994, %v2978
  %v4627 = vpack.c.b16 %v2995, %v2979
  %v4628 = vpack.c.b16 %v2996, %v2980
  %v4629 = vpack.c.b16 %v2997, %v2981
  %v4630 = vpack.c.b16 %v2998, %v2982
  %v4631 = vpack.c.b16 %v2999, %v2983
  %v4632 = vpack.c.b16 %v3000, %v2984
  %v4633 = vpack.c.b16 %v3001, %v2985
  %v4634 = vpack.c.b16 %v3002, %v2986
  %v4635 = vpack.c.b16 %v3003, %v2987
  %v4636 = vpack.c.b16 %v3004, %v2988
  %v4637 = vpack.c.b16 %v3005, %v2989
  %v4638 = vpack.c.b16 %v3006, %v2990
  %v4639 = vpack.c.b16 %v3023, %v3007
  %v4640 = vpack.c.b16 %v3024, %v3008
  %v4641 = vpack.c.b16 %v3025, %v3009
  %v4642 = vpack.c.b16 %v3026, %v3010
  %v4643 = vpack.c.b16 %v3027, %v3011
  %v4644 = vpack.c.b16 %v3028, %v3012
  %v4645 = vpack.c.b16 %v3029, %v3013
  %v4646 = vpack.c.b16 %v3030, %v3014
  %v4647 = vpack.c.b16 %v3031, %v3015
  %v4648 = vpack.c.b16 %v3032, %v3016
  %v4649 = vpack.c.b16 %v3033, %v3017
  %v4650 = vpack.c.b16 %v3034, %v3018
  %v4651 = vpack.c.b16 %v3035, %v3019
  %v4652 = vpack.c.b16 %v3036, %v3020
  %v4653 = vpack.c.b16 %v3037, %v3021
  %v4654 = vpack.c.b16 %v3038, %v3022
  %v4655 = vpack.c.b16 %v3055, %v3039
  %v4656 = vpack.c.b16 %v3056, %v3040
  %v4657 = vpack.c.b16 %v3057, %v3041
  %v4658 = vpack.c.b16 %v3058, %v3042
  %v4659 = vpack.c.b16 %v3059, %v3043
  %v4660 = vpack.c.b16 %v3060, %v3044
  %v4661 = vpack.c.b16 %v3061, %v3045
  %v4662 = vpack.c.b16 %v3062, %v3046
  %v4663 = vpack.c.b16 %v3063, %v3047
  %v4664 = vpack.c.b16 %v3064, %v3048
  %v4665 = vpack.c.b16 %v3065, %v3049
  %v4666 = vpack.c.b16 %v3066, %v3050
  %v4667 = vpack.c.b16 %v3067, %v3051
  %v4668 = vpack.c.b16 %v3068, %v3052
  %v4669 = vpack.c.b16 %v3069, %v3053
  %v4670 = vpack.c.b16 %v3070, %v3054
  %v4671 = vpack.c.b16 %v3087, %v3071
  %v4672 = vpack.c.b16 %v3088, %v3072
  %v4673 = vpack.c.b16 %v3089, %v3073
  %v4674 = vpack.c.b16 %v3090, %v3074
  %v4675 = vpack.c.b16 %v3091, %v3075
  %v4676 = vpack.c.b16 %v3092, %v3076
  %v4677 = vpack.c.b16 %v3093, %v3077
  %v4678 = vpack.c.b16 %v3094, %v3078
  %v4679 = vpack.c.b16 %v3095, %v3079
  %v4680 = vpack.c.b16 %v3096, %v3080
  %v4681 = vpack.c.b16 %v3097, %v3081
  %v4682 = vpack.c.b16 %v3098, %v3082
  %v4683 = vpack.c.b16 %v3099, %v3083
  %v4684 = vpack.c.b16 %v3100, %v3084
  %v4685 = vpack.c.b16 %v3101, %v3085
  %v4686 = vpack.c.b16 %v3102, %v3086
  %v4687 = vpack.c.b16 %v3119, %v3103
  %v4688 = vpack.c.b16 %v3120, %v3104
  %v4689 = vpack.c.b16 %v3121, %v3105
  %v4690 = vpack.c.b16 %v3122, %v3106
  %v4691 = vpack.c.b16 %v3123, %v3107
  %v4692 = vpack.c.b16 %v3124, %v3108
  %v4693 = vpack.c.b16 %v3125, %v3109
  %v4694 = vpack.c.b16 %v3126, %v3110
  %v4695 = vpack.c.b16 %v3127, %v3111
  %v4696 = vpack.c.b16 %v3128, %v3112
  %v4697 = vpack.c.b16 %v3129, %v3113
  %v4698 = vpack.c.b16 %v3130, %v3114
  %v4699 = vpack.c.b16 %v3131, %v3115
  %v4700 = vpack.c.b16 %v3132, %v3116
  %v4701 = vpack.c.b16 %v3133, %v3117
  %v4702 = vpack.c.b16 %v3134, %v3118
  %v4703 = vpack.c.b16 %v3151, %v3135
  %v4704 = vpack.c.b16 %v3152, %v3136
  %v4705 = vpack.c.b16 %v3153, %v3137
  %v4706 = vpack.c.b16 %v3154, %v3138
  %v4707 = vpack.c.b16 %v3155, %v3139
  %v4708 = vpack.c.b16 %v3156, %v3140
  %v4709 = vpack.c.b16 %v3157, %v3141
  %v4710 = vpack.c.b16 %v3158, %v3142
  %v4711 = vpack.c.b16 %v3159, %v3143
  %v4712 = vpack.c.b16 %v3160, %v3144
  %v4713 = vpack.c.b16 %v3161, %v3145
  %v4714 = vpack.c.b16 %v3162, %v3146
  %v4715 = vpack.c.b16 %v3163, %v3147
  %v4716 = vpack.c.b16 %v3164, %v3148
  %v4717 = vpack.c.b16 %v3165, %v3149
  %v4718 = vpack.c.b16 %v3166, %v3150
  %v4719 = vpack.c.b16 %v3183, %v3167
  %v4720 = vpack.c.b16 %v3184, %v3168
  %v4721 = vpack.c.b16 %v3185, %v3169
  %v4722 = vpack.c.b16 %v3186, %v3170
  %v4723 = vpack.c.b16 %v3187, %v3171
  %v4724 = vpack.c.b16 %v3188, %v3172
  %v4725 = vpack.c.b16 %v3189, %v3173
  %v4726 = vpack.c.b16 %v3190, %v3174
  %v4727 = vpack.c.b16 %v3191, %v3175
  %v4728 = vpack.c.b16 %v3192, %v3176
  %v4729 = vpack.c.b16 %v3193, %v3177
  %v4730 = vpack.c.b16 %v3194, %v3178
  %v4731 = vpack.c.b16 %v3195, %v3179
  %v4732 = vpack.c.b16 %v3196, %v3180
  %v4733 = vpack.c.b16 %v3197, %v3181
  %v4734 = vpack.c.b16 %v3198, %v3182
  %v4735 = vpack.c.b16 %v3215, %v3199
  %v4736 = vpack.c.b16 %v3216, %v3200
  %v4737 = vpack.c.b16 %v3217, %v3201
  %v4738 = vpack.c.b16 %v3218, %v3202
  %v4739 = vpack.c.b16 %v3219, %v3203
  %v4740 = vpack.c.b16 %v3220, %v3204
  %v4741 = vpack.c.b16 %v3221, %v3205
  %v4742 = vpack.c.b16 %v3222, %v3206
  %v4743 = vpack.c.b16 %v3223, %v3207
  %v4744 = vpack.c.b16 %v3224, %v3208
  %v4745 = vpack.c.b16 %v3225, %v3209
  %v4746 = vpack.c.b16 %v3226, %v3210
  %v4747 = vpack.c.b16 %v3227, %v3211
  %v4748 = vpack.c.b16 %v3228, %v3212
  %v4749 = vpack.c.b16 %v3229, %v3213
  %v4750 = vpack.c.b16 %v3230, %v3214
  %v4751 = vpack.c.b16 %v3247, %v3231
  %v4752 = vpack.c.b16 %v3248, %v3232
  %v4753 = vpack.c.b16 %v3249, %v3233
  %v4754 = vpack.c.b16 %v3250, %v3234
  %v4755 = vpack.c.b16 %v3251, %v3235
  %v4756 = vpack.c.b16 %v3252, %v3236
  %v4757 = vpack.c.b16 %v3253, %v3237
  %v4758 = vpack.c.b16 %v3254, %v3238
  %v4759 = vpack.c.b16 %v3255, %v3239
  %v4760 = vpack.c.b16 %v3256, %v3240
  %v4761 = vpack.c.b16 %v3257, %v3241
  %v4762 = vpack.c.b16 %v3258, %v3242
  %v4763 = vpack.c.b16 %v3259, %v3243
  %v4764 = vpack.c.b16 %v3260, %v3244
  %v4765 = vpack.c.b16 %v3261, %v3245
  %v4766 = vpack.c.b16 %v3262, %v3246
  %v4767 = vpack.c.b16 %v3279, %v3263
  %v4768 = vpack.c.b16 %v3280, %v3264
  %v4769 = vpack.c.b16 %v3281, %v3265
  %v4770 = vpack.c.b16 %v3282, %v3266
  %v4771 = vpack.c.b16 %v3283, %v3267
  %v4772 = vpack.c.b16 %v3284, %v3268
  %v4773 = vpack.c.b16 %v3285, %v3269
  %v4774 = vpack.c.b16 %v3286, %v3270
  %v4775 = vpack.c.b16 %v3287, %v3271
  %v4776 = vpack.c.b16 %v3288, %v3272
  %v4777 = vpack.c.b16 %v3289, %v3273
  %v4778 = vpack.c.b16 %v3290, %v3274
  %v4779 = vpack.c.b16 %v3291, %v3275
  %v4780 = vpack.c.b16 %v3292, %v3276
  %v4781 = vpack.c.b16 %v3293, %v3277
  %v4782 = vpack.c.b16 %v3294, %v3278
  %v4783 = vpack.c.b16 %v3311, %v3295
  %v4784 = vpack.c.b16 %v3312, %v3296
  %v4785 = vpack.c.b16 %v3313, %v3297
  %v4786 = vpack.c.b16 %v3314, %v3298
  %v4787 = vpack.c.b16 %v3315, %v3299
  %v4788 = vpack.c.b16 %v3316, %v3300
  %v4789 = vpack.c.b16 %v3317, %v3301
  %v4790 = vpack.c.b16 %v3318, %v3302
  %v4791 = vpack.c.b16 %v3319, %v3303
  %v4792 = vpack.c.b16 %v3320, %v3304
  %v4793 = vpack.c.b16 %v3321, %v3305
  %v4794 = vpack.c.b16 %v3322, %v3306
  %v4795 = vpack.c.b16 %v3323, %v3307
  %v4796 = vpack.c.b16 %v3324, %v3308
  %v4797 = vpack.c.b16 %v3325, %v3309
  %v4798 = vpack.c.b16 %v3326, %v3310
  %v4799 = vpack.c.b16 %v3343, %v3327
  %v4800 = vpack.c.b16 %v3344, %v3328
  %v4801 = vpack.c.b16 %v3345, %v3329
  %v4802 = vpack.c.b16 %v3346, %v3330
  %v4803 = vpack.c.b16 %v3347, %v3331
  %v4804 = vpack.c.b16 %v3348, %v3332
  %v4805 = vpack.c.b16 %v3349, %v3333
  %v4806 = vpack.c.b16 %v3350, %v3334
  %v4807 = vpack.c.b16 %v3351, %v3335
  %v4808 = vpack.c.b16 %v3352, %v3336
  %v4809 = vpack.c.b16 %v3353, %v3337
  %v4810 = vpack.c.b16 %v3354, %v3338
  %v4811 = vpack.c.b16 %v3355, %v3339
  %v4812 = vpack.c.b16 %v3356, %v3340
  %v4813 = vpack.c.b16 %v3357, %v3341
  %v4814 = vpack.c.b16 %v3358, %v3342
  %v4815 = vpack.c.b16 %v3375, %v3359
  %v4816 = vpack.c.b16 %v3376, %v3360
  %v4817 = vpack.c.b16 %v3377, %v3361
  %v4818 = vpack.c.b16 %v3378, %v3362
  %v4819 = vpack.c.b16 %v3379, %v3363
  %v4820 = vpack.c.b16 %v3380, %v3364
  %v4821 = vpack.c.b16 %v3381, %v3365
  %v4822 = vpack.c.b16 %v3382, %v3366
  %v4823 = vpack.c.b16 %v3383, %v3367
  %v4824 = vpack.c.b16 %v3384, %v3368
  %v4825 = vpack.c.b16 %v3385, %v3369
  %v4826 = vpack.c.b16 %v3386, %v3370
  %v4827 = vpack.c.b16 %v3387, %v3371
  %v4828 = vpack.c.b16 %v3388, %v3372
  %v4829 = vpack.c.b16 %v3389, %v3373
  %v4830 = vpack.c.b16 %v3390, %v3374
  %v4831 = vpack.c.b16 %v3407, %v3391
  %v4832 = vpack.c.b16 %v3408, %v3392
  %v4833 = vpack.c.b16 %v3409, %v3393
  %v4834 = vpack.c.b16 %v3410, %v3394
  %v4835 = vpack.c.b16 %v3411, %v3395
  %v4836 = vpack.c.b16 %v3412, %v3396
  %v4837 = vpack.c.b16 %v3413, %v3397
  %v4838 = vpack.c.b16 %v3414, %v3398
  %v4839 = vpack.c.b16 %v3415, %v3399
  %v4840 = vpack.c.b16 %v3416, %v3400
  %v4841 = vpack.c.b16 %v3417, %v3401
  %v4842 = vpack.c.b16 %v3418, %v3402
  %v4843 = vpack.c.b16 %v3419, %v3403
  %v4844 = vpack.c.b16 %v3420, %v3404
  %v4845 = vpack.c.b16 %v3421, %v3405
  %v4846 = vpack.c.b16 %v3422, %v3406
  %v4847 = vpack.c.b16 %v3439, %v3423
  %v4848 = vpack.c.b16 %v3440, %v3424
  %v4849 = vpack.c.b16 %v3441, %v3425
  %v4850 = vpack.c.b16 %v3442, %v3426
  %v4851 = vpack.c.b16 %v3443, %v3427
  %v4852 = vpack.c.b16 %v3444, %v3428
  %v4853 = vpack.c.b16 %v3445, %v3429
  %v4854 = vpack.c.b16 %v3446, %v3430
  %v4855 = vpack.c.b16 %v3447, %v3431
  %v4856 = vpack.c.b16 %v3448, %v3432
  %v4857 = vpack.c.b16 %v3449, %v3433
  %v4858 = vpack.c.b16 %v3450, %v3434
  %v4859 = vpack.c.b16 %v3451, %v3435
  %v4860 = vpack.c.b16 %v3452, %v3436
  %v4861 = vpack.c.b16 %v3453, %v3437
  %v4862 = vpack.c.b16 %v3454, %v3438
  %v4863 = vpack.c.b16 %v3471, %v3455
  %v4864 = vpack.c.b16 %v3472, %v3456
  %v4865 = vpack.c.b16 %v3473, %v3457
  %v4866 = vpack.c.b16 %v3474, %v3458
  %v4867 = vpack.c.b16 %v3475, %v3459
  %v4868 = vpack.c.b16 %v3476, %v3460
  %v4869 = vpack.c.b16 %v3477, %v3461
  %v4870 = vpack.c.b16 %v3478, %v3462
  %v4871 = vpack.c.b16 %v3479, %v3463
  %v4872 = vpack.c.b16 %v3480, %v3464
  %v4873 = vpack.c.b16 %v3481, %v3465
  %v4874 = vpack.c.b16 %v3482, %v3466
  %v4875 = vpack.c.b16 %v3483, %v3467
  %v4876 = vpack.c.b16 %v3484, %v3468
  %v4877 = vpack.c.b16 %v3485, %v3469
  %v4878 = vpack.c.b16 %v3486, %v3470
  %v4879 = vpack.c.b16 %v3503, %v3487
  %v4880 = vpack.c.b16 %v3504, %v3488
  %v4881 = vpack.c.b16 %v3505, %v3489
  %v4882 = vpack.c.b16 %v3506, %v3490
  %v4883 = vpack.c.b16 %v3507, %v3491
  %v4884 = vpack.c.b16 %v3508, %v3492
  %v4885 = vpack.c.b16 %v3509, %v3493
  %v4886 = vpack.c.b16 %v3510, %v3494
  %v4887 = vpack.c.b16 %v3511, %v3495
  %v4888 = vpack.c.b16 %v3512, %v3496
  %v4889 = vpack.c.b16 %v3513, %v3497
  %v4890 = vpack.c.b16 %v3514, %v3498
  %v4891 = vpack.c.b16 %v3515, %v3499
  %v4892 = vpack.c.b16 %v3516, %v3500
  %v4893 = vpack.c.b16 %v3517, %v3501
  %v4894 = vpack.c.b16 %v3518, %v3502
  %v4895 = vpack.c.b16 %v3535, %v3519
  %v4896 = vpack.c.b16 %v3536, %v3520
  %v4897 = vpack.c.b16 %v3537, %v3521
  %v4898 = vpack.c.b16 %v3538, %v3522
  %v4899 = vpack.c.b16 %v3539, %v3523
  %v4900 = vpack.c.b16 %v3540, %v3524
  %v4901 = vpack.c.b16 %v3541, %v3525
  %v4902 = vpack.c.b16 %v3542, %v3526
  %v4903 = vpack.c.b16 %v3543, %v3527
  %v4904 = vpack.c.b16 %v3544, %v3528
  %v4905 = vpack.c.b16 %v3545, %v3529
  %v4906 = vpack.c.b16 %v3546, %v3530
  %v4907 = vpack.c.b16 %v3547, %v3531
  %v4908 = vpack.c.b16 %v3548, %v3532
  %v4909 = vpack.c.b16 %v3549, %v3533
  %v4910 = vpack.c.b16 %v3550, %v3534
  %v4911 = vpack.c.b16 %v3567, %v3551
  %v4912 = vpack.c.b16 %v3568, %v3552
  %v4913 = vpack.c.b16 %v3569, %v3553
  %v4914 = vpack.c.b16 %v3570, %v3554
  %v4915 = vpack.c.b16 %v3571, %v3555
  %v4916 = vpack.c.b16 %v3572, %v3556
  %v4917 = vpack.c.b16 %v3573, %v3557
  %v4918 = vpack.c.b16 %v3574, %v3558
  %v4919 = vpack.c.b16 %v3575, %v3559
  %v4920 = vpack.c.b16 %v3576, %v3560
  %v4921 = vpack.c.b16 %v3577, %v3561
  %v4922 = vpack.c.b16 %v3578, %v3562
  %v4923 = vpack.c.b16 %v3579, %v3563
  %v4924 = vpack.c.b16 %v3580, %v3564
  %v4925 = vpack.c.b16 %v3581, %v3565
  %v4926 = vpack.c.b16 %v3582, %v3566
  %v4927 = vpack.c.b16 %v3599, %v3583
  %v4928 = vpack.c.b16 %v3600, %v3584
  %v4929 = vpack.c.b16 %v3601, %v3585
  %v4930 = vpack.c.b16 %v3602, %v3586
  %v4931 = vpack.c.b16 %v3603, %v3587
  %v4932 = vpack.c.b16 %v3604, %v3588
  %v4933 = vpack.c.b16 %v3605, %v3589
  %v4934 = vpack.c.b16 %v3606, %v3590
  %v4935 = vpack.c.b16 %v3607, %v3591
  %v4936 = vpack.c.b16 %v3608, %v3592
  %v4937 = vpack.c.b16 %v3609, %v3593
  %v4938 = vpack.c.b16 %v3610, %v3594
  %v4939 = vpack.c.b16 %v3611, %v3595
  %v4940 = vpack.c.b16 %v3612, %v3596
  %v4941 = vpack.c.b16 %v3613, %v3597
  %v4942 = vpack.c.b16 %v3614, %v3598
  %v4943 = vpack.c.b16 %v3631, %v3615
  %v4944 = vpack.c.b16 %v3632, %v3616
  %v4945 = vpack.c.b16 %v3633, %v3617
  %v4946 = vpack.c.b16 %v3634, %v3618
  %v4947 = vpack.c.b16 %v3635, %v3619
  %v4948 = vpack.c.b16 %v3636, %v3620
  %v4949 = vpack.c.b16 %v3637, %v3621
  %v4950 = vpack.c.b16 %v3638, %v3622
  %v4951 = vpack.c.b16 %v3639, %v3623
  %v4952 = vpack.c.b16 %v3640, %v3624
  %v4953 = vpack.c.b16 %v3641, %v3625
  %v4954 = vpack.c.b16 %v3642, %v3626
  %v4955 = vpack.c.b16 %v3643, %v3627
  %v4956 = vpack.c.b16 %v3644, %v3628
  %v4957 = vpack.c.b16 %v3645, %v3629
  %v4958 = vpack.c.b16 %v3646, %v3630
  %v4959 = vpack.c.b16 %v3663, %v3647
  %v4960 = vpack.c.b16 %v3664, %v3648
  %v4961 = vpack.c.b16 %v3665, %v3649
  %v4962 = vpack.c.b16 %v3666, %v3650
  %v4963 = vpack.c.b16 %v3667, %v3651
  %v4964 = vpack.c.b16 %v3668, %v3652
  %v4965 = vpack.c.b16 %v3669, %v3653
  %v4966 = vpack.c.b16 %v3670, %v3654
  %v4967 = vpack.c.b16 %v3671, %v3655
  %v4968 = vpack.c.b16 %v3672, %v3656
  %v4969 = vpack.c.b16 %v3673, %v3657
  %v4970 = vpack.c.b16 %v3674, %v3658
  %v4971 = vpack.c.b16 %v3675, %v3659
  %v4972 = vpack.c.b16 %v3676, %v3660
  %v4973 = vpack.c.b16 %v3677, %v3661
  %v4974 = vpack.c.b16 %v3678, %v3662
  %v4975 = vpack.c.b16 %v3695, %v3679
  %v4976 = vpack.c.b16 %v3696, %v3680
  %v4977 = vpack.c.b16 %v3697, %v3681
  %v4978 = vpack.c.b16 %v3698, %v3682
  %v4979 = vpack.c.b16 %v3699, %v3683
  %v4980 = vpack.c.b16 %v3700, %v3684
  %v4981 = vpack.c.b16 %v3701, %v3685
  %v4982 = vpack.c.b16 %v3702, %v3686
  %v4983 = vpack.c.b16 %v3703, %v3687
  %v4984 = vpack.c.b16 %v3704, %v3688
  %v4985 = vpack.c.b16 %v3705, %v3689
  %v4986 = vpack.c.b16 %v3706, %v3690
  %v4987 = vpack.c.b16 %v3707, %v3691
  %v4988 = vpack.c.b16 %v3708, %v3692
  %v4989 = vpack.c.b16 %v3709, %v3693
  %v4990 = vpack.c.b16 %v3710, %v3694
  %v4991 = vpack.c.b16 %v3727, %v3711
  %v4992 = vpack.c.b16 %v3728, %v3712
  %v4993 = vpack.c.b16 %v3729, %v3713
  %v4994 = vpack.c.b16 %v3730, %v3714
  %v4995 = vpack.c.b16 %v3731, %v3715
  %v4996 = vpack.c.b16 %v3732, %v3716
  %v4997 = vpack.c.b16 %v3733, %v3717
  %v4998 = vpack.c.b16 %v3734, %v3718
  %v4999 = vpack.c.b16 %v3735, %v3719
  %v5000 = vpack.c.b16 %v3736, %v3720
  %v5001 = vpack.c.b16 %v3737, %v3721
  %v5002 = vpack.c.b16 %v3738, %v3722
  %v5003 = vpack.c.b16 %v3739, %v3723
  %v5004 = vpack.c.b16 %v3740, %v3724
  %v5005 = vpack.c.b16 %v3741, %v3725
  %v5006 = vpack.c.b16 %v3742, %v3726
  %v5007 = vpack.c.b16 %v3759, %v3743
  %v5008 = vpack.c.b16 %v3760, %v3744
  %v5009 = vpack.c.b16 %v3761, %v3745
  %v5010 = vpack.c.b16 %v3762, %v3746
  %v5011 = vpack.c.b16 %v3763, %v3747
  %v5012 = vpack.c.b16 %v3764, %v3748
  %v5013 = vpack.c.b16 %v3765, %v3749
  %v5014 = vpack.c.b16 %v3766, %v3750
  %v5015 = vpack.c.b16 %v3767, %v3751
  %v5016 = vpack.c.b16 %v3768, %v3752
  %v5017 = vpack.c.b16 %v3769, %v3753
  %v5018 = vpack.c.b16 %v3770, %v3754
  %v5019 = vpack.c.b16 %v3771, %v3755
  %v5020 = vpack.c.b16 %v3772, %v3756
  %v5021 = vpack.c.b16 %v3773, %v3757
  %v5022 = vpack.c.b16 %v3774, %v3758
  %v5023 = vpack.c.b16 %v3791, %v3775
  %v5024 = vpack.c.b16 %v3792, %v3776
  %v5025 = vpack.c.b16 %v3793, %v3777
  %v5026 = vpack.c.b16 %v3794, %v3778
  %v5027 = vpack.c.b16 %v3795, %v3779
  %v5028 = vpack.c.b16 %v3796, %v3780
  %v5029 = vpack.c.b16 %v3797, %v3781
  %v5030 = vpack.c.b16 %v3798, %v3782
  %v5031 = vpack.c.b16 %v3799, %v3783
  %v5032 = vpack.c.b16 %v3800, %v3784
  %v5033 = vpack.c.b16 %v3801, %v3785
  %v5034 = vpack.c.b16 %v3802, %v3786
  %v5035 = vpack.c.b16 %v3803, %v3787
  %v5036 = vpack.c.b16 %v3804, %v3788
  %v5037 = vpack.c.b16 %v3805, %v3789
  %v5038 = vpack.c.b16 %v3806, %v3790
  %v5039 = vpack.c.b16 %v3823, %v3807
  %v5040 = vpack.c.b16 %v3824, %v3808
  %v5041 = vpack.c.b16 %v3825, %v3809
  %v5042 = vpack.c.b16 %v3826, %v3810
  %v5043 = vpack.c.b16 %v3827, %v3811
  %v5044 = vpack.c.b16 %v3828, %v3812
  %v5045 = vpack.c.b16 %v3829, %v3813
  %v5046 = vpack.c.b16 %v3830, %v3814
  %v5047 = vpack.c.b16 %v3831, %v3815
  %v5048 = vpack.c.b16 %v3832, %v3816
  %v5049 = vpack.c.b16 %v3833, %v3817
  %v5050 = vpack.c.b16 %v3834, %v3818
  %v5051 = vpack.c.b16 %v3835, %v3819
  %v5052 = vpack.c.b16 %v3836, %v3820
  %v5053 = vpack.c.b16 %v3837, %v3821
  %v5054 = vpack.c.b16 %v3838, %v3822
  %v5055 = vpack.c.b16 %v3855, %v3839
  %v5056 = vpack.c.b16 %v3856, %v3840
  %v5057 = vpack.c.b16 %v3857, %v3841
  %v5058 = vpack.c.b16 %v3858, %v3842
  %v5059 = vpack.c.b16 %v3859, %v3843
  %v5060 = vpack.c.b16 %v3860, %v3844
  %v5061 = vpack.c.b16 %v3861, %v3845
  %v5062 = vpack.c.b16 %v3862, %v3846
  %v5063 = vpack.c.b16 %v3863, %v3847
  %v5064 = vpack.c.b16 %v3864, %v3848
  %v5065 = vpack.c.b16 %v3865, %v3849
  %v5066 = vpack.c.b16 %v3866, %v3850
  %v5067 = vpack.c.b16 %v3867, %v3851
  %v5068 = vpack.c.b16 %v3868, %v3852
  %v5069 = vpack.c.b16 %v3869, %v3853
  %v5070 = vpack.c.b16 %v3870, %v3854
  %v5071 = vpack.c.b16 %v3887, %v3871
  %v5072 = vpack.c.b16 %v3888, %v3872
  %v5073 = vpack.c.b16 %v3889, %v3873
  %v5074 = vpack.c.b16 %v3890, %v3874
  %v5075 = vpack.c.b16 %v3891, %v3875
  %v5076 = vpack.c.b16 %v3892, %v3876
  %v5077 = vpack.c.b16 %v3893, %v3877
  %v5078 = vpack.c.b16 %v3894, %v3878
  %v5079 = vpack.c.b16 %v3895, %v3879
  %v5080 = vpack.c.b16 %v3896, %v3880
  %v5081 = vpack.c.b16 %v3897, %v3881
  %v5082 = vpack.c.b16 %v3898, %v3882
  %v5083 = vpack.c.b16 %v3899, %v3883
  %v5084 = vpack.c.b16 %v3900, %v3884
  %v5085 = vpack.c.b16 %v3901, %v3885
  %v5086 = vpack.c.b16 %v3902, %v3886
  %v5087 = vpack.c.b16 %v3919, %v3903
  %v5088 = vpack.c.b16 %v3920, %v3904
  %v5089 = vpack.c.b16 %v3921, %v3905
  %v5090 = vpack.c.b16 %v3922, %v3906
  %v5091 = vpack.c.b16 %v3923, %v3907
  %v5092 = vpack.c.b16 %v3924, %v3908
  %v5093 = vpack.c.b16 %v3925, %v3909
  %v5094 = vpack.c.b16 %v3926, %v3910
  %v5095 = vpack.c.b16 %v3927, %v3911
  %v5096 = vpack.c.b16 %v3928, %v3912
  %v5097 = vpack.c.b16 %v3929, %v3913
  %v5098 = vpack.c.b16 %v3930, %v3914
  %v5099 = vpack.c.b16 %v3931, %v3915
  %v5100 = vpack.c.b16 %v3932, %v3916
  %v5101 = vpack.c.b16 %v3933, %v3917
  %v5102 = vpack.c.b16 %v3934, %v3918
  %v5103 = vpack.c.b16 %v3951, %v3935
  %v5104 = vpack.c.b16 %v3952, %v3936
  %v5105 = vpack.c.b16 %v3953, %v3937
  %v5106 = vpack.c.b16 %v3954, %v3938
  %v5107 = vpack.c.b16 %v3955, %v3939
  %v5108 = vpack.c.b16 %v3956, %v3940
  %v5109 = vpack.c.b16 %v3957, %v3941
  %v5110 = vpack.c.b16 %v3958, %v3942
  %v5111 = vpack.c.b16 %v3959, %v3943
  %v5112 = vpack.c.b16 %v3960, %v3944
  %v5113 = vpack.c.b16 %v3961, %v3945
  %v5114 = vpack.c.b16 %v3962, %v3946
  %v5115 = vpack.c.b16 %v3963, %v3947
  %v5116 = vpack.c.b16 %v3964, %v3948
  %v5117 = vpack.c.b16 %v3965, %v3949
  %v5118 = vpack.c.b16 %v3966, %v3950
  %v5119 = vpack.c.b16 %v3983, %v3967
  %v5120 = vpack.c.b16 %v3984, %v3968
  %v5121 = vpack.c.b16 %v3985, %v3969
  %v5122 = vpack.c.b16 %v3986, %v3970
  %v5123 = vpack.c.b16 %v3987, %v3971
  %v5124 = vpack.c.b16 %v3988, %v3972
  %v5125 = vpack.c.b16 %v3989, %v3973
  %v5126 = vpack.c.b16 %v3990, %v3974
  %v5127 = vpack.c.b16 %v3991, %v3975
  %v5128 = vpack.c.b16 %v3992, %v3976
  %v5129 = vpack.c.b16 %v3993, %v3977
  %v5130 = vpack.c.b16 %v3994, %v3978
  %v5131 = vpack.c.b16 %v3995, %v3979
  %v5132 = vpack.c.b16 %v3996, %v3980
  %v5133 = vpack.c.b16 %v3997, %v3981
  %v5134 = vpack.c.b16 %v3998, %v3982
  %v5135 = vpack.c.b16 %v4015, %v3999
  %v5136 = vpack.c.b16 %v4016, %v4000
  %v5137 = vpack.c.b16 %v4017, %v4001
  %v5138 = vpack.c.b16 %v4018, %v4002
  %v5139 = vpack.c.b16 %v4019, %v4003
  %v5140 = vpack.c.b16 %v4020, %v4004
  %v5141 = vpack.c.b16 %v4021, %v4005
  %v5142 = vpack.c.b16 %v4022, %v4006
  %v5143 = vpack.c.b16 %v4023, %v4007
  %v5144 = vpack.c.b16 %v4024, %v4008
  %v5145 = vpack.c.b16 %v4025, %v4009
  %v5146 = vpack.c.b16 %v4026, %v4010
  %v5147 = vpack.c.b16 %v4027, %v4011
  %v5148 = vpack.c.b16 %v4028, %v4012
  %v5149 = vpack.c.b16 %v4029, %v4013
  %v5150 = vpack.c.b16 %v4030, %v4014
  %v5151 = vpack.c.b16 %v4047, %v4031
  %v5152 = vpack.c.b16 %v4048, %v4032
  %v5153 = vpack.c.b16 %v4049, %v4033
  %v5154 = vpack.c.b16 %v4050, %v4034
  %v5155 = vpack.c.b16 %v4051, %v4035
  %v5156 = vpack.c.b16 %v4052, %v4036
  %v5157 = vpack.c.b16 %v4053, %v4037
  %v5158 = vpack.c.b16 %v4054, %v4038
  %v5159 = vpack.c.b16 %v4055, %v4039
  %v5160 = vpack.c.b16 %v4056, %v4040
  %v5161 = vpack.c.b16 %v4057, %v4041
  %v5162 = vpack.c.b16 %v4058, %v4042
  %v5163 = vpack.c.b16 %v4059, %v4043
  %v5164 = vpack.c.b16 %v4060, %v4044
  %v5165 = vpack.c.b16 %v4061, %v4045
  %v5166 = vpack.c.b16 %v4062, %v4046
  %v5167 = vpack.c.b16 %v4079, %v4063
  %v5168 = vpack.c.b16 %v4080, %v4064
  %v5169 = vpack.c.b16 %v4081, %v4065
  %v5170 = vpack.c.b16 %v4082, %v4066
  %v5171 = vpack.c.b16 %v4083, %v4067
  %v5172 = vpack.c.b16 %v4084, %v4068
  %v5173 = vpack.c.b16 %v4085, %v4069
  %v5174 = vpack.c.b16 %v4086, %v4070
  %v5175 = vpack.c.b16 %v4087, %v4071
  %v5176 = vpack.c.b16 %v4088, %v4072
  %v5177 = vpack.c.b16 %v4089, %v4073
  %v5178 = vpack.c.b16 %v4090, %v4074
  %v5179 = vpack.c.b16 %v4091, %v4075
  %v5180 = vpack.c.b16 %v4092, %v4076
  %v5181 = vpack.c.b16 %v4093, %v4077
  %v5182 = vpack.c.b16 %v4094, %v4078
  %v5183 = vpack.c.b16 %v4111, %v4095
  %v5184 = vpack.c.b16 %v4112, %v4096
  %v5185 = vpack.c.b16 %v4113, %v4097
  %v5186 = vpack.c.b16 %v4114, %v4098
  %v5187 = vpack.c.b16 %v4115, %v4099
  %v5188 = vpack.c.b16 %v4116, %v4100
  %v5189 = vpack.c.b16 %v4117, %v4101
  %v5190 = vpack.c.b16 %v4118, %v4102
  %v5191 = vpack.c.b16 %v4119, %v4103
  %v5192 = vpack.c.b16 %v4120, %v4104
  %v5193 = vpack.c.b16 %v4121, %v4105
  %v5194 = vpack.c.b16 %v4122, %v4106
  %v5195 = vpack.c.b16 %v4123, %v4107
  %v5196 = vpack.c.b16 %v4124, %v4108
  %v5197 = vpack.c.b16 %v4125, %v4109
  %v5198 = vpack.c.b16 %v4126, %v4110
  %v5199 = vpack.c.b16 %v4143, %v4127
  %v5200 = vpack.c.b16 %v4144, %v4128
  %v5201 = vpack.c.b16 %v4145, %v4129
  %v5202 = vpack.c.b16 %v4146, %v4130
  %v5203 = vpack.c.b16 %v4147, %v4131
  %v5204 = vpack.c.b16 %v4148, %v4132
  %v5205 = vpack.c.b16 %v4149, %v4133
  %v5206 = vpack.c.b16 %v4150, %v4134
  %v5207 = vpack.c.b16 %v4151, %v4135
  %v5208 = vpack.c.b16 %v4152, %v4136
  %v5209 = vpack.c.b16 %v4153, %v4137
  %v5210 = vpack.c.b16 %v4154, %v4138
  %v5211 = vpack.c.b16 %v4155, %v4139
  %v5212 = vpack.c.b16 %v4156, %v4140
  %v5213 = vpack.c.b16 %v4157, %v4141
  %v5214 = vpack.c.b16 %v4158, %v4142
  %v5215 = vpack.c.b16 %v4175, %v4159
  %v5216 = vpack.c.b16 %v4176, %v4160
  %v5217 = vpack.c.b16 %v4177, %v4161
  %v5218 = vpack.c.b16 %v4178, %v4162
  %v5219 = vpack.c.b16 %v4179, %v4163
  %v5220 = vpack.c.b16 %v4180, %v4164
  %v5221 = vpack.c.b16 %v4181, %v4165
  %v5222 = vpack.c.b16 %v4182, %v4166
  %v5223 = vpack.c.b16 %v4183, %v4167
  %v5224 = vpack.c.b16 %v4184, %v4168
  %v5225 = vpack.c.b16 %v4185, %v4169
  %v5226 = vpack.c.b16 %v4186, %v4170
  %v5227 = vpack.c.b16 %v4187, %v4171
  %v5228 = vpack.c.b16 %v4188, %v4172
  %v5229 = vpack.c.b16 %v4189, %v4173
  %v5230 = vpack.c.b16 %v4190, %v4174
  %v5231 = vpack.c.b16 %v4207, %v4191
  %v5232 = vpack.c.b16 %v4208, %v4192
  %v5233 = vpack.c.b16 %v4209, %v4193
  %v5234 = vpack.c.b16 %v4210, %v4194
  %v5235 = vpack.c.b16 %v4211, %v4195
  %v5236 = vpack.c.b16 %v4212, %v4196
  %v5237 = vpack.c.b16 %v4213, %v4197
  %v5238 = vpack.c.b16 %v4214, %v4198
  %v5239 = vpack.c.b16 %v4215, %v4199
  %v5240 = vpack.c.b16 %v4216, %v4200
  %v5241 = vpack.c.b16 %v4217, %v4201
  %v5242 = vpack.c.b16 %v4218, %v4202
  %v5243 = vpack.c.b16 %v4219, %v4203
  %v5244 = vpack.c.b16 %v4220, %v4204
  %v5245 = vpack.c.b16 %v4221, %v4205
  %v5246 = vpack.c.b16 %v4222, %v4206
  %6271 = vmatprep.subr.bf16.mxu0 %v4224
  %6272 = vmatpush1.bf16.msra.mxu0 %v4223
  %6273 = vmatprep.subr.bf16.mxu0 %v4240
  %6274 = vmatpush1.bf16.msra.mxu0 %v4239
  %6275 = vmatprep.subr.bf16.mxu0 %v4256
  %6276 = vmatpush1.bf16.msra.mxu0 %v4255
  %6277 = vmatprep.subr.bf16.mxu0 %v4272
  %6278 = vmatpush1.bf16.msra.mxu0 %v4271
  %6279 = vmatprep.subr.bf16.mxu0 %v4288
  %6280 = vmatpush1.bf16.msra.mxu0 %v4287
  %6281 = vmatprep.subr.bf16.mxu0 %v4304
  %6282 = vmatpush1.bf16.msra.mxu0 %v4303
  %6283 = vmatprep.subr.bf16.mxu0 %v4320
  %6284 = vmatpush1.bf16.msra.mxu0 %v4319
  %6285 = vmatprep.subr.bf16.mxu0 %v4336
  %6286 = vmatpush1.bf16.msra.mxu0 %v4335
  %6287 = vmatprep.subr.bf16.mxu0 %v4352
  %6288 = vmatpush1.bf16.msra.mxu0 %v4351
  %6289 = vmatprep.subr.bf16.mxu0 %v4368
  %6290 = vmatpush1.bf16.msra.mxu0 %v4367
  %6291 = vmatprep.subr.bf16.mxu0 %v4384
  %6292 = vmatpush1.bf16.msra.mxu0 %v4383
  %6293 = vmatprep.subr.bf16.mxu0 %v4400
  %6294 = vmatpush1.bf16.msra.mxu0 %v4399
  %6295 = vmatprep.subr.bf16.mxu0 %v4416
  %6296 = vmatpush1.bf16.msra.mxu0 %v4415
  %6297 = vmatprep.subr.bf16.mxu0 %v4432
  %6298 = vmatpush1.bf16.msra.mxu0 %v4431
  %6299 = vmatprep.subr.bf16.mxu0 %v4448
  %6300 = vmatpush1.bf16.msra.mxu0 %v4447
  %6301 = vmatprep.subr.bf16.mxu0 %v4464
  %6302 = vmatpush1.bf16.msra.mxu0 %v4463
  %6303 = vmatprep.mubr.bf16.mxu0 %v36
  %6304 = vmatmul.mubr.bf16.gmra.mrb[0].mxu0 %v35
  %v6305 = vpop.f32.mrb[0].mxu0
  %v6306 = vadd.f32 %v1074, %v6305
  %v6307 = vpop.f32.mrb[0].mxu0
  %v6308 = vadd.f32 %v1078, %v6307
  %v6309 = vpop.f32.mrb[0].mxu0
  %v6310 = vpop.f32.mrb[0].mxu0
  %6311 = vdwg.mxu0
  %6312 = vmatprep.subr.bf16.mxu0 %v4480
  %6313 = vmatpush1.bf16.msra.mxu0 %v4479
  %6314 = vmatprep.subr.bf16.mxu0 %v4496
  %6315 = vmatpush1.bf16.msra.mxu0 %v4495
  %6316 = vmatprep.subr.bf16.mxu0 %v4512
  %6317 = vmatpush1.bf16.msra.mxu0 %v4511
  %6318 = vmatprep.subr.bf16.mxu0 %v4528
  %6319 = vmatpush1.bf16.msra.mxu0 %v4527
  %6320 = vmatprep.subr.bf16.mxu0 %v4544
  %6321 = vmatpush1.bf16.msra.mxu0 %v4543
  %6322 = vmatprep.subr.bf16.mxu0 %v4560
  %6323 = vmatpush1.bf16.msra.mxu0 %v4559
  %6324 = vmatprep.subr.bf16.mxu0 %v4576
  %6325 = vmatpush1.bf16.msra.mxu0 %v4575
  %6326 = vmatprep.subr.bf16.mxu0 %v4592
  %6327 = vmatpush1.bf16.msra.mxu0 %v4591
  %6328 = vmatprep.subr.bf16.mxu0 %v4608
  %6329 = vmatpush1.bf16.msra.mxu0 %v4607
  %6330 = vmatprep.subr.bf16.mxu0 %v4624
  %6331 = vmatpush1.bf16.msra.mxu0 %v4623
  %6332 = vmatprep.subr.bf16.mxu0 %v4640
  %6333 = vmatpush1.bf16.msra.mxu0 %v4639
  %6334 = vmatprep.subr.bf16.mxu0 %v4656
  %6335 = vmatpush1.bf16.msra.mxu0 %v4655
  %6336 = vmatprep.subr.bf16.mxu0 %v4672
  %6337 = vmatpush1.bf16.msra.mxu0 %v4671
  %6338 = vmatprep.subr.bf16.mxu0 %v4688
  %6339 = vmatpush1.bf16.msra.mxu0 %v4687
  %6340 = vmatprep.subr.bf16.mxu0 %v4704
  %6341 = vmatpush1.bf16.msra.mxu0 %v4703
  %6342 = vmatprep.subr.bf16.mxu0 %v4720
  %6343 = vmatpush1.bf16.msra.mxu0 %v4719
  %6344 = vmatprep.mubr.bf16.mxu0 %v38
  %6345 = vmatmul.mubr.bf16.gmra.mrb[0].mxu0 %v37
  %v6346 = vpop.f32.mrb[0].mxu0
  %v6347 = vadd.f32 %v6306, %v6346
  %v6348 = vpop.f32.mrb[0].mxu0
  %v6349 = vadd.f32 %v6308, %v6348
  %v6350 = vpop.f32.mrb[0].mxu0
  %v6351 = vpop.f32.mrb[0].mxu0
  %6352 = vdwg.mxu0
  %6353 = vmatprep.subr.bf16.mxu0 %v4736
  %6354 = vmatpush1.bf16.msra.mxu0 %v4735
  %6355 = vmatprep.subr.bf16.mxu0 %v4752
  %6356 = vmatpush1.bf16.msra.mxu0 %v4751
  %6357 = vmatprep.subr.bf16.mxu0 %v4768
  %6358 = vmatpush1.bf16.msra.mxu0 %v4767
  %6359 = vmatprep.subr.bf16.mxu0 %v4784
  %6360 = vmatpush1.bf16.msra.mxu0 %v4783
  %6361 = vmatprep.subr.bf16.mxu0 %v4800
  %6362 = vmatpush1.bf16.msra.mxu0 %v4799
  %6363 = vmatprep.subr.bf16.mxu0 %v4816
  %6364 = vmatpush1.bf16.msra.mxu0 %v4815
  %6365 = vmatprep.subr.bf16.mxu0 %v4832
  %6366 = vmatpush1.bf16.msra.mxu0 %v4831
  %6367 = vmatprep.subr.bf16.mxu0 %v4848
  %6368 = vmatpush1.bf16.msra.mxu0 %v4847
  %6369 = vmatprep.subr.bf16.mxu0 %v4864
  %6370 = vmatpush1.bf16.msra.mxu0 %v4863
  %6371 = vmatprep.subr.bf16.mxu0 %v4880
  %6372 = vmatpush1.bf16.msra.mxu0 %v4879
  %6373 = vmatprep.subr.bf16.mxu0 %v4896
  %6374 = vmatpush1.bf16.msra.mxu0 %v4895
  %6375 = vmatprep.subr.bf16.mxu0 %v4912
  %6376 = vmatpush1.bf16.msra.mxu0 %v4911
  %6377 = vmatprep.subr.bf16.mxu0 %v4928
  %6378 = vmatpush1.bf16.msra.mxu0 %v4927
  %6379 = vmatprep.subr.bf16.mxu0 %v4944
  %6380 = vmatpush1.bf16.msra.mxu0 %v4943
  %6381 = vmatprep.subr.bf16.mxu0 %v4960
  %6382 = vmatpush1.bf16.msra.mxu0 %v4959
  %6383 = vmatprep.subr.bf16.mxu0 %v4976
  %6384 = vmatpush1.bf16.msra.mxu0 %v4975
  %6385 = vmatprep.mubr.bf16.mxu0 %v40
  %6386 = vmatmul.mubr.bf16.gmra.mrb[0].mxu0 %v39
  %v6387 = vpop.f32.mrb[0].mxu0
  %v6388 = vadd.f32 %v6347, %v6387
  %v6389 = vpop.f32.mrb[0].mxu0
  %v6390 = vadd.f32 %v6349, %v6389
  %v6391 = vpop.f32.mrb[0].mxu0
  %v6392 = vpop.f32.mrb[0].mxu0
  %6393 = vdwg.mxu0
  %6394 = vmatprep.subr.bf16.mxu0 %v4992
  %6395 = vmatpush1.bf16.msra.mxu0 %v4991
  %6396 = vmatprep.subr.bf16.mxu0 %v5008
  %6397 = vmatpush1.bf16.msra.mxu0 %v5007
  %6398 = vmatprep.subr.bf16.mxu0 %v5024
  %6399 = vmatpush1.bf16.msra.mxu0 %v5023
  %6400 = vmatprep.subr.bf16.mxu0 %v5040
  %6401 = vmatpush1.bf16.msra.mxu0 %v5039
  %6402 = vmatprep.subr.bf16.mxu0 %v5056
  %6403 = vmatpush1.bf16.msra.mxu0 %v5055
  %6404 = vmatprep.subr.bf16.mxu0 %v5072
  %6405 = vmatpush1.bf16.msra.mxu0 %v5071
  %6406 = vmatprep.subr.bf16.mxu0 %v5088
  %6407 = vmatpush1.bf16.msra.mxu0 %v5087
  %6408 = vmatprep.subr.bf16.mxu0 %v5104
  %6409 = vmatpush1.bf16.msra.mxu0 %v5103
  %6410 = vmatprep.subr.bf16.mxu0 %v5120
  %6411 = vmatpush1.bf16.msra.mxu0 %v5119
  %6412 = vmatprep.subr.bf16.mxu0 %v5136
  %6413 = vmatpush1.bf16.msra.mxu0 %v5135
  %6414 = vmatprep.subr.bf16.mxu0 %v5152
  %6415 = vmatpush1.bf16.msra.mxu0 %v5151
  %6416 = vmatprep.subr.bf16.mxu0 %v5168
  %6417 = vmatpush1.bf16.msra.mxu0 %v5167
  %6418 = vmatprep.subr.bf16.mxu0 %v5184
  %6419 = vmatpush1.bf16.msra.mxu0 %v5183
  %6420 = vmatprep.subr.bf16.mxu0 %v5200
  %6421 = vmatpush1.bf16.msra.mxu0 %v5199
  %6422 = vmatprep.subr.bf16.mxu0 %v5216
  %6423 = vmatpush1.bf16.msra.mxu0 %v5215
  %6424 = vmatprep.subr.bf16.mxu0 %v5232
  %6425 = vmatpush1.bf16.msra.mxu0 %v5231
  %6426 = vmatprep.mubr.bf16.mxu0 %v42
  %6427 = vmatmul.mubr.bf16.gmra.mrb[0].mxu0 %v41
  %v6428 = vpop.f32.mrb[0].mxu0
  %v6429 = vadd.f32 %v6388, %v6428
  %v6430 = vpop.f32.mrb[0].mxu0
  %v6431 = vadd.f32 %v6390, %v6430
  %v6432 = vpop.f32.mrb[0].mxu0
  %v6433 = vpop.f32.mrb[0].mxu0
  %6434 = vdwg.mxu0
  %6435 = vmatprep.subr.bf16.mxu0 %v4226
  %6436 = vmatpush1.bf16.msra.mxu0 %v4225
  %6437 = vmatprep.subr.bf16.mxu0 %v4242
  %6438 = vmatpush1.bf16.msra.mxu0 %v4241
  %6439 = vmatprep.subr.bf16.mxu0 %v4258
  %6440 = vmatpush1.bf16.msra.mxu0 %v4257
  %6441 = vmatprep.subr.bf16.mxu0 %v4274
  %6442 = vmatpush1.bf16.msra.mxu0 %v4273
  %6443 = vmatprep.subr.bf16.mxu0 %v4290
  %6444 = vmatpush1.bf16.msra.mxu0 %v4289
  %6445 = vmatprep.subr.bf16.mxu0 %v4306
  %6446 = vmatpush1.bf16.msra.mxu0 %v4305
  %6447 = vmatprep.subr.bf16.mxu0 %v4322
  %6448 = vmatpush1.bf16.msra.mxu0 %v4321
  %6449 = vmatprep.subr.bf16.mxu0 %v4338
  %6450 = vmatpush1.bf16.msra.mxu0 %v4337
  %6451 = vmatprep.subr.bf16.mxu0 %v4354
  %6452 = vmatpush1.bf16.msra.mxu0 %v4353
  %6453 = vmatprep.subr.bf16.mxu0 %v4370
  %6454 = vmatpush1.bf16.msra.mxu0 %v4369
  %6455 = vmatprep.subr.bf16.mxu0 %v4386
  %6456 = vmatpush1.bf16.msra.mxu0 %v4385
  %6457 = vmatprep.subr.bf16.mxu0 %v4402
  %6458 = vmatpush1.bf16.msra.mxu0 %v4401
  %6459 = vmatprep.subr.bf16.mxu0 %v4418
  %6460 = vmatpush1.bf16.msra.mxu0 %v4417
  %6461 = vmatprep.subr.bf16.mxu0 %v4434
  %6462 = vmatpush1.bf16.msra.mxu0 %v4433
  %6463 = vmatprep.subr.bf16.mxu0 %v4450
  %6464 = vmatpush1.bf16.msra.mxu0 %v4449
  %6465 = vmatprep.subr.bf16.mxu0 %v4466
  %6466 = vmatpush1.bf16.msra.mxu0 %v4465
  %6467 = vmatprep.mubr.bf16.mxu0 %v36
  %6468 = vmatmul.mubr.bf16.gmra.mrb[0].mxu0 %v35
  %v6469 = vpop.f32.mrb[0].mxu0
  %v6470 = vadd.f32 %v1082, %v6469
  %v6471 = vpop.f32.mrb[0].mxu0
  %v6472 = vadd.f32 %v1086, %v6471
  %v6473 = vpop.f32.mrb[0].mxu0
  %v6474 = vpop.f32.mrb[0].mxu0
  %6475 = vdwg.mxu0
  %6476 = vmatprep.subr.bf16.mxu0 %v4482
  %6477 = vmatpush1.bf16.msra.mxu0 %v4481
  %6478 = vmatprep.subr.bf16.mxu0 %v4498
  %6479 = vmatpush1.bf16.msra.mxu0 %v4497
  %6480 = vmatprep.subr.bf16.mxu0 %v4514
  %6481 = vmatpush1.bf16.msra.mxu0 %v4513
  %6482 = vmatprep.subr.bf16.mxu0 %v4530
  %6483 = vmatpush1.bf16.msra.mxu0 %v4529
  %6484 = vmatprep.subr.bf16.mxu0 %v4546
  %6485 = vmatpush1.bf16.msra.mxu0 %v4545
  %6486 = vmatprep.subr.bf16.mxu0 %v4562
  %6487 = vmatpush1.bf16.msra.mxu0 %v4561
  %6488 = vmatprep.subr.bf16.mxu0 %v4578
  %6489 = vmatpush1.bf16.msra.mxu0 %v4577
  %6490 = vmatprep.subr.bf16.mxu0 %v4594
  %6491 = vmatpush1.bf16.msra.mxu0 %v4593
  %6492 = vmatprep.subr.bf16.mxu0 %v4610
  %6493 = vmatpush1.bf16.msra.mxu0 %v4609
  %6494 = vmatprep.subr.bf16.mxu0 %v4626
  %6495 = vmatpush1.bf16.msra.mxu0 %v4625
  %6496 = vmatprep.subr.bf16.mxu0 %v4642
  %6497 = vmatpush1.bf16.msra.mxu0 %v4641
  %6498 = vmatprep.subr.bf16.mxu0 %v4658
  %6499 = vmatpush1.bf16.msra.mxu0 %v4657
  %6500 = vmatprep.subr.bf16.mxu0 %v4674
  %6501 = vmatpush1.bf16.msra.mxu0 %v4673
  %6502 = vmatprep.subr.bf16.mxu0 %v4690
  %6503 = vmatpush1.bf16.msra.mxu0 %v4689
  %6504 = vmatprep.subr.bf16.mxu0 %v4706
  %6505 = vmatpush1.bf16.msra.mxu0 %v4705
  %6506 = vmatprep.subr.bf16.mxu0 %v4722
  %6507 = vmatpush1.bf16.msra.mxu0 %v4721
  %6508 = vmatprep.mubr.bf16.mxu0 %v38
  %6509 = vmatmul.mubr.bf16.gmra.mrb[0].mxu0 %v37
  %v6510 = vpop.f32.mrb[0].mxu0
  %v6511 = vadd.f32 %v6470, %v6510
  %v6512 = vpop.f32.mrb[0].mxu0
  %v6513 = vadd.f32 %v6472, %v6512
  %v6514 = vpop.f32.mrb[0].mxu0
  %v6515 = vpop.f32.mrb[0].mxu0
  %6516 = vdwg.mxu0
  %6517 = vmatprep.subr.bf16.mxu0 %v4738
  %6518 = vmatpush1.bf16.msra.mxu0 %v4737
  %6519 = vmatprep.subr.bf16.mxu0 %v4754
  %6520 = vmatpush1.bf16.msra.mxu0 %v4753
  %6521 = vmatprep.subr.bf16.mxu0 %v4770
  %6522 = vmatpush1.bf16.msra.mxu0 %v4769
  %6523 = vmatprep.subr.bf16.mxu0 %v4786
  %6524 = vmatpush1.bf16.msra.mxu0 %v4785
  %6525 = vmatprep.subr.bf16.mxu0 %v4802
  %6526 = vmatpush1.bf16.msra.mxu0 %v4801
  %6527 = vmatprep.subr.bf16.mxu0 %v4818
  %6528 = vmatpush1.bf16.msra.mxu0 %v4817
  %6529 = vmatprep.subr.bf16.mxu0 %v4834
  %6530 = vmatpush1.bf16.msra.mxu0 %v4833
  %6531 = vmatprep.subr.bf16.mxu0 %v4850
  %6532 = vmatpush1.bf16.msra.mxu0 %v4849
  %6533 = vmatprep.subr.bf16.mxu0 %v4866
  %6534 = vmatpush1.bf16.msra.mxu0 %v4865
  %6535 = vmatprep.subr.bf16.mxu0 %v4882
  %6536 = vmatpush1.bf16.msra.mxu0 %v4881
  %6537 = vmatprep.subr.bf16.mxu0 %v4898
  %6538 = vmatpush1.bf16.msra.mxu0 %v4897
  %6539 = vmatprep.subr.bf16.mxu0 %v4914
  %6540 = vmatpush1.bf16.msra.mxu0 %v4913
  %6541 = vmatprep.subr.bf16.mxu0 %v4930
  %6542 = vmatpush1.bf16.msra.mxu0 %v4929
  %6543 = vmatprep.subr.bf16.mxu0 %v4946
  %6544 = vmatpush1.bf16.msra.mxu0 %v4945
  %6545 = vmatprep.subr.bf16.mxu0 %v4962
  %6546 = vmatpush1.bf16.msra.mxu0 %v4961
  %6547 = vmatprep.subr.bf16.mxu0 %v4978
  %6548 = vmatpush1.bf16.msra.mxu0 %v4977
  %6549 = vmatprep.mubr.bf16.mxu0 %v40
  %6550 = vmatmul.mubr.bf16.gmra.mrb[0].mxu0 %v39
  %v6551 = vpop.f32.mrb[0].mxu0
  %v6552 = vadd.f32 %v6511, %v6551
  %v6553 = vpop.f32.mrb[0].mxu0
  %v6554 = vadd.f32 %v6513, %v6553
  %v6555 = vpop.f32.mrb[0].mxu0
  %v6556 = vpop.f32.mrb[0].mxu0
  %6557 = vdwg.mxu0
  %6558 = vmatprep.subr.bf16.mxu0 %v4994
  %6559 = vmatpush1.bf16.msra.mxu0 %v4993
  %6560 = vmatprep.subr.bf16.mxu0 %v5010
  %6561 = vmatpush1.bf16.msra.mxu0 %v5009
  %6562 = vmatprep.subr.bf16.mxu0 %v5026
  %6563 = vmatpush1.bf16.msra.mxu0 %v5025
  %6564 = vmatprep.subr.bf16.mxu0 %v5042
  %6565 = vmatpush1.bf16.msra.mxu0 %v5041
  %6566 = vmatprep.subr.bf16.mxu0 %v5058
  %6567 = vmatpush1.bf16.msra.mxu0 %v5057
  %6568 = vmatprep.subr.bf16.mxu0 %v5074
  %6569 = vmatpush1.bf16.msra.mxu0 %v5073
  %6570 = vmatprep.subr.bf16.mxu0 %v5090
  %6571 = vmatpush1.bf16.msra.mxu0 %v5089
  %6572 = vmatprep.subr.bf16.mxu0 %v5106
  %6573 = vmatpush1.bf16.msra.mxu0 %v5105
  %6574 = vmatprep.subr.bf16.mxu0 %v5122
  %6575 = vmatpush1.bf16.msra.mxu0 %v5121
  %6576 = vmatprep.subr.bf16.mxu0 %v5138
  %6577 = vmatpush1.bf16.msra.mxu0 %v5137
  %6578 = vmatprep.subr.bf16.mxu0 %v5154
  %6579 = vmatpush1.bf16.msra.mxu0 %v5153
  %6580 = vmatprep.subr.bf16.mxu0 %v5170
  %6581 = vmatpush1.bf16.msra.mxu0 %v5169
  %6582 = vmatprep.subr.bf16.mxu0 %v5186
  %6583 = vmatpush1.bf16.msra.mxu0 %v5185
  %6584 = vmatprep.subr.bf16.mxu0 %v5202
  %6585 = vmatpush1.bf16.msra.mxu0 %v5201
  %6586 = vmatprep.subr.bf16.mxu0 %v5218
  %6587 = vmatpush1.bf16.msra.mxu0 %v5217
  %6588 = vmatprep.subr.bf16.mxu0 %v5234
  %6589 = vmatpush1.bf16.msra.mxu0 %v5233
  %6590 = vmatprep.mubr.bf16.mxu0 %v42
  %6591 = vmatmul.mubr.bf16.gmra.mrb[0].mxu0 %v41
  %v6592 = vpop.f32.mrb[0].mxu0
  %v6593 = vadd.f32 %v6552, %v6592
  %v6594 = vpop.f32.mrb[0].mxu0
  %v6595 = vadd.f32 %v6554, %v6594
  %v6596 = vpop.f32.mrb[0].mxu0
  %v6597 = vpop.f32.mrb[0].mxu0
  %6598 = vdwg.mxu0
  %6599 = vmatprep.subr.bf16.mxu0 %v4228
  %6600 = vmatpush1.bf16.msra.mxu0 %v4227
  %6601 = vmatprep.subr.bf16.mxu0 %v4244
  %6602 = vmatpush1.bf16.msra.mxu0 %v4243
  %6603 = vmatprep.subr.bf16.mxu0 %v4260
  %6604 = vmatpush1.bf16.msra.mxu0 %v4259
  %6605 = vmatprep.subr.bf16.mxu0 %v4276
  %6606 = vmatpush1.bf16.msra.mxu0 %v4275
  %6607 = vmatprep.subr.bf16.mxu0 %v4292
  %6608 = vmatpush1.bf16.msra.mxu0 %v4291
  %6609 = vmatprep.subr.bf16.mxu0 %v4308
  %6610 = vmatpush1.bf16.msra.mxu0 %v4307
  %6611 = vmatprep.subr.bf16.mxu0 %v4324
  %6612 = vmatpush1.bf16.msra.mxu0 %v4323
  %6613 = vmatprep.subr.bf16.mxu0 %v4340
  %6614 = vmatpush1.bf16.msra.mxu0 %v4339
  %6615 = vmatprep.subr.bf16.mxu0 %v4356
  %6616 = vmatpush1.bf16.msra.mxu0 %v4355
  %6617 = vmatprep.subr.bf16.mxu0 %v4372
  %6618 = vmatpush1.bf16.msra.mxu0 %v4371
  %6619 = vmatprep.subr.bf16.mxu0 %v4388
  %6620 = vmatpush1.bf16.msra.mxu0 %v4387
  %6621 = vmatprep.subr.bf16.mxu0 %v4404
  %6622 = vmatpush1.bf16.msra.mxu0 %v4403
  %6623 = vmatprep.subr.bf16.mxu0 %v4420
  %6624 = vmatpush1.bf16.msra.mxu0 %v4419
  %6625 = vmatprep.subr.bf16.mxu0 %v4436
  %6626 = vmatpush1.bf16.msra.mxu0 %v4435
  %6627 = vmatprep.subr.bf16.mxu0 %v4452
  %6628 = vmatpush1.bf16.msra.mxu0 %v4451
  %6629 = vmatprep.subr.bf16.mxu0 %v4468
  %6630 = vmatpush1.bf16.msra.mxu0 %v4467
  %6631 = vmatprep.mubr.bf16.mxu0 %v36
  %6632 = vmatmul.mubr.bf16.gmra.mrb[0].mxu0 %v35
  %v6633 = vpop.f32.mrb[0].mxu0
  %v6634 = vadd.f32 %v1090, %v6633
  %v6635 = vpop.f32.mrb[0].mxu0
  %v6636 = vadd.f32 %v1094, %v6635
  %v6637 = vpop.f32.mrb[0].mxu0
  %v6638 = vpop.f32.mrb[0].mxu0
  %6639 = vdwg.mxu0
  %6640 = vmatprep.subr.bf16.mxu0 %v4484
  %6641 = vmatpush1.bf16.msra.mxu0 %v4483
  %6642 = vmatprep.subr.bf16.mxu0 %v4500
  %6643 = vmatpush1.bf16.msra.mxu0 %v4499
  %6644 = vmatprep.subr.bf16.mxu0 %v4516
  %6645 = vmatpush1.bf16.msra.mxu0 %v4515
  %6646 = vmatprep.subr.bf16.mxu0 %v4532
  %6647 = vmatpush1.bf16.msra.mxu0 %v4531
  %6648 = vmatprep.subr.bf16.mxu0 %v4548
  %6649 = vmatpush1.bf16.msra.mxu0 %v4547
  %6650 = vmatprep.subr.bf16.mxu0 %v4564
  %6651 = vmatpush1.bf16.msra.mxu0 %v4563
  %6652 = vmatprep.subr.bf16.mxu0 %v4580
  %6653 = vmatpush1.bf16.msra.mxu0 %v4579
  %6654 = vmatprep.subr.bf16.mxu0 %v4596
  %6655 = vmatpush1.bf16.msra.mxu0 %v4595
  %6656 = vmatprep.subr.bf16.mxu0 %v4612
  %6657 = vmatpush1.bf16.msra.mxu0 %v4611
  %6658 = vmatprep.subr.bf16.mxu0 %v4628
  %6659 = vmatpush1.bf16.msra.mxu0 %v4627
  %6660 = vmatprep.subr.bf16.mxu0 %v4644
  %6661 = vmatpush1.bf16.msra.mxu0 %v4643
  %6662 = vmatprep.subr.bf16.mxu0 %v4660
  %6663 = vmatpush1.bf16.msra.mxu0 %v4659
  %6664 = vmatprep.subr.bf16.mxu0 %v4676
  %6665 = vmatpush1.bf16.msra.mxu0 %v4675
  %6666 = vmatprep.subr.bf16.mxu0 %v4692
  %6667 = vmatpush1.bf16.msra.mxu0 %v4691
  %6668 = vmatprep.subr.bf16.mxu0 %v4708
  %6669 = vmatpush1.bf16.msra.mxu0 %v4707
  %6670 = vmatprep.subr.bf16.mxu0 %v4724
  %6671 = vmatpush1.bf16.msra.mxu0 %v4723
  %6672 = vmatprep.mubr.bf16.mxu0 %v38
  %6673 = vmatmul.mubr.bf16.gmra.mrb[0].mxu0 %v37
  %v6674 = vpop.f32.mrb[0].mxu0
  %v6675 = vadd.f32 %v6634, %v6674
  %v6676 = vpop.f32.mrb[0].mxu0
  %v6677 = vadd.f32 %v6636, %v6676
  %v6678 = vpop.f32.mrb[0].mxu0
  %v6679 = vpop.f32.mrb[0].mxu0
  %6680 = vdwg.mxu0
  %6681 = vmatprep.subr.bf16.mxu0 %v4740
  %6682 = vmatpush1.bf16.msra.mxu0 %v4739
  %6683 = vmatprep.subr.bf16.mxu0 %v4756
  %6684 = vmatpush1.bf16.msra.mxu0 %v4755
  %6685 = vmatprep.subr.bf16.mxu0 %v4772
  %6686 = vmatpush1.bf16.msra.mxu0 %v4771
  %6687 = vmatprep.subr.bf16.mxu0 %v4788
  %6688 = vmatpush1.bf16.msra.mxu0 %v4787
  %6689 = vmatprep.subr.bf16.mxu0 %v4804
  %6690 = vmatpush1.bf16.msra.mxu0 %v4803
  %6691 = vmatprep.subr.bf16.mxu0 %v4820
  %6692 = vmatpush1.bf16.msra.mxu0 %v4819
  %6693 = vmatprep.subr.bf16.mxu0 %v4836
  %6694 = vmatpush1.bf16.msra.mxu0 %v4835
  %6695 = vmatprep.subr.bf16.mxu0 %v4852
  %6696 = vmatpush1.bf16.msra.mxu0 %v4851
  %6697 = vmatprep.subr.bf16.mxu0 %v4868
  %6698 = vmatpush1.bf16.msra.mxu0 %v4867
  %6699 = vmatprep.subr.bf16.mxu0 %v4884
  %6700 = vmatpush1.bf16.msra.mxu0 %v4883
  %6701 = vmatprep.subr.bf16.mxu0 %v4900
  %6702 = vmatpush1.bf16.msra.mxu0 %v4899
  %6703 = vmatprep.subr.bf16.mxu0 %v4916
  %6704 = vmatpush1.bf16.msra.mxu0 %v4915
  %6705 = vmatprep.subr.bf16.mxu0 %v4932
  %6706 = vmatpush1.bf16.msra.mxu0 %v4931
  %6707 = vmatprep.subr.bf16.mxu0 %v4948
  %6708 = vmatpush1.bf16.msra.mxu0 %v4947
  %6709 = vmatprep.subr.bf16.mxu0 %v4964
  %6710 = vmatpush1.bf16.msra.mxu0 %v4963
  %6711 = vmatprep.subr.bf16.mxu0 %v4980
  %6712 = vmatpush1.bf16.msra.mxu0 %v4979
  %6713 = vmatprep.mubr.bf16.mxu0 %v40
  %6714 = vmatmul.mubr.bf16.gmra.mrb[0].mxu0 %v39
  %v6715 = vpop.f32.mrb[0].mxu0
  %v6716 = vadd.f32 %v6675, %v6715
  %v6717 = vpop.f32.mrb[0].mxu0
  %v6718 = vadd.f32 %v6677, %v6717
  %v6719 = vpop.f32.mrb[0].mxu0
  %v6720 = vpop.f32.mrb[0].mxu0
  %6721 = vdwg.mxu0
  %6722 = vmatprep.subr.bf16.mxu0 %v4996
  %6723 = vmatpush1.bf16.msra.mxu0 %v4995
  %6724 = vmatprep.subr.bf16.mxu0 %v5012
  %6725 = vmatpush1.bf16.msra.mxu0 %v5011
  %6726 = vmatprep.subr.bf16.mxu0 %v5028
  %6727 = vmatpush1.bf16.msra.mxu0 %v5027
  %6728 = vmatprep.subr.bf16.mxu0 %v5044
  %6729 = vmatpush1.bf16.msra.mxu0 %v5043
  %6730 = vmatprep.subr.bf16.mxu0 %v5060
  %6731 = vmatpush1.bf16.msra.mxu0 %v5059
  %6732 = vmatprep.subr.bf16.mxu0 %v5076
  %6733 = vmatpush1.bf16.msra.mxu0 %v5075
  %6734 = vmatprep.subr.bf16.mxu0 %v5092
  %6735 = vmatpush1.bf16.msra.mxu0 %v5091
  %6736 = vmatprep.subr.bf16.mxu0 %v5108
  %6737 = vmatpush1.bf16.msra.mxu0 %v5107
  %6738 = vmatprep.subr.bf16.mxu0 %v5124
  %6739 = vmatpush1.bf16.msra.mxu0 %v5123
  %6740 = vmatprep.subr.bf16.mxu0 %v5140
  %6741 = vmatpush1.bf16.msra.mxu0 %v5139
  %6742 = vmatprep.subr.bf16.mxu0 %v5156
  %6743 = vmatpush1.bf16.msra.mxu0 %v5155
  %6744 = vmatprep.subr.bf16.mxu0 %v5172
  %6745 = vmatpush1.bf16.msra.mxu0 %v5171
  %6746 = vmatprep.subr.bf16.mxu0 %v5188
  %6747 = vmatpush1.bf16.msra.mxu0 %v5187
  %6748 = vmatprep.subr.bf16.mxu0 %v5204
  %6749 = vmatpush1.bf16.msra.mxu0 %v5203
  %6750 = vmatprep.subr.bf16.mxu0 %v5220
  %6751 = vmatpush1.bf16.msra.mxu0 %v5219
  %6752 = vmatprep.subr.bf16.mxu0 %v5236
  %6753 = vmatpush1.bf16.msra.mxu0 %v5235
  %6754 = vmatprep.mubr.bf16.mxu0 %v42
  %6755 = vmatmul.mubr.bf16.gmra.mrb[0].mxu0 %v41
  %v6756 = vpop.f32.mrb[0].mxu0
  %v6757 = vadd.f32 %v6716, %v6756
  %v6758 = vpop.f32.mrb[0].mxu0
  %v6759 = vadd.f32 %v6718, %v6758
  %v6760 = vpop.f32.mrb[0].mxu0
  %v6761 = vpop.f32.mrb[0].mxu0
  %6762 = vdwg.mxu0
  %6763 = vmatprep.subr.bf16.mxu0 %v4230
  %6764 = vmatpush1.bf16.msra.mxu0 %v4229
  %6765 = vmatprep.subr.bf16.mxu0 %v4246
  %6766 = vmatpush1.bf16.msra.mxu0 %v4245
  %6767 = vmatprep.subr.bf16.mxu0 %v4262
  %6768 = vmatpush1.bf16.msra.mxu0 %v4261
  %6769 = vmatprep.subr.bf16.mxu0 %v4278
  %6770 = vmatpush1.bf16.msra.mxu0 %v4277
  %6771 = vmatprep.subr.bf16.mxu0 %v4294
  %6772 = vmatpush1.bf16.msra.mxu0 %v4293
  %6773 = vmatprep.subr.bf16.mxu0 %v4310
  %6774 = vmatpush1.bf16.msra.mxu0 %v4309
  %6775 = vmatprep.subr.bf16.mxu0 %v4326
  %6776 = vmatpush1.bf16.msra.mxu0 %v4325
  %6777 = vmatprep.subr.bf16.mxu0 %v4342
  %6778 = vmatpush1.bf16.msra.mxu0 %v4341
  %6779 = vmatprep.subr.bf16.mxu0 %v4358
  %6780 = vmatpush1.bf16.msra.mxu0 %v4357
  %6781 = vmatprep.subr.bf16.mxu0 %v4374
  %6782 = vmatpush1.bf16.msra.mxu0 %v4373
  %6783 = vmatprep.subr.bf16.mxu0 %v4390
  %6784 = vmatpush1.bf16.msra.mxu0 %v4389
  %6785 = vmatprep.subr.bf16.mxu0 %v4406
  %6786 = vmatpush1.bf16.msra.mxu0 %v4405
  %6787 = vmatprep.subr.bf16.mxu0 %v4422
  %6788 = vmatpush1.bf16.msra.mxu0 %v4421
  %6789 = vmatprep.subr.bf16.mxu0 %v4438
  %6790 = vmatpush1.bf16.msra.mxu0 %v4437
  %6791 = vmatprep.subr.bf16.mxu0 %v4454
  %6792 = vmatpush1.bf16.msra.mxu0 %v4453
  %6793 = vmatprep.subr.bf16.mxu0 %v4470
  %6794 = vmatpush1.bf16.msra.mxu0 %v4469
  %6795 = vmatprep.mubr.bf16.mxu0 %v36
  %6796 = vmatmul.mubr.bf16.gmra.mrb[0].mxu0 %v35
  %v6797 = vpop.f32.mrb[0].mxu0
  %v6798 = vadd.f32 %v1098, %v6797
  %v6799 = vpop.f32.mrb[0].mxu0
  %v6800 = vadd.f32 %v1102, %v6799
  %v6801 = vpop.f32.mrb[0].mxu0
  %v6802 = vpop.f32.mrb[0].mxu0
  %6803 = vdwg.mxu0
  %6804 = vmatprep.subr.bf16.mxu0 %v4486
  %6805 = vmatpush1.bf16.msra.mxu0 %v4485
  %6806 = vmatprep.subr.bf16.mxu0 %v4502
  %6807 = vmatpush1.bf16.msra.mxu0 %v4501
  %6808 = vmatprep.subr.bf16.mxu0 %v4518
  %6809 = vmatpush1.bf16.msra.mxu0 %v4517
  %6810 = vmatprep.subr.bf16.mxu0 %v4534
  %6811 = vmatpush1.bf16.msra.mxu0 %v4533
  %6812 = vmatprep.subr.bf16.mxu0 %v4550
  %6813 = vmatpush1.bf16.msra.mxu0 %v4549
  %6814 = vmatprep.subr.bf16.mxu0 %v4566
  %6815 = vmatpush1.bf16.msra.mxu0 %v4565
  %6816 = vmatprep.subr.bf16.mxu0 %v4582
  %6817 = vmatpush1.bf16.msra.mxu0 %v4581
  %6818 = vmatprep.subr.bf16.mxu0 %v4598
  %6819 = vmatpush1.bf16.msra.mxu0 %v4597
  %6820 = vmatprep.subr.bf16.mxu0 %v4614
  %6821 = vmatpush1.bf16.msra.mxu0 %v4613
  %6822 = vmatprep.subr.bf16.mxu0 %v4630
  %6823 = vmatpush1.bf16.msra.mxu0 %v4629
  %6824 = vmatprep.subr.bf16.mxu0 %v4646
  %6825 = vmatpush1.bf16.msra.mxu0 %v4645
  %6826 = vmatprep.subr.bf16.mxu0 %v4662
  %6827 = vmatpush1.bf16.msra.mxu0 %v4661
  %6828 = vmatprep.subr.bf16.mxu0 %v4678
  %6829 = vmatpush1.bf16.msra.mxu0 %v4677
  %6830 = vmatprep.subr.bf16.mxu0 %v4694
  %6831 = vmatpush1.bf16.msra.mxu0 %v4693
  %6832 = vmatprep.subr.bf16.mxu0 %v4710
  %6833 = vmatpush1.bf16.msra.mxu0 %v4709
  %6834 = vmatprep.subr.bf16.mxu0 %v4726
  %6835 = vmatpush1.bf16.msra.mxu0 %v4725
  %6836 = vmatprep.mubr.bf16.mxu0 %v38
  %6837 = vmatmul.mubr.bf16.gmra.mrb[0].mxu0 %v37
  %v6838 = vpop.f32.mrb[0].mxu0
  %v6839 = vadd.f32 %v6798, %v6838
  %v6840 = vpop.f32.mrb[0].mxu0
  %v6841 = vadd.f32 %v6800, %v6840
  %v6842 = vpop.f32.mrb[0].mxu0
  %v6843 = vpop.f32.mrb[0].mxu0
  %6844 = vdwg.mxu0
  %6845 = vmatprep.subr.bf16.mxu0 %v4742
  %6846 = vmatpush1.bf16.msra.mxu0 %v4741
  %6847 = vmatprep.subr.bf16.mxu0 %v4758
  %6848 = vmatpush1.bf16.msra.mxu0 %v4757
  %6849 = vmatprep.subr.bf16.mxu0 %v4774
  %6850 = vmatpush1.bf16.msra.mxu0 %v4773
  %6851 = vmatprep.subr.bf16.mxu0 %v4790
  %6852 = vmatpush1.bf16.msra.mxu0 %v4789
  %6853 = vmatprep.subr.bf16.mxu0 %v4806
  %6854 = vmatpush1.bf16.msra.mxu0 %v4805
  %6855 = vmatprep.subr.bf16.mxu0 %v4822
  %6856 = vmatpush1.bf16.msra.mxu0 %v4821
  %6857 = vmatprep.subr.bf16.mxu0 %v4838
  %6858 = vmatpush1.bf16.msra.mxu0 %v4837
  %6859 = vmatprep.subr.bf16.mxu0 %v4854
  %6860 = vmatpush1.bf16.msra.mxu0 %v4853
  %6861 = vmatprep.subr.bf16.mxu0 %v4870
  %6862 = vmatpush1.bf16.msra.mxu0 %v4869
  %6863 = vmatprep.subr.bf16.mxu0 %v4886
  %6864 = vmatpush1.bf16.msra.mxu0 %v4885
  %6865 = vmatprep.subr.bf16.mxu0 %v4902
  %6866 = vmatpush1.bf16.msra.mxu0 %v4901
  %6867 = vmatprep.subr.bf16.mxu0 %v4918
  %6868 = vmatpush1.bf16.msra.mxu0 %v4917
  %6869 = vmatprep.subr.bf16.mxu0 %v4934
  %6870 = vmatpush1.bf16.msra.mxu0 %v4933
  %6871 = vmatprep.subr.bf16.mxu0 %v4950
  %6872 = vmatpush1.bf16.msra.mxu0 %v4949
  %6873 = vmatprep.subr.bf16.mxu0 %v4966
  %6874 = vmatpush1.bf16.msra.mxu0 %v4965
  %6875 = vmatprep.subr.bf16.mxu0 %v4982
  %6876 = vmatpush1.bf16.msra.mxu0 %v4981
  %6877 = vmatprep.mubr.bf16.mxu0 %v40
  %6878 = vmatmul.mubr.bf16.gmra.mrb[0].mxu0 %v39
  %v6879 = vpop.f32.mrb[0].mxu0
  %v6880 = vadd.f32 %v6839, %v6879
  %v6881 = vpop.f32.mrb[0].mxu0
  %v6882 = vadd.f32 %v6841, %v6881
  %v6883 = vpop.f32.mrb[0].mxu0
  %v6884 = vpop.f32.mrb[0].mxu0
  %6885 = vdwg.mxu0
  %6886 = vmatprep.subr.bf16.mxu0 %v4998
  %6887 = vmatpush1.bf16.msra.mxu0 %v4997
  %6888 = vmatprep.subr.bf16.mxu0 %v5014
  %6889 = vmatpush1.bf16.msra.mxu0 %v5013
  %6890 = vmatprep.subr.bf16.mxu0 %v5030
  %6891 = vmatpush1.bf16.msra.mxu0 %v5029
  %6892 = vmatprep.subr.bf16.mxu0 %v5046
  %6893 = vmatpush1.bf16.msra.mxu0 %v5045
  %6894 = vmatprep.subr.bf16.mxu0 %v5062
  %6895 = vmatpush1.bf16.msra.mxu0 %v5061
  %6896 = vmatprep.subr.bf16.mxu0 %v5078
  %6897 = vmatpush1.bf16.msra.mxu0 %v5077
  %6898 = vmatprep.subr.bf16.mxu0 %v5094
  %6899 = vmatpush1.bf16.msra.mxu0 %v5093
  %6900 = vmatprep.subr.bf16.mxu0 %v5110
  %6901 = vmatpush1.bf16.msra.mxu0 %v5109
  %6902 = vmatprep.subr.bf16.mxu0 %v5126
  %6903 = vmatpush1.bf16.msra.mxu0 %v5125
  %6904 = vmatprep.subr.bf16.mxu0 %v5142
  %6905 = vmatpush1.bf16.msra.mxu0 %v5141
  %6906 = vmatprep.subr.bf16.mxu0 %v5158
  %6907 = vmatpush1.bf16.msra.mxu0 %v5157
  %6908 = vmatprep.subr.bf16.mxu0 %v5174
  %6909 = vmatpush1.bf16.msra.mxu0 %v5173
  %6910 = vmatprep.subr.bf16.mxu0 %v5190
  %6911 = vmatpush1.bf16.msra.mxu0 %v5189
  %6912 = vmatprep.subr.bf16.mxu0 %v5206
  %6913 = vmatpush1.bf16.msra.mxu0 %v5205
  %6914 = vmatprep.subr.bf16.mxu0 %v5222
  %6915 = vmatpush1.bf16.msra.mxu0 %v5221
  %6916 = vmatprep.subr.bf16.mxu0 %v5238
  %6917 = vmatpush1.bf16.msra.mxu0 %v5237
  %6918 = vmatprep.mubr.bf16.mxu0 %v42
  %6919 = vmatmul.mubr.bf16.gmra.mrb[0].mxu0 %v41
  %v6920 = vpop.f32.mrb[0].mxu0
  %v6921 = vadd.f32 %v6880, %v6920
  %v6922 = vpop.f32.mrb[0].mxu0
  %v6923 = vadd.f32 %v6882, %v6922
  %v6924 = vpop.f32.mrb[0].mxu0
  %v6925 = vpop.f32.mrb[0].mxu0
  %6926 = vdwg.mxu0
  %6927 = vmatprep.subr.bf16.mxu0 %v4232
  %6928 = vmatpush1.bf16.msra.mxu0 %v4231
  %6929 = vmatprep.subr.bf16.mxu0 %v4248
  %6930 = vmatpush1.bf16.msra.mxu0 %v4247
  %6931 = vmatprep.subr.bf16.mxu0 %v4264
  %6932 = vmatpush1.bf16.msra.mxu0 %v4263
  %6933 = vmatprep.subr.bf16.mxu0 %v4280
  %6934 = vmatpush1.bf16.msra.mxu0 %v4279
  %6935 = vmatprep.subr.bf16.mxu0 %v4296
  %6936 = vmatpush1.bf16.msra.mxu0 %v4295
  %6937 = vmatprep.subr.bf16.mxu0 %v4312
  %6938 = vmatpush1.bf16.msra.mxu0 %v4311
  %6939 = vmatprep.subr.bf16.mxu0 %v4328
  %6940 = vmatpush1.bf16.msra.mxu0 %v4327
  %6941 = vmatprep.subr.bf16.mxu0 %v4344
  %6942 = vmatpush1.bf16.msra.mxu0 %v4343
  %6943 = vmatprep.subr.bf16.mxu0 %v4360
  %6944 = vmatpush1.bf16.msra.mxu0 %v4359
  %6945 = vmatprep.subr.bf16.mxu0 %v4376
  %6946 = vmatpush1.bf16.msra.mxu0 %v4375
  %6947 = vmatprep.subr.bf16.mxu0 %v4392
  %6948 = vmatpush1.bf16.msra.mxu0 %v4391
  %6949 = vmatprep.subr.bf16.mxu0 %v4408
  %6950 = vmatpush1.bf16.msra.mxu0 %v4407
  %6951 = vmatprep.subr.bf16.mxu0 %v4424
  %6952 = vmatpush1.bf16.msra.mxu0 %v4423
  %6953 = vmatprep.subr.bf16.mxu0 %v4440
  %6954 = vmatpush1.bf16.msra.mxu0 %v4439
  %6955 = vmatprep.subr.bf16.mxu0 %v4456
  %6956 = vmatpush1.bf16.msra.mxu0 %v4455
  %6957 = vmatprep.subr.bf16.mxu0 %v4472
  %6958 = vmatpush1.bf16.msra.mxu0 %v4471
  %6959 = vmatprep.mubr.bf16.mxu0 %v36
  %6960 = vmatmul.mubr.bf16.gmra.mrb[0].mxu0 %v35
  %v6961 = vpop.f32.mrb[0].mxu0
  %v6962 = vadd.f32 %v1106, %v6961
  %v6963 = vpop.f32.mrb[0].mxu0
  %v6964 = vadd.f32 %v1110, %v6963
  %v6965 = vpop.f32.mrb[0].mxu0
  %v6966 = vpop.f32.mrb[0].mxu0
  %6967 = vdwg.mxu0
  %6968 = vmatprep.subr.bf16.mxu0 %v4488
  %6969 = vmatpush1.bf16.msra.mxu0 %v4487
  %6970 = vmatprep.subr.bf16.mxu0 %v4504
  %6971 = vmatpush1.bf16.msra.mxu0 %v4503
  %6972 = vmatprep.subr.bf16.mxu0 %v4520
  %6973 = vmatpush1.bf16.msra.mxu0 %v4519
  %6974 = vmatprep.subr.bf16.mxu0 %v4536
  %6975 = vmatpush1.bf16.msra.mxu0 %v4535
  %6976 = vmatprep.subr.bf16.mxu0 %v4552
  %6977 = vmatpush1.bf16.msra.mxu0 %v4551
  %6978 = vmatprep.subr.bf16.mxu0 %v4568
  %6979 = vmatpush1.bf16.msra.mxu0 %v4567
  %6980 = vmatprep.subr.bf16.mxu0 %v4584
  %6981 = vmatpush1.bf16.msra.mxu0 %v4583
  %6982 = vmatprep.subr.bf16.mxu0 %v4600
  %6983 = vmatpush1.bf16.msra.mxu0 %v4599
  %6984 = vmatprep.subr.bf16.mxu0 %v4616
  %6985 = vmatpush1.bf16.msra.mxu0 %v4615
  %6986 = vmatprep.subr.bf16.mxu0 %v4632
  %6987 = vmatpush1.bf16.msra.mxu0 %v4631
  %6988 = vmatprep.subr.bf16.mxu0 %v4648
  %6989 = vmatpush1.bf16.msra.mxu0 %v4647
  %6990 = vmatprep.subr.bf16.mxu0 %v4664
  %6991 = vmatpush1.bf16.msra.mxu0 %v4663
  %6992 = vmatprep.subr.bf16.mxu0 %v4680
  %6993 = vmatpush1.bf16.msra.mxu0 %v4679
  %6994 = vmatprep.subr.bf16.mxu0 %v4696
  %6995 = vmatpush1.bf16.msra.mxu0 %v4695
  %6996 = vmatprep.subr.bf16.mxu0 %v4712
  %6997 = vmatpush1.bf16.msra.mxu0 %v4711
  %6998 = vmatprep.subr.bf16.mxu0 %v4728
  %6999 = vmatpush1.bf16.msra.mxu0 %v4727
  %7000 = vmatprep.mubr.bf16.mxu0 %v38
  %7001 = vmatmul.mubr.bf16.gmra.mrb[0].mxu0 %v37
  %v7002 = vpop.f32.mrb[0].mxu0
  %v7003 = vadd.f32 %v6962, %v7002
  %v7004 = vpop.f32.mrb[0].mxu0
  %v7005 = vadd.f32 %v6964, %v7004
  %v7006 = vpop.f32.mrb[0].mxu0
  %v7007 = vpop.f32.mrb[0].mxu0
  %7008 = vdwg.mxu0
  %7009 = vmatprep.subr.bf16.mxu0 %v4744
  %7010 = vmatpush1.bf16.msra.mxu0 %v4743
  %7011 = vmatprep.subr.bf16.mxu0 %v4760
  %7012 = vmatpush1.bf16.msra.mxu0 %v4759
  %7013 = vmatprep.subr.bf16.mxu0 %v4776
  %7014 = vmatpush1.bf16.msra.mxu0 %v4775
  %7015 = vmatprep.subr.bf16.mxu0 %v4792
  %7016 = vmatpush1.bf16.msra.mxu0 %v4791
  %7017 = vmatprep.subr.bf16.mxu0 %v4808
  %7018 = vmatpush1.bf16.msra.mxu0 %v4807
  %7019 = vmatprep.subr.bf16.mxu0 %v4824
  %7020 = vmatpush1.bf16.msra.mxu0 %v4823
  %7021 = vmatprep.subr.bf16.mxu0 %v4840
  %7022 = vmatpush1.bf16.msra.mxu0 %v4839
  %7023 = vmatprep.subr.bf16.mxu0 %v4856
  %7024 = vmatpush1.bf16.msra.mxu0 %v4855
  %7025 = vmatprep.subr.bf16.mxu0 %v4872
  %7026 = vmatpush1.bf16.msra.mxu0 %v4871
  %7027 = vmatprep.subr.bf16.mxu0 %v4888
  %7028 = vmatpush1.bf16.msra.mxu0 %v4887
  %7029 = vmatprep.subr.bf16.mxu0 %v4904
  %7030 = vmatpush1.bf16.msra.mxu0 %v4903
  %7031 = vmatprep.subr.bf16.mxu0 %v4920
  %7032 = vmatpush1.bf16.msra.mxu0 %v4919
  %7033 = vmatprep.subr.bf16.mxu0 %v4936
  %7034 = vmatpush1.bf16.msra.mxu0 %v4935
  %7035 = vmatprep.subr.bf16.mxu0 %v4952
  %7036 = vmatpush1.bf16.msra.mxu0 %v4951
  %7037 = vmatprep.subr.bf16.mxu0 %v4968
  %7038 = vmatpush1.bf16.msra.mxu0 %v4967
  %7039 = vmatprep.subr.bf16.mxu0 %v4984
  %7040 = vmatpush1.bf16.msra.mxu0 %v4983
  %7041 = vmatprep.mubr.bf16.mxu0 %v40
  %7042 = vmatmul.mubr.bf16.gmra.mrb[0].mxu0 %v39
  %v7043 = vpop.f32.mrb[0].mxu0
  %v7044 = vadd.f32 %v7003, %v7043
  %v7045 = vpop.f32.mrb[0].mxu0
  %v7046 = vadd.f32 %v7005, %v7045
  %v7047 = vpop.f32.mrb[0].mxu0
  %v7048 = vpop.f32.mrb[0].mxu0
  %7049 = vdwg.mxu0
  %7050 = vmatprep.subr.bf16.mxu0 %v5000
  %7051 = vmatpush1.bf16.msra.mxu0 %v4999
  %7052 = vmatprep.subr.bf16.mxu0 %v5016
  %7053 = vmatpush1.bf16.msra.mxu0 %v5015
  %7054 = vmatprep.subr.bf16.mxu0 %v5032
  %7055 = vmatpush1.bf16.msra.mxu0 %v5031
  %7056 = vmatprep.subr.bf16.mxu0 %v5048
  %7057 = vmatpush1.bf16.msra.mxu0 %v5047
  %7058 = vmatprep.subr.bf16.mxu0 %v5064
  %7059 = vmatpush1.bf16.msra.mxu0 %v5063
  %7060 = vmatprep.subr.bf16.mxu0 %v5080
  %7061 = vmatpush1.bf16.msra.mxu0 %v5079
  %7062 = vmatprep.subr.bf16.mxu0 %v5096
  %7063 = vmatpush1.bf16.msra.mxu0 %v5095
  %7064 = vmatprep.subr.bf16.mxu0 %v5112
  %7065 = vmatpush1.bf16.msra.mxu0 %v5111
  %7066 = vmatprep.subr.bf16.mxu0 %v5128
  %7067 = vmatpush1.bf16.msra.mxu0 %v5127
  %7068 = vmatprep.subr.bf16.mxu0 %v5144
  %7069 = vmatpush1.bf16.msra.mxu0 %v5143
  %7070 = vmatprep.subr.bf16.mxu0 %v5160
  %7071 = vmatpush1.bf16.msra.mxu0 %v5159
  %7072 = vmatprep.subr.bf16.mxu0 %v5176
  %7073 = vmatpush1.bf16.msra.mxu0 %v5175
  %7074 = vmatprep.subr.bf16.mxu0 %v5192
  %7075 = vmatpush1.bf16.msra.mxu0 %v5191
  %7076 = vmatprep.subr.bf16.mxu0 %v5208
  %7077 = vmatpush1.bf16.msra.mxu0 %v5207
  %7078 = vmatprep.subr.bf16.mxu0 %v5224
  %7079 = vmatpush1.bf16.msra.mxu0 %v5223
  %7080 = vmatprep.subr.bf16.mxu0 %v5240
  %7081 = vmatpush1.bf16.msra.mxu0 %v5239
  %7082 = vmatprep.mubr.bf16.mxu0 %v42
  %7083 = vmatmul.mubr.bf16.gmra.mrb[0].mxu0 %v41
  %v7084 = vpop.f32.mrb[0].mxu0
  %v7085 = vadd.f32 %v7044, %v7084
  %v7086 = vpop.f32.mrb[0].mxu0
  %v7087 = vadd.f32 %v7046, %v7086
  %v7088 = vpop.f32.mrb[0].mxu0
  %v7089 = vpop.f32.mrb[0].mxu0
  %7090 = vdwg.mxu0
  %7091 = vmatprep.subr.bf16.mxu0 %v4234
  %7092 = vmatpush1.bf16.msra.mxu0 %v4233
  %7093 = vmatprep.subr.bf16.mxu0 %v4250
  %7094 = vmatpush1.bf16.msra.mxu0 %v4249
  %7095 = vmatprep.subr.bf16.mxu0 %v4266
  %7096 = vmatpush1.bf16.msra.mxu0 %v4265
  %7097 = vmatprep.subr.bf16.mxu0 %v4282
  %7098 = vmatpush1.bf16.msra.mxu0 %v4281
  %7099 = vmatprep.subr.bf16.mxu0 %v4298
  %7100 = vmatpush1.bf16.msra.mxu0 %v4297
  %7101 = vmatprep.subr.bf16.mxu0 %v4314
  %7102 = vmatpush1.bf16.msra.mxu0 %v4313
  %7103 = vmatprep.subr.bf16.mxu0 %v4330
  %7104 = vmatpush1.bf16.msra.mxu0 %v4329
  %7105 = vmatprep.subr.bf16.mxu0 %v4346
  %7106 = vmatpush1.bf16.msra.mxu0 %v4345
  %7107 = vmatprep.subr.bf16.mxu0 %v4362
  %7108 = vmatpush1.bf16.msra.mxu0 %v4361
  %7109 = vmatprep.subr.bf16.mxu0 %v4378
  %7110 = vmatpush1.bf16.msra.mxu0 %v4377
  %7111 = vmatprep.subr.bf16.mxu0 %v4394
  %7112 = vmatpush1.bf16.msra.mxu0 %v4393
  %7113 = vmatprep.subr.bf16.mxu0 %v4410
  %7114 = vmatpush1.bf16.msra.mxu0 %v4409
  %7115 = vmatprep.subr.bf16.mxu0 %v4426
  %7116 = vmatpush1.bf16.msra.mxu0 %v4425
  %7117 = vmatprep.subr.bf16.mxu0 %v4442
  %7118 = vmatpush1.bf16.msra.mxu0 %v4441
  %7119 = vmatprep.subr.bf16.mxu0 %v4458
  %7120 = vmatpush1.bf16.msra.mxu0 %v4457
  %7121 = vmatprep.subr.bf16.mxu0 %v4474
  %7122 = vmatpush1.bf16.msra.mxu0 %v4473
  %7123 = vmatprep.mubr.bf16.mxu0 %v36
  %7124 = vmatmul.mubr.bf16.gmra.mrb[0].mxu0 %v35
  %v7125 = vpop.f32.mrb[0].mxu0
  %v7126 = vadd.f32 %v1114, %v7125
  %v7127 = vpop.f32.mrb[0].mxu0
  %v7128 = vadd.f32 %v1118, %v7127
  %v7129 = vpop.f32.mrb[0].mxu0
  %v7130 = vpop.f32.mrb[0].mxu0
  %7131 = vdwg.mxu0
  %7132 = vmatprep.subr.bf16.mxu0 %v4490
  %7133 = vmatpush1.bf16.msra.mxu0 %v4489
  %7134 = vmatprep.subr.bf16.mxu0 %v4506
  %7135 = vmatpush1.bf16.msra.mxu0 %v4505
  %7136 = vmatprep.subr.bf16.mxu0 %v4522
  %7137 = vmatpush1.bf16.msra.mxu0 %v4521
  %7138 = vmatprep.subr.bf16.mxu0 %v4538
  %7139 = vmatpush1.bf16.msra.mxu0 %v4537
  %7140 = vmatprep.subr.bf16.mxu0 %v4554
  %7141 = vmatpush1.bf16.msra.mxu0 %v4553
  %7142 = vmatprep.subr.bf16.mxu0 %v4570
  %7143 = vmatpush1.bf16.msra.mxu0 %v4569
  %7144 = vmatprep.subr.bf16.mxu0 %v4586
  %7145 = vmatpush1.bf16.msra.mxu0 %v4585
  %7146 = vmatprep.subr.bf16.mxu0 %v4602
  %7147 = vmatpush1.bf16.msra.mxu0 %v4601
  %7148 = vmatprep.subr.bf16.mxu0 %v4618
  %7149 = vmatpush1.bf16.msra.mxu0 %v4617
  %7150 = vmatprep.subr.bf16.mxu0 %v4634
  %7151 = vmatpush1.bf16.msra.mxu0 %v4633
  %7152 = vmatprep.subr.bf16.mxu0 %v4650
  %7153 = vmatpush1.bf16.msra.mxu0 %v4649
  %7154 = vmatprep.subr.bf16.mxu0 %v4666
  %7155 = vmatpush1.bf16.msra.mxu0 %v4665
  %7156 = vmatprep.subr.bf16.mxu0 %v4682
  %7157 = vmatpush1.bf16.msra.mxu0 %v4681
  %7158 = vmatprep.subr.bf16.mxu0 %v4698
  %7159 = vmatpush1.bf16.msra.mxu0 %v4697
  %7160 = vmatprep.subr.bf16.mxu0 %v4714
  %7161 = vmatpush1.bf16.msra.mxu0 %v4713
  %7162 = vmatprep.subr.bf16.mxu0 %v4730
  %7163 = vmatpush1.bf16.msra.mxu0 %v4729
  %7164 = vmatprep.mubr.bf16.mxu0 %v38
  %7165 = vmatmul.mubr.bf16.gmra.mrb[0].mxu0 %v37
  %v7166 = vpop.f32.mrb[0].mxu0
  %v7167 = vadd.f32 %v7126, %v7166
  %v7168 = vpop.f32.mrb[0].mxu0
  %v7169 = vadd.f32 %v7128, %v7168
  %v7170 = vpop.f32.mrb[0].mxu0
  %v7171 = vpop.f32.mrb[0].mxu0
  %7172 = vdwg.mxu0
  %7173 = vmatprep.subr.bf16.mxu0 %v4746
  %7174 = vmatpush1.bf16.msra.mxu0 %v4745
  %7175 = vmatprep.subr.bf16.mxu0 %v4762
  %7176 = vmatpush1.bf16.msra.mxu0 %v4761
  %7177 = vmatprep.subr.bf16.mxu0 %v4778
  %7178 = vmatpush1.bf16.msra.mxu0 %v4777
  %7179 = vmatprep.subr.bf16.mxu0 %v4794
  %7180 = vmatpush1.bf16.msra.mxu0 %v4793
  %7181 = vmatprep.subr.bf16.mxu0 %v4810
  %7182 = vmatpush1.bf16.msra.mxu0 %v4809
  %7183 = vmatprep.subr.bf16.mxu0 %v4826
  %7184 = vmatpush1.bf16.msra.mxu0 %v4825
  %7185 = vmatprep.subr.bf16.mxu0 %v4842
  %7186 = vmatpush1.bf16.msra.mxu0 %v4841
  %7187 = vmatprep.subr.bf16.mxu0 %v4858
  %7188 = vmatpush1.bf16.msra.mxu0 %v4857
  %7189 = vmatprep.subr.bf16.mxu0 %v4874
  %7190 = vmatpush1.bf16.msra.mxu0 %v4873
  %7191 = vmatprep.subr.bf16.mxu0 %v4890
  %7192 = vmatpush1.bf16.msra.mxu0 %v4889
  %7193 = vmatprep.subr.bf16.mxu0 %v4906
  %7194 = vmatpush1.bf16.msra.mxu0 %v4905
  %7195 = vmatprep.subr.bf16.mxu0 %v4922
  %7196 = vmatpush1.bf16.msra.mxu0 %v4921
  %7197 = vmatprep.subr.bf16.mxu0 %v4938
  %7198 = vmatpush1.bf16.msra.mxu0 %v4937
  %7199 = vmatprep.subr.bf16.mxu0 %v4954
  %7200 = vmatpush1.bf16.msra.mxu0 %v4953
  %7201 = vmatprep.subr.bf16.mxu0 %v4970
  %7202 = vmatpush1.bf16.msra.mxu0 %v4969
  %7203 = vmatprep.subr.bf16.mxu0 %v4986
  %7204 = vmatpush1.bf16.msra.mxu0 %v4985
  %7205 = vmatprep.mubr.bf16.mxu0 %v40
  %7206 = vmatmul.mubr.bf16.gmra.mrb[0].mxu0 %v39
  %v7207 = vpop.f32.mrb[0].mxu0
  %v7208 = vadd.f32 %v7167, %v7207
  %v7209 = vpop.f32.mrb[0].mxu0
  %v7210 = vadd.f32 %v7169, %v7209
  %v7211 = vpop.f32.mrb[0].mxu0
  %v7212 = vpop.f32.mrb[0].mxu0
  %7213 = vdwg.mxu0
  %7214 = vmatprep.subr.bf16.mxu0 %v5002
  %7215 = vmatpush1.bf16.msra.mxu0 %v5001
  %7216 = vmatprep.subr.bf16.mxu0 %v5018
  %7217 = vmatpush1.bf16.msra.mxu0 %v5017
  %7218 = vmatprep.subr.bf16.mxu0 %v5034
  %7219 = vmatpush1.bf16.msra.mxu0 %v5033
  %7220 = vmatprep.subr.bf16.mxu0 %v5050
  %7221 = vmatpush1.bf16.msra.mxu0 %v5049
  %7222 = vmatprep.subr.bf16.mxu0 %v5066
  %7223 = vmatpush1.bf16.msra.mxu0 %v5065
  %7224 = vmatprep.subr.bf16.mxu0 %v5082
  %7225 = vmatpush1.bf16.msra.mxu0 %v5081
  %7226 = vmatprep.subr.bf16.mxu0 %v5098
  %7227 = vmatpush1.bf16.msra.mxu0 %v5097
  %7228 = vmatprep.subr.bf16.mxu0 %v5114
  %7229 = vmatpush1.bf16.msra.mxu0 %v5113
  %7230 = vmatprep.subr.bf16.mxu0 %v5130
  %7231 = vmatpush1.bf16.msra.mxu0 %v5129
  %7232 = vmatprep.subr.bf16.mxu0 %v5146
  %7233 = vmatpush1.bf16.msra.mxu0 %v5145
  %7234 = vmatprep.subr.bf16.mxu0 %v5162
  %7235 = vmatpush1.bf16.msra.mxu0 %v5161
  %7236 = vmatprep.subr.bf16.mxu0 %v5178
  %7237 = vmatpush1.bf16.msra.mxu0 %v5177
  %7238 = vmatprep.subr.bf16.mxu0 %v5194
  %7239 = vmatpush1.bf16.msra.mxu0 %v5193
  %7240 = vmatprep.subr.bf16.mxu0 %v5210
  %7241 = vmatpush1.bf16.msra.mxu0 %v5209
  %7242 = vmatprep.subr.bf16.mxu0 %v5226
  %7243 = vmatpush1.bf16.msra.mxu0 %v5225
  %7244 = vmatprep.subr.bf16.mxu0 %v5242
  %7245 = vmatpush1.bf16.msra.mxu0 %v5241
  %7246 = vmatprep.mubr.bf16.mxu0 %v42
  %7247 = vmatmul.mubr.bf16.gmra.mrb[0].mxu0 %v41
  %v7248 = vpop.f32.mrb[0].mxu0
  %v7249 = vadd.f32 %v7208, %v7248
  %v7250 = vpop.f32.mrb[0].mxu0
  %v7251 = vadd.f32 %v7210, %v7250
  %v7252 = vpop.f32.mrb[0].mxu0
  %v7253 = vpop.f32.mrb[0].mxu0
  %7254 = vdwg.mxu0
  %7255 = vmatprep.subr.bf16.mxu0 %v4236
  %7256 = vmatpush1.bf16.msra.mxu0 %v4235
  %7257 = vmatprep.subr.bf16.mxu0 %v4252
  %7258 = vmatpush1.bf16.msra.mxu0 %v4251
  %7259 = vmatprep.subr.bf16.mxu0 %v4268
  %7260 = vmatpush1.bf16.msra.mxu0 %v4267
  %7261 = vmatprep.subr.bf16.mxu0 %v4284
  %7262 = vmatpush1.bf16.msra.mxu0 %v4283
  %7263 = vmatprep.subr.bf16.mxu0 %v4300
  %7264 = vmatpush1.bf16.msra.mxu0 %v4299
  %7265 = vmatprep.subr.bf16.mxu0 %v4316
  %7266 = vmatpush1.bf16.msra.mxu0 %v4315
  %7267 = vmatprep.subr.bf16.mxu0 %v4332
  %7268 = vmatpush1.bf16.msra.mxu0 %v4331
  %7269 = vmatprep.subr.bf16.mxu0 %v4348
  %7270 = vmatpush1.bf16.msra.mxu0 %v4347
  %7271 = vmatprep.subr.bf16.mxu0 %v4364
  %7272 = vmatpush1.bf16.msra.mxu0 %v4363
  %7273 = vmatprep.subr.bf16.mxu0 %v4380
  %7274 = vmatpush1.bf16.msra.mxu0 %v4379
  %7275 = vmatprep.subr.bf16.mxu0 %v4396
  %7276 = vmatpush1.bf16.msra.mxu0 %v4395
  %7277 = vmatprep.subr.bf16.mxu0 %v4412
  %7278 = vmatpush1.bf16.msra.mxu0 %v4411
  %7279 = vmatprep.subr.bf16.mxu0 %v4428
  %7280 = vmatpush1.bf16.msra.mxu0 %v4427
  %7281 = vmatprep.subr.bf16.mxu0 %v4444
  %7282 = vmatpush1.bf16.msra.mxu0 %v4443
  %7283 = vmatprep.subr.bf16.mxu0 %v4460
  %7284 = vmatpush1.bf16.msra.mxu0 %v4459
  %7285 = vmatprep.subr.bf16.mxu0 %v4476
  %7286 = vmatpush1.bf16.msra.mxu0 %v4475
  %7287 = vmatprep.mubr.bf16.mxu0 %v36
  %7288 = vmatmul.mubr.bf16.gmra.mrb[0].mxu0 %v35
  %v7289 = vpop.f32.mrb[0].mxu0
  %v7290 = vadd.f32 %v1122, %v7289
  %v7291 = vpop.f32.mrb[0].mxu0
  %v7292 = vadd.f32 %v1126, %v7291
  %v7293 = vpop.f32.mrb[0].mxu0
  %v7294 = vpop.f32.mrb[0].mxu0
  %7295 = vdwg.mxu0
  %7296 = vmatprep.subr.bf16.mxu0 %v4492
  %7297 = vmatpush1.bf16.msra.mxu0 %v4491
  %7298 = vmatprep.subr.bf16.mxu0 %v4508
  %7299 = vmatpush1.bf16.msra.mxu0 %v4507
  %7300 = vmatprep.subr.bf16.mxu0 %v4524
  %7301 = vmatpush1.bf16.msra.mxu0 %v4523
  %7302 = vmatprep.subr.bf16.mxu0 %v4540
  %7303 = vmatpush1.bf16.msra.mxu0 %v4539
  %7304 = vmatprep.subr.bf16.mxu0 %v4556
  %7305 = vmatpush1.bf16.msra.mxu0 %v4555
  %7306 = vmatprep.subr.bf16.mxu0 %v4572
  %7307 = vmatpush1.bf16.msra.mxu0 %v4571
  %7308 = vmatprep.subr.bf16.mxu0 %v4588
  %7309 = vmatpush1.bf16.msra.mxu0 %v4587
  %7310 = vmatprep.subr.bf16.mxu0 %v4604
  %7311 = vmatpush1.bf16.msra.mxu0 %v4603
  %7312 = vmatprep.subr.bf16.mxu0 %v4620
  %7313 = vmatpush1.bf16.msra.mxu0 %v4619
  %7314 = vmatprep.subr.bf16.mxu0 %v4636
  %7315 = vmatpush1.bf16.msra.mxu0 %v4635
  %7316 = vmatprep.subr.bf16.mxu0 %v4652
  %7317 = vmatpush1.bf16.msra.mxu0 %v4651
  %7318 = vmatprep.subr.bf16.mxu0 %v4668
  %7319 = vmatpush1.bf16.msra.mxu0 %v4667
  %7320 = vmatprep.subr.bf16.mxu0 %v4684
  %7321 = vmatpush1.bf16.msra.mxu0 %v4683
  %7322 = vmatprep.subr.bf16.mxu0 %v4700
  %7323 = vmatpush1.bf16.msra.mxu0 %v4699
  %7324 = vmatprep.subr.bf16.mxu0 %v4716
  %7325 = vmatpush1.bf16.msra.mxu0 %v4715
  %7326 = vmatprep.subr.bf16.mxu0 %v4732
  %7327 = vmatpush1.bf16.msra.mxu0 %v4731
  %7328 = vmatprep.mubr.bf16.mxu0 %v38
  %7329 = vmatmul.mubr.bf16.gmra.mrb[0].mxu0 %v37
  %v7330 = vpop.f32.mrb[0].mxu0
  %v7331 = vadd.f32 %v7290, %v7330
  %v7332 = vpop.f32.mrb[0].mxu0
  %v7333 = vadd.f32 %v7292, %v7332
  %v7334 = vpop.f32.mrb[0].mxu0
  %v7335 = vpop.f32.mrb[0].mxu0
  %7336 = vdwg.mxu0
  %7337 = vmatprep.subr.bf16.mxu0 %v4748
  %7338 = vmatpush1.bf16.msra.mxu0 %v4747
  %7339 = vmatprep.subr.bf16.mxu0 %v4764
  %7340 = vmatpush1.bf16.msra.mxu0 %v4763
  %7341 = vmatprep.subr.bf16.mxu0 %v4780
  %7342 = vmatpush1.bf16.msra.mxu0 %v4779
  %7343 = vmatprep.subr.bf16.mxu0 %v4796
  %7344 = vmatpush1.bf16.msra.mxu0 %v4795
  %7345 = vmatprep.subr.bf16.mxu0 %v4812
  %7346 = vmatpush1.bf16.msra.mxu0 %v4811
  %7347 = vmatprep.subr.bf16.mxu0 %v4828
  %7348 = vmatpush1.bf16.msra.mxu0 %v4827
  %7349 = vmatprep.subr.bf16.mxu0 %v4844
  %7350 = vmatpush1.bf16.msra.mxu0 %v4843
  %7351 = vmatprep.subr.bf16.mxu0 %v4860
  %7352 = vmatpush1.bf16.msra.mxu0 %v4859
  %7353 = vmatprep.subr.bf16.mxu0 %v4876
  %7354 = vmatpush1.bf16.msra.mxu0 %v4875
  %7355 = vmatprep.subr.bf16.mxu0 %v4892
  %7356 = vmatpush1.bf16.msra.mxu0 %v4891
  %7357 = vmatprep.subr.bf16.mxu0 %v4908
  %7358 = vmatpush1.bf16.msra.mxu0 %v4907
  %7359 = vmatprep.subr.bf16.mxu0 %v4924
  %7360 = vmatpush1.bf16.msra.mxu0 %v4923
  %7361 = vmatprep.subr.bf16.mxu0 %v4940
  %7362 = vmatpush1.bf16.msra.mxu0 %v4939
  %7363 = vmatprep.subr.bf16.mxu0 %v4956
  %7364 = vmatpush1.bf16.msra.mxu0 %v4955
  %7365 = vmatprep.subr.bf16.mxu0 %v4972
  %7366 = vmatpush1.bf16.msra.mxu0 %v4971
  %7367 = vmatprep.subr.bf16.mxu0 %v4988
  %7368 = vmatpush1.bf16.msra.mxu0 %v4987
  %7369 = vmatprep.mubr.bf16.mxu0 %v40
  %7370 = vmatmul.mubr.bf16.gmra.mrb[0].mxu0 %v39
  %v7371 = vpop.f32.mrb[0].mxu0
  %v7372 = vadd.f32 %v7331, %v7371
  %v7373 = vpop.f32.mrb[0].mxu0
  %v7374 = vadd.f32 %v7333, %v7373
  %v7375 = vpop.f32.mrb[0].mxu0
  %v7376 = vpop.f32.mrb[0].mxu0
  %7377 = vdwg.mxu0
  %7378 = vmatprep.subr.bf16.mxu0 %v5004
  %7379 = vmatpush1.bf16.msra.mxu0 %v5003
  %7380 = vmatprep.subr.bf16.mxu0 %v5020
  %7381 = vmatpush1.bf16.msra.mxu0 %v5019
  %7382 = vmatprep.subr.bf16.mxu0 %v5036
  %7383 = vmatpush1.bf16.msra.mxu0 %v5035
  %7384 = vmatprep.subr.bf16.mxu0 %v5052
  %7385 = vmatpush1.bf16.msra.mxu0 %v5051
  %7386 = vmatprep.subr.bf16.mxu0 %v5068
  %7387 = vmatpush1.bf16.msra.mxu0 %v5067
  %7388 = vmatprep.subr.bf16.mxu0 %v5084
  %7389 = vmatpush1.bf16.msra.mxu0 %v5083
  %7390 = vmatprep.subr.bf16.mxu0 %v5100
  %7391 = vmatpush1.bf16.msra.mxu0 %v5099
  %7392 = vmatprep.subr.bf16.mxu0 %v5116
  %7393 = vmatpush1.bf16.msra.mxu0 %v5115
  %7394 = vmatprep.subr.bf16.mxu0 %v5132
  %7395 = vmatpush1.bf16.msra.mxu0 %v5131
  %7396 = vmatprep.subr.bf16.mxu0 %v5148
  %7397 = vmatpush1.bf16.msra.mxu0 %v5147
  %7398 = vmatprep.subr.bf16.mxu0 %v5164
  %7399 = vmatpush1.bf16.msra.mxu0 %v5163
  %7400 = vmatprep.subr.bf16.mxu0 %v5180
  %7401 = vmatpush1.bf16.msra.mxu0 %v5179
  %7402 = vmatprep.subr.bf16.mxu0 %v5196
  %7403 = vmatpush1.bf16.msra.mxu0 %v5195
  %7404 = vmatprep.subr.bf16.mxu0 %v5212
  %7405 = vmatpush1.bf16.msra.mxu0 %v5211
  %7406 = vmatprep.subr.bf16.mxu0 %v5228
  %7407 = vmatpush1.bf16.msra.mxu0 %v5227
  %7408 = vmatprep.subr.bf16.mxu0 %v5244
  %7409 = vmatpush1.bf16.msra.mxu0 %v5243
  %7410 = vmatprep.mubr.bf16.mxu0 %v42
  %7411 = vmatmul.mubr.bf16.gmra.mrb[0].mxu0 %v41
  %v7412 = vpop.f32.mrb[0].mxu0
  %v7413 = vadd.f32 %v7372, %v7412
  %v7414 = vpop.f32.mrb[0].mxu0
  %v7415 = vadd.f32 %v7374, %v7414
  %v7416 = vpop.f32.mrb[0].mxu0
  %v7417 = vpop.f32.mrb[0].mxu0
  %7418 = vdwg.mxu0
  %7419 = vmatprep.subr.bf16.mxu0 %v4238
  %7420 = vmatpush1.bf16.msra.mxu0 %v4237
  %7421 = vmatprep.subr.bf16.mxu0 %v4254
  %7422 = vmatpush1.bf16.msra.mxu0 %v4253
  %7423 = vmatprep.subr.bf16.mxu0 %v4270
  %7424 = vmatpush1.bf16.msra.mxu0 %v4269
  %7425 = vmatprep.subr.bf16.mxu0 %v4286
  %7426 = vmatpush1.bf16.msra.mxu0 %v4285
  %7427 = vmatprep.subr.bf16.mxu0 %v4302
  %7428 = vmatpush1.bf16.msra.mxu0 %v4301
  %7429 = vmatprep.subr.bf16.mxu0 %v4318
  %7430 = vmatpush1.bf16.msra.mxu0 %v4317
  %7431 = vmatprep.subr.bf16.mxu0 %v4334
  %7432 = vmatpush1.bf16.msra.mxu0 %v4333
  %7433 = vmatprep.subr.bf16.mxu0 %v4350
  %7434 = vmatpush1.bf16.msra.mxu0 %v4349
  %7435 = vmatprep.subr.bf16.mxu0 %v4366
  %7436 = vmatpush1.bf16.msra.mxu0 %v4365
  %7437 = vmatprep.subr.bf16.mxu0 %v4382
  %7438 = vmatpush1.bf16.msra.mxu0 %v4381
  %7439 = vmatprep.subr.bf16.mxu0 %v4398
  %7440 = vmatpush1.bf16.msra.mxu0 %v4397
  %7441 = vmatprep.subr.bf16.mxu0 %v4414
  %7442 = vmatpush1.bf16.msra.mxu0 %v4413
  %7443 = vmatprep.subr.bf16.mxu0 %v4430
  %7444 = vmatpush1.bf16.msra.mxu0 %v4429
  %7445 = vmatprep.subr.bf16.mxu0 %v4446
  %7446 = vmatpush1.bf16.msra.mxu0 %v4445
  %7447 = vmatprep.subr.bf16.mxu0 %v4462
  %7448 = vmatpush1.bf16.msra.mxu0 %v4461
  %7449 = vmatprep.subr.bf16.mxu0 %v4478
  %7450 = vmatpush1.bf16.msra.mxu0 %v4477
  %7451 = vmatprep.mubr.bf16.mxu0 %v36
  %7452 = vmatmul.mubr.bf16.gmra.mrb[0].mxu0 %v35
  %v7453 = vpop.f32.mrb[0].mxu0
  %v7454 = vadd.f32 %v1130, %v7453
  %v7455 = vpop.f32.mrb[0].mxu0
  %v7456 = vadd.f32 %v1134, %v7455
  %v7457 = vpop.f32.mrb[0].mxu0
  %v7458 = vpop.f32.mrb[0].mxu0
  %7459 = vdwg.mxu0
  %7460 = vmatprep.subr.bf16.mxu0 %v4494
  %7461 = vmatpush1.bf16.msra.mxu0 %v4493
  %7462 = vmatprep.subr.bf16.mxu0 %v4510
  %7463 = vmatpush1.bf16.msra.mxu0 %v4509
  %7464 = vmatprep.subr.bf16.mxu0 %v4526
  %7465 = vmatpush1.bf16.msra.mxu0 %v4525
  %7466 = vmatprep.subr.bf16.mxu0 %v4542
  %7467 = vmatpush1.bf16.msra.mxu0 %v4541
  %7468 = vmatprep.subr.bf16.mxu0 %v4558
  %7469 = vmatpush1.bf16.msra.mxu0 %v4557
  %7470 = vmatprep.subr.bf16.mxu0 %v4574
  %7471 = vmatpush1.bf16.msra.mxu0 %v4573
  %7472 = vmatprep.subr.bf16.mxu0 %v4590
  %7473 = vmatpush1.bf16.msra.mxu0 %v4589
  %7474 = vmatprep.subr.bf16.mxu0 %v4606
  %7475 = vmatpush1.bf16.msra.mxu0 %v4605
  %7476 = vmatprep.subr.bf16.mxu0 %v4622
  %7477 = vmatpush1.bf16.msra.mxu0 %v4621
  %7478 = vmatprep.subr.bf16.mxu0 %v4638
  %7479 = vmatpush1.bf16.msra.mxu0 %v4637
  %7480 = vmatprep.subr.bf16.mxu0 %v4654
  %7481 = vmatpush1.bf16.msra.mxu0 %v4653
  %7482 = vmatprep.subr.bf16.mxu0 %v4670
  %7483 = vmatpush1.bf16.msra.mxu0 %v4669
  %7484 = vmatprep.subr.bf16.mxu0 %v4686
  %7485 = vmatpush1.bf16.msra.mxu0 %v4685
  %7486 = vmatprep.subr.bf16.mxu0 %v4702
  %7487 = vmatpush1.bf16.msra.mxu0 %v4701
  %7488 = vmatprep.subr.bf16.mxu0 %v4718
  %7489 = vmatpush1.bf16.msra.mxu0 %v4717
  %7490 = vmatprep.subr.bf16.mxu0 %v4734
  %7491 = vmatpush1.bf16.msra.mxu0 %v4733
  %7492 = vmatprep.mubr.bf16.mxu0 %v38
  %7493 = vmatmul.mubr.bf16.gmra.mrb[0].mxu0 %v37
  %v7494 = vpop.f32.mrb[0].mxu0
  %v7495 = vadd.f32 %v7454, %v7494
  %v7496 = vpop.f32.mrb[0].mxu0
  %v7497 = vadd.f32 %v7456, %v7496
  %v7498 = vpop.f32.mrb[0].mxu0
  %v7499 = vpop.f32.mrb[0].mxu0
  %7500 = vdwg.mxu0
  %7501 = vmatprep.subr.bf16.mxu0 %v4750
  %7502 = vmatpush1.bf16.msra.mxu0 %v4749
  %7503 = vmatprep.subr.bf16.mxu0 %v4766
  %7504 = vmatpush1.bf16.msra.mxu0 %v4765
  %7505 = vmatprep.subr.bf16.mxu0 %v4782
  %7506 = vmatpush1.bf16.msra.mxu0 %v4781
  %7507 = vmatprep.subr.bf16.mxu0 %v4798
  %7508 = vmatpush1.bf16.msra.mxu0 %v4797
  %7509 = vmatprep.subr.bf16.mxu0 %v4814
  %7510 = vmatpush1.bf16.msra.mxu0 %v4813
  %7511 = vmatprep.subr.bf16.mxu0 %v4830
  %7512 = vmatpush1.bf16.msra.mxu0 %v4829
  %7513 = vmatprep.subr.bf16.mxu0 %v4846
  %7514 = vmatpush1.bf16.msra.mxu0 %v4845
  %7515 = vmatprep.subr.bf16.mxu0 %v4862
  %7516 = vmatpush1.bf16.msra.mxu0 %v4861
  %7517 = vmatprep.subr.bf16.mxu0 %v4878
  %7518 = vmatpush1.bf16.msra.mxu0 %v4877
  %7519 = vmatprep.subr.bf16.mxu0 %v4894
  %7520 = vmatpush1.bf16.msra.mxu0 %v4893
  %7521 = vmatprep.subr.bf16.mxu0 %v4910
  %7522 = vmatpush1.bf16.msra.mxu0 %v4909
  %7523 = vmatprep.subr.bf16.mxu0 %v4926
  %7524 = vmatpush1.bf16.msra.mxu0 %v4925
  %7525 = vmatprep.subr.bf16.mxu0 %v4942
  %7526 = vmatpush1.bf16.msra.mxu0 %v4941
  %7527 = vmatprep.subr.bf16.mxu0 %v4958
  %7528 = vmatpush1.bf16.msra.mxu0 %v4957
  %7529 = vmatprep.subr.bf16.mxu0 %v4974
  %7530 = vmatpush1.bf16.msra.mxu0 %v4973
  %7531 = vmatprep.subr.bf16.mxu0 %v4990
  %7532 = vmatpush1.bf16.msra.mxu0 %v4989
  %7533 = vmatprep.mubr.bf16.mxu0 %v40
  %7534 = vmatmul.mubr.bf16.gmra.mrb[0].mxu0 %v39
  %v7535 = vpop.f32.mrb[0].mxu0
  %v7536 = vadd.f32 %v7495, %v7535
  %v7537 = vpop.f32.mrb[0].mxu0
  %v7538 = vadd.f32 %v7497, %v7537
  %v7539 = vpop.f32.mrb[0].mxu0
  %v7540 = vpop.f32.mrb[0].mxu0
  %7541 = vdwg.mxu0
  %7542 = vmatprep.subr.bf16.mxu0 %v5006
  %7543 = vmatpush1.bf16.msra.mxu0 %v5005
  %7544 = vmatprep.subr.bf16.mxu0 %v5022
  %7545 = vmatpush1.bf16.msra.mxu0 %v5021
  %7546 = vmatprep.subr.bf16.mxu0 %v5038
  %7547 = vmatpush1.bf16.msra.mxu0 %v5037
  %7548 = vmatprep.subr.bf16.mxu0 %v5054
  %7549 = vmatpush1.bf16.msra.mxu0 %v5053
  %7550 = vmatprep.subr.bf16.mxu0 %v5070
  %7551 = vmatpush1.bf16.msra.mxu0 %v5069
  %7552 = vmatprep.subr.bf16.mxu0 %v5086
  %7553 = vmatpush1.bf16.msra.mxu0 %v5085
  %7554 = vmatprep.subr.bf16.mxu0 %v5102
  %7555 = vmatpush1.bf16.msra.mxu0 %v5101
  %7556 = vmatprep.subr.bf16.mxu0 %v5118
  %7557 = vmatpush1.bf16.msra.mxu0 %v5117
  %7558 = vmatprep.subr.bf16.mxu0 %v5134
  %7559 = vmatpush1.bf16.msra.mxu0 %v5133
  %7560 = vmatprep.subr.bf16.mxu0 %v5150
  %7561 = vmatpush1.bf16.msra.mxu0 %v5149
  %7562 = vmatprep.subr.bf16.mxu0 %v5166
  %7563 = vmatpush1.bf16.msra.mxu0 %v5165
  %7564 = vmatprep.subr.bf16.mxu0 %v5182
  %7565 = vmatpush1.bf16.msra.mxu0 %v5181
  %7566 = vmatprep.subr.bf16.mxu0 %v5198
  %7567 = vmatpush1.bf16.msra.mxu0 %v5197
  %7568 = vmatprep.subr.bf16.mxu0 %v5214
  %7569 = vmatpush1.bf16.msra.mxu0 %v5213
  %7570 = vmatprep.subr.bf16.mxu0 %v5230
  %7571 = vmatpush1.bf16.msra.mxu0 %v5229
  %7572 = vmatprep.subr.bf16.mxu0 %v5246
  %7573 = vmatpush1.bf16.msra.mxu0 %v5245
  %7574 = vmatprep.mubr.bf16.mxu0 %v42
  %7575 = vmatmul.mubr.bf16.gmra.mrb[0].mxu0 %v41
  %v7576 = vpop.f32.mrb[0].mxu0
  %v7577 = vadd.f32 %v7536, %v7576
  %v7578 = vpop.f32.mrb[0].mxu0
  %v7579 = vadd.f32 %v7538, %v7578
  %v7580 = vpop.f32.mrb[0].mxu0
  %v7581 = vpop.f32.mrb[0].mxu0
  %7582 = vdwg.mxu0
  %v7583 = vmax.f32 %v6429, 0.0
  %v7584 = vmax.f32 %v6431, 0.0
  %v7585 = vmax.f32 %v6593, 0.0
  %v7586 = vmax.f32 %v6595, 0.0
  %v7587 = vmax.f32 %v6757, 0.0
  %v7588 = vmax.f32 %v6759, 0.0
  %v7589 = vmax.f32 %v6921, 0.0
  %v7590 = vmax.f32 %v6923, 0.0
  %v7591 = vmax.f32 %v7085, 0.0
  %v7592 = vmax.f32 %v7087, 0.0
  %v7593 = vmax.f32 %v7249, 0.0
  %v7594 = vmax.f32 %v7251, 0.0
  %v7595 = vmax.f32 %v7413, 0.0
  %v7596 = vmax.f32 %v7415, 0.0
  %v7597 = vmax.f32 %v7577, 0.0
  %v7598 = vmax.f32 %v7579, 0.0
  %v7599 = vpack.c.bf16 %v7583, %v7583
  %v7600 = vpack.c.bf16 %v7584, %v7584
  %v7601 = vpack.c.bf16 %v7585, %v7585
  %v7602 = vpack.c.bf16 %v7586, %v7586
  %v7603 = vpack.c.bf16 %v7587, %v7587
  %v7604 = vpack.c.bf16 %v7588, %v7588
  %v7605 = vpack.c.bf16 %v7589, %v7589
  %v7606 = vpack.c.bf16 %v7590, %v7590
  %v7607 = vpack.c.bf16 %v7591, %v7591
  %v7608 = vpack.c.bf16 %v7592, %v7592
  %v7609 = vpack.c.bf16 %v7593, %v7593
  %v7610 = vpack.c.bf16 %v7594, %v7594
  %v7611 = vpack.c.bf16 %v7595, %v7595
  %v7612 = vpack.c.bf16 %v7596, %v7596
  %v7613 = vpack.c.bf16 %v7597, %v7597
  %v7614 = vpack.c.bf16 %v7598, %v7598
  %v7615 = vld [vmem:[%s3] sm:$0xf]
  %v7616 = vld [vmem:[%s3 + $0x4] sm:$0xf]
  %v7617 = vld [vmem:[%s3 + $0x8] sm:$0xf]
  %v7618 = vld [vmem:[%s3 + $0xc] sm:$0xf]
  %v7619 = vld [vmem:[%s3 + $0x10] sm:$0xf]
  %v7620 = vld [vmem:[%s3 + $0x14] sm:$0xf]
  %v7621 = vld [vmem:[%s3 + $0x18] sm:$0xf]
  %v7622 = vld [vmem:[%s3 + $0x1c] sm:$0xf]
  %v7623 = vld [vmem:[%s3 + $0x20] sm:$0xf]
  %v7624 = vld [vmem:[%s3 + $0x24] sm:$0xf]
  %v7625 = vld [vmem:[%s3 + $0x28] sm:$0xf]
  %v7626 = vld [vmem:[%s3 + $0x2c] sm:$0xf]
  %v7627 = vld [vmem:[%s3 + $0x30] sm:$0xf]
  %v7628 = vld [vmem:[%s3 + $0x34] sm:$0xf]
  %v7629 = vld [vmem:[%s3 + $0x38] sm:$0xf]
  %v7630 = vld [vmem:[%s3 + $0x3c] sm:$0xf]
  %v7631 = vld [vmem:[%s3 + $0x40] sm:$0xf]
  %v7632 = vld [vmem:[%s3 + $0x44] sm:$0xf]
  %v7633 = vld [vmem:[%s3 + $0x48] sm:$0xf]
  %v7634 = vld [vmem:[%s3 + $0x4c] sm:$0xf]
  %v7635 = vld [vmem:[%s3 + $0x50] sm:$0xf]
  %v7636 = vld [vmem:[%s3 + $0x54] sm:$0xf]
  %v7637 = vld [vmem:[%s3 + $0x58] sm:$0xf]
  %v7638 = vld [vmem:[%s3 + $0x5c] sm:$0xf]
  %v7639 = vld [vmem:[%s3 + $0x60] sm:$0xf]
  %v7640 = vld [vmem:[%s3 + $0x64] sm:$0xf]
  %v7641 = vld [vmem:[%s3 + $0x68] sm:$0xf]
  %v7642 = vld [vmem:[%s3 + $0x6c] sm:$0xf]
  %v7643 = vld [vmem:[%s3 + $0x70] sm:$0xf]
  %v7644 = vld [vmem:[%s3 + $0x74] sm:$0xf]
  %v7645 = vld [vmem:[%s3 + $0x78] sm:$0xf]
  %v7646 = vld [vmem:[%s3 + $0x7c] sm:$0xf]
  %v7647 = vld [vmem:[%s3 + $0x80] sm:$0xf]
  %v7648 = vld [vmem:[%s3 + $0x84] sm:$0xf]
  %v7649 = vld [vmem:[%s3 + $0x88] sm:$0xf]
  %v7650 = vld [vmem:[%s3 + $0x8c] sm:$0xf]
  %v7651 = vld [vmem:[%s3 + $0x90] sm:$0xf]
  %v7652 = vld [vmem:[%s3 + $0x94] sm:$0xf]
  %v7653 = vld [vmem:[%s3 + $0x98] sm:$0xf]
  %v7654 = vld [vmem:[%s3 + $0x9c] sm:$0xf]
  %v7655 = vld [vmem:[%s3 + $0xa0] sm:$0xf]
  %v7656 = vld [vmem:[%s3 + $0xa4] sm:$0xf]
  %v7657 = vld [vmem:[%s3 + $0xa8] sm:$0xf]
  %v7658 = vld [vmem:[%s3 + $0xac] sm:$0xf]
  %v7659 = vld [vmem:[%s3 + $0xb0] sm:$0xf]
  %v7660 = vld [vmem:[%s3 + $0xb4] sm:$0xf]
  %v7661 = vld [vmem:[%s3 + $0xb8] sm:$0xf]
  %v7662 = vld [vmem:[%s3 + $0xbc] sm:$0xf]
  %v7663 = vld [vmem:[%s3 + $0xc0] sm:$0xf]
  %v7664 = vld [vmem:[%s3 + $0xc4] sm:$0xf]
  %v7665 = vld [vmem:[%s3 + $0xc8] sm:$0xf]
  %v7666 = vld [vmem:[%s3 + $0xcc] sm:$0xf]
  %v7667 = vld [vmem:[%s3 + $0xd0] sm:$0xf]
  %v7668 = vld [vmem:[%s3 + $0xd4] sm:$0xf]
  %v7669 = vld [vmem:[%s3 + $0xd8] sm:$0xf]
  %v7670 = vld [vmem:[%s3 + $0xdc] sm:$0xf]
  %v7671 = vld [vmem:[%s3 + $0xe0] sm:$0xf]
  %v7672 = vld [vmem:[%s3 + $0xe4] sm:$0xf]
  %v7673 = vld [vmem:[%s3 + $0xe8] sm:$0xf]
  %v7674 = vld [vmem:[%s3 + $0xec] sm:$0xf]
  %v7675 = vld [vmem:[%s3 + $0xf0] sm:$0xf]
  %v7676 = vld [vmem:[%s3 + $0xf4] sm:$0xf]
  %v7677 = vld [vmem:[%s3 + $0xf8] sm:$0xf]
  %v7678 = vld [vmem:[%s3 + $0xfc] sm:$0xf]
  %v7679 = vld [vmem:[%s3 + $0x100] sm:$0xf]
  %v7680 = vld [vmem:[%s3 + $0x104] sm:$0xf]
  %v7681 = vld [vmem:[%s3 + $0x108] sm:$0xf]
  %v7682 = vld [vmem:[%s3 + $0x10c] sm:$0xf]
  %v7683 = vld [vmem:[%s3 + $0x110] sm:$0xf]
  %v7684 = vld [vmem:[%s3 + $0x114] sm:$0xf]
  %v7685 = vld [vmem:[%s3 + $0x118] sm:$0xf]
  %v7686 = vld [vmem:[%s3 + $0x11c] sm:$0xf]
  %v7687 = vld [vmem:[%s3 + $0x120] sm:$0xf]
  %v7688 = vld [vmem:[%s3 + $0x124] sm:$0xf]
  %v7689 = vld [vmem:[%s3 + $0x128] sm:$0xf]
  %v7690 = vld [vmem:[%s3 + $0x12c] sm:$0xf]
  %v7691 = vld [vmem:[%s3 + $0x130] sm:$0xf]
  %v7692 = vld [vmem:[%s3 + $0x134] sm:$0xf]
  %v7693 = vld [vmem:[%s3 + $0x138] sm:$0xf]
  %v7694 = vld [vmem:[%s3 + $0x13c] sm:$0xf]
  %v7695 = vld [vmem:[%s3 + $0x140] sm:$0xf]
  %v7696 = vld [vmem:[%s3 + $0x144] sm:$0xf]
  %v7697 = vld [vmem:[%s3 + $0x148] sm:$0xf]
  %v7698 = vld [vmem:[%s3 + $0x14c] sm:$0xf]
  %v7699 = vld [vmem:[%s3 + $0x150] sm:$0xf]
  %v7700 = vld [vmem:[%s3 + $0x154] sm:$0xf]
  %v7701 = vld [vmem:[%s3 + $0x158] sm:$0xf]
  %v7702 = vld [vmem:[%s3 + $0x15c] sm:$0xf]
  %v7703 = vld [vmem:[%s3 + $0x160] sm:$0xf]
  %v7704 = vld [vmem:[%s3 + $0x164] sm:$0xf]
  %v7705 = vld [vmem:[%s3 + $0x168] sm:$0xf]
  %v7706 = vld [vmem:[%s3 + $0x16c] sm:$0xf]
  %v7707 = vld [vmem:[%s3 + $0x170] sm:$0xf]
  %v7708 = vld [vmem:[%s3 + $0x174] sm:$0xf]
  %v7709 = vld [vmem:[%s3 + $0x178] sm:$0xf]
  %v7710 = vld [vmem:[%s3 + $0x17c] sm:$0xf]
  %v7711 = vld [vmem:[%s3 + $0x180] sm:$0xf]
  %v7712 = vld [vmem:[%s3 + $0x184] sm:$0xf]
  %v7713 = vld [vmem:[%s3 + $0x188] sm:$0xf]
  %v7714 = vld [vmem:[%s3 + $0x18c] sm:$0xf]
  %v7715 = vld [vmem:[%s3 + $0x190] sm:$0xf]
  %v7716 = vld [vmem:[%s3 + $0x194] sm:$0xf]
  %v7717 = vld [vmem:[%s3 + $0x198] sm:$0xf]
  %v7718 = vld [vmem:[%s3 + $0x19c] sm:$0xf]
  %v7719 = vld [vmem:[%s3 + $0x1a0] sm:$0xf]
  %v7720 = vld [vmem:[%s3 + $0x1a4] sm:$0xf]
  %v7721 = vld [vmem:[%s3 + $0x1a8] sm:$0xf]
  %v7722 = vld [vmem:[%s3 + $0x1ac] sm:$0xf]
  %v7723 = vld [vmem:[%s3 + $0x1b0] sm:$0xf]
  %v7724 = vld [vmem:[%s3 + $0x1b4] sm:$0xf]
  %v7725 = vld [vmem:[%s3 + $0x1b8] sm:$0xf]
  %v7726 = vld [vmem:[%s3 + $0x1bc] sm:$0xf]
  %v7727 = vld [vmem:[%s3 + $0x1c0] sm:$0xf]
  %v7728 = vld [vmem:[%s3 + $0x1c4] sm:$0xf]
  %v7729 = vld [vmem:[%s3 + $0x1c8] sm:$0xf]
  %v7730 = vld [vmem:[%s3 + $0x1cc] sm:$0xf]
  %v7731 = vld [vmem:[%s3 + $0x1d0] sm:$0xf]
  %v7732 = vld [vmem:[%s3 + $0x1d4] sm:$0xf]
  %v7733 = vld [vmem:[%s3 + $0x1d8] sm:$0xf]
  %v7734 = vld [vmem:[%s3 + $0x1dc] sm:$0xf]
  %v7735 = vld [vmem:[%s3 + $0x1e0] sm:$0xf]
  %v7736 = vld [vmem:[%s3 + $0x1e4] sm:$0xf]
  %v7737 = vld [vmem:[%s3 + $0x1e8] sm:$0xf]
  %v7738 = vld [vmem:[%s3 + $0x1ec] sm:$0xf]
  %v7739 = vld [vmem:[%s3 + $0x1f0] sm:$0xf]
  %v7740 = vld [vmem:[%s3 + $0x1f4] sm:$0xf]
  %v7741 = vld [vmem:[%s3 + $0x1f8] sm:$0xf]
  %v7742 = vld [vmem:[%s3 + $0x1fc] sm:$0xf]
  %v7743 = vld [vmem:[%s3 + $0x200] sm:$0xf]
  %v7744 = vld [vmem:[%s3 + $0x204] sm:$0xf]
  %v7745 = vld [vmem:[%s3 + $0x208] sm:$0xf]
  %v7746 = vld [vmem:[%s3 + $0x20c] sm:$0xf]
  %v7747 = vld [vmem:[%s3 + $0x210] sm:$0xf]
  %v7748 = vld [vmem:[%s3 + $0x214] sm:$0xf]
  %v7749 = vld [vmem:[%s3 + $0x218] sm:$0xf]
  %v7750 = vld [vmem:[%s3 + $0x21c] sm:$0xf]
  %v7751 = vld [vmem:[%s3 + $0x220] sm:$0xf]
  %v7752 = vld [vmem:[%s3 + $0x224] sm:$0xf]
  %v7753 = vld [vmem:[%s3 + $0x228] sm:$0xf]
  %v7754 = vld [vmem:[%s3 + $0x22c] sm:$0xf]
  %v7755 = vld [vmem:[%s3 + $0x230] sm:$0xf]
  %v7756 = vld [vmem:[%s3 + $0x234] sm:$0xf]
  %v7757 = vld [vmem:[%s3 + $0x238] sm:$0xf]
  %v7758 = vld [vmem:[%s3 + $0x23c] sm:$0xf]
  %v7759 = vld [vmem:[%s3 + $0x240] sm:$0xf]
  %v7760 = vld [vmem:[%s3 + $0x244] sm:$0xf]
  %v7761 = vld [vmem:[%s3 + $0x248] sm:$0xf]
  %v7762 = vld [vmem:[%s3 + $0x24c] sm:$0xf]
  %v7763 = vld [vmem:[%s3 + $0x250] sm:$0xf]
  %v7764 = vld [vmem:[%s3 + $0x254] sm:$0xf]
  %v7765 = vld [vmem:[%s3 + $0x258] sm:$0xf]
  %v7766 = vld [vmem:[%s3 + $0x25c] sm:$0xf]
  %v7767 = vld [vmem:[%s3 + $0x260] sm:$0xf]
  %v7768 = vld [vmem:[%s3 + $0x264] sm:$0xf]
  %v7769 = vld [vmem:[%s3 + $0x268] sm:$0xf]
  %v7770 = vld [vmem:[%s3 + $0x26c] sm:$0xf]
  %v7771 = vld [vmem:[%s3 + $0x270] sm:$0xf]
  %v7772 = vld [vmem:[%s3 + $0x274] sm:$0xf]
  %v7773 = vld [vmem:[%s3 + $0x278] sm:$0xf]
  %v7774 = vld [vmem:[%s3 + $0x27c] sm:$0xf]
  %v7775 = vld [vmem:[%s3 + $0x280] sm:$0xf]
  %v7776 = vld [vmem:[%s3 + $0x284] sm:$0xf]
  %v7777 = vld [vmem:[%s3 + $0x288] sm:$0xf]
  %v7778 = vld [vmem:[%s3 + $0x28c] sm:$0xf]
  %v7779 = vld [vmem:[%s3 + $0x290] sm:$0xf]
  %v7780 = vld [vmem:[%s3 + $0x294] sm:$0xf]
  %v7781 = vld [vmem:[%s3 + $0x298] sm:$0xf]
  %v7782 = vld [vmem:[%s3 + $0x29c] sm:$0xf]
  %v7783 = vld [vmem:[%s3 + $0x2a0] sm:$0xf]
  %v7784 = vld [vmem:[%s3 + $0x2a4] sm:$0xf]
  %v7785 = vld [vmem:[%s3 + $0x2a8] sm:$0xf]
  %v7786 = vld [vmem:[%s3 + $0x2ac] sm:$0xf]
  %v7787 = vld [vmem:[%s3 + $0x2b0] sm:$0xf]
  %v7788 = vld [vmem:[%s3 + $0x2b4] sm:$0xf]
  %v7789 = vld [vmem:[%s3 + $0x2b8] sm:$0xf]
  %v7790 = vld [vmem:[%s3 + $0x2bc] sm:$0xf]
  %v7791 = vld [vmem:[%s3 + $0x2c0] sm:$0xf]
  %v7792 = vld [vmem:[%s3 + $0x2c4] sm:$0xf]
  %v7793 = vld [vmem:[%s3 + $0x2c8] sm:$0xf]
  %v7794 = vld [vmem:[%s3 + $0x2cc] sm:$0xf]
  %v7795 = vld [vmem:[%s3 + $0x2d0] sm:$0xf]
  %v7796 = vld [vmem:[%s3 + $0x2d4] sm:$0xf]
  %v7797 = vld [vmem:[%s3 + $0x2d8] sm:$0xf]
  %v7798 = vld [vmem:[%s3 + $0x2dc] sm:$0xf]
  %v7799 = vld [vmem:[%s3 + $0x2e0] sm:$0xf]
  %v7800 = vld [vmem:[%s3 + $0x2e4] sm:$0xf]
  %v7801 = vld [vmem:[%s3 + $0x2e8] sm:$0xf]
  %v7802 = vld [vmem:[%s3 + $0x2ec] sm:$0xf]
  %v7803 = vld [vmem:[%s3 + $0x2f0] sm:$0xf]
  %v7804 = vld [vmem:[%s3 + $0x2f4] sm:$0xf]
  %v7805 = vld [vmem:[%s3 + $0x2f8] sm:$0xf]
  %v7806 = vld [vmem:[%s3 + $0x2fc] sm:$0xf]
  %v7807 = vld [vmem:[%s3 + $0x300] sm:$0xf]
  %v7808 = vld [vmem:[%s3 + $0x304] sm:$0xf]
  %v7809 = vld [vmem:[%s3 + $0x308] sm:$0xf]
  %v7810 = vld [vmem:[%s3 + $0x30c] sm:$0xf]
  %v7811 = vld [vmem:[%s3 + $0x310] sm:$0xf]
  %v7812 = vld [vmem:[%s3 + $0x314] sm:$0xf]
  %v7813 = vld [vmem:[%s3 + $0x318] sm:$0xf]
  %v7814 = vld [vmem:[%s3 + $0x31c] sm:$0xf]
  %v7815 = vld [vmem:[%s3 + $0x320] sm:$0xf]
  %v7816 = vld [vmem:[%s3 + $0x324] sm:$0xf]
  %v7817 = vld [vmem:[%s3 + $0x328] sm:$0xf]
  %v7818 = vld [vmem:[%s3 + $0x32c] sm:$0xf]
  %v7819 = vld [vmem:[%s3 + $0x330] sm:$0xf]
  %v7820 = vld [vmem:[%s3 + $0x334] sm:$0xf]
  %v7821 = vld [vmem:[%s3 + $0x338] sm:$0xf]
  %v7822 = vld [vmem:[%s3 + $0x33c] sm:$0xf]
  %v7823 = vld [vmem:[%s3 + $0x340] sm:$0xf]
  %v7824 = vld [vmem:[%s3 + $0x344] sm:$0xf]
  %v7825 = vld [vmem:[%s3 + $0x348] sm:$0xf]
  %v7826 = vld [vmem:[%s3 + $0x34c] sm:$0xf]
  %v7827 = vld [vmem:[%s3 + $0x350] sm:$0xf]
  %v7828 = vld [vmem:[%s3 + $0x354] sm:$0xf]
  %v7829 = vld [vmem:[%s3 + $0x358] sm:$0xf]
  %v7830 = vld [vmem:[%s3 + $0x35c] sm:$0xf]
  %v7831 = vld [vmem:[%s3 + $0x360] sm:$0xf]
  %v7832 = vld [vmem:[%s3 + $0x364] sm:$0xf]
  %v7833 = vld [vmem:[%s3 + $0x368] sm:$0xf]
  %v7834 = vld [vmem:[%s3 + $0x36c] sm:$0xf]
  %v7835 = vld [vmem:[%s3 + $0x370] sm:$0xf]
  %v7836 = vld [vmem:[%s3 + $0x374] sm:$0xf]
  %v7837 = vld [vmem:[%s3 + $0x378] sm:$0xf]
  %v7838 = vld [vmem:[%s3 + $0x37c] sm:$0xf]
  %v7839 = vld [vmem:[%s3 + $0x380] sm:$0xf]
  %v7840 = vld [vmem:[%s3 + $0x384] sm:$0xf]
  %v7841 = vld [vmem:[%s3 + $0x388] sm:$0xf]
  %v7842 = vld [vmem:[%s3 + $0x38c] sm:$0xf]
  %v7843 = vld [vmem:[%s3 + $0x390] sm:$0xf]
  %v7844 = vld [vmem:[%s3 + $0x394] sm:$0xf]
  %v7845 = vld [vmem:[%s3 + $0x398] sm:$0xf]
  %v7846 = vld [vmem:[%s3 + $0x39c] sm:$0xf]
  %v7847 = vld [vmem:[%s3 + $0x3a0] sm:$0xf]
  %v7848 = vld [vmem:[%s3 + $0x3a4] sm:$0xf]
  %v7849 = vld [vmem:[%s3 + $0x3a8] sm:$0xf]
  %v7850 = vld [vmem:[%s3 + $0x3ac] sm:$0xf]
  %v7851 = vld [vmem:[%s3 + $0x3b0] sm:$0xf]
  %v7852 = vld [vmem:[%s3 + $0x3b4] sm:$0xf]
  %v7853 = vld [vmem:[%s3 + $0x3b8] sm:$0xf]
  %v7854 = vld [vmem:[%s3 + $0x3bc] sm:$0xf]
  %v7855 = vld [vmem:[%s3 + $0x3c0] sm:$0xf]
  %v7856 = vld [vmem:[%s3 + $0x3c4] sm:$0xf]
  %v7857 = vld [vmem:[%s3 + $0x3c8] sm:$0xf]
  %v7858 = vld [vmem:[%s3 + $0x3cc] sm:$0xf]
  %v7859 = vld [vmem:[%s3 + $0x3d0] sm:$0xf]
  %v7860 = vld [vmem:[%s3 + $0x3d4] sm:$0xf]
  %v7861 = vld [vmem:[%s3 + $0x3d8] sm:$0xf]
  %v7862 = vld [vmem:[%s3 + $0x3dc] sm:$0xf]
  %v7863 = vld [vmem:[%s3 + $0x3e0] sm:$0xf]
  %v7864 = vld [vmem:[%s3 + $0x3e4] sm:$0xf]
  %v7865 = vld [vmem:[%s3 + $0x3e8] sm:$0xf]
  %v7866 = vld [vmem:[%s3 + $0x3ec] sm:$0xf]
  %v7867 = vld [vmem:[%s3 + $0x3f0] sm:$0xf]
  %v7868 = vld [vmem:[%s3 + $0x3f4] sm:$0xf]
  %v7869 = vld [vmem:[%s3 + $0x3f8] sm:$0xf]
  %v7870 = vld [vmem:[%s3 + $0x3fc] sm:$0xf]
  %v7871 = vld [vmem:[%s4] sm:$0x1]
  %v7873 = vlaneseq
  %v7874 = vshrl.u32 %v7873, 7
  %v7875 = vsub.s32 0, %v7874
  %v7876 = vrot.slane %v7871, %v7875
  %v8134 = vunpack.c.l.b16 %v7615
  %v8135 = vunpack.c.l.b16 %v7616
  %v8136 = vunpack.c.l.b16 %v7617
  %v8137 = vunpack.c.l.b16 %v7618
  %v8138 = vunpack.c.l.b16 %v7619
  %v8139 = vunpack.c.l.b16 %v7620
  %v8140 = vunpack.c.l.b16 %v7621
  %v8141 = vunpack.c.l.b16 %v7622
  %v8142 = vunpack.c.l.b16 %v7623
  %v8143 = vunpack.c.l.b16 %v7624
  %v8144 = vunpack.c.l.b16 %v7625
  %v8145 = vunpack.c.l.b16 %v7626
  %v8146 = vunpack.c.l.b16 %v7627
  %v8147 = vunpack.c.l.b16 %v7628
  %v8148 = vunpack.c.l.b16 %v7629
  %v8149 = vunpack.c.l.b16 %v7630
  %v8150 = vunpack.c.l.b16 %v7631
  %v8151 = vunpack.c.l.b16 %v7632
  %v8152 = vunpack.c.l.b16 %v7633
  %v8153 = vunpack.c.l.b16 %v7634
  %v8154 = vunpack.c.l.b16 %v7635
  %v8155 = vunpack.c.l.b16 %v7636
  %v8156 = vunpack.c.l.b16 %v7637
  %v8157 = vunpack.c.l.b16 %v7638
  %v8158 = vunpack.c.l.b16 %v7639
  %v8159 = vunpack.c.l.b16 %v7640
  %v8160 = vunpack.c.l.b16 %v7641
  %v8161 = vunpack.c.l.b16 %v7642
  %v8162 = vunpack.c.l.b16 %v7643
  %v8163 = vunpack.c.l.b16 %v7644
  %v8164 = vunpack.c.l.b16 %v7645
  %v8165 = vunpack.c.l.b16 %v7646
  %v8166 = vunpack.c.l.b16 %v7647
  %v8167 = vunpack.c.l.b16 %v7648
  %v8168 = vunpack.c.l.b16 %v7649
  %v8169 = vunpack.c.l.b16 %v7650
  %v8170 = vunpack.c.l.b16 %v7651
  %v8171 = vunpack.c.l.b16 %v7652
  %v8172 = vunpack.c.l.b16 %v7653
  %v8173 = vunpack.c.l.b16 %v7654
  %v8174 = vunpack.c.l.b16 %v7655
  %v8175 = vunpack.c.l.b16 %v7656
  %v8176 = vunpack.c.l.b16 %v7657
  %v8177 = vunpack.c.l.b16 %v7658
  %v8178 = vunpack.c.l.b16 %v7659
  %v8179 = vunpack.c.l.b16 %v7660
  %v8180 = vunpack.c.l.b16 %v7661
  %v8181 = vunpack.c.l.b16 %v7662
  %v8182 = vunpack.c.l.b16 %v7663
  %v8183 = vunpack.c.l.b16 %v7664
  %v8184 = vunpack.c.l.b16 %v7665
  %v8185 = vunpack.c.l.b16 %v7666
  %v8186 = vunpack.c.l.b16 %v7667
  %v8187 = vunpack.c.l.b16 %v7668
  %v8188 = vunpack.c.l.b16 %v7669
  %v8189 = vunpack.c.l.b16 %v7670
  %v8190 = vunpack.c.l.b16 %v7671
  %v8191 = vunpack.c.l.b16 %v7672
  %v8192 = vunpack.c.l.b16 %v7673
  %v8193 = vunpack.c.l.b16 %v7674
  %v8194 = vunpack.c.l.b16 %v7675
  %v8195 = vunpack.c.l.b16 %v7676
  %v8196 = vunpack.c.l.b16 %v7677
  %v8197 = vunpack.c.l.b16 %v7678
  %v8198 = vunpack.c.l.b16 %v7679
  %v8199 = vunpack.c.l.b16 %v7680
  %v8200 = vunpack.c.l.b16 %v7681
  %v8201 = vunpack.c.l.b16 %v7682
  %v8202 = vunpack.c.l.b16 %v7683
  %v8203 = vunpack.c.l.b16 %v7684
  %v8204 = vunpack.c.l.b16 %v7685
  %v8205 = vunpack.c.l.b16 %v7686
  %v8206 = vunpack.c.l.b16 %v7687
  %v8207 = vunpack.c.l.b16 %v7688
  %v8208 = vunpack.c.l.b16 %v7689
  %v8209 = vunpack.c.l.b16 %v7690
  %v8210 = vunpack.c.l.b16 %v7691
  %v8211 = vunpack.c.l.b16 %v7692
  %v8212 = vunpack.c.l.b16 %v7693
  %v8213 = vunpack.c.l.b16 %v7694
  %v8214 = vunpack.c.l.b16 %v7695
  %v8215 = vunpack.c.l.b16 %v7696
  %v8216 = vunpack.c.l.b16 %v7697
  %v8217 = vunpack.c.l.b16 %v7698
  %v8218 = vunpack.c.l.b16 %v7699
  %v8219 = vunpack.c.l.b16 %v7700
  %v8220 = vunpack.c.l.b16 %v7701
  %v8221 = vunpack.c.l.b16 %v7702
  %v8222 = vunpack.c.l.b16 %v7703
  %v8223 = vunpack.c.l.b16 %v7704
  %v8224 = vunpack.c.l.b16 %v7705
  %v8225 = vunpack.c.l.b16 %v7706
  %v8226 = vunpack.c.l.b16 %v7707
  %v8227 = vunpack.c.l.b16 %v7708
  %v8228 = vunpack.c.l.b16 %v7709
  %v8229 = vunpack.c.l.b16 %v7710
  %v8230 = vunpack.c.l.b16 %v7711
  %v8231 = vunpack.c.l.b16 %v7712
  %v8232 = vunpack.c.l.b16 %v7713
  %v8233 = vunpack.c.l.b16 %v7714
  %v8234 = vunpack.c.l.b16 %v7715
  %v8235 = vunpack.c.l.b16 %v7716
  %v8236 = vunpack.c.l.b16 %v7717
  %v8237 = vunpack.c.l.b16 %v7718
  %v8238 = vunpack.c.l.b16 %v7719
  %v8239 = vunpack.c.l.b16 %v7720
  %v8240 = vunpack.c.l.b16 %v7721
  %v8241 = vunpack.c.l.b16 %v7722
  %v8242 = vunpack.c.l.b16 %v7723
  %v8243 = vunpack.c.l.b16 %v7724
  %v8244 = vunpack.c.l.b16 %v7725
  %v8245 = vunpack.c.l.b16 %v7726
  %v8246 = vunpack.c.l.b16 %v7727
  %v8247 = vunpack.c.l.b16 %v7728
  %v8248 = vunpack.c.l.b16 %v7729
  %v8249 = vunpack.c.l.b16 %v7730
  %v8250 = vunpack.c.l.b16 %v7731
  %v8251 = vunpack.c.l.b16 %v7732
  %v8252 = vunpack.c.l.b16 %v7733
  %v8253 = vunpack.c.l.b16 %v7734
  %v8254 = vunpack.c.l.b16 %v7735
  %v8255 = vunpack.c.l.b16 %v7736
  %v8256 = vunpack.c.l.b16 %v7737
  %v8257 = vunpack.c.l.b16 %v7738
  %v8258 = vunpack.c.l.b16 %v7739
  %v8259 = vunpack.c.l.b16 %v7740
  %v8260 = vunpack.c.l.b16 %v7741
  %v8261 = vunpack.c.l.b16 %v7742
  %v8262 = vunpack.c.l.b16 %v7743
  %v8263 = vunpack.c.l.b16 %v7744
  %v8264 = vunpack.c.l.b16 %v7745
  %v8265 = vunpack.c.l.b16 %v7746
  %v8266 = vunpack.c.l.b16 %v7747
  %v8267 = vunpack.c.l.b16 %v7748
  %v8268 = vunpack.c.l.b16 %v7749
  %v8269 = vunpack.c.l.b16 %v7750
  %v8270 = vunpack.c.l.b16 %v7751
  %v8271 = vunpack.c.l.b16 %v7752
  %v8272 = vunpack.c.l.b16 %v7753
  %v8273 = vunpack.c.l.b16 %v7754
  %v8274 = vunpack.c.l.b16 %v7755
  %v8275 = vunpack.c.l.b16 %v7756
  %v8276 = vunpack.c.l.b16 %v7757
  %v8277 = vunpack.c.l.b16 %v7758
  %v8278 = vunpack.c.l.b16 %v7759
  %v8279 = vunpack.c.l.b16 %v7760
  %v8280 = vunpack.c.l.b16 %v7761
  %v8281 = vunpack.c.l.b16 %v7762
  %v8282 = vunpack.c.l.b16 %v7763
  %v8283 = vunpack.c.l.b16 %v7764
  %v8284 = vunpack.c.l.b16 %v7765
  %v8285 = vunpack.c.l.b16 %v7766
  %v8286 = vunpack.c.l.b16 %v7767
  %v8287 = vunpack.c.l.b16 %v7768
  %v8288 = vunpack.c.l.b16 %v7769
  %v8289 = vunpack.c.l.b16 %v7770
  %v8290 = vunpack.c.l.b16 %v7771
  %v8291 = vunpack.c.l.b16 %v7772
  %v8292 = vunpack.c.l.b16 %v7773
  %v8293 = vunpack.c.l.b16 %v7774
  %v8294 = vunpack.c.l.b16 %v7775
  %v8295 = vunpack.c.l.b16 %v7776
  %v8296 = vunpack.c.l.b16 %v7777
  %v8297 = vunpack.c.l.b16 %v7778
  %v8298 = vunpack.c.l.b16 %v7779
  %v8299 = vunpack.c.l.b16 %v7780
  %v8300 = vunpack.c.l.b16 %v7781
  %v8301 = vunpack.c.l.b16 %v7782
  %v8302 = vunpack.c.l.b16 %v7783
  %v8303 = vunpack.c.l.b16 %v7784
  %v8304 = vunpack.c.l.b16 %v7785
  %v8305 = vunpack.c.l.b16 %v7786
  %v8306 = vunpack.c.l.b16 %v7787
  %v8307 = vunpack.c.l.b16 %v7788
  %v8308 = vunpack.c.l.b16 %v7789
  %v8309 = vunpack.c.l.b16 %v7790
  %v8310 = vunpack.c.l.b16 %v7791
  %v8311 = vunpack.c.l.b16 %v7792
  %v8312 = vunpack.c.l.b16 %v7793
  %v8313 = vunpack.c.l.b16 %v7794
  %v8314 = vunpack.c.l.b16 %v7795
  %v8315 = vunpack.c.l.b16 %v7796
  %v8316 = vunpack.c.l.b16 %v7797
  %v8317 = vunpack.c.l.b16 %v7798
  %v8318 = vunpack.c.l.b16 %v7799
  %v8319 = vunpack.c.l.b16 %v7800
  %v8320 = vunpack.c.l.b16 %v7801
  %v8321 = vunpack.c.l.b16 %v7802
  %v8322 = vunpack.c.l.b16 %v7803
  %v8323 = vunpack.c.l.b16 %v7804
  %v8324 = vunpack.c.l.b16 %v7805
  %v8325 = vunpack.c.l.b16 %v7806
  %v8326 = vunpack.c.l.b16 %v7807
  %v8327 = vunpack.c.l.b16 %v7808
  %v8328 = vunpack.c.l.b16 %v7809
  %v8329 = vunpack.c.l.b16 %v7810
  %v8330 = vunpack.c.l.b16 %v7811
  %v8331 = vunpack.c.l.b16 %v7812
  %v8332 = vunpack.c.l.b16 %v7813
  %v8333 = vunpack.c.l.b16 %v7814
  %v8334 = vunpack.c.l.b16 %v7815
  %v8335 = vunpack.c.l.b16 %v7816
  %v8336 = vunpack.c.l.b16 %v7817
  %v8337 = vunpack.c.l.b16 %v7818
  %v8338 = vunpack.c.l.b16 %v7819
  %v8339 = vunpack.c.l.b16 %v7820
  %v8340 = vunpack.c.l.b16 %v7821
  %v8341 = vunpack.c.l.b16 %v7822
  %v8342 = vunpack.c.l.b16 %v7823
  %v8343 = vunpack.c.l.b16 %v7824
  %v8344 = vunpack.c.l.b16 %v7825
  %v8345 = vunpack.c.l.b16 %v7826
  %v8346 = vunpack.c.l.b16 %v7827
  %v8347 = vunpack.c.l.b16 %v7828
  %v8348 = vunpack.c.l.b16 %v7829
  %v8349 = vunpack.c.l.b16 %v7830
  %v8350 = vunpack.c.l.b16 %v7831
  %v8351 = vunpack.c.l.b16 %v7832
  %v8352 = vunpack.c.l.b16 %v7833
  %v8353 = vunpack.c.l.b16 %v7834
  %v8354 = vunpack.c.l.b16 %v7835
  %v8355 = vunpack.c.l.b16 %v7836
  %v8356 = vunpack.c.l.b16 %v7837
  %v8357 = vunpack.c.l.b16 %v7838
  %v8358 = vunpack.c.l.b16 %v7839
  %v8359 = vunpack.c.l.b16 %v7840
  %v8360 = vunpack.c.l.b16 %v7841
  %v8361 = vunpack.c.l.b16 %v7842
  %v8362 = vunpack.c.l.b16 %v7843
  %v8363 = vunpack.c.l.b16 %v7844
  %v8364 = vunpack.c.l.b16 %v7845
  %v8365 = vunpack.c.l.b16 %v7846
  %v8366 = vunpack.c.l.b16 %v7847
  %v8367 = vunpack.c.l.b16 %v7848
  %v8368 = vunpack.c.l.b16 %v7849
  %v8369 = vunpack.c.l.b16 %v7850
  %v8370 = vunpack.c.l.b16 %v7851
  %v8371 = vunpack.c.l.b16 %v7852
  %v8372 = vunpack.c.l.b16 %v7853
  %v8373 = vunpack.c.l.b16 %v7854
  %v8374 = vunpack.c.l.b16 %v7855
  %v8375 = vunpack.c.l.b16 %v7856
  %v8376 = vunpack.c.l.b16 %v7857
  %v8377 = vunpack.c.l.b16 %v7858
  %v8378 = vunpack.c.l.b16 %v7859
  %v8379 = vunpack.c.l.b16 %v7860
  %v8380 = vunpack.c.l.b16 %v7861
  %v8381 = vunpack.c.l.b16 %v7862
  %v8382 = vunpack.c.l.b16 %v7863
  %v8383 = vunpack.c.l.b16 %v7864
  %v8384 = vunpack.c.l.b16 %v7865
  %v8385 = vunpack.c.l.b16 %v7866
  %v8386 = vunpack.c.l.b16 %v7867
  %v8387 = vunpack.c.l.b16 %v7868
  %v8388 = vunpack.c.l.b16 %v7869
  %v8389 = vunpack.c.l.b16 %v7870
  %v8390 = vpack.c.b16 %v8135, %v8134
  %v8391 = vpack.c.b16 %v8137, %v8136
  %v8392 = vpack.c.b16 %v8139, %v8138
  %v8393 = vpack.c.b16 %v8141, %v8140
  %v8394 = vpack.c.b16 %v8143, %v8142
  %v8395 = vpack.c.b16 %v8145, %v8144
  %v8396 = vpack.c.b16 %v8147, %v8146
  %v8397 = vpack.c.b16 %v8149, %v8148
  %v8398 = vpack.c.b16 %v8151, %v8150
  %v8399 = vpack.c.b16 %v8153, %v8152
  %v8400 = vpack.c.b16 %v8155, %v8154
  %v8401 = vpack.c.b16 %v8157, %v8156
  %v8402 = vpack.c.b16 %v8159, %v8158
  %v8403 = vpack.c.b16 %v8161, %v8160
  %v8404 = vpack.c.b16 %v8163, %v8162
  %v8405 = vpack.c.b16 %v8165, %v8164
  %v8406 = vpack.c.b16 %v8167, %v8166
  %v8407 = vpack.c.b16 %v8169, %v8168
  %v8408 = vpack.c.b16 %v8171, %v8170
  %v8409 = vpack.c.b16 %v8173, %v8172
  %v8410 = vpack.c.b16 %v8175, %v8174
  %v8411 = vpack.c.b16 %v8177, %v8176
  %v8412 = vpack.c.b16 %v8179, %v8178
  %v8413 = vpack.c.b16 %v8181, %v8180
  %v8414 = vpack.c.b16 %v8183, %v8182
  %v8415 = vpack.c.b16 %v8185, %v8184
  %v8416 = vpack.c.b16 %v8187, %v8186
  %v8417 = vpack.c.b16 %v8189, %v8188
  %v8418 = vpack.c.b16 %v8191, %v8190
  %v8419 = vpack.c.b16 %v8193, %v8192
  %v8420 = vpack.c.b16 %v8195, %v8194
  %v8421 = vpack.c.b16 %v8197, %v8196
  %v8422 = vpack.c.b16 %v8199, %v8198
  %v8423 = vpack.c.b16 %v8201, %v8200
  %v8424 = vpack.c.b16 %v8203, %v8202
  %v8425 = vpack.c.b16 %v8205, %v8204
  %v8426 = vpack.c.b16 %v8207, %v8206
  %v8427 = vpack.c.b16 %v8209, %v8208
  %v8428 = vpack.c.b16 %v8211, %v8210
  %v8429 = vpack.c.b16 %v8213, %v8212
  %v8430 = vpack.c.b16 %v8215, %v8214
  %v8431 = vpack.c.b16 %v8217, %v8216
  %v8432 = vpack.c.b16 %v8219, %v8218
  %v8433 = vpack.c.b16 %v8221, %v8220
  %v8434 = vpack.c.b16 %v8223, %v8222
  %v8435 = vpack.c.b16 %v8225, %v8224
  %v8436 = vpack.c.b16 %v8227, %v8226
  %v8437 = vpack.c.b16 %v8229, %v8228
  %v8438 = vpack.c.b16 %v8231, %v8230
  %v8439 = vpack.c.b16 %v8233, %v8232
  %v8440 = vpack.c.b16 %v8235, %v8234
  %v8441 = vpack.c.b16 %v8237, %v8236
  %v8442 = vpack.c.b16 %v8239, %v8238
  %v8443 = vpack.c.b16 %v8241, %v8240
  %v8444 = vpack.c.b16 %v8243, %v8242
  %v8445 = vpack.c.b16 %v8245, %v8244
  %v8446 = vpack.c.b16 %v8247, %v8246
  %v8447 = vpack.c.b16 %v8249, %v8248
  %v8448 = vpack.c.b16 %v8251, %v8250
  %v8449 = vpack.c.b16 %v8253, %v8252
  %v8450 = vpack.c.b16 %v8255, %v8254
  %v8451 = vpack.c.b16 %v8257, %v8256
  %v8452 = vpack.c.b16 %v8259, %v8258
  %v8453 = vpack.c.b16 %v8261, %v8260
  %v8454 = vpack.c.b16 %v8263, %v8262
  %v8455 = vpack.c.b16 %v8265, %v8264
  %v8456 = vpack.c.b16 %v8267, %v8266
  %v8457 = vpack.c.b16 %v8269, %v8268
  %v8458 = vpack.c.b16 %v8271, %v8270
  %v8459 = vpack.c.b16 %v8273, %v8272
  %v8460 = vpack.c.b16 %v8275, %v8274
  %v8461 = vpack.c.b16 %v8277, %v8276
  %v8462 = vpack.c.b16 %v8279, %v8278
  %v8463 = vpack.c.b16 %v8281, %v8280
  %v8464 = vpack.c.b16 %v8283, %v8282
  %v8465 = vpack.c.b16 %v8285, %v8284
  %v8466 = vpack.c.b16 %v8287, %v8286
  %v8467 = vpack.c.b16 %v8289, %v8288
  %v8468 = vpack.c.b16 %v8291, %v8290
  %v8469 = vpack.c.b16 %v8293, %v8292
  %v8470 = vpack.c.b16 %v8295, %v8294
  %v8471 = vpack.c.b16 %v8297, %v8296
  %v8472 = vpack.c.b16 %v8299, %v8298
  %v8473 = vpack.c.b16 %v8301, %v8300
  %v8474 = vpack.c.b16 %v8303, %v8302
  %v8475 = vpack.c.b16 %v8305, %v8304
  %v8476 = vpack.c.b16 %v8307, %v8306
  %v8477 = vpack.c.b16 %v8309, %v8308
  %v8478 = vpack.c.b16 %v8311, %v8310
  %v8479 = vpack.c.b16 %v8313, %v8312
  %v8480 = vpack.c.b16 %v8315, %v8314
  %v8481 = vpack.c.b16 %v8317, %v8316
  %v8482 = vpack.c.b16 %v8319, %v8318
  %v8483 = vpack.c.b16 %v8321, %v8320
  %v8484 = vpack.c.b16 %v8323, %v8322
  %v8485 = vpack.c.b16 %v8325, %v8324
  %v8486 = vpack.c.b16 %v8327, %v8326
  %v8487 = vpack.c.b16 %v8329, %v8328
  %v8488 = vpack.c.b16 %v8331, %v8330
  %v8489 = vpack.c.b16 %v8333, %v8332
  %v8490 = vpack.c.b16 %v8335, %v8334
  %v8491 = vpack.c.b16 %v8337, %v8336
  %v8492 = vpack.c.b16 %v8339, %v8338
  %v8493 = vpack.c.b16 %v8341, %v8340
  %v8494 = vpack.c.b16 %v8343, %v8342
  %v8495 = vpack.c.b16 %v8345, %v8344
  %v8496 = vpack.c.b16 %v8347, %v8346
  %v8497 = vpack.c.b16 %v8349, %v8348
  %v8498 = vpack.c.b16 %v8351, %v8350
  %v8499 = vpack.c.b16 %v8353, %v8352
  %v8500 = vpack.c.b16 %v8355, %v8354
  %v8501 = vpack.c.b16 %v8357, %v8356
  %v8502 = vpack.c.b16 %v8359, %v8358
  %v8503 = vpack.c.b16 %v8361, %v8360
  %v8504 = vpack.c.b16 %v8363, %v8362
  %v8505 = vpack.c.b16 %v8365, %v8364
  %v8506 = vpack.c.b16 %v8367, %v8366
  %v8507 = vpack.c.b16 %v8369, %v8368
  %v8508 = vpack.c.b16 %v8371, %v8370
  %v8509 = vpack.c.b16 %v8373, %v8372
  %v8510 = vpack.c.b16 %v8375, %v8374
  %v8511 = vpack.c.b16 %v8377, %v8376
  %v8512 = vpack.c.b16 %v8379, %v8378
  %v8513 = vpack.c.b16 %v8381, %v8380
  %v8514 = vpack.c.b16 %v8383, %v8382
  %v8515 = vpack.c.b16 %v8385, %v8384
  %v8516 = vpack.c.b16 %v8387, %v8386
  %v8517 = vpack.c.b16 %v8389, %v8388
  %8646 = vmatprep.subr.bf16.mxu0 0
  %8647 = vmatpush1.bf16.msra.mxu0 %v8390
  %8648 = vmatprep.subr.bf16.mxu0 0
  %8649 = vmatpush1.bf16.msra.mxu0 %v8391
  %8650 = vmatprep.subr.bf16.mxu0 0
  %8651 = vmatpush1.bf16.msra.mxu0 %v8392
  %8652 = vmatprep.subr.bf16.mxu0 0
  %8653 = vmatpush1.bf16.msra.mxu0 %v8393
  %8654 = vmatprep.subr.bf16.mxu0 0
  %8655 = vmatpush1.bf16.msra.mxu0 %v8394
  %8656 = vmatprep.subr.bf16.mxu0 0
  %8657 = vmatpush1.bf16.msra.mxu0 %v8395
  %8658 = vmatprep.subr.bf16.mxu0 0
  %8659 = vmatpush1.bf16.msra.mxu0 %v8396
  %8660 = vmatprep.subr.bf16.mxu0 0
  %8661 = vmatpush1.bf16.msra.mxu0 %v8397
  %8662 = vmatprep.subr.bf16.mxu0 0
  %8663 = vmatpush1.bf16.msra.mxu0 %v8398
  %8664 = vmatprep.subr.bf16.mxu0 0
  %8665 = vmatpush1.bf16.msra.mxu0 %v8399
  %8666 = vmatprep.subr.bf16.mxu0 0
  %8667 = vmatpush1.bf16.msra.mxu0 %v8400
  %8668 = vmatprep.subr.bf16.mxu0 0
  %8669 = vmatpush1.bf16.msra.mxu0 %v8401
  %8670 = vmatprep.subr.bf16.mxu0 0
  %8671 = vmatpush1.bf16.msra.mxu0 %v8402
  %8672 = vmatprep.subr.bf16.mxu0 0
  %8673 = vmatpush1.bf16.msra.mxu0 %v8403
  %8674 = vmatprep.subr.bf16.mxu0 0
  %8675 = vmatpush1.bf16.msra.mxu0 %v8404
  %8676 = vmatprep.subr.bf16.mxu0 0
  %8677 = vmatpush1.bf16.msra.mxu0 %v8405
  %8678 = vmatprep.mubr.bf16.mxu0 %v7600
  %8679 = vmatmul.mubr.bf16.gmra.mrb[0].mxu0 %v7599
  %v8680 = vpop.f32.mrb[0].mxu0
  %v8681 = vadd.f32 %v7876, %v8680
  %v8682 = vpop.f32.mrb[0].mxu0
  %v8683 = vpop.f32.mrb[0].mxu0
  %v8684 = vpop.f32.mrb[0].mxu0
  %8685 = vdwg.mxu0
  %8686 = vmatprep.subr.bf16.mxu0 0
  %8687 = vmatpush1.bf16.msra.mxu0 %v8406
  %8688 = vmatprep.subr.bf16.mxu0 0
  %8689 = vmatpush1.bf16.msra.mxu0 %v8407
  %8690 = vmatprep.subr.bf16.mxu0 0
  %8691 = vmatpush1.bf16.msra.mxu0 %v8408
  %8692 = vmatprep.subr.bf16.mxu0 0
  %8693 = vmatpush1.bf16.msra.mxu0 %v8409
  %8694 = vmatprep.subr.bf16.mxu0 0
  %8695 = vmatpush1.bf16.msra.mxu0 %v8410
  %8696 = vmatprep.subr.bf16.mxu0 0
  %8697 = vmatpush1.bf16.msra.mxu0 %v8411
  %8698 = vmatprep.subr.bf16.mxu0 0
  %8699 = vmatpush1.bf16.msra.mxu0 %v8412
  %8700 = vmatprep.subr.bf16.mxu0 0
  %8701 = vmatpush1.bf16.msra.mxu0 %v8413
  %8702 = vmatprep.subr.bf16.mxu0 0
  %8703 = vmatpush1.bf16.msra.mxu0 %v8414
  %8704 = vmatprep.subr.bf16.mxu0 0
  %8705 = vmatpush1.bf16.msra.mxu0 %v8415
  %8706 = vmatprep.subr.bf16.mxu0 0
  %8707 = vmatpush1.bf16.msra.mxu0 %v8416
  %8708 = vmatprep.subr.bf16.mxu0 0
  %8709 = vmatpush1.bf16.msra.mxu0 %v8417
  %8710 = vmatprep.subr.bf16.mxu0 0
  %8711 = vmatpush1.bf16.msra.mxu0 %v8418
  %8712 = vmatprep.subr.bf16.mxu0 0
  %8713 = vmatpush1.bf16.msra.mxu0 %v8419
  %8714 = vmatprep.subr.bf16.mxu0 0
  %8715 = vmatpush1.bf16.msra.mxu0 %v8420
  %8716 = vmatprep.subr.bf16.mxu0 0
  %8717 = vmatpush1.bf16.msra.mxu0 %v8421
  %8718 = vmatprep.mubr.bf16.mxu0 %v7602
  %8719 = vmatmul.mubr.bf16.gmra.mrb[0].mxu0 %v7601
  %v8720 = vpop.f32.mrb[0].mxu0
  %v8721 = vadd.f32 %v8681, %v8720
  %v8722 = vpop.f32.mrb[0].mxu0
  %v8723 = vpop.f32.mrb[0].mxu0
  %v8724 = vpop.f32.mrb[0].mxu0
  %8725 = vdwg.mxu0
  %8726 = vmatprep.subr.bf16.mxu0 0
  %8727 = vmatpush1.bf16.msra.mxu0 %v8422
  %8728 = vmatprep.subr.bf16.mxu0 0
  %8729 = vmatpush1.bf16.msra.mxu0 %v8423
  %8730 = vmatprep.subr.bf16.mxu0 0
  %8731 = vmatpush1.bf16.msra.mxu0 %v8424
  %8732 = vmatprep.subr.bf16.mxu0 0
  %8733 = vmatpush1.bf16.msra.mxu0 %v8425
  %8734 = vmatprep.subr.bf16.mxu0 0
  %8735 = vmatpush1.bf16.msra.mxu0 %v8426
  %8736 = vmatprep.subr.bf16.mxu0 0
  %8737 = vmatpush1.bf16.msra.mxu0 %v8427
  %8738 = vmatprep.subr.bf16.mxu0 0
  %8739 = vmatpush1.bf16.msra.mxu0 %v8428
  %8740 = vmatprep.subr.bf16.mxu0 0
  %8741 = vmatpush1.bf16.msra.mxu0 %v8429
  %8742 = vmatprep.subr.bf16.mxu0 0
  %8743 = vmatpush1.bf16.msra.mxu0 %v8430
  %8744 = vmatprep.subr.bf16.mxu0 0
  %8745 = vmatpush1.bf16.msra.mxu0 %v8431
  %8746 = vmatprep.subr.bf16.mxu0 0
  %8747 = vmatpush1.bf16.msra.mxu0 %v8432
  %8748 = vmatprep.subr.bf16.mxu0 0
  %8749 = vmatpush1.bf16.msra.mxu0 %v8433
  %8750 = vmatprep.subr.bf16.mxu0 0
  %8751 = vmatpush1.bf16.msra.mxu0 %v8434
  %8752 = vmatprep.subr.bf16.mxu0 0
  %8753 = vmatpush1.bf16.msra.mxu0 %v8435
  %8754 = vmatprep.subr.bf16.mxu0 0
  %8755 = vmatpush1.bf16.msra.mxu0 %v8436
  %8756 = vmatprep.subr.bf16.mxu0 0
  %8757 = vmatpush1.bf16.msra.mxu0 %v8437
  %8758 = vmatprep.mubr.bf16.mxu0 %v7604
  %8759 = vmatmul.mubr.bf16.gmra.mrb[0].mxu0 %v7603
  %v8760 = vpop.f32.mrb[0].mxu0
  %v8761 = vadd.f32 %v8721, %v8760
  %v8762 = vpop.f32.mrb[0].mxu0
  %v8763 = vpop.f32.mrb[0].mxu0
  %v8764 = vpop.f32.mrb[0].mxu0
  %8765 = vdwg.mxu0
  %8766 = vmatprep.subr.bf16.mxu0 0
  %8767 = vmatpush1.bf16.msra.mxu0 %v8438
  %8768 = vmatprep.subr.bf16.mxu0 0
  %8769 = vmatpush1.bf16.msra.mxu0 %v8439
  %8770 = vmatprep.subr.bf16.mxu0 0
  %8771 = vmatpush1.bf16.msra.mxu0 %v8440
  %8772 = vmatprep.subr.bf16.mxu0 0
  %8773 = vmatpush1.bf16.msra.mxu0 %v8441
  %8774 = vmatprep.subr.bf16.mxu0 0
  %8775 = vmatpush1.bf16.msra.mxu0 %v8442
  %8776 = vmatprep.subr.bf16.mxu0 0
  %8777 = vmatpush1.bf16.msra.mxu0 %v8443
  %8778 = vmatprep.subr.bf16.mxu0 0
  %8779 = vmatpush1.bf16.msra.mxu0 %v8444
  %8780 = vmatprep.subr.bf16.mxu0 0
  %8781 = vmatpush1.bf16.msra.mxu0 %v8445
  %8782 = vmatprep.subr.bf16.mxu0 0
  %8783 = vmatpush1.bf16.msra.mxu0 %v8446
  %8784 = vmatprep.subr.bf16.mxu0 0
  %8785 = vmatpush1.bf16.msra.mxu0 %v8447
  %8786 = vmatprep.subr.bf16.mxu0 0
  %8787 = vmatpush1.bf16.msra.mxu0 %v8448
  %8788 = vmatprep.subr.bf16.mxu0 0
  %8789 = vmatpush1.bf16.msra.mxu0 %v8449
  %8790 = vmatprep.subr.bf16.mxu0 0
  %8791 = vmatpush1.bf16.msra.mxu0 %v8450
  %8792 = vmatprep.subr.bf16.mxu0 0
  %8793 = vmatpush1.bf16.msra.mxu0 %v8451
  %8794 = vmatprep.subr.bf16.mxu0 0
  %8795 = vmatpush1.bf16.msra.mxu0 %v8452
  %8796 = vmatprep.subr.bf16.mxu0 0
  %8797 = vmatpush1.bf16.msra.mxu0 %v8453
  %8798 = vmatprep.mubr.bf16.mxu0 %v7606
  %8799 = vmatmul.mubr.bf16.gmra.mrb[0].mxu0 %v7605
  %v8800 = vpop.f32.mrb[0].mxu0
  %v8801 = vadd.f32 %v8761, %v8800
  %v8802 = vpop.f32.mrb[0].mxu0
  %v8803 = vpop.f32.mrb[0].mxu0
  %v8804 = vpop.f32.mrb[0].mxu0
  %8805 = vdwg.mxu0
  %8806 = vmatprep.subr.bf16.mxu0 0
  %8807 = vmatpush1.bf16.msra.mxu0 %v8454
  %8808 = vmatprep.subr.bf16.mxu0 0
  %8809 = vmatpush1.bf16.msra.mxu0 %v8455
  %8810 = vmatprep.subr.bf16.mxu0 0
  %8811 = vmatpush1.bf16.msra.mxu0 %v8456
  %8812 = vmatprep.subr.bf16.mxu0 0
  %8813 = vmatpush1.bf16.msra.mxu0 %v8457
  %8814 = vmatprep.subr.bf16.mxu0 0
  %8815 = vmatpush1.bf16.msra.mxu0 %v8458
  %8816 = vmatprep.subr.bf16.mxu0 0
  %8817 = vmatpush1.bf16.msra.mxu0 %v8459
  %8818 = vmatprep.subr.bf16.mxu0 0
  %8819 = vmatpush1.bf16.msra.mxu0 %v8460
  %8820 = vmatprep.subr.bf16.mxu0 0
  %8821 = vmatpush1.bf16.msra.mxu0 %v8461
  %8822 = vmatprep.subr.bf16.mxu0 0
  %8823 = vmatpush1.bf16.msra.mxu0 %v8462
  %8824 = vmatprep.subr.bf16.mxu0 0
  %8825 = vmatpush1.bf16.msra.mxu0 %v8463
  %8826 = vmatprep.subr.bf16.mxu0 0
  %8827 = vmatpush1.bf16.msra.mxu0 %v8464
  %8828 = vmatprep.subr.bf16.mxu0 0
  %8829 = vmatpush1.bf16.msra.mxu0 %v8465
  %8830 = vmatprep.subr.bf16.mxu0 0
  %8831 = vmatpush1.bf16.msra.mxu0 %v8466
  %8832 = vmatprep.subr.bf16.mxu0 0
  %8833 = vmatpush1.bf16.msra.mxu0 %v8467
  %8834 = vmatprep.subr.bf16.mxu0 0
  %8835 = vmatpush1.bf16.msra.mxu0 %v8468
  %8836 = vmatprep.subr.bf16.mxu0 0
  %8837 = vmatpush1.bf16.msra.mxu0 %v8469
  %8838 = vmatprep.mubr.bf16.mxu0 %v7608
  %8839 = vmatmul.mubr.bf16.gmra.mrb[0].mxu0 %v7607
  %v8840 = vpop.f32.mrb[0].mxu0
  %v8841 = vadd.f32 %v8801, %v8840
  %v8842 = vpop.f32.mrb[0].mxu0
  %v8843 = vpop.f32.mrb[0].mxu0
  %v8844 = vpop.f32.mrb[0].mxu0
  %8845 = vdwg.mxu0
  %8846 = vmatprep.subr.bf16.mxu0 0
  %8847 = vmatpush1.bf16.msra.mxu0 %v8470
  %8848 = vmatprep.subr.bf16.mxu0 0
  %8849 = vmatpush1.bf16.msra.mxu0 %v8471
  %8850 = vmatprep.subr.bf16.mxu0 0
  %8851 = vmatpush1.bf16.msra.mxu0 %v8472
  %8852 = vmatprep.subr.bf16.mxu0 0
  %8853 = vmatpush1.bf16.msra.mxu0 %v8473
  %8854 = vmatprep.subr.bf16.mxu0 0
  %8855 = vmatpush1.bf16.msra.mxu0 %v8474
  %8856 = vmatprep.subr.bf16.mxu0 0
  %8857 = vmatpush1.bf16.msra.mxu0 %v8475
  %8858 = vmatprep.subr.bf16.mxu0 0
  %8859 = vmatpush1.bf16.msra.mxu0 %v8476
  %8860 = vmatprep.subr.bf16.mxu0 0
  %8861 = vmatpush1.bf16.msra.mxu0 %v8477
  %8862 = vmatprep.subr.bf16.mxu0 0
  %8863 = vmatpush1.bf16.msra.mxu0 %v8478
  %8864 = vmatprep.subr.bf16.mxu0 0
  %8865 = vmatpush1.bf16.msra.mxu0 %v8479
  %8866 = vmatprep.subr.bf16.mxu0 0
  %8867 = vmatpush1.bf16.msra.mxu0 %v8480
  %8868 = vmatprep.subr.bf16.mxu0 0
  %8869 = vmatpush1.bf16.msra.mxu0 %v8481
  %8870 = vmatprep.subr.bf16.mxu0 0
  %8871 = vmatpush1.bf16.msra.mxu0 %v8482
  %8872 = vmatprep.subr.bf16.mxu0 0
  %8873 = vmatpush1.bf16.msra.mxu0 %v8483
  %8874 = vmatprep.subr.bf16.mxu0 0
  %8875 = vmatpush1.bf16.msra.mxu0 %v8484
  %8876 = vmatprep.subr.bf16.mxu0 0
  %8877 = vmatpush1.bf16.msra.mxu0 %v8485
  %8878 = vmatprep.mubr.bf16.mxu0 %v7610
  %8879 = vmatmul.mubr.bf16.gmra.mrb[0].mxu0 %v7609
  %v8880 = vpop.f32.mrb[0].mxu0
  %v8881 = vadd.f32 %v8841, %v8880
  %v8882 = vpop.f32.mrb[0].mxu0
  %v8883 = vpop.f32.mrb[0].mxu0
  %v8884 = vpop.f32.mrb[0].mxu0
  %8885 = vdwg.mxu0
  %8886 = vmatprep.subr.bf16.mxu0 0
  %8887 = vmatpush1.bf16.msra.mxu0 %v8486
  %8888 = vmatprep.subr.bf16.mxu0 0
  %8889 = vmatpush1.bf16.msra.mxu0 %v8487
  %8890 = vmatprep.subr.bf16.mxu0 0
  %8891 = vmatpush1.bf16.msra.mxu0 %v8488
  %8892 = vmatprep.subr.bf16.mxu0 0
  %8893 = vmatpush1.bf16.msra.mxu0 %v8489
  %8894 = vmatprep.subr.bf16.mxu0 0
  %8895 = vmatpush1.bf16.msra.mxu0 %v8490
  %8896 = vmatprep.subr.bf16.mxu0 0
  %8897 = vmatpush1.bf16.msra.mxu0 %v8491
  %8898 = vmatprep.subr.bf16.mxu0 0
  %8899 = vmatpush1.bf16.msra.mxu0 %v8492
  %8900 = vmatprep.subr.bf16.mxu0 0
  %8901 = vmatpush1.bf16.msra.mxu0 %v8493
  %8902 = vmatprep.subr.bf16.mxu0 0
  %8903 = vmatpush1.bf16.msra.mxu0 %v8494
  %8904 = vmatprep.subr.bf16.mxu0 0
  %8905 = vmatpush1.bf16.msra.mxu0 %v8495
  %8906 = vmatprep.subr.bf16.mxu0 0
  %8907 = vmatpush1.bf16.msra.mxu0 %v8496
  %8908 = vmatprep.subr.bf16.mxu0 0
  %8909 = vmatpush1.bf16.msra.mxu0 %v8497
  %8910 = vmatprep.subr.bf16.mxu0 0
  %8911 = vmatpush1.bf16.msra.mxu0 %v8498
  %8912 = vmatprep.subr.bf16.mxu0 0
  %8913 = vmatpush1.bf16.msra.mxu0 %v8499
  %8914 = vmatprep.subr.bf16.mxu0 0
  %8915 = vmatpush1.bf16.msra.mxu0 %v8500
  %8916 = vmatprep.subr.bf16.mxu0 0
  %8917 = vmatpush1.bf16.msra.mxu0 %v8501
  %8918 = vmatprep.mubr.bf16.mxu0 %v7612
  %8919 = vmatmul.mubr.bf16.gmra.mrb[0].mxu0 %v7611
  %v8920 = vpop.f32.mrb[0].mxu0
  %v8921 = vadd.f32 %v8881, %v8920
  %v8922 = vpop.f32.mrb[0].mxu0
  %v8923 = vpop.f32.mrb[0].mxu0
  %v8924 = vpop.f32.mrb[0].mxu0
  %8925 = vdwg.mxu0
  %8926 = vmatprep.subr.bf16.mxu0 0
  %8927 = vmatpush1.bf16.msra.mxu0 %v8502
  %8928 = vmatprep.subr.bf16.mxu0 0
  %8929 = vmatpush1.bf16.msra.mxu0 %v8503
  %8930 = vmatprep.subr.bf16.mxu0 0
  %8931 = vmatpush1.bf16.msra.mxu0 %v8504
  %8932 = vmatprep.subr.bf16.mxu0 0
  %8933 = vmatpush1.bf16.msra.mxu0 %v8505
  %8934 = vmatprep.subr.bf16.mxu0 0
  %8935 = vmatpush1.bf16.msra.mxu0 %v8506
  %8936 = vmatprep.subr.bf16.mxu0 0
  %8937 = vmatpush1.bf16.msra.mxu0 %v8507
  %8938 = vmatprep.subr.bf16.mxu0 0
  %8939 = vmatpush1.bf16.msra.mxu0 %v8508
  %8940 = vmatprep.subr.bf16.mxu0 0
  %8941 = vmatpush1.bf16.msra.mxu0 %v8509
  %8942 = vmatprep.subr.bf16.mxu0 0
  %8943 = vmatpush1.bf16.msra.mxu0 %v8510
  %8944 = vmatprep.subr.bf16.mxu0 0
  %8945 = vmatpush1.bf16.msra.mxu0 %v8511
  %8946 = vmatprep.subr.bf16.mxu0 0
  %8947 = vmatpush1.bf16.msra.mxu0 %v8512
  %8948 = vmatprep.subr.bf16.mxu0 0
  %8949 = vmatpush1.bf16.msra.mxu0 %v8513
  %8950 = vmatprep.subr.bf16.mxu0 0
  %8951 = vmatpush1.bf16.msra.mxu0 %v8514
  %8952 = vmatprep.subr.bf16.mxu0 0
  %8953 = vmatpush1.bf16.msra.mxu0 %v8515
  %8954 = vmatprep.subr.bf16.mxu0 0
  %8955 = vmatpush1.bf16.msra.mxu0 %v8516
  %8956 = vmatprep.subr.bf16.mxu0 0
  %8957 = vmatpush1.bf16.msra.mxu0 %v8517
  %8958 = vmatprep.mubr.bf16.mxu0 %v7614
  %8959 = vmatmul.mubr.bf16.gmra.mrb[0].mxu0 %v7613
  %v8960 = vpop.f32.mrb[0].mxu0
  %v8961 = vadd.f32 %v8921, %v8960
  %v8962 = vpop.f32.mrb[0].mxu0
  %v8963 = vpop.f32.mrb[0].mxu0
  %v8964 = vpop.f32.mrb[0].mxu0
  %8965 = vdwg.mxu0
  %v8966 = vmax.f32 %v8961, 0.0
  %v8967 = vpack.c.bf16 %v8966, %v8966
  %v8968 = vld [vmem:[%s5] sm:$0xf]
  %v8969 = vld [vmem:[%s5 + $0x4] sm:$0xf]
  %v8970 = vld [vmem:[%s5 + $0x8] sm:$0xf]
  %v8971 = vld [vmem:[%s5 + $0xc] sm:$0xf]
  %v8972 = vld [vmem:[%s6] sm:$0x1]
  %v8974 = vlaneseq
  %v8975 = vshrl.u32 %v8974, 7
  %v8976 = vsub.s32 0, %v8975
  %v8977 = vrot.slane %v8972, %v8976
  %v8983 = vunpack.c.l.b16 %v8968
  %v8984 = vunpack.c.l.b16 %v8969
  %v8985 = vunpack.c.l.b16 %v8970
  %v8986 = vunpack.c.l.b16 %v8971
  %v8987 = vpack.c.b16 %v8984, %v8983
  %v8988 = vpack.c.b16 %v8986, %v8985
  %vm8991 = vcmask 261120
  %v8993 = vsel %vm8991, %v8967, 0
  %8995 = vmatprep.subr.bf16.mxu0 0
  %8996 = vmatpush1.bf16.msra.mxu0 %v8987
  %8997 = vmatprep.subr.bf16.mxu0 0
  %8998 = vmatpush1.bf16.msra.mxu0 %v8988
  %8999 = vmatprep.subr.bf16.mxu0 0
  %9000 = vmatpush1.bf16.msra.mxu0 0
  %9001 = vmatprep.subr.bf16.mxu0 0
  %9002 = vmatpush1.bf16.msra.mxu0 0
  %9003 = vmatprep.subr.bf16.mxu0 0
  %9004 = vmatpush1.bf16.msra.mxu0 0
  %9005 = vmatprep.subr.bf16.mxu0 0
  %9006 = vmatpush1.bf16.msra.mxu0 0
  %9007 = vmatprep.subr.bf16.mxu0 0
  %9008 = vmatpush1.bf16.msra.mxu0 0
  %9009 = vmatprep.subr.bf16.mxu0 0
  %9010 = vmatpush1.bf16.msra.mxu0 0
  %9011 = vmatprep.subr.bf16.mxu0 0
  %9012 = vmatpush1.bf16.msra.mxu0 0
  %9013 = vmatprep.subr.bf16.mxu0 0
  %9014 = vmatpush1.bf16.msra.mxu0 0
  %9015 = vmatprep.subr.bf16.mxu0 0
  %9016 = vmatpush1.bf16.msra.mxu0 0
  %9017 = vmatprep.subr.bf16.mxu0 0
  %9018 = vmatpush1.bf16.msra.mxu0 0
  %9019 = vmatprep.subr.bf16.mxu0 0
  %9020 = vmatpush1.bf16.msra.mxu0 0
  %9021 = vmatprep.subr.bf16.mxu0 0
  %9022 = vmatpush1.bf16.msra.mxu0 0
  %9023 = vmatprep.subr.bf16.mxu0 0
  %9024 = vmatpush1.bf16.msra.mxu0 0
  %9025 = vmatprep.subr.bf16.mxu0 0
  %9026 = vmatpush1.bf16.msra.mxu0 0
  %9027 = vmatprep.mubr.bf16.mxu0 0
  %9028 = vmatmul.mubr.bf16.gmra.mrb[0].mxu0 %v8993
  %v9029 = vpop.f32.mrb[0].mxu0
  %v9030 = vadd.f32 %v8977, %v9029
  %v9031 = vpop.f32.mrb[0].mxu0
  %v9032 = vpop.f32.mrb[0].mxu0
  %v9033 = vpop.f32.mrb[0].mxu0
  %9034 = vdwg.mxu0
  %9035 = vst [vmem:[%s7] sm:$0xff] %v9030
  // Predicated region
  $region30: #{decoupled_model_forward.1} parent=0 // pred_check
    _
  $region31: #{decoupled_model_forward.1} parent=0 // pred_check_branch
    %9037 = sbr.rel (0) target = $region33
  $region32: #{decoupled_model_forward.1} parent=0 // pred_region
    _
  $region33: #{decoupled_model_forward.1} parent=0 // pred_fallthru
    _
  // Predicated region
  $region34: #{decoupled_model_forward.1} parent=0 // pred_check
    _
  $region35: #{decoupled_model_forward.1} parent=0 // pred_check_branch
    %9039 = sbr.rel (0) target = $region37
  $region36: #{decoupled_model_forward.1} parent=0 // pred_region
    _
  $region37: #{decoupled_model_forward.1} parent=0 // pred_fallthru
    _

</llo_original>
